<compile_context>
chip_gen: v7x
topology: tpu7x:2x2x1
jax: 0.10.0
libtpu: 0.0.40
codegen_flags: <defaults>
</compile_context>

<pallas_src>
import jax
import jax.numpy as jnp
from jax import lax
from jax.experimental import pallas as pl
from jax.experimental.pallas import tpu as pltpu

EPS = 1e-5   # PyTorch BatchNorm2d default eps
PADR = 8     # sublane-aligned row pad above/below the flattened activation slab


# --------------------------------------------------------------------------
# Pallas kernel: fused DoubleConv (conv3x3 -> BN(train) -> ReLU) x 2
# --------------------------------------------------------------------------
def _make_double_conv_kernel(N, H, W, Cmid, Cout):
    rows = N * H
    inv_nhw = 1.0 / float(rows * W)
    hi = lax.Precision.HIGHEST   # only for the tiny stat fold/tile dots

    def kernel(x_ref, w1_ref, g1_ref, b1_ref, f1_ref, t1_ref,
               w2_ref, g2_ref, b2_ref, f2_ref, t2_ref,
               o_ref, mid_ref):
        # x_ref  : (2*PADR + N*H, W*Cin)  bf16, real rows at [PADR : PADR+N*H]
        # w1_ref : (3*W*Cin,  W*Cmid)     bf16 K-stacked banded conv1 weights
        # w2_ref : (3*W*Cmid, W*Cout)     bf16 K-stacked banded conv2 weights
        # g/b    : (1, C) f32 BatchNorm affine params
        # f*_ref : (W*C, C) 0/1 fold matrix   (per-lane -> per-channel reduce)
        # t*_ref : (C, W*C) 0/1 tile matrix   (per-channel -> per-lane bcast)
        # o_ref  : (N*H, W*Cout) f32 lane-dense output slab
        # mid_ref: VMEM scratch (2*PADR + N*H, W*Cmid) bf16

        def taps(src_ref):
            # K-stacked LHS for the 3 kernel rows.  Tap dy reads source row
            # (r + dy - 1); rows whose neighbour crosses an image boundary
            # (or the outer pad) are zeroed with a per-row select, so the pad
            # row *values* are never consumed.
            wc = src_ref.shape[1]
            h_idx = lax.broadcasted_iota(jnp.int32, (rows, wc), 0) % H
            zero = jnp.zeros((rows, wc), src_ref.dtype)
            t0 = jnp.where(h_idx == 0, zero, src_ref[pl.ds(PADR - 1, rows), :])
            tc = src_ref[pl.ds(PADR, rows), :]
            t2 = jnp.where(h_idx == H - 1, zero, src_ref[pl.ds(PADR + 1, rows), :])
            return jnp.concatenate([t0, tc, t2], axis=1)     # (rows, 3*wc)

        def bn_relu(acc, f_ref, t_ref, g_ref, b_ref):
            # Training-mode BatchNorm (biased batch stats), single-pass sums.
            srow = jnp.sum(acc, axis=0, keepdims=True)           # (1, W*C)
            qrow = jnp.sum(acc * acc, axis=0, keepdims=True)     # (1, W*C)
            sq_c = jnp.dot(jnp.concatenate([srow, qrow], axis=0), f_ref[...],
                           preferred_element_type=jnp.float32, precision=hi)
            mean = sq_c[0:1, :] * inv_nhw                        # (1, C)
            var = jnp.maximum(sq_c[1:2, :] * inv_nhw - mean * mean, 0.0)
            scale = g_ref[...] * lax.rsqrt(var + EPS)
            shift = b_ref[...] - mean * scale
            # Broadcast per-channel scale/shift back to the lane layout.
            ss_l = jnp.dot(jnp.concatenate([scale, shift], axis=0), t_ref[...],
                           preferred_element_type=jnp.float32, precision=hi)
            return jnp.maximum(acc * ss_l[0:1, :] + ss_l[1:2, :], 0.0)

        # ---- conv1 (single K-stacked bf16 MXU matmul) + BN1 + ReLU ----
        acc1 = jnp.dot(taps(x_ref), w1_ref[...], preferred_element_type=jnp.float32)
        y1 = bn_relu(acc1, f1_ref, t1_ref, g1_ref, b1_ref)

        # ---- stage y1 (bf16) into the row-padded scratch: aligned stores only,
        #      only the two pad blocks actually peeked at by the taps are zeroed.
        WCm = W * Cmid
        mid_ref[0:PADR, :] = jnp.zeros((PADR, WCm), jnp.bfloat16)
        mid_ref[PADR + rows:, :] = jnp.zeros((PADR, WCm), jnp.bfloat16)
        mid_ref[PADR:PADR + rows, :] = y1.astype(jnp.bfloat16)

        # ---- conv2 + BN2 + ReLU, lane-dense f32 output store ----
        acc2 = jnp.dot(taps(mid_ref), w2_ref[...], preferred_element_type=jnp.float32)
        o_ref[...] = bn_relu(acc2, f2_ref, t2_ref, g2_ref, b2_ref)

    return kernel


def _full_spec(shape):
    nd = len(shape)
    return pl.BlockSpec(shape, lambda i, _nd=nd: (0,) * _nd)


# --------------------------------------------------------------------------
# Wrapper-side parameter plumbing
# --------------------------------------------------------------------------
def _band_weights(w, W_out):
    # w: (3, 3, Ci, Co) HWIO -> (3, W_out*Ci, W_out*Co) banded per-row-tap
    # weights, with the conv's COLUMN zero-padding (pad=1) folded in.
    KH, KW, Ci, Co = w.shape
    x_in = jnp.arange(W_out)[:, None]        # unpadded input column
    x_out = jnp.arange(W_out)[None, :]       # output column
    dx = x_in - x_out + 1                    # kernel column tap
    valid = (dx >= 0) & (dx < KW)
    dxc = jnp.clip(dx, 0, KW - 1)
    b = w[:, dxc]                            # (KH, W, W, Ci, Co)
    b = b * valid[None, :, :, None, None].astype(w.dtype)
    b = jnp.transpose(b, (0, 1, 3, 2, 4))    # (KH, W(x_in), Ci, W(x_out), Co)
    return b.reshape(KH, W_out * Ci, W_out * Co)


def _fold_tile(W_out, C):
    # fold: (W*C, C) 0/1 matrix summing the W interleaved groups per channel.
    # tile: (C, W*C) its transpose, broadcasting per-channel values to lanes.
    j = jnp.arange(W_out * C)
    c = jnp.arange(C)
    fold = (j[:, None] % C == c[None, :]).astype(jnp.float32)
    return fold, fold.T


def double_conv_pallas(x_nhwc, w1, g1, b1, w2, g2, b2):
    N, H, W, Cin = x_nhwc.shape
    Cmid = w1.shape[3]
    Cout = w2.shape[3]
    rows = N * H

    # Flat lane-dense (rows, W*C) bf16 slab with aligned row padding.  The
    # convs' COLUMN zero-padding is folded into the banded weights; the ROW
    # padding / image-boundary handling is done with per-row selects in-kernel.
    x2d = x_nhwc.astype(jnp.bfloat16).reshape(rows, W * Cin)
    xp = jnp.pad(x2d, ((PADR, PADR), (0, 0)))

    w1k = _band_weights(w1.astype(jnp.bfloat16), W).reshape(3 * W * Cin, W * Cmid)
    w2k = _band_weights(w2.astype(jnp.bfloat16), W).reshape(3 * W * Cmid, W * Cout)
    f1, t1 = _fold_tile(W, Cmid)
    f2, t2 = _fold_tile(W, Cout)
    g1r = g1.reshape(1, Cmid).astype(jnp.float32)
    b1r = b1.reshape(1, Cmid).astype(jnp.float32)
    g2r = g2.reshape(1, Cout).astype(jnp.float32)
    b2r = b2.reshape(1, Cout).astype(jnp.float32)

    args = (xp, w1k, g1r, b1r, f1, t1, w2k, g2r, b2r, f2, t2)

    # TODO(synk): for realistic U-Net sizes, (a) tile rows across a "parallel"
    # grid axis with a two-pass BN (partial sum/sum-sq combine) so v7x's 2nd
    # TensorCore and the BlockSpec pipeline are actually used, and (b) block
    # the band matmul over W (each output W-block only needs its 3 input
    # W-blocks) to drop the ~W/3 zero-FLOP inflation and the O(W^2) weight
    # footprint; set vmem_limit_bytes / pl.Buffered(1) on the grid-invariant
    # weight specs when scaling.  At these toy sizes a single fully-resident
    # grid step is best.  Output kept f32 for strict parity with the module.
    kernel = _make_double_conv_kernel(N, H, W, Cmid, Cout)
    out2d = pl.pallas_call(
        kernel,
        out_shape=jax.ShapeDtypeStruct((rows, W * Cout), jnp.float32),
        grid_spec=pltpu.PrefetchScalarGridSpec(
            num_scalar_prefetch=0,
            grid=(1,),
            in_specs=[_full_spec(a.shape) for a in args],
            out_specs=_full_spec((rows, W * Cout)),
            scratch_shapes=[pltpu.VMEM((rows + 2 * PADR, W * Cmid), jnp.bfloat16)],
        ),
        compiler_params=pltpu.CompilerParams(
            dimension_semantics=("arbitrary",)),
    )(*args)

    return out2d.reshape(N, H, W, Cout)


# --------------------------------------------------------------------------
# JAX glue: bilinear upsample (align_corners=True), pad, concat  (NHWC)
# --------------------------------------------------------------------------
def bilinear_upsample_2x_align_corners(x):
    # x: (N, H, W, C) -> (N, 2H, 2W, C), matching nn.Upsample(scale_factor=2,
    # mode='bilinear', align_corners=True)
    N, H, W, C = x.shape
    Ho, Wo = 2 * H, 2 * W

    def idx_frac(n_out, n_in):
        if n_in == 1:
            z = jnp.zeros((n_out,), jnp.int32)
            return z, z, jnp.zeros((n_out,), jnp.float32)
        pos = jnp.arange(n_out, dtype=jnp.float32) * (n_in - 1) / (n_out - 1)
        lo = jnp.floor(pos).astype(jnp.int32)
        lo = jnp.minimum(lo, n_in - 1)
        hi = jnp.minimum(lo + 1, n_in - 1)
        frac = pos - lo.astype(jnp.float32)
        return lo, hi, frac

    lh, hh, fh = idx_frac(Ho, H)
    lw, hw, fw = idx_frac(Wo, W)
    top = (x[:, lh] * (1.0 - fh)[None, :, None, None]
           + x[:, hh] * fh[None, :, None, None])
    out = (top[:, :, lw] * (1.0 - fw)[None, None, :, None]
           + top[:, :, hw] * fw[None, None, :, None])
    return out


def _upsample_pad_concat(x1_nchw, x2_nchw):
    # NCHW -> NHWC, upsample x1, F.pad-style centering, torch.cat([x2, x1], dim=1)
    # TODO(synk): the gather-based bilinear upsample stays in plain JAX glue;
    # only the DoubleConv hot path runs inside the Pallas kernel.
    x1 = jnp.transpose(x1_nchw, (0, 2, 3, 1))
    x2 = jnp.transpose(x2_nchw, (0, 2, 3, 1))
    x1 = bilinear_upsample_2x_align_corners(x1)
    diffY = x2.shape[1] - x1.shape[1]
    diffX = x2.shape[2] - x1.shape[2]
    x1 = jnp.pad(x1, ((0, 0),
                      (diffY // 2, diffY - diffY // 2),
                      (diffX // 2, diffX - diffX // 2),
                      (0, 0)))
    return jnp.concatenate([x2, x1], axis=-1)


def up_forward(x1_nchw, x2_nchw, params):
    w1, g1, b1, w2, g2, b2 = params
    x = _upsample_pad_concat(x1_nchw, x2_nchw)
    y = double_conv_pallas(x, w1, g1, b1, w2, g2, b2)
    return jnp.transpose(y, (0, 3, 1, 2))  # back to NCHW


# --------------------------------------------------------------------------
# Pure-JAX reference (same bf16-matmul / f32-accumulate precision choice)
# --------------------------------------------------------------------------
def up_forward_ref(x1_nchw, x2_nchw, params):
    w1, g1, b1, w2, g2, b2 = params
    x = _upsample_pad_concat(x1_nchw, x2_nchw)

    def conv_bn_relu(h, w, g, b):
        hc = lax.conv_general_dilated(
            h.astype(jnp.bfloat16), w.astype(jnp.bfloat16), (1, 1),
            ((1, 1), (1, 1)),
            dimension_numbers=('NHWC', 'HWIO', 'NHWC'),
            preferred_element_type=jnp.float32)
        m = jnp.mean(hc, axis=(0, 1, 2))
        v = jnp.mean((hc - m) ** 2, axis=(0, 1, 2))
        return jnp.maximum((hc - m) * lax.rsqrt(v + EPS) * g + b, 0.0)

    h = conv_bn_relu(x, w1, g1, b1)
    h = conv_bn_relu(h, w2, g2, b2)
    return jnp.transpose(h, (0, 3, 1, 2))


# --------------------------------------------------------------------------
if __name__ == "__main__":
    # Up(in_channels=32, out_channels=32, bilinear=True, wide_factor=1):
    #   x1: (N, 16, 8, 8), x2: (N, 16, 16, 16)  ->  concat channels = 32,
    #   DoubleConv(32, 32, mid_channels=16)  ->  output (N, 32, 16, 16)
    N = 2
    C1, H1, W1 = 16, 8, 8          # x1 channels / spatial
    C2, H2, W2 = 16, 16, 16        # x2 channels / spatial
    Cin, Cmid, Cout = C1 + C2, (C1 + C2) // 2, 32

    key = jax.random.PRNGKey(0)
    k = jax.random.split(key, 8)
    x1 = jax.random.normal(k[0], (N, C1, H1, W1), jnp.float32)
    x2 = jax.random.normal(k[1], (N, C2, H2, W2), jnp.float32)

    # Deterministic synthetic parameters (shapes per the module's __init__).
    w1 = 0.1 * jax.random.normal(k[2], (3, 3, Cin, Cmid), jnp.float32)   # HWIO
    g1 = 1.0 + 0.1 * jax.random.normal(k[3], (Cmid,), jnp.float32)
    b1 = 0.1 * jax.random.normal(k[4], (Cmid,), jnp.float32)
    w2 = 0.1 * jax.random.normal(k[5], (3, 3, Cmid, Cout), jnp.float32)  # HWIO
    g2 = 1.0 + 0.1 * jax.random.normal(k[6], (Cout,), jnp.float32)
    b2 = 0.1 * jax.random.normal(k[7], (Cout,), jnp.float32)
    params = (w1, g1, b1, w2, g2, b2)

    out = up_forward(x1, x2, params)
    out = jax.block_until_ready(out)

    ref = jax.block_until_ready(up_forward_ref(x1, x2, params))
    assert out.shape == (N, Cout, H2, W2), out.shape
    # bf16-MXU math in both kernel and reference; accumulation-order / bf16
    # re-rounding differences stay well inside 1e-2.
    assert jnp.allclose(out, ref, atol=1e-2, rtol=1e-2), \
        f"max abs err {jnp.max(jnp.abs(out - ref))}"

    print("KERNEL_OK")
</pallas_src>

<mosaic_0001>
module attributes {stable_mosaic.version = 11 : i64} {
  func.func @kernel(%arg0: i32, %arg1: memref<48x512xbf16, #tpu.memory_space<vmem>>, %arg2: memref<1536x256xbf16, #tpu.memory_space<vmem>>, %arg3: memref<1x16xf32, #tpu.memory_space<vmem>>, %arg4: memref<1x16xf32, #tpu.memory_space<vmem>>, %arg5: memref<256x16xf32, #tpu.memory_space<vmem>>, %arg6: memref<16x256xf32, #tpu.memory_space<vmem>>, %arg7: memref<768x512xbf16, #tpu.memory_space<vmem>>, %arg8: memref<1x32xf32, #tpu.memory_space<vmem>>, %arg9: memref<1x32xf32, #tpu.memory_space<vmem>>, %arg10: memref<512x32xf32, #tpu.memory_space<vmem>>, %arg11: memref<32x512xf32, #tpu.memory_space<vmem>>, %arg12: memref<32x512xf32, #tpu.memory_space<vmem>>, %arg13: memref<48x256xbf16, #tpu.memory_space<vmem>>) attributes {dimension_semantics = [#tpu.dimension_semantics<arbitrary>], iteration_bounds = array<i64: 1>, scalar_prefetch = 0 : i64, scratch_operands = 1 : i64, tpu.core_type = #tpu.core_type<tc>, window_params = [{pipeline_mode = #tpu.pipeline_mode<synchronous>, transform_indices = @transform_0, window_bounds = array<i64: 48, 512>}, {pipeline_mode = #tpu.pipeline_mode<synchronous>, transform_indices = @transform_1, window_bounds = array<i64: 1536, 256>}, {pipeline_mode = #tpu.pipeline_mode<synchronous>, transform_indices = @transform_2, window_bounds = array<i64: 1, 16>}, {pipeline_mode = #tpu.pipeline_mode<synchronous>, transform_indices = @transform_3, window_bounds = array<i64: 1, 16>}, {pipeline_mode = #tpu.pipeline_mode<synchronous>, transform_indices = @transform_4, window_bounds = array<i64: 256, 16>}, {pipeline_mode = #tpu.pipeline_mode<synchronous>, transform_indices = @transform_5, window_bounds = array<i64: 16, 256>}, {pipeline_mode = #tpu.pipeline_mode<synchronous>, transform_indices = @transform_6, window_bounds = array<i64: 768, 512>}, {pipeline_mode = #tpu.pipeline_mode<synchronous>, transform_indices = @transform_7, window_bounds = array<i64: 1, 32>}, {pipeline_mode = #tpu.pipeline_mode<synchronous>, transform_indices = @transform_8, window_bounds = array<i64: 1, 32>}, {pipeline_mode = #tpu.pipeline_mode<synchronous>, transform_indices = @transform_9, window_bounds = array<i64: 512, 32>}, {pipeline_mode = #tpu.pipeline_mode<synchronous>, transform_indices = @transform_10, window_bounds = array<i64: 32, 512>}, {pipeline_mode = #tpu.pipeline_mode<synchronous>, transform_indices = @transform_11, window_bounds = array<i64: 32, 512>}]} {
    %0 = tpu.iota {dimensions = array<i32: 0>} : vector<32x512xi32>
    %c16_i32 = arith.constant 16 : i32
    %c0_i32 = arith.constant 0 : i32
    %1 = arith.cmpi eq, %c16_i32, %c0_i32 : i32
    %c1_i32 = arith.constant 1 : i32
    %2 = arith.select %1, %c1_i32, %c16_i32 : i32
    %3 = vector.broadcast %2 : i32 to vector<32x512xi32>
    %4 = arith.remsi %0, %3 : vector<32x512xi32>
    %c0_i32_0 = arith.constant 0 : i32
    %5 = vector.broadcast %c0_i32_0 : i32 to vector<32x512xi32>
    %6 = arith.cmpi ne, %4, %5 : vector<32x512xi32>
    %c0_i32_1 = arith.constant 0 : i32
    %7 = vector.broadcast %c0_i32_1 : i32 to vector<32x512xi32>
    %8 = arith.cmpi slt, %4, %7 : vector<32x512xi32>
    %c0_i32_2 = arith.constant 0 : i32
    %9 = arith.cmpi slt, %2, %c0_i32_2 : i32
    %10 = vector.broadcast %9 : i1 to vector<32x512xi1>
    %11 = vector.broadcast %10 : vector<32x512xi1> to vector<32x512xi1>
    %12 = arith.xori %8, %11 : vector<32x512xi1>
    %13 = arith.andi %12, %6 : vector<32x512xi1>
    %14 = vector.broadcast %2 : i32 to vector<32x512xi32>
    %15 = arith.addi %4, %14 : vector<32x512xi32>
    %16 = arith.select %13, %15, %4 : vector<32x512xi1>, vector<32x512xi32>
    %cst = arith.constant 0.000000e+00 : bf16
    %17 = vector.broadcast %cst : bf16 to vector<32x512xbf16>
    %c0_i32_3 = arith.constant 0 : i32
    %18 = vector.broadcast %c0_i32_3 : i32 to vector<32x512xi32>
    %19 = arith.cmpi eq, %16, %18 : vector<32x512xi32>
    %c7 = arith.constant 7 : index
    %c0 = arith.constant 0 : index
    %20 = vector.load %arg1[%c7, %c0] : memref<48x512xbf16, #tpu.memory_space<vmem>>, vector<32x512xbf16>
    %21 = arith.select %19, %17, %20 : vector<32x512xi1>, vector<32x512xbf16>
    %c8 = arith.constant 8 : index
    %c0_4 = arith.constant 0 : index
    %22 = vector.load %arg1[%c8, %c0_4] : memref<48x512xbf16, #tpu.memory_space<vmem>>, vector<32x512xbf16>
    %c15_i32 = arith.constant 15 : i32
    %23 = vector.broadcast %c15_i32 : i32 to vector<32x512xi32>
    %24 = arith.cmpi eq, %16, %23 : vector<32x512xi32>
    %c9 = arith.constant 9 : index
    %c0_5 = arith.constant 0 : index
    %25 = vector.load %arg1[%c9, %c0_5] : memref<48x512xbf16, #tpu.memory_space<vmem>>, vector<32x512xbf16>
    %26 = arith.select %24, %17, %25 : vector<32x512xi1>, vector<32x512xbf16>
    %27 = tpu.concatenate %21, %22, %26 in 1 : vector<32x512xbf16>, vector<32x512xbf16>, vector<32x512xbf16> -> vector<32x1536xbf16>
    %c0_6 = arith.constant 0 : index
    %c0_7 = arith.constant 0 : index
    %28 = vector.load %arg2[%c0_6, %c0_7] : memref<1536x256xbf16, #tpu.memory_space<vmem>>, vector<1536x256xbf16>
    %cst_8 = arith.constant dense<0.000000e+00> : vector<32x256xf32>
    %29 = tpu.matmul %27, %28, %cst_8 {dimension_numbers = #tpu.dot_dimension_numbers<[1], [0], [0], [1], [0, 0, 1, 1], [], []>} : vector<32x1536xbf16>, vector<1536x256xbf16>, vector<32x256xf32> -> vector<32x256xf32>
    %cst_9 = arith.constant dense<0.000000e+00> : vector<256xf32>
    %30 = vector.multi_reduction <add>, %29, %cst_9 [0] : vector<32x256xf32> to vector<256xf32>
    %31 = vector.shape_cast %30 : vector<256xf32> to vector<1x256xf32>
    %32 = arith.mulf %29, %29 : vector<32x256xf32>
    %cst_10 = arith.constant dense<0.000000e+00> : vector<256xf32>
    %33 = vector.multi_reduction <add>, %32, %cst_10 [0] : vector<32x256xf32> to vector<256xf32>
    %34 = vector.shape_cast %33 : vector<256xf32> to vector<1x256xf32>
    %35 = tpu.concatenate %31, %34 in 0 : vector<1x256xf32>, vector<1x256xf32> -> vector<2x256xf32>
    %c0_11 = arith.constant 0 : index
    %c0_12 = arith.constant 0 : index
    %36 = vector.load %arg5[%c0_11, %c0_12] : memref<256x16xf32, #tpu.memory_space<vmem>>, vector<256x16xf32>
    %cst_13 = arith.constant dense<0.000000e+00> : vector<2x16xf32>
    %37 = tpu.matmul %35, %36, %cst_13 {dimension_numbers = #tpu.dot_dimension_numbers<[1], [0], [0], [1], [0, 0, 1, 1], [], []>, precision = #tpu.contract_precision<fp32>} : vector<2x256xf32>, vector<256x16xf32>, vector<2x16xf32> -> vector<2x16xf32>
    %38 = vector.extract_strided_slice %37 {offsets = [0, 0], sizes = [1, 16], strides = [1, 1]} : vector<2x16xf32> to vector<1x16xf32>
    %cst_14 = arith.constant 0.001953125 : f32
    %39 = vector.broadcast %cst_14 : f32 to vector<1x16xf32>
    %40 = arith.mulf %38, %39 : vector<1x16xf32>
    %41 = vector.extract_strided_slice %37 {offsets = [1, 0], sizes = [1, 16], strides = [1, 1]} : vector<2x16xf32> to vector<1x16xf32>
    %cst_15 = arith.constant 0.001953125 : f32
    %42 = vector.broadcast %cst_15 : f32 to vector<1x16xf32>
    %43 = arith.mulf %41, %42 : vector<1x16xf32>
    %44 = arith.mulf %40, %40 : vector<1x16xf32>
    %45 = arith.subf %43, %44 : vector<1x16xf32>
    %cst_16 = arith.constant 0.000000e+00 : f32
    %46 = vector.broadcast %cst_16 : f32 to vector<1x16xf32>
    %47 = arith.maximumf %45, %46 : vector<1x16xf32>
    %c0_17 = arith.constant 0 : index
    %c0_18 = arith.constant 0 : index
    %48 = vector.load %arg3[%c0_17, %c0_18] : memref<1x16xf32, #tpu.memory_space<vmem>>, vector<1x16xf32>
    %cst_19 = arith.constant 9.99999974E-6 : f32
    %49 = vector.broadcast %cst_19 : f32 to vector<1x16xf32>
    %50 = arith.addf %47, %49 : vector<1x16xf32>
    %51 = math.rsqrt %50 : vector<1x16xf32>
    %52 = arith.mulf %48, %51 : vector<1x16xf32>
    %c0_20 = arith.constant 0 : index
    %c0_21 = arith.constant 0 : index
    %53 = vector.load %arg4[%c0_20, %c0_21] : memref<1x16xf32, #tpu.memory_space<vmem>>, vector<1x16xf32>
    %54 = arith.mulf %40, %52 : vector<1x16xf32>
    %55 = arith.subf %53, %54 : vector<1x16xf32>
    %56 = tpu.concatenate %52, %55 in 0 : vector<1x16xf32>, vector<1x16xf32> -> vector<2x16xf32>
    %c0_22 = arith.constant 0 : index
    %c0_23 = arith.constant 0 : index
    %57 = vector.load %arg6[%c0_22, %c0_23] : memref<16x256xf32, #tpu.memory_space<vmem>>, vector<16x256xf32>
    %cst_24 = arith.constant dense<0.000000e+00> : vector<2x256xf32>
    %58 = tpu.matmul %56, %57, %cst_24 {dimension_numbers = #tpu.dot_dimension_numbers<[1], [0], [0], [1], [0, 0, 1, 1], [], []>, precision = #tpu.contract_precision<fp32>} : vector<2x16xf32>, vector<16x256xf32>, vector<2x256xf32> -> vector<2x256xf32>
    %59 = vector.extract_strided_slice %58 {offsets = [0, 0], sizes = [1, 256], strides = [1, 1]} : vector<2x256xf32> to vector<1x256xf32>
    %60 = vector.broadcast %59 : vector<1x256xf32> to vector<32x256xf32>
    %61 = arith.mulf %29, %60 : vector<32x256xf32>
    %62 = vector.extract_strided_slice %58 {offsets = [1, 0], sizes = [1, 256], strides = [1, 1]} : vector<2x256xf32> to vector<1x256xf32>
    %63 = vector.broadcast %62 : vector<1x256xf32> to vector<32x256xf32>
    %64 = arith.addf %61, %63 : vector<32x256xf32>
    %cst_25 = arith.constant 0.000000e+00 : f32
    %65 = vector.broadcast %cst_25 : f32 to vector<32x256xf32>
    %66 = arith.maximumf %64, %65 : vector<32x256xf32>
    %cst_26 = arith.constant 0.000000e+00 : bf16
    %67 = vector.broadcast %cst_26 : bf16 to vector<8x256xbf16>
    %c0_27 = arith.constant 0 : index
    %c0_28 = arith.constant 0 : index
    %68 = vector.load %arg13[%c0_27, %c0_28] : memref<48x256xbf16, #tpu.memory_space<vmem>>, vector<8x256xbf16>
    tpu.vector_store %arg13[%c0_27, %c0_28], %67 {strides = array<i32>} : memref<48x256xbf16, #tpu.memory_space<vmem>>, vector<8x256xbf16>,
    %cst_29 = arith.constant 0.000000e+00 : bf16
    %69 = vector.broadcast %cst_29 : bf16 to vector<8x256xbf16>
    %c40 = arith.constant 40 : index
    %c0_30 = arith.constant 0 : index
    %70 = vector.load %arg13[%c40, %c0_30] : memref<48x256xbf16, #tpu.memory_space<vmem>>, vector<8x256xbf16>
    tpu.vector_store %arg13[%c40, %c0_30], %69 {strides = array<i32>} : memref<48x256xbf16, #tpu.memory_space<vmem>>, vector<8x256xbf16>,
    %71 = arith.truncf %66 : vector<32x256xf32> to vector<32x256xbf16>
    %c8_31 = arith.constant 8 : index
    %c0_32 = arith.constant 0 : index
    %72 = vector.load %arg13[%c8_31, %c0_32] : memref<48x256xbf16, #tpu.memory_space<vmem>>, vector<32x256xbf16>
    tpu.vector_store %arg13[%c8_31, %c0_32], %71 {strides = array<i32>} : memref<48x256xbf16, #tpu.memory_space<vmem>>, vector<32x256xbf16>,
    %73 = tpu.iota {dimensions = array<i32: 0>} : vector<32x256xi32>
    %c16_i32_33 = arith.constant 16 : i32
    %c0_i32_34 = arith.constant 0 : i32
    %74 = arith.cmpi eq, %c16_i32_33, %c0_i32_34 : i32
    %c1_i32_35 = arith.constant 1 : i32
    %75 = arith.select %74, %c1_i32_35, %c16_i32_33 : i32
    %76 = vector.broadcast %75 : i32 to vector<32x256xi32>
    %77 = arith.remsi %73, %76 : vector<32x256xi32>
    %c0_i32_36 = arith.constant 0 : i32
    %78 = vector.broadcast %c0_i32_36 : i32 to vector<32x256xi32>
    %79 = arith.cmpi ne, %77, %78 : vector<32x256xi32>
    %c0_i32_37 = arith.constant 0 : i32
    %80 = vector.broadcast %c0_i32_37 : i32 to vector<32x256xi32>
    %81 = arith.cmpi slt, %77, %80 : vector<32x256xi32>
    %c0_i32_38 = arith.constant 0 : i32
    %82 = arith.cmpi slt, %75, %c0_i32_38 : i32
    %83 = vector.broadcast %82 : i1 to vector<32x256xi1>
    %84 = vector.broadcast %83 : vector<32x256xi1> to vector<32x256xi1>
    %85 = arith.xori %81, %84 : vector<32x256xi1>
    %86 = arith.andi %85, %79 : vector<32x256xi1>
    %87 = vector.broadcast %75 : i32 to vector<32x256xi32>
    %88 = arith.addi %77, %87 : vector<32x256xi32>
    %89 = arith.select %86, %88, %77 : vector<32x256xi1>, vector<32x256xi32>
    %cst_39 = arith.constant 0.000000e+00 : bf16
    %90 = vector.broadcast %cst_39 : bf16 to vector<32x256xbf16>
    %c0_i32_40 = arith.constant 0 : i32
    %91 = vector.broadcast %c0_i32_40 : i32 to vector<32x256xi32>
    %92 = arith.cmpi eq, %89, %91 : vector<32x256xi32>
    %c7_41 = arith.constant 7 : index
    %c0_42 = arith.constant 0 : index
    %93 = vector.load %arg13[%c7_41, %c0_42] : memref<48x256xbf16, #tpu.memory_space<vmem>>, vector<32x256xbf16>
    %94 = arith.select %92, %90, %93 : vector<32x256xi1>, vector<32x256xbf16>
    %c8_43 = arith.constant 8 : index
    %c0_44 = arith.constant 0 : index
    %95 = vector.load %arg13[%c8_43, %c0_44] : memref<48x256xbf16, #tpu.memory_space<vmem>>, vector<32x256xbf16>
    %c15_i32_45 = arith.constant 15 : i32
    %96 = vector.broadcast %c15_i32_45 : i32 to vector<32x256xi32>
    %97 = arith.cmpi eq, %89, %96 : vector<32x256xi32>
    %c9_46 = arith.constant 9 : index
    %c0_47 = arith.constant 0 : index
    %98 = vector.load %arg13[%c9_46, %c0_47] : memref<48x256xbf16, #tpu.memory_space<vmem>>, vector<32x256xbf16>
    %99 = arith.select %97, %90, %98 : vector<32x256xi1>, vector<32x256xbf16>
    %100 = tpu.concatenate %94, %95, %99 in 1 : vector<32x256xbf16>, vector<32x256xbf16>, vector<32x256xbf16> -> vector<32x768xbf16>
    %c0_48 = arith.constant 0 : index
    %c0_49 = arith.constant 0 : index
    %101 = vector.load %arg7[%c0_48, %c0_49] : memref<768x512xbf16, #tpu.memory_space<vmem>>, vector<768x512xbf16>
    %cst_50 = arith.constant dense<0.000000e+00> : vector<32x512xf32>
    %102 = tpu.matmul %100, %101, %cst_50 {dimension_numbers = #tpu.dot_dimension_numbers<[1], [0], [0], [1], [0, 0, 1, 1], [], []>} : vector<32x768xbf16>, vector<768x512xbf16>, vector<32x512xf32> -> vector<32x512xf32>
    %cst_51 = arith.constant dense<0.000000e+00> : vector<512xf32>
    %103 = vector.multi_reduction <add>, %102, %cst_51 [0] : vector<32x512xf32> to vector<512xf32>
    %104 = vector.shape_cast %103 : vector<512xf32> to vector<1x512xf32>
    %105 = arith.mulf %102, %102 : vector<32x512xf32>
    %cst_52 = arith.constant dense<0.000000e+00> : vector<512xf32>
    %106 = vector.multi_reduction <add>, %105, %cst_52 [0] : vector<32x512xf32> to vector<512xf32>
    %107 = vector.shape_cast %106 : vector<512xf32> to vector<1x512xf32>
    %108 = tpu.concatenate %104, %107 in 0 : vector<1x512xf32>, vector<1x512xf32> -> vector<2x512xf32>
    %c0_53 = arith.constant 0 : index
    %c0_54 = arith.constant 0 : index
    %109 = vector.load %arg10[%c0_53, %c0_54] : memref<512x32xf32, #tpu.memory_space<vmem>>, vector<512x32xf32>
    %cst_55 = arith.constant dense<0.000000e+00> : vector<2x32xf32>
    %110 = tpu.matmul %108, %109, %cst_55 {dimension_numbers = #tpu.dot_dimension_numbers<[1], [0], [0], [1], [0, 0, 1, 1], [], []>, precision = #tpu.contract_precision<fp32>} : vector<2x512xf32>, vector<512x32xf32>, vector<2x32xf32> -> vector<2x32xf32>
    %111 = vector.extract_strided_slice %110 {offsets = [0, 0], sizes = [1, 32], strides = [1, 1]} : vector<2x32xf32> to vector<1x32xf32>
    %cst_56 = arith.constant 0.001953125 : f32
    %112 = vector.broadcast %cst_56 : f32 to vector<1x32xf32>
    %113 = arith.mulf %111, %112 : vector<1x32xf32>
    %114 = vector.extract_strided_slice %110 {offsets = [1, 0], sizes = [1, 32], strides = [1, 1]} : vector<2x32xf32> to vector<1x32xf32>
    %cst_57 = arith.constant 0.001953125 : f32
    %115 = vector.broadcast %cst_57 : f32 to vector<1x32xf32>
    %116 = arith.mulf %114, %115 : vector<1x32xf32>
    %117 = arith.mulf %113, %113 : vector<1x32xf32>
    %118 = arith.subf %116, %117 : vector<1x32xf32>
    %cst_58 = arith.constant 0.000000e+00 : f32
    %119 = vector.broadcast %cst_58 : f32 to vector<1x32xf32>
    %120 = arith.maximumf %118, %119 : vector<1x32xf32>
    %c0_59 = arith.constant 0 : index
    %c0_60 = arith.constant 0 : index
    %121 = vector.load %arg8[%c0_59, %c0_60] : memref<1x32xf32, #tpu.memory_space<vmem>>, vector<1x32xf32>
    %cst_61 = arith.constant 9.99999974E-6 : f32
    %122 = vector.broadcast %cst_61 : f32 to vector<1x32xf32>
    %123 = arith.addf %120, %122 : vector<1x32xf32>
    %124 = math.rsqrt %123 : vector<1x32xf32>
    %125 = arith.mulf %121, %124 : vector<1x32xf32>
    %c0_62 = arith.constant 0 : index
    %c0_63 = arith.constant 0 : index
    %126 = vector.load %arg9[%c0_62, %c0_63] : memref<1x32xf32, #tpu.memory_space<vmem>>, vector<1x32xf32>
    %127 = arith.mulf %113, %125 : vector<1x32xf32>
    %128 = arith.subf %126, %127 : vector<1x32xf32>
    %129 = tpu.concatenate %125, %128 in 0 : vector<1x32xf32>, vector<1x32xf32> -> vector<2x32xf32>
    %c0_64 = arith.constant 0 : index
    %c0_65 = arith.constant 0 : index
    %130 = vector.load %arg11[%c0_64, %c0_65] : memref<32x512xf32, #tpu.memory_space<vmem>>, vector<32x512xf32>
    %cst_66 = arith.constant dense<0.000000e+00> : vector<2x512xf32>
    %131 = tpu.matmul %129, %130, %cst_66 {dimension_numbers = #tpu.dot_dimension_numbers<[1], [0], [0], [1], [0, 0, 1, 1], [], []>, precision = #tpu.contract_precision<fp32>} : vector<2x32xf32>, vector<32x512xf32>, vector<2x512xf32> -> vector<2x512xf32>
    %132 = vector.extract_strided_slice %131 {offsets = [0, 0], sizes = [1, 512], strides = [1, 1]} : vector<2x512xf32> to vector<1x512xf32>
    %133 = vector.broadcast %132 : vector<1x512xf32> to vector<32x512xf32>
    %134 = arith.mulf %102, %133 : vector<32x512xf32>
    %135 = vector.extract_strided_slice %131 {offsets = [1, 0], sizes = [1, 512], strides = [1, 1]} : vector<2x512xf32> to vector<1x512xf32>
    %136 = vector.broadcast %135 : vector<1x512xf32> to vector<32x512xf32>
    %137 = arith.addf %134, %136 : vector<32x512xf32>
    %cst_67 = arith.constant 0.000000e+00 : f32
    %138 = vector.broadcast %cst_67 : f32 to vector<32x512xf32>
    %139 = arith.maximumf %137, %138 : vector<32x512xf32>
    %c0_68 = arith.constant 0 : index
    %c0_69 = arith.constant 0 : index
    %140 = vector.load %arg12[%c0_68, %c0_69] : memref<32x512xf32, #tpu.memory_space<vmem>>, vector<32x512xf32>
    tpu.vector_store %arg12[%c0_68, %c0_69], %139 {strides = array<i32>} : memref<32x512xf32, #tpu.memory_space<vmem>>, vector<32x512xf32>,
    return
  }
  func.func @transform_0(%arg0: i32) -> (i32, i32) {
    %c0_i32 = arith.constant 0 : i32
    %c0_i32_0 = arith.constant 0 : i32
    %c0_i32_1 = arith.constant 0 : i32
    return %c0_i32, %c0_i32_0 : i32, i32
  }
  func.func @transform_1(%arg0: i32) -> (i32, i32) {
    %c0_i32 = arith.constant 0 : i32
    %c0_i32_0 = arith.constant 0 : i32
    %c0_i32_1 = arith.constant 0 : i32
    return %c0_i32, %c0_i32_0 : i32, i32
  }
  func.func @transform_2(%arg0: i32) -> (i32, i32) {
    %c0_i32 = arith.constant 0 : i32
    %c0_i32_0 = arith.constant 0 : i32
    %c0_i32_1 = arith.constant 0 : i32
    return %c0_i32, %c0_i32_0 : i32, i32
  }
  func.func @transform_3(%arg0: i32) -> (i32, i32) {
    %c0_i32 = arith.constant 0 : i32
    %c0_i32_0 = arith.constant 0 : i32
    %c0_i32_1 = arith.constant 0 : i32
    return %c0_i32, %c0_i32_0 : i32, i32
  }
  func.func @transform_4(%arg0: i32) -> (i32, i32) {
    %c0_i32 = arith.constant 0 : i32
    %c0_i32_0 = arith.constant 0 : i32
    %c0_i32_1 = arith.constant 0 : i32
    return %c0_i32, %c0_i32_0 : i32, i32
  }
  func.func @transform_5(%arg0: i32) -> (i32, i32) {
    %c0_i32 = arith.constant 0 : i32
    %c0_i32_0 = arith.constant 0 : i32
    %c0_i32_1 = arith.constant 0 : i32
    return %c0_i32, %c0_i32_0 : i32, i32
  }
  func.func @transform_6(%arg0: i32) -> (i32, i32) {
    %c0_i32 = arith.constant 0 : i32
    %c0_i32_0 = arith.constant 0 : i32
    %c0_i32_1 = arith.constant 0 : i32
    return %c0_i32, %c0_i32_0 : i32, i32
  }
  func.func @transform_7(%arg0: i32) -> (i32, i32) {
    %c0_i32 = arith.constant 0 : i32
    %c0_i32_0 = arith.constant 0 : i32
    %c0_i32_1 = arith.constant 0 : i32
    return %c0_i32, %c0_i32_0 : i32, i32
  }
  func.func @transform_8(%arg0: i32) -> (i32, i32) {
    %c0_i32 = arith.constant 0 : i32
    %c0_i32_0 = arith.constant 0 : i32
    %c0_i32_1 = arith.constant 0 : i32
    return %c0_i32, %c0_i32_0 : i32, i32
  }
  func.func @transform_9(%arg0: i32) -> (i32, i32) {
    %c0_i32 = arith.constant 0 : i32
    %c0_i32_0 = arith.constant 0 : i32
    %c0_i32_1 = arith.constant 0 : i32
    return %c0_i32, %c0_i32_0 : i32, i32
  }
  func.func @transform_10(%arg0: i32) -> (i32, i32) {
    %c0_i32 = arith.constant 0 : i32
    %c0_i32_0 = arith.constant 0 : i32
    %c0_i32_1 = arith.constant 0 : i32
    return %c0_i32, %c0_i32_0 : i32, i32
  }
  func.func @transform_11(%arg0: i32) -> (i32, i32) {
    %c0_i32 = arith.constant 0 : i32
    %c0_i32_0 = arith.constant 0 : i32
    %c0_i32_1 = arith.constant 0 : i32
    return %c0_i32, %c0_i32_0 : i32, i32
  }
}

</mosaic_0001>

<llo_original>
// kernel: tpu_custom_call.1
$region0: #{tpu_custom_call.1}
  #allocation0 [shape = 'u32[]', space=smem, size = 0x4, offset = 0x4, fixed_abs, tag = 'smem constant byte address 0x4 - core index']
  #allocation1 [shape = 'u32[144,128]{1,0:T(1,128)}', space=vmem, size = 0x12000, scoped, tag = 'internal scratch']
  #allocation2 [shape = 'bf16[48,256]{1,0:T(16,128)(2,1)}', space=vmem, size = 0x6000, scoped, tag = 'scratch operand']
  %s0 = inlined_call_operand.vmem [shape: bf16[48,512], index: 0, kind: input, shape index: {}]
  %s1 = inlined_call_operand.hbm [shape: bf16[1536,256], index: 1, kind: input, shape index: {}]
  %s2 = inlined_call_operand.vmem [shape: f32[1,16], index: 2, kind: input, shape index: {}]
  %s3 = inlined_call_operand.vmem [shape: f32[1,16], index: 3, kind: input, shape index: {}]
  %s4 = inlined_call_operand.vmem [shape: f32[256,16], index: 4, kind: input, shape index: {}]
  %s5 = inlined_call_operand.vmem [shape: f32[16,256], index: 5, kind: input, shape index: {}]
  %s6 = inlined_call_operand.hbm [shape: bf16[768,512], index: 6, kind: input, shape index: {}]
  %s7 = inlined_call_operand.vmem [shape: f32[1,32], index: 7, kind: input, shape index: {}]
  %s8 = inlined_call_operand.vmem [shape: f32[1,32], index: 8, kind: input, shape index: {}]
  %s9 = inlined_call_operand.vmem [shape: f32[512,32], index: 9, kind: input, shape index: {}]
  %s10 = inlined_call_operand.vmem [shape: f32[32,512], index: 10, kind: input, shape index: {}]
  %s11 = inlined_call_operand.hbm [shape: f32[32,512], index: 11, kind: output, shape index: {}]
  %s12 = sld [smem:[#allocation0]]
  $region62: #{tpu_custom_call.1} parent=0
    _
  %s14 = ssub.s32 1, %s12
  %s15 = scalar_select 0, %s14, %s12
  $region1: #{tpu_custom_call.1} parent=0
    #allocation3 [shape = 'u8[786432]{0}', space=vmem, size = 0xc0000, scoped, tag = 'input window, operand 1, single buffered']
    #allocation4 [shape = 's32[1]{0}', space=sflag, size = 0x4, scoped, tag = 'scoped memory for tpu_custom_call.1']
    #allocation5 [shape = 's32[1]{0}', space=sflag, size = 0x4, scoped, tag = 'scoped memory for tpu_custom_call.1']
    #allocation6 [shape = 'u8[786432]{0}', space=vmem, size = 0xc0000, scoped, tag = 'input window, operand 6, single buffered']
    #allocation7 [shape = 's32[1]{0}', space=sflag, size = 0x4, scoped, tag = 'scoped memory for tpu_custom_call.1']
    #allocation8 [shape = 'u8[65536]{0}', space=vmem, size = 0x10000, scoped, tag = 'output window, operand 0, single buffered']
    %16 = vsyncpa [#allocation4], 0
    %17 = vsyncpa [#allocation7], 0
    %18 = vsyncpa [#allocation5], 0
    // Predicated region
    $region2: #{tpu_custom_call.1} parent=1 // pred_check
      _
    $region3: #{tpu_custom_call.1} parent=1 // pred_check_branch
      %20 = sbr.rel (0) target = $region5
    $region4: #{tpu_custom_call.1} parent=1 // pred_region
      _
    $region5: #{tpu_custom_call.1} parent=1 // pred_fallthru
      _
    // Predicated region
    $region6: #{tpu_custom_call.1} parent=1 // pred_check
      _
    $region7: #{tpu_custom_call.1} parent=1 // pred_check_branch
      %22 = sbr.rel (0) target = $region9
    $region8: #{tpu_custom_call.1} parent=1 // pred_region
      %s24 = ssub.s32 24576, 24576
      %25 = vsyncadd [#allocation4], %s24
      %s26 = sshll.u32 [#allocation3], 4
      %s27 = int_to_ptr.vmem [resolvable:$true] %s26
      %32 = dma.hbm_to_vmem [thread:$0]  %s1, 24576, %s27, [#allocation4], 128, 128, 8
    $region9: #{tpu_custom_call.1} parent=1 // pred_fallthru
      _
    // Predicated region
    $region10: #{tpu_custom_call.1} parent=1 // pred_check
      _
    $region11: #{tpu_custom_call.1} parent=1 // pred_check_branch
      %34 = sbr.rel (0) target = $region13
    $region12: #{tpu_custom_call.1} parent=1 // pred_region
      _
    $region13: #{tpu_custom_call.1} parent=1 // pred_fallthru
      _
    // Predicated region
    $region14: #{tpu_custom_call.1} parent=1 // pred_check
      _
    $region15: #{tpu_custom_call.1} parent=1 // pred_check_branch
      %36 = sbr.rel (0) target = $region17
    $region16: #{tpu_custom_call.1} parent=1 // pred_region
      _
    $region17: #{tpu_custom_call.1} parent=1 // pred_fallthru
      _
    // Predicated region
    $region18: #{tpu_custom_call.1} parent=1 // pred_check
      _
    $region19: #{tpu_custom_call.1} parent=1 // pred_check_branch
      %38 = sbr.rel (0) target = $region21
    $region20: #{tpu_custom_call.1} parent=1 // pred_region
      _
    $region21: #{tpu_custom_call.1} parent=1 // pred_fallthru
      _
    // Predicated region
    $region22: #{tpu_custom_call.1} parent=1 // pred_check
      _
    $region23: #{tpu_custom_call.1} parent=1 // pred_check_branch
      %40 = sbr.rel (0) target = $region25
    $region24: #{tpu_custom_call.1} parent=1 // pred_region
      _
    $region25: #{tpu_custom_call.1} parent=1 // pred_fallthru
      _
    // Predicated region
    $region26: #{tpu_custom_call.1} parent=1 // pred_check
      _
    $region27: #{tpu_custom_call.1} parent=1 // pred_check_branch
      %42 = sbr.rel (0) target = $region29
    $region28: #{tpu_custom_call.1} parent=1 // pred_region
      %s44 = ssub.s32 24576, 24576
      %45 = vsyncadd [#allocation7], %s44
      %s46 = sshll.u32 [#allocation6], 4
      %s47 = int_to_ptr.vmem [resolvable:$true] %s46
      %52 = dma.hbm_to_vmem [thread:$0]  %s6, 24576, %s47, [#allocation7], 256, 256, 16
    $region29: #{tpu_custom_call.1} parent=1 // pred_fallthru
      _
    // Predicated region
    $region30: #{tpu_custom_call.1} parent=1 // pred_check
      _
    $region31: #{tpu_custom_call.1} parent=1 // pred_check_branch
      %54 = sbr.rel (0) target = $region33
    $region32: #{tpu_custom_call.1} parent=1 // pred_region
      _
    $region33: #{tpu_custom_call.1} parent=1 // pred_fallthru
      _
    // Predicated region
    $region34: #{tpu_custom_call.1} parent=1 // pred_check
      _
    $region35: #{tpu_custom_call.1} parent=1 // pred_check_branch
      %56 = sbr.rel (0) target = $region37
    $region36: #{tpu_custom_call.1} parent=1 // pred_region
      _
    $region37: #{tpu_custom_call.1} parent=1 // pred_fallthru
      _
    // Predicated region
    $region38: #{tpu_custom_call.1} parent=1 // pred_check
      _
    $region39: #{tpu_custom_call.1} parent=1 // pred_check_branch
      %58 = sbr.rel (0) target = $region41
    $region40: #{tpu_custom_call.1} parent=1 // pred_region
      _
    $region41: #{tpu_custom_call.1} parent=1 // pred_fallthru
      _
    // Predicated region
    $region42: #{tpu_custom_call.1} parent=1 // pred_check
      _
    $region43: #{tpu_custom_call.1} parent=1 // pred_check_branch
      %60 = sbr.rel (0) target = $region45
    $region44: #{tpu_custom_call.1} parent=1 // pred_region
      _
    $region45: #{tpu_custom_call.1} parent=1 // pred_fallthru
      _
    // Predicated region
    $region46: #{tpu_custom_call.1} parent=1 // pred_check
      _
    $region47: #{tpu_custom_call.1} parent=1 // pred_check_branch
      %62 = sbr.rel (0) target = $region49
    $region48: #{tpu_custom_call.1} parent=1 // pred_region
      %63 = dma.done [#allocation4], 24576
    $region49: #{tpu_custom_call.1} parent=1 // pred_fallthru
      _
    // Predicated region
    $region50: #{tpu_custom_call.1} parent=1 // pred_check
      _
    $region51: #{tpu_custom_call.1} parent=1 // pred_check_branch
      %65 = sbr.rel (0) target = $region53
    $region52: #{tpu_custom_call.1} parent=1 // pred_region
      %66 = dma.done [#allocation7], 24576
    $region53: #{tpu_custom_call.1} parent=1 // pred_fallthru
      _
    %v70 = vlaneseq
    %v71 = vshrl.u32 %v70, 7
    %v72 = vadd.s32 %v71, 8
    %v73 = vadd.s32 %v71, 16
    %v74 = vadd.s32 %v71, 24
    %vm75 = vcmp.lt.s32.totalorder %v71, 0
    %v76 = vsub.s32 0, %v71
    %v77 = vsel %vm75, %v76, %v71
    %v78 = vshrl.u32 %v77, 4
    %v79 = vand.u32 %v77, 15
    %v80 = vsub.s32 0, %v79
    %v81 = vsel %vm75, %v80, %v79
    %vm82 = vcmp.lt.s32.totalorder %v72, 0
    %v83 = vsub.s32 0, %v72
    %v84 = vsel %vm82, %v83, %v72
    %v85 = vshrl.u32 %v84, 4
    %v86 = vand.u32 %v84, 15
    %v87 = vsub.s32 0, %v86
    %v88 = vsel %vm82, %v87, %v86
    %vm89 = vcmp.lt.s32.totalorder %v73, 0
    %v90 = vsub.s32 0, %v73
    %v91 = vsel %vm89, %v90, %v73
    %v92 = vshrl.u32 %v91, 4
    %v93 = vand.u32 %v91, 15
    %v94 = vsub.s32 0, %v93
    %v95 = vsel %vm89, %v94, %v93
    %vm96 = vcmp.lt.s32.totalorder %v74, 0
    %v97 = vsub.s32 0, %v74
    %v98 = vsel %vm96, %v97, %v74
    %v99 = vshrl.u32 %v98, 4
    %v100 = vand.u32 %v98, 15
    %v101 = vsub.s32 0, %v100
    %v102 = vsel %vm96, %v101, %v100
    %vm103 = vcmp.ne.s32.totalorder %v81, 0
    %vm104 = vcmp.ne.s32.totalorder %v88, 0
    %vm105 = vcmp.ne.s32.totalorder %v95, 0
    %vm106 = vcmp.ne.s32.totalorder %v102, 0
    %vm107 = vcmp.lt.s32.totalorder %v81, 0
    %vm108 = vcmp.lt.s32.totalorder %v88, 0
    %vm109 = vcmp.lt.s32.totalorder %v95, 0
    %vm110 = vcmp.lt.s32.totalorder %v102, 0
    %vm111 = vmand %vm107, %vm103
    %vm112 = vmand %vm108, %vm104
    %vm113 = vmand %vm109, %vm105
    %vm114 = vmand %vm110, %vm106
    %v115 = vadd.s32 %v81, 16
    %v116 = vadd.s32 %v88, 16
    %v117 = vadd.s32 %v95, 16
    %v118 = vadd.s32 %v102, 16
    %v119 = vsel %vm111, %v115, %v81
    %v120 = vsel %vm112, %v116, %v88
    %v121 = vsel %vm113, %v117, %v95
    %v122 = vsel %vm114, %v118, %v102
    %vm123 = vcmp.eq.s32.totalorder %v119, 0
    %vm124 = vcmp.eq.s32.totalorder %v120, 0
    %vm125 = vcmp.eq.s32.totalorder %v121, 0
    %vm126 = vcmp.eq.s32.totalorder %v122, 0
    %v127 = vld [vmem:[%s0] sm:$0x88]
    %v128 = vld [vmem:[%s0 + $0x8] sm:$0x88]
    %v129 = vld [vmem:[%s0 + $0x10] sm:$0xff]
    %v130 = vld [vmem:[%s0 + $0x18] sm:$0xff]
    %v131 = vld [vmem:[%s0 + $0x20] sm:$0xff]
    %v132 = vld [vmem:[%s0 + $0x28] sm:$0xff]
    %v133 = vld [vmem:[%s0 + $0x30] sm:$0xff]
    %v134 = vld [vmem:[%s0 + $0x38] sm:$0xff]
    %v135 = vld [vmem:[%s0 + $0x40] sm:$0xff]
    %v136 = vld [vmem:[%s0 + $0x48] sm:$0xff]
    %vm137 = vmpackc.low %vm123, %vm123
    %vm138 = vmpackc.low %vm124, %vm124
    %vm139 = vmpackc.low %vm125, %vm125
    %vm140 = vmpackc.low %vm126, %vm126
    %v141 = vsel %vm137, 65537, 0
    %v142 = vsel %vm138, 65537, 0
    %v143 = vsel %vm139, 65537, 0
    %v144 = vsel %vm140, 65537, 0
    %vm145 = vsmask.f32 3328
    %vm146 = vsmask.f32 7440
    %vm147 = vmor %vm145, %vm146
    %v149 = vshll.u32 %v141, 16
    %v151 = vrot.slane %v149, 5
    %v152 = vshrl.u32 %v141, 16
    %v154 = vrot.slane %v152, 4
    %v155 = vor.u32 %v154, %v151
    %v156 = vrot.slane %v155, 4
    %v158 = vshll.u32 %v142, 16
    %v160 = vrot.slane %v158, 5
    %v161 = vsel %vm147, %v156, %v160
    %v162 = vshrl.u32 %v142, 16
    %v164 = vrot.slane %v162, 4
    %v165 = vor.u32 %v164, %v160
    %v166 = vrot.slane %v165, 4
    %v168 = vshll.u32 %v143, 16
    %v170 = vrot.slane %v168, 5
    %v171 = vsel %vm147, %v166, %v170
    %v172 = vshrl.u32 %v143, 16
    %v174 = vrot.slane %v172, 4
    %v175 = vor.u32 %v174, %v170
    %v176 = vrot.slane %v175, 4
    %v178 = vshll.u32 %v144, 16
    %v180 = vrot.slane %v178, 5
    %v181 = vsel %vm147, %v176, %v180
    %v182 = vshrl.u32 %v144, 16
    %v184 = vrot.slane %v182, 4
    %v185 = vor.u32 %v184, %v180
    %v186 = vrot.slane %v185, 4
    %vm187 = vcmp.ne.s16.totalorder %v151, 0
    %vm188 = vcmp.ne.s16.totalorder %v161, 0
    %vm189 = vcmp.ne.s16.totalorder %v171, 0
    %vm190 = vcmp.ne.s16.totalorder %v181, 0
    %vm191 = vcmp.ne.s16.totalorder %v186, 0
    %v192 = vsel %vm187, 0, %v127
    %v193 = vsel %vm187, 0, %v128
    %v194 = vsel %vm188, 0, %v129
    %v195 = vsel %vm188, 0, %v130
    %v196 = vsel %vm189, 0, %v131
    %v197 = vsel %vm189, 0, %v132
    %v198 = vsel %vm190, 0, %v133
    %v199 = vsel %vm190, 0, %v134
    %v200 = vsel %vm191, 0, %v135
    %v201 = vsel %vm191, 0, %v136
    %vm202 = vcmp.eq.s32.totalorder %v119, 15
    %vm203 = vcmp.eq.s32.totalorder %v120, 15
    %vm204 = vcmp.eq.s32.totalorder %v121, 15
    %vm205 = vcmp.eq.s32.totalorder %v122, 15
    %v206 = vld [vmem:[%s0 + $0x10] sm:$0xff]
    %v207 = vld [vmem:[%s0 + $0x18] sm:$0xff]
    %v208 = vld [vmem:[%s0 + $0x20] sm:$0xff]
    %v209 = vld [vmem:[%s0 + $0x28] sm:$0xff]
    %v210 = vld [vmem:[%s0 + $0x30] sm:$0xff]
    %v211 = vld [vmem:[%s0 + $0x38] sm:$0xff]
    %v212 = vld [vmem:[%s0 + $0x40] sm:$0xff]
    %v213 = vld [vmem:[%s0 + $0x48] sm:$0xff]
    %v214 = vld [vmem:[%s0 + $0x50] sm:$0x11]
    %v215 = vld [vmem:[%s0 + $0x58] sm:$0x11]
    %vm216 = vmpackc.low %vm202, %vm202
    %vm217 = vmpackc.low %vm203, %vm203
    %vm218 = vmpackc.low %vm204, %vm204
    %vm219 = vmpackc.low %vm205, %vm205
    %v220 = vsel %vm216, 65537, 0
    %v221 = vsel %vm217, 65537, 0
    %v222 = vsel %vm218, 65537, 0
    %v223 = vsel %vm219, 65537, 0
    %vm224 = vsmask.f32 256
    %vm225 = vsmask.f32 4368
    %vm226 = vmor %vm224, %vm225
    %v228 = vshrl.u32 %v220, 16
    %v230 = vrot.slane %v228, 7
    %v231 = vshll.u32 %v220, 16
    %v233 = vor.u32 %v230, %v231
    %v234 = vrot.slane %v230, 4
    %v236 = vshrl.u32 %v221, 16
    %v238 = vrot.slane %v236, 7
    %v239 = vshll.u32 %v221, 16
    %v241 = vor.u32 %v238, %v239
    %v242 = vsel %vm226, %v234, %v241
    %v243 = vrot.slane %v238, 4
    %v245 = vshrl.u32 %v222, 16
    %v247 = vrot.slane %v245, 7
    %v248 = vshll.u32 %v222, 16
    %v250 = vor.u32 %v247, %v248
    %v251 = vsel %vm226, %v243, %v250
    %v252 = vrot.slane %v247, 4
    %v254 = vshrl.u32 %v223, 16
    %v256 = vrot.slane %v254, 7
    %v257 = vshll.u32 %v223, 16
    %v259 = vor.u32 %v256, %v257
    %v260 = vsel %vm226, %v252, %v259
    %v261 = vrot.slane %v256, 4
    %vm262 = vcmp.ne.s16.totalorder %v233, 0
    %vm263 = vcmp.ne.s16.totalorder %v242, 0
    %vm264 = vcmp.ne.s16.totalorder %v251, 0
    %vm265 = vcmp.ne.s16.totalorder %v260, 0
    %vm266 = vcmp.ne.s16.totalorder %v261, 0
    %v267 = vsel %vm262, 0, %v206
    %v268 = vsel %vm262, 0, %v207
    %v269 = vsel %vm263, 0, %v208
    %v270 = vsel %vm263, 0, %v209
    %v271 = vsel %vm264, 0, %v210
    %v272 = vsel %vm264, 0, %v211
    %v273 = vsel %vm265, 0, %v212
    %v274 = vsel %vm265, 0, %v213
    %v275 = vsel %vm266, 0, %v214
    %v276 = vsel %vm266, 0, %v215
    %v287 = vunpack.c.l.b16 %v192
    %v288 = vunpack.c.h.b16 %v192
    %v289 = vunpack.c.l.b16 %v193
    %v290 = vunpack.c.h.b16 %v193
    %v291 = vunpack.c.l.b16 %v194
    %v292 = vunpack.c.h.b16 %v194
    %v293 = vunpack.c.l.b16 %v195
    %v294 = vunpack.c.h.b16 %v195
    %v295 = vunpack.c.l.b16 %v196
    %v296 = vunpack.c.h.b16 %v196
    %v297 = vunpack.c.l.b16 %v197
    %v298 = vunpack.c.h.b16 %v197
    %v299 = vunpack.c.l.b16 %v198
    %v300 = vunpack.c.h.b16 %v198
    %v301 = vunpack.c.l.b16 %v199
    %v302 = vunpack.c.h.b16 %v199
    %v303 = vunpack.c.l.b16 %v200
    %v304 = vunpack.c.h.b16 %v200
    %v305 = vunpack.c.l.b16 %v201
    %v306 = vunpack.c.h.b16 %v201
    %v307 = vpack.c.b16 %v291, %v287
    %v308 = vpack.c.b16 %v292, %v288
    %v309 = vpack.c.b16 %v293, %v289
    %v310 = vpack.c.b16 %v294, %v290
    %v311 = vpack.c.b16 %v299, %v295
    %v312 = vpack.c.b16 %v300, %v296
    %v313 = vpack.c.b16 %v301, %v297
    %v314 = vpack.c.b16 %v302, %v298
    %v315 = vpack.c.b16 %v303, %v303
    %v316 = vpack.c.b16 %v304, %v304
    %v317 = vpack.c.b16 %v305, %v305
    %v318 = vpack.c.b16 %v306, %v306
    %v327 = vunpack.c.l.b16 %v129
    %v328 = vunpack.c.h.b16 %v129
    %v329 = vunpack.c.l.b16 %v130
    %v330 = vunpack.c.h.b16 %v130
    %v331 = vunpack.c.l.b16 %v131
    %v332 = vunpack.c.h.b16 %v131
    %v333 = vunpack.c.l.b16 %v132
    %v334 = vunpack.c.h.b16 %v132
    %v335 = vunpack.c.l.b16 %v133
    %v336 = vunpack.c.h.b16 %v133
    %v337 = vunpack.c.l.b16 %v134
    %v338 = vunpack.c.h.b16 %v134
    %v339 = vunpack.c.l.b16 %v135
    %v340 = vunpack.c.h.b16 %v135
    %v341 = vunpack.c.l.b16 %v136
    %v342 = vunpack.c.h.b16 %v136
    %v343 = vpack.c.b16 %v331, %v327
    %v344 = vpack.c.b16 %v332, %v328
    %v345 = vpack.c.b16 %v333, %v329
    %v346 = vpack.c.b16 %v334, %v330
    %v347 = vpack.c.b16 %v339, %v335
    %v348 = vpack.c.b16 %v340, %v336
    %v349 = vpack.c.b16 %v341, %v337
    %v350 = vpack.c.b16 %v342, %v338
    %v352 = vshrl.u32 %v343, 16
    %v354 = vrot.slane %v352, 4
    %v355 = vshll.u32 %v343, 16
    %v357 = vrot.slane %v355, 5
    %v358 = vor.u32 %v354, %v357
    %v360 = vshrl.u32 %v344, 16
    %v362 = vrot.slane %v360, 4
    %v363 = vshll.u32 %v344, 16
    %v365 = vrot.slane %v363, 5
    %v366 = vor.u32 %v362, %v365
    %v368 = vshrl.u32 %v345, 16
    %v370 = vrot.slane %v368, 4
    %v371 = vshll.u32 %v345, 16
    %v373 = vrot.slane %v371, 5
    %v374 = vor.u32 %v370, %v373
    %v376 = vshrl.u32 %v346, 16
    %v378 = vrot.slane %v376, 4
    %v379 = vshll.u32 %v346, 16
    %v381 = vrot.slane %v379, 5
    %v382 = vor.u32 %v378, %v381
    %v384 = vshrl.u32 %v347, 16
    %v386 = vrot.slane %v384, 4
    %v387 = vshll.u32 %v347, 16
    %v389 = vrot.slane %v387, 5
    %v390 = vor.u32 %v386, %v389
    %v391 = vsel %vm145, %v358, %v390
    %v393 = vshrl.u32 %v348, 16
    %v395 = vrot.slane %v393, 4
    %v396 = vshll.u32 %v348, 16
    %v398 = vrot.slane %v396, 5
    %v399 = vor.u32 %v395, %v398
    %v400 = vsel %vm145, %v366, %v399
    %v402 = vshrl.u32 %v349, 16
    %v404 = vrot.slane %v402, 4
    %v405 = vshll.u32 %v349, 16
    %v407 = vrot.slane %v405, 5
    %v408 = vor.u32 %v404, %v407
    %v409 = vsel %vm145, %v374, %v408
    %v411 = vshrl.u32 %v350, 16
    %v413 = vrot.slane %v411, 4
    %v414 = vshll.u32 %v350, 16
    %v416 = vrot.slane %v414, 5
    %v417 = vor.u32 %v413, %v416
    %v418 = vsel %vm145, %v382, %v417
    %v429 = vunpack.c.l.b16 %v267
    %v430 = vunpack.c.h.b16 %v267
    %v431 = vunpack.c.l.b16 %v268
    %v432 = vunpack.c.h.b16 %v268
    %v433 = vunpack.c.l.b16 %v269
    %v434 = vunpack.c.h.b16 %v269
    %v435 = vunpack.c.l.b16 %v270
    %v436 = vunpack.c.h.b16 %v270
    %v437 = vunpack.c.l.b16 %v271
    %v438 = vunpack.c.h.b16 %v271
    %v439 = vunpack.c.l.b16 %v272
    %v440 = vunpack.c.h.b16 %v272
    %v441 = vunpack.c.l.b16 %v273
    %v442 = vunpack.c.h.b16 %v273
    %v443 = vunpack.c.l.b16 %v274
    %v444 = vunpack.c.h.b16 %v274
    %v445 = vunpack.c.l.b16 %v275
    %v446 = vunpack.c.h.b16 %v275
    %v447 = vunpack.c.l.b16 %v276
    %v448 = vunpack.c.h.b16 %v276
    %v449 = vpack.c.b16 %v433, %v429
    %v450 = vpack.c.b16 %v434, %v430
    %v451 = vpack.c.b16 %v435, %v431
    %v452 = vpack.c.b16 %v436, %v432
    %v453 = vpack.c.b16 %v441, %v437
    %v454 = vpack.c.b16 %v442, %v438
    %v455 = vpack.c.b16 %v443, %v439
    %v456 = vpack.c.b16 %v444, %v440
    %v457 = vpack.c.b16 %v445, %v445
    %v458 = vpack.c.b16 %v446, %v446
    %v459 = vpack.c.b16 %v447, %v447
    %v460 = vpack.c.b16 %v448, %v448
    %vm461 = vcmask 1042432
    %v462 = vrot.slane %v449, 5
    %v463 = vrot.slane %v450, 5
    %v464 = vrot.slane %v451, 5
    %v465 = vrot.slane %v452, 5
    %v466 = vrot.slane %v453, 5
    %v467 = vsel %vm461, %v462, %v466
    %v468 = vrot.slane %v454, 5
    %v469 = vsel %vm461, %v463, %v468
    %v470 = vrot.slane %v455, 5
    %v471 = vsel %vm461, %v464, %v470
    %v472 = vrot.slane %v456, 5
    %v473 = vsel %vm461, %v465, %v472
    %v474 = vrot.slane %v457, 5
    %v475 = vsel %vm461, %v466, %v474
    %v476 = vrot.slane %v458, 5
    %v477 = vsel %vm461, %v468, %v476
    %v478 = vrot.slane %v459, 5
    %v479 = vsel %vm461, %v470, %v478
    %v480 = vrot.slane %v460, 5
    %v481 = vsel %vm461, %v472, %v480
    %v482 = vld [vmem:[#allocation3] sm:$0xff]
    %v483 = vld [vmem:[#allocation3 + $0x8] sm:$0xff]
    %v484 = vld [vmem:[#allocation3 + $0x10] sm:$0xff]
    %v485 = vld [vmem:[#allocation3 + $0x18] sm:$0xff]
    %v486 = vld [vmem:[#allocation3 + $0x20] sm:$0xff]
    %v487 = vld [vmem:[#allocation3 + $0x28] sm:$0xff]
    %v488 = vld [vmem:[#allocation3 + $0x30] sm:$0xff]
    %v489 = vld [vmem:[#allocation3 + $0x38] sm:$0xff]
    %v490 = vld [vmem:[#allocation3 + $0x40] sm:$0xff]
    %v491 = vld [vmem:[#allocation3 + $0x48] sm:$0xff]
    %v492 = vld [vmem:[#allocation3 + $0x50] sm:$0xff]
    %v493 = vld [vmem:[#allocation3 + $0x58] sm:$0xff]
    %v494 = vld [vmem:[#allocation3 + $0x60] sm:$0xff]
    %v495 = vld [vmem:[#allocation3 + $0x68] sm:$0xff]
    %v496 = vld [vmem:[#allocation3 + $0x70] sm:$0xff]
    %v497 = vld [vmem:[#allocation3 + $0x78] sm:$0xff]
    %v498 = vld [vmem:[#allocation3 + $0x80] sm:$0xff]
    %v499 = vld [vmem:[#allocation3 + $0x88] sm:$0xff]
    %v500 = vld [vmem:[#allocation3 + $0x90] sm:$0xff]
    %v501 = vld [vmem:[#allocation3 + $0x98] sm:$0xff]
    %v502 = vld [vmem:[#allocation3 + $0xa0] sm:$0xff]
    %v503 = vld [vmem:[#allocation3 + $0xa8] sm:$0xff]
    %v504 = vld [vmem:[#allocation3 + $0xb0] sm:$0xff]
    %v505 = vld [vmem:[#allocation3 + $0xb8] sm:$0xff]
    %v506 = vld [vmem:[#allocation3 + $0xc0] sm:$0xff]
    %v507 = vld [vmem:[#allocation3 + $0xc8] sm:$0xff]
    %v508 = vld [vmem:[#allocation3 + $0xd0] sm:$0xff]
    %v509 = vld [vmem:[#allocation3 + $0xd8] sm:$0xff]
    %v510 = vld [vmem:[#allocation3 + $0xe0] sm:$0xff]
    %v511 = vld [vmem:[#allocation3 + $0xe8] sm:$0xff]
    %v512 = vld [vmem:[#allocation3 + $0xf0] sm:$0xff]
    %v513 = vld [vmem:[#allocation3 + $0xf8] sm:$0xff]
    %v514 = vld [vmem:[#allocation3 + $0x100] sm:$0xff]
    %v515 = vld [vmem:[#allocation3 + $0x108] sm:$0xff]
    %v516 = vld [vmem:[#allocation3 + $0x110] sm:$0xff]
    %v517 = vld [vmem:[#allocation3 + $0x118] sm:$0xff]
    %v518 = vld [vmem:[#allocation3 + $0x120] sm:$0xff]
    %v519 = vld [vmem:[#allocation3 + $0x128] sm:$0xff]
    %v520 = vld [vmem:[#allocation3 + $0x130] sm:$0xff]
    %v521 = vld [vmem:[#allocation3 + $0x138] sm:$0xff]
    %v522 = vld [vmem:[#allocation3 + $0x140] sm:$0xff]
    %v523 = vld [vmem:[#allocation3 + $0x148] sm:$0xff]
    %v524 = vld [vmem:[#allocation3 + $0x150] sm:$0xff]
    %v525 = vld [vmem:[#allocation3 + $0x158] sm:$0xff]
    %v526 = vld [vmem:[#allocation3 + $0x160] sm:$0xff]
    %v527 = vld [vmem:[#allocation3 + $0x168] sm:$0xff]
    %v528 = vld [vmem:[#allocation3 + $0x170] sm:$0xff]
    %v529 = vld [vmem:[#allocation3 + $0x178] sm:$0xff]
    %v530 = vld [vmem:[#allocation3 + $0x180] sm:$0xff]
    %v531 = vld [vmem:[#allocation3 + $0x188] sm:$0xff]
    %v532 = vld [vmem:[#allocation3 + $0x190] sm:$0xff]
    %v533 = vld [vmem:[#allocation3 + $0x198] sm:$0xff]
    %v534 = vld [vmem:[#allocation3 + $0x1a0] sm:$0xff]
    %v535 = vld [vmem:[#allocation3 + $0x1a8] sm:$0xff]
    %v536 = vld [vmem:[#allocation3 + $0x1b0] sm:$0xff]
    %v537 = vld [vmem:[#allocation3 + $0x1b8] sm:$0xff]
    %v538 = vld [vmem:[#allocation3 + $0x1c0] sm:$0xff]
    %v539 = vld [vmem:[#allocation3 + $0x1c8] sm:$0xff]
    %v540 = vld [vmem:[#allocation3 + $0x1d0] sm:$0xff]
    %v541 = vld [vmem:[#allocation3 + $0x1d8] sm:$0xff]
    %v542 = vld [vmem:[#allocation3 + $0x1e0] sm:$0xff]
    %v543 = vld [vmem:[#allocation3 + $0x1e8] sm:$0xff]
    %v544 = vld [vmem:[#allocation3 + $0x1f0] sm:$0xff]
    %v545 = vld [vmem:[#allocation3 + $0x1f8] sm:$0xff]
    %v546 = vld [vmem:[#allocation3 + $0x200] sm:$0xff]
    %v547 = vld [vmem:[#allocation3 + $0x208] sm:$0xff]
    %v548 = vld [vmem:[#allocation3 + $0x210] sm:$0xff]
    %v549 = vld [vmem:[#allocation3 + $0x218] sm:$0xff]
    %v550 = vld [vmem:[#allocation3 + $0x220] sm:$0xff]
    %v551 = vld [vmem:[#allocation3 + $0x228] sm:$0xff]
    %v552 = vld [vmem:[#allocation3 + $0x230] sm:$0xff]
    %v553 = vld [vmem:[#allocation3 + $0x238] sm:$0xff]
    %v554 = vld [vmem:[#allocation3 + $0x240] sm:$0xff]
    %v555 = vld [vmem:[#allocation3 + $0x248] sm:$0xff]
    %v556 = vld [vmem:[#allocation3 + $0x250] sm:$0xff]
    %v557 = vld [vmem:[#allocation3 + $0x258] sm:$0xff]
    %v558 = vld [vmem:[#allocation3 + $0x260] sm:$0xff]
    %v559 = vld [vmem:[#allocation3 + $0x268] sm:$0xff]
    %v560 = vld [vmem:[#allocation3 + $0x270] sm:$0xff]
    %v561 = vld [vmem:[#allocation3 + $0x278] sm:$0xff]
    %v562 = vld [vmem:[#allocation3 + $0x280] sm:$0xff]
    %v563 = vld [vmem:[#allocation3 + $0x288] sm:$0xff]
    %v564 = vld [vmem:[#allocation3 + $0x290] sm:$0xff]
    %v565 = vld [vmem:[#allocation3 + $0x298] sm:$0xff]
    %v566 = vld [vmem:[#allocation3 + $0x2a0] sm:$0xff]
    %v567 = vld [vmem:[#allocation3 + $0x2a8] sm:$0xff]
    %v568 = vld [vmem:[#allocation3 + $0x2b0] sm:$0xff]
    %v569 = vld [vmem:[#allocation3 + $0x2b8] sm:$0xff]
    %v570 = vld [vmem:[#allocation3 + $0x2c0] sm:$0xff]
    %v571 = vld [vmem:[#allocation3 + $0x2c8] sm:$0xff]
    %v572 = vld [vmem:[#allocation3 + $0x2d0] sm:$0xff]
    %v573 = vld [vmem:[#allocation3 + $0x2d8] sm:$0xff]
    %v574 = vld [vmem:[#allocation3 + $0x2e0] sm:$0xff]
    %v575 = vld [vmem:[#allocation3 + $0x2e8] sm:$0xff]
    %v576 = vld [vmem:[#allocation3 + $0x2f0] sm:$0xff]
    %v577 = vld [vmem:[#allocation3 + $0x2f8] sm:$0xff]
    %v578 = vld [vmem:[#allocation3 + $0x300] sm:$0xff]
    %v579 = vld [vmem:[#allocation3 + $0x308] sm:$0xff]
    %v580 = vld [vmem:[#allocation3 + $0x310] sm:$0xff]
    %v581 = vld [vmem:[#allocation3 + $0x318] sm:$0xff]
    %v582 = vld [vmem:[#allocation3 + $0x320] sm:$0xff]
    %v583 = vld [vmem:[#allocation3 + $0x328] sm:$0xff]
    %v584 = vld [vmem:[#allocation3 + $0x330] sm:$0xff]
    %v585 = vld [vmem:[#allocation3 + $0x338] sm:$0xff]
    %v586 = vld [vmem:[#allocation3 + $0x340] sm:$0xff]
    %v587 = vld [vmem:[#allocation3 + $0x348] sm:$0xff]
    %v588 = vld [vmem:[#allocation3 + $0x350] sm:$0xff]
    %v589 = vld [vmem:[#allocation3 + $0x358] sm:$0xff]
    %v590 = vld [vmem:[#allocation3 + $0x360] sm:$0xff]
    %v591 = vld [vmem:[#allocation3 + $0x368] sm:$0xff]
    %v592 = vld [vmem:[#allocation3 + $0x370] sm:$0xff]
    %v593 = vld [vmem:[#allocation3 + $0x378] sm:$0xff]
    %v594 = vld [vmem:[#allocation3 + $0x380] sm:$0xff]
    %v595 = vld [vmem:[#allocation3 + $0x388] sm:$0xff]
    %v596 = vld [vmem:[#allocation3 + $0x390] sm:$0xff]
    %v597 = vld [vmem:[#allocation3 + $0x398] sm:$0xff]
    %v598 = vld [vmem:[#allocation3 + $0x3a0] sm:$0xff]
    %v599 = vld [vmem:[#allocation3 + $0x3a8] sm:$0xff]
    %v600 = vld [vmem:[#allocation3 + $0x3b0] sm:$0xff]
    %v601 = vld [vmem:[#allocation3 + $0x3b8] sm:$0xff]
    %v602 = vld [vmem:[#allocation3 + $0x3c0] sm:$0xff]
    %v603 = vld [vmem:[#allocation3 + $0x3c8] sm:$0xff]
    %v604 = vld [vmem:[#allocation3 + $0x3d0] sm:$0xff]
    %v605 = vld [vmem:[#allocation3 + $0x3d8] sm:$0xff]
    %v606 = vld [vmem:[#allocation3 + $0x3e0] sm:$0xff]
    %v607 = vld [vmem:[#allocation3 + $0x3e8] sm:$0xff]
    %v608 = vld [vmem:[#allocation3 + $0x3f0] sm:$0xff]
    %v609 = vld [vmem:[#allocation3 + $0x3f8] sm:$0xff]
    %v610 = vld [vmem:[#allocation3 + $0x400] sm:$0xff]
    %v611 = vld [vmem:[#allocation3 + $0x408] sm:$0xff]
    %v612 = vld [vmem:[#allocation3 + $0x410] sm:$0xff]
    %v613 = vld [vmem:[#allocation3 + $0x418] sm:$0xff]
    %v614 = vld [vmem:[#allocation3 + $0x420] sm:$0xff]
    %v615 = vld [vmem:[#allocation3 + $0x428] sm:$0xff]
    %v616 = vld [vmem:[#allocation3 + $0x430] sm:$0xff]
    %v617 = vld [vmem:[#allocation3 + $0x438] sm:$0xff]
    %v618 = vld [vmem:[#allocation3 + $0x440] sm:$0xff]
    %v619 = vld [vmem:[#allocation3 + $0x448] sm:$0xff]
    %v620 = vld [vmem:[#allocation3 + $0x450] sm:$0xff]
    %v621 = vld [vmem:[#allocation3 + $0x458] sm:$0xff]
    %v622 = vld [vmem:[#allocation3 + $0x460] sm:$0xff]
    %v623 = vld [vmem:[#allocation3 + $0x468] sm:$0xff]
    %v624 = vld [vmem:[#allocation3 + $0x470] sm:$0xff]
    %v625 = vld [vmem:[#allocation3 + $0x478] sm:$0xff]
    %v626 = vld [vmem:[#allocation3 + $0x480] sm:$0xff]
    %v627 = vld [vmem:[#allocation3 + $0x488] sm:$0xff]
    %v628 = vld [vmem:[#allocation3 + $0x490] sm:$0xff]
    %v629 = vld [vmem:[#allocation3 + $0x498] sm:$0xff]
    %v630 = vld [vmem:[#allocation3 + $0x4a0] sm:$0xff]
    %v631 = vld [vmem:[#allocation3 + $0x4a8] sm:$0xff]
    %v632 = vld [vmem:[#allocation3 + $0x4b0] sm:$0xff]
    %v633 = vld [vmem:[#allocation3 + $0x4b8] sm:$0xff]
    %v634 = vld [vmem:[#allocation3 + $0x4c0] sm:$0xff]
    %v635 = vld [vmem:[#allocation3 + $0x4c8] sm:$0xff]
    %v636 = vld [vmem:[#allocation3 + $0x4d0] sm:$0xff]
    %v637 = vld [vmem:[#allocation3 + $0x4d8] sm:$0xff]
    %v638 = vld [vmem:[#allocation3 + $0x4e0] sm:$0xff]
    %v639 = vld [vmem:[#allocation3 + $0x4e8] sm:$0xff]
    %v640 = vld [vmem:[#allocation3 + $0x4f0] sm:$0xff]
    %v641 = vld [vmem:[#allocation3 + $0x4f8] sm:$0xff]
    %v642 = vld [vmem:[#allocation3 + $0x500] sm:$0xff]
    %v643 = vld [vmem:[#allocation3 + $0x508] sm:$0xff]
    %v644 = vld [vmem:[#allocation3 + $0x510] sm:$0xff]
    %v645 = vld [vmem:[#allocation3 + $0x518] sm:$0xff]
    %v646 = vld [vmem:[#allocation3 + $0x520] sm:$0xff]
    %v647 = vld [vmem:[#allocation3 + $0x528] sm:$0xff]
    %v648 = vld [vmem:[#allocation3 + $0x530] sm:$0xff]
    %v649 = vld [vmem:[#allocation3 + $0x538] sm:$0xff]
    %v650 = vld [vmem:[#allocation3 + $0x540] sm:$0xff]
    %v651 = vld [vmem:[#allocation3 + $0x548] sm:$0xff]
    %v652 = vld [vmem:[#allocation3 + $0x550] sm:$0xff]
    %v653 = vld [vmem:[#allocation3 + $0x558] sm:$0xff]
    %v654 = vld [vmem:[#allocation3 + $0x560] sm:$0xff]
    %v655 = vld [vmem:[#allocation3 + $0x568] sm:$0xff]
    %v656 = vld [vmem:[#allocation3 + $0x570] sm:$0xff]
    %v657 = vld [vmem:[#allocation3 + $0x578] sm:$0xff]
    %v658 = vld [vmem:[#allocation3 + $0x580] sm:$0xff]
    %v659 = vld [vmem:[#allocation3 + $0x588] sm:$0xff]
    %v660 = vld [vmem:[#allocation3 + $0x590] sm:$0xff]
    %v661 = vld [vmem:[#allocation3 + $0x598] sm:$0xff]
    %v662 = vld [vmem:[#allocation3 + $0x5a0] sm:$0xff]
    %v663 = vld [vmem:[#allocation3 + $0x5a8] sm:$0xff]
    %v664 = vld [vmem:[#allocation3 + $0x5b0] sm:$0xff]
    %v665 = vld [vmem:[#allocation3 + $0x5b8] sm:$0xff]
    %v666 = vld [vmem:[#allocation3 + $0x5c0] sm:$0xff]
    %v667 = vld [vmem:[#allocation3 + $0x5c8] sm:$0xff]
    %v668 = vld [vmem:[#allocation3 + $0x5d0] sm:$0xff]
    %v669 = vld [vmem:[#allocation3 + $0x5d8] sm:$0xff]
    %v670 = vld [vmem:[#allocation3 + $0x5e0] sm:$0xff]
    %v671 = vld [vmem:[#allocation3 + $0x5e8] sm:$0xff]
    %v672 = vld [vmem:[#allocation3 + $0x5f0] sm:$0xff]
    %v673 = vld [vmem:[#allocation3 + $0x5f8] sm:$0xff]
    %vm674 = vsmask.f32 4352
    %v676 = vshrl.u32 %v307, 16
    %v678 = vrot.slane %v676, 3
    %v679 = vshll.u32 %v307, 16
    %v681 = vrot.slane %v679, 4
    %v682 = vor.u32 %v678, %v681
    %v684 = vshrl.u32 %v311, 16
    %v686 = vrot.slane %v684, 3
    %v687 = vshll.u32 %v311, 16
    %v689 = vrot.slane %v687, 4
    %v690 = vor.u32 %v686, %v689
    %v691 = vsel %vm674, %v682, %v690
    %v693 = vshrl.u32 %v308, 16
    %v695 = vrot.slane %v693, 3
    %v696 = vshll.u32 %v308, 16
    %v698 = vrot.slane %v696, 4
    %v699 = vor.u32 %v695, %v698
    %v701 = vshrl.u32 %v312, 16
    %v703 = vrot.slane %v701, 3
    %v704 = vshll.u32 %v312, 16
    %v706 = vrot.slane %v704, 4
    %v707 = vor.u32 %v703, %v706
    %v708 = vsel %vm674, %v699, %v707
    %v710 = vshrl.u32 %v309, 16
    %v712 = vrot.slane %v710, 3
    %v713 = vshll.u32 %v309, 16
    %v715 = vrot.slane %v713, 4
    %v716 = vor.u32 %v712, %v715
    %v718 = vshrl.u32 %v313, 16
    %v720 = vrot.slane %v718, 3
    %v721 = vshll.u32 %v313, 16
    %v723 = vrot.slane %v721, 4
    %v724 = vor.u32 %v720, %v723
    %v725 = vsel %vm674, %v716, %v724
    %v727 = vshrl.u32 %v310, 16
    %v729 = vrot.slane %v727, 3
    %v730 = vshll.u32 %v310, 16
    %v732 = vrot.slane %v730, 4
    %v733 = vor.u32 %v729, %v732
    %v735 = vshrl.u32 %v314, 16
    %v737 = vrot.slane %v735, 3
    %v738 = vshll.u32 %v314, 16
    %v740 = vrot.slane %v738, 4
    %v741 = vor.u32 %v737, %v740
    %v742 = vsel %vm674, %v733, %v741
    %v744 = vshrl.u32 %v358, 16
    %v746 = vrot.slane %v744, 3
    %v747 = vshll.u32 %v358, 16
    %v749 = vrot.slane %v747, 4
    %v750 = vor.u32 %v746, %v749
    %v752 = vshrl.u32 %v391, 16
    %v754 = vrot.slane %v752, 3
    %v755 = vshll.u32 %v391, 16
    %v757 = vrot.slane %v755, 4
    %v758 = vor.u32 %v754, %v757
    %v759 = vsel %vm674, %v750, %v758
    %v761 = vshrl.u32 %v366, 16
    %v763 = vrot.slane %v761, 3
    %v764 = vshll.u32 %v366, 16
    %v766 = vrot.slane %v764, 4
    %v767 = vor.u32 %v763, %v766
    %v769 = vshrl.u32 %v400, 16
    %v771 = vrot.slane %v769, 3
    %v772 = vshll.u32 %v400, 16
    %v774 = vrot.slane %v772, 4
    %v775 = vor.u32 %v771, %v774
    %v776 = vsel %vm674, %v767, %v775
    %v778 = vshrl.u32 %v374, 16
    %v780 = vrot.slane %v778, 3
    %v781 = vshll.u32 %v374, 16
    %v783 = vrot.slane %v781, 4
    %v784 = vor.u32 %v780, %v783
    %v786 = vshrl.u32 %v409, 16
    %v788 = vrot.slane %v786, 3
    %v789 = vshll.u32 %v409, 16
    %v791 = vrot.slane %v789, 4
    %v792 = vor.u32 %v788, %v791
    %v793 = vsel %vm674, %v784, %v792
    %v795 = vshrl.u32 %v382, 16
    %v797 = vrot.slane %v795, 3
    %v798 = vshll.u32 %v382, 16
    %v800 = vrot.slane %v798, 4
    %v801 = vor.u32 %v797, %v800
    %v803 = vshrl.u32 %v418, 16
    %v805 = vrot.slane %v803, 3
    %v806 = vshll.u32 %v418, 16
    %v808 = vrot.slane %v806, 4
    %v809 = vor.u32 %v805, %v808
    %v810 = vsel %vm674, %v801, %v809
    %v812 = vshrl.u32 %v462, 16
    %v814 = vrot.slane %v812, 3
    %v815 = vshll.u32 %v462, 16
    %v817 = vrot.slane %v815, 4
    %v818 = vor.u32 %v814, %v817
    %v820 = vshrl.u32 %v467, 16
    %v822 = vrot.slane %v820, 3
    %v823 = vshll.u32 %v467, 16
    %v825 = vrot.slane %v823, 4
    %v826 = vor.u32 %v822, %v825
    %v827 = vsel %vm674, %v818, %v826
    %v829 = vshrl.u32 %v463, 16
    %v831 = vrot.slane %v829, 3
    %v832 = vshll.u32 %v463, 16
    %v834 = vrot.slane %v832, 4
    %v835 = vor.u32 %v831, %v834
    %v837 = vshrl.u32 %v469, 16
    %v839 = vrot.slane %v837, 3
    %v840 = vshll.u32 %v469, 16
    %v842 = vrot.slane %v840, 4
    %v843 = vor.u32 %v839, %v842
    %v844 = vsel %vm674, %v835, %v843
    %v846 = vshrl.u32 %v464, 16
    %v848 = vrot.slane %v846, 3
    %v849 = vshll.u32 %v464, 16
    %v851 = vrot.slane %v849, 4
    %v852 = vor.u32 %v848, %v851
    %v854 = vshrl.u32 %v471, 16
    %v856 = vrot.slane %v854, 3
    %v857 = vshll.u32 %v471, 16
    %v859 = vrot.slane %v857, 4
    %v860 = vor.u32 %v856, %v859
    %v861 = vsel %vm674, %v852, %v860
    %v863 = vshrl.u32 %v465, 16
    %v865 = vrot.slane %v863, 3
    %v866 = vshll.u32 %v465, 16
    %v868 = vrot.slane %v866, 4
    %v869 = vor.u32 %v865, %v868
    %v871 = vshrl.u32 %v473, 16
    %v873 = vrot.slane %v871, 3
    %v874 = vshll.u32 %v473, 16
    %v876 = vrot.slane %v874, 4
    %v877 = vor.u32 %v873, %v876
    %v878 = vsel %vm674, %v869, %v877
    %v880 = vshrl.u32 %v315, 16
    %v882 = vrot.slane %v880, 3
    %v883 = vshll.u32 %v315, 16
    %v885 = vrot.slane %v883, 4
    %v886 = vor.u32 %v882, %v885
    %v887 = vsel %vm674, %v690, %v886
    %v889 = vshrl.u32 %v316, 16
    %v891 = vrot.slane %v889, 3
    %v892 = vshll.u32 %v316, 16
    %v894 = vrot.slane %v892, 4
    %v895 = vor.u32 %v891, %v894
    %v896 = vsel %vm674, %v707, %v895
    %v898 = vshrl.u32 %v317, 16
    %v900 = vrot.slane %v898, 3
    %v901 = vshll.u32 %v317, 16
    %v903 = vrot.slane %v901, 4
    %v904 = vor.u32 %v900, %v903
    %v905 = vsel %vm674, %v724, %v904
    %v907 = vshrl.u32 %v318, 16
    %v909 = vrot.slane %v907, 3
    %v910 = vshll.u32 %v318, 16
    %v912 = vrot.slane %v910, 4
    %v913 = vor.u32 %v909, %v912
    %v914 = vsel %vm674, %v741, %v913
    %v916 = vshrl.u32 %v390, 16
    %v918 = vrot.slane %v916, 3
    %v919 = vshll.u32 %v390, 16
    %v921 = vrot.slane %v919, 4
    %v922 = vor.u32 %v918, %v921
    %v923 = vsel %vm674, %v758, %v922
    %v925 = vshrl.u32 %v399, 16
    %v927 = vrot.slane %v925, 3
    %v928 = vshll.u32 %v399, 16
    %v930 = vrot.slane %v928, 4
    %v931 = vor.u32 %v927, %v930
    %v932 = vsel %vm674, %v775, %v931
    %v934 = vshrl.u32 %v408, 16
    %v936 = vrot.slane %v934, 3
    %v937 = vshll.u32 %v408, 16
    %v939 = vrot.slane %v937, 4
    %v940 = vor.u32 %v936, %v939
    %v941 = vsel %vm674, %v792, %v940
    %v943 = vshrl.u32 %v417, 16
    %v945 = vrot.slane %v943, 3
    %v946 = vshll.u32 %v417, 16
    %v948 = vrot.slane %v946, 4
    %v949 = vor.u32 %v945, %v948
    %v950 = vsel %vm674, %v809, %v949
    %v952 = vshrl.u32 %v475, 16
    %v954 = vrot.slane %v952, 3
    %v955 = vshll.u32 %v475, 16
    %v957 = vrot.slane %v955, 4
    %v958 = vor.u32 %v954, %v957
    %v959 = vsel %vm674, %v826, %v958
    %v961 = vshrl.u32 %v477, 16
    %v963 = vrot.slane %v961, 3
    %v964 = vshll.u32 %v477, 16
    %v966 = vrot.slane %v964, 4
    %v967 = vor.u32 %v963, %v966
    %v968 = vsel %vm674, %v843, %v967
    %v970 = vshrl.u32 %v479, 16
    %v972 = vrot.slane %v970, 3
    %v973 = vshll.u32 %v479, 16
    %v975 = vrot.slane %v973, 4
    %v976 = vor.u32 %v972, %v975
    %v977 = vsel %vm674, %v860, %v976
    %v979 = vshrl.u32 %v481, 16
    %v981 = vrot.slane %v979, 3
    %v982 = vshll.u32 %v481, 16
    %v984 = vrot.slane %v982, 4
    %v985 = vor.u32 %v981, %v984
    %v986 = vsel %vm674, %v877, %v985
    %v1203 = vunpack.c.l.b16 %v482
    %v1204 = vunpack.c.h.b16 %v482
    %v1205 = vunpack.c.l.b16 %v483
    %v1206 = vunpack.c.h.b16 %v483
    %v1207 = vunpack.c.l.b16 %v484
    %v1208 = vunpack.c.h.b16 %v484
    %v1209 = vunpack.c.l.b16 %v485
    %v1210 = vunpack.c.h.b16 %v485
    %v1211 = vunpack.c.l.b16 %v486
    %v1212 = vunpack.c.h.b16 %v486
    %v1213 = vunpack.c.l.b16 %v487
    %v1214 = vunpack.c.h.b16 %v487
    %v1215 = vunpack.c.l.b16 %v488
    %v1216 = vunpack.c.h.b16 %v488
    %v1217 = vunpack.c.l.b16 %v489
    %v1218 = vunpack.c.h.b16 %v489
    %v1219 = vunpack.c.l.b16 %v490
    %v1220 = vunpack.c.h.b16 %v490
    %v1221 = vunpack.c.l.b16 %v491
    %v1222 = vunpack.c.h.b16 %v491
    %v1223 = vunpack.c.l.b16 %v492
    %v1224 = vunpack.c.h.b16 %v492
    %v1225 = vunpack.c.l.b16 %v493
    %v1226 = vunpack.c.h.b16 %v493
    %v1227 = vunpack.c.l.b16 %v494
    %v1228 = vunpack.c.h.b16 %v494
    %v1229 = vunpack.c.l.b16 %v495
    %v1230 = vunpack.c.h.b16 %v495
    %v1231 = vunpack.c.l.b16 %v496
    %v1232 = vunpack.c.h.b16 %v496
    %v1233 = vunpack.c.l.b16 %v497
    %v1234 = vunpack.c.h.b16 %v497
    %v1235 = vunpack.c.l.b16 %v498
    %v1236 = vunpack.c.h.b16 %v498
    %v1237 = vunpack.c.l.b16 %v499
    %v1238 = vunpack.c.h.b16 %v499
    %v1239 = vunpack.c.l.b16 %v500
    %v1240 = vunpack.c.h.b16 %v500
    %v1241 = vunpack.c.l.b16 %v501
    %v1242 = vunpack.c.h.b16 %v501
    %v1243 = vunpack.c.l.b16 %v502
    %v1244 = vunpack.c.h.b16 %v502
    %v1245 = vunpack.c.l.b16 %v503
    %v1246 = vunpack.c.h.b16 %v503
    %v1247 = vunpack.c.l.b16 %v504
    %v1248 = vunpack.c.h.b16 %v504
    %v1249 = vunpack.c.l.b16 %v505
    %v1250 = vunpack.c.h.b16 %v505
    %v1251 = vunpack.c.l.b16 %v506
    %v1252 = vunpack.c.h.b16 %v506
    %v1253 = vunpack.c.l.b16 %v507
    %v1254 = vunpack.c.h.b16 %v507
    %v1255 = vunpack.c.l.b16 %v508
    %v1256 = vunpack.c.h.b16 %v508
    %v1257 = vunpack.c.l.b16 %v509
    %v1258 = vunpack.c.h.b16 %v509
    %v1259 = vunpack.c.l.b16 %v510
    %v1260 = vunpack.c.h.b16 %v510
    %v1261 = vunpack.c.l.b16 %v511
    %v1262 = vunpack.c.h.b16 %v511
    %v1263 = vunpack.c.l.b16 %v512
    %v1264 = vunpack.c.h.b16 %v512
    %v1265 = vunpack.c.l.b16 %v513
    %v1266 = vunpack.c.h.b16 %v513
    %v1267 = vunpack.c.l.b16 %v514
    %v1268 = vunpack.c.h.b16 %v514
    %v1269 = vunpack.c.l.b16 %v515
    %v1270 = vunpack.c.h.b16 %v515
    %v1271 = vunpack.c.l.b16 %v516
    %v1272 = vunpack.c.h.b16 %v516
    %v1273 = vunpack.c.l.b16 %v517
    %v1274 = vunpack.c.h.b16 %v517
    %v1275 = vunpack.c.l.b16 %v518
    %v1276 = vunpack.c.h.b16 %v518
    %v1277 = vunpack.c.l.b16 %v519
    %v1278 = vunpack.c.h.b16 %v519
    %v1279 = vunpack.c.l.b16 %v520
    %v1280 = vunpack.c.h.b16 %v520
    %v1281 = vunpack.c.l.b16 %v521
    %v1282 = vunpack.c.h.b16 %v521
    %v1283 = vunpack.c.l.b16 %v522
    %v1284 = vunpack.c.h.b16 %v522
    %v1285 = vunpack.c.l.b16 %v523
    %v1286 = vunpack.c.h.b16 %v523
    %v1287 = vunpack.c.l.b16 %v524
    %v1288 = vunpack.c.h.b16 %v524
    %v1289 = vunpack.c.l.b16 %v525
    %v1290 = vunpack.c.h.b16 %v525
    %v1291 = vunpack.c.l.b16 %v526
    %v1292 = vunpack.c.h.b16 %v526
    %v1293 = vunpack.c.l.b16 %v527
    %v1294 = vunpack.c.h.b16 %v527
    %v1295 = vunpack.c.l.b16 %v528
    %v1296 = vunpack.c.h.b16 %v528
    %v1297 = vunpack.c.l.b16 %v529
    %v1298 = vunpack.c.h.b16 %v529
    %v1299 = vunpack.c.l.b16 %v530
    %v1300 = vunpack.c.h.b16 %v530
    %v1301 = vunpack.c.l.b16 %v531
    %v1302 = vunpack.c.h.b16 %v531
    %v1303 = vunpack.c.l.b16 %v532
    %v1304 = vunpack.c.h.b16 %v532
    %v1305 = vunpack.c.l.b16 %v533
    %v1306 = vunpack.c.h.b16 %v533
    %v1307 = vunpack.c.l.b16 %v534
    %v1308 = vunpack.c.h.b16 %v534
    %v1309 = vunpack.c.l.b16 %v535
    %v1310 = vunpack.c.h.b16 %v535
    %v1311 = vunpack.c.l.b16 %v536
    %v1312 = vunpack.c.h.b16 %v536
    %v1313 = vunpack.c.l.b16 %v537
    %v1314 = vunpack.c.h.b16 %v537
    %v1315 = vunpack.c.l.b16 %v538
    %v1316 = vunpack.c.h.b16 %v538
    %v1317 = vunpack.c.l.b16 %v539
    %v1318 = vunpack.c.h.b16 %v539
    %v1319 = vunpack.c.l.b16 %v540
    %v1320 = vunpack.c.h.b16 %v540
    %v1321 = vunpack.c.l.b16 %v541
    %v1322 = vunpack.c.h.b16 %v541
    %v1323 = vunpack.c.l.b16 %v542
    %v1324 = vunpack.c.h.b16 %v542
    %v1325 = vunpack.c.l.b16 %v543
    %v1326 = vunpack.c.h.b16 %v543
    %v1327 = vunpack.c.l.b16 %v544
    %v1328 = vunpack.c.h.b16 %v544
    %v1329 = vunpack.c.l.b16 %v545
    %v1330 = vunpack.c.h.b16 %v545
    %v1331 = vunpack.c.l.b16 %v546
    %v1332 = vunpack.c.h.b16 %v546
    %v1333 = vunpack.c.l.b16 %v547
    %v1334 = vunpack.c.h.b16 %v547
    %v1335 = vunpack.c.l.b16 %v548
    %v1336 = vunpack.c.h.b16 %v548
    %v1337 = vunpack.c.l.b16 %v549
    %v1338 = vunpack.c.h.b16 %v549
    %v1339 = vunpack.c.l.b16 %v550
    %v1340 = vunpack.c.h.b16 %v550
    %v1341 = vunpack.c.l.b16 %v551
    %v1342 = vunpack.c.h.b16 %v551
    %v1343 = vunpack.c.l.b16 %v552
    %v1344 = vunpack.c.h.b16 %v552
    %v1345 = vunpack.c.l.b16 %v553
    %v1346 = vunpack.c.h.b16 %v553
    %v1347 = vunpack.c.l.b16 %v554
    %v1348 = vunpack.c.h.b16 %v554
    %v1349 = vunpack.c.l.b16 %v555
    %v1350 = vunpack.c.h.b16 %v555
    %v1351 = vunpack.c.l.b16 %v556
    %v1352 = vunpack.c.h.b16 %v556
    %v1353 = vunpack.c.l.b16 %v557
    %v1354 = vunpack.c.h.b16 %v557
    %v1355 = vunpack.c.l.b16 %v558
    %v1356 = vunpack.c.h.b16 %v558
    %v1357 = vunpack.c.l.b16 %v559
    %v1358 = vunpack.c.h.b16 %v559
    %v1359 = vunpack.c.l.b16 %v560
    %v1360 = vunpack.c.h.b16 %v560
    %v1361 = vunpack.c.l.b16 %v561
    %v1362 = vunpack.c.h.b16 %v561
    %v1363 = vunpack.c.l.b16 %v562
    %v1364 = vunpack.c.h.b16 %v562
    %v1365 = vunpack.c.l.b16 %v563
    %v1366 = vunpack.c.h.b16 %v563
    %v1367 = vunpack.c.l.b16 %v564
    %v1368 = vunpack.c.h.b16 %v564
    %v1369 = vunpack.c.l.b16 %v565
    %v1370 = vunpack.c.h.b16 %v565
    %v1371 = vunpack.c.l.b16 %v566
    %v1372 = vunpack.c.h.b16 %v566
    %v1373 = vunpack.c.l.b16 %v567
    %v1374 = vunpack.c.h.b16 %v567
    %v1375 = vunpack.c.l.b16 %v568
    %v1376 = vunpack.c.h.b16 %v568
    %v1377 = vunpack.c.l.b16 %v569
    %v1378 = vunpack.c.h.b16 %v569
    %v1379 = vunpack.c.l.b16 %v570
    %v1380 = vunpack.c.h.b16 %v570
    %v1381 = vunpack.c.l.b16 %v571
    %v1382 = vunpack.c.h.b16 %v571
    %v1383 = vunpack.c.l.b16 %v572
    %v1384 = vunpack.c.h.b16 %v572
    %v1385 = vunpack.c.l.b16 %v573
    %v1386 = vunpack.c.h.b16 %v573
    %v1387 = vunpack.c.l.b16 %v574
    %v1388 = vunpack.c.h.b16 %v574
    %v1389 = vunpack.c.l.b16 %v575
    %v1390 = vunpack.c.h.b16 %v575
    %v1391 = vunpack.c.l.b16 %v576
    %v1392 = vunpack.c.h.b16 %v576
    %v1393 = vunpack.c.l.b16 %v577
    %v1394 = vunpack.c.h.b16 %v577
    %v1395 = vunpack.c.l.b16 %v578
    %v1396 = vunpack.c.h.b16 %v578
    %v1397 = vunpack.c.l.b16 %v579
    %v1398 = vunpack.c.h.b16 %v579
    %v1399 = vunpack.c.l.b16 %v580
    %v1400 = vunpack.c.h.b16 %v580
    %v1401 = vunpack.c.l.b16 %v581
    %v1402 = vunpack.c.h.b16 %v581
    %v1403 = vunpack.c.l.b16 %v582
    %v1404 = vunpack.c.h.b16 %v582
    %v1405 = vunpack.c.l.b16 %v583
    %v1406 = vunpack.c.h.b16 %v583
    %v1407 = vunpack.c.l.b16 %v584
    %v1408 = vunpack.c.h.b16 %v584
    %v1409 = vunpack.c.l.b16 %v585
    %v1410 = vunpack.c.h.b16 %v585
    %v1411 = vunpack.c.l.b16 %v586
    %v1412 = vunpack.c.h.b16 %v586
    %v1413 = vunpack.c.l.b16 %v587
    %v1414 = vunpack.c.h.b16 %v587
    %v1415 = vunpack.c.l.b16 %v588
    %v1416 = vunpack.c.h.b16 %v588
    %v1417 = vunpack.c.l.b16 %v589
    %v1418 = vunpack.c.h.b16 %v589
    %v1419 = vunpack.c.l.b16 %v590
    %v1420 = vunpack.c.h.b16 %v590
    %v1421 = vunpack.c.l.b16 %v591
    %v1422 = vunpack.c.h.b16 %v591
    %v1423 = vunpack.c.l.b16 %v592
    %v1424 = vunpack.c.h.b16 %v592
    %v1425 = vunpack.c.l.b16 %v593
    %v1426 = vunpack.c.h.b16 %v593
    %v1427 = vunpack.c.l.b16 %v594
    %v1428 = vunpack.c.h.b16 %v594
    %v1429 = vunpack.c.l.b16 %v595
    %v1430 = vunpack.c.h.b16 %v595
    %v1431 = vunpack.c.l.b16 %v596
    %v1432 = vunpack.c.h.b16 %v596
    %v1433 = vunpack.c.l.b16 %v597
    %v1434 = vunpack.c.h.b16 %v597
    %v1435 = vunpack.c.l.b16 %v598
    %v1436 = vunpack.c.h.b16 %v598
    %v1437 = vunpack.c.l.b16 %v599
    %v1438 = vunpack.c.h.b16 %v599
    %v1439 = vunpack.c.l.b16 %v600
    %v1440 = vunpack.c.h.b16 %v600
    %v1441 = vunpack.c.l.b16 %v601
    %v1442 = vunpack.c.h.b16 %v601
    %v1443 = vunpack.c.l.b16 %v602
    %v1444 = vunpack.c.h.b16 %v602
    %v1445 = vunpack.c.l.b16 %v603
    %v1446 = vunpack.c.h.b16 %v603
    %v1447 = vunpack.c.l.b16 %v604
    %v1448 = vunpack.c.h.b16 %v604
    %v1449 = vunpack.c.l.b16 %v605
    %v1450 = vunpack.c.h.b16 %v605
    %v1451 = vunpack.c.l.b16 %v606
    %v1452 = vunpack.c.h.b16 %v606
    %v1453 = vunpack.c.l.b16 %v607
    %v1454 = vunpack.c.h.b16 %v607
    %v1455 = vunpack.c.l.b16 %v608
    %v1456 = vunpack.c.h.b16 %v608
    %v1457 = vunpack.c.l.b16 %v609
    %v1458 = vunpack.c.h.b16 %v609
    %v1459 = vunpack.c.l.b16 %v610
    %v1460 = vunpack.c.h.b16 %v610
    %v1461 = vunpack.c.l.b16 %v611
    %v1462 = vunpack.c.h.b16 %v611
    %v1463 = vunpack.c.l.b16 %v612
    %v1464 = vunpack.c.h.b16 %v612
    %v1465 = vunpack.c.l.b16 %v613
    %v1466 = vunpack.c.h.b16 %v613
    %v1467 = vunpack.c.l.b16 %v614
    %v1468 = vunpack.c.h.b16 %v614
    %v1469 = vunpack.c.l.b16 %v615
    %v1470 = vunpack.c.h.b16 %v615
    %v1471 = vunpack.c.l.b16 %v616
    %v1472 = vunpack.c.h.b16 %v616
    %v1473 = vunpack.c.l.b16 %v617
    %v1474 = vunpack.c.h.b16 %v617
    %v1475 = vunpack.c.l.b16 %v618
    %v1476 = vunpack.c.h.b16 %v618
    %v1477 = vunpack.c.l.b16 %v619
    %v1478 = vunpack.c.h.b16 %v619
    %v1479 = vunpack.c.l.b16 %v620
    %v1480 = vunpack.c.h.b16 %v620
    %v1481 = vunpack.c.l.b16 %v621
    %v1482 = vunpack.c.h.b16 %v621
    %v1483 = vunpack.c.l.b16 %v622
    %v1484 = vunpack.c.h.b16 %v622
    %v1485 = vunpack.c.l.b16 %v623
    %v1486 = vunpack.c.h.b16 %v623
    %v1487 = vunpack.c.l.b16 %v624
    %v1488 = vunpack.c.h.b16 %v624
    %v1489 = vunpack.c.l.b16 %v625
    %v1490 = vunpack.c.h.b16 %v625
    %v1491 = vunpack.c.l.b16 %v626
    %v1492 = vunpack.c.h.b16 %v626
    %v1493 = vunpack.c.l.b16 %v627
    %v1494 = vunpack.c.h.b16 %v627
    %v1495 = vunpack.c.l.b16 %v628
    %v1496 = vunpack.c.h.b16 %v628
    %v1497 = vunpack.c.l.b16 %v629
    %v1498 = vunpack.c.h.b16 %v629
    %v1499 = vunpack.c.l.b16 %v630
    %v1500 = vunpack.c.h.b16 %v630
    %v1501 = vunpack.c.l.b16 %v631
    %v1502 = vunpack.c.h.b16 %v631
    %v1503 = vunpack.c.l.b16 %v632
    %v1504 = vunpack.c.h.b16 %v632
    %v1505 = vunpack.c.l.b16 %v633
    %v1506 = vunpack.c.h.b16 %v633
    %v1507 = vunpack.c.l.b16 %v634
    %v1508 = vunpack.c.h.b16 %v634
    %v1509 = vunpack.c.l.b16 %v635
    %v1510 = vunpack.c.h.b16 %v635
    %v1511 = vunpack.c.l.b16 %v636
    %v1512 = vunpack.c.h.b16 %v636
    %v1513 = vunpack.c.l.b16 %v637
    %v1514 = vunpack.c.h.b16 %v637
    %v1515 = vunpack.c.l.b16 %v638
    %v1516 = vunpack.c.h.b16 %v638
    %v1517 = vunpack.c.l.b16 %v639
    %v1518 = vunpack.c.h.b16 %v639
    %v1519 = vunpack.c.l.b16 %v640
    %v1520 = vunpack.c.h.b16 %v640
    %v1521 = vunpack.c.l.b16 %v641
    %v1522 = vunpack.c.h.b16 %v641
    %v1523 = vunpack.c.l.b16 %v642
    %v1524 = vunpack.c.h.b16 %v642
    %v1525 = vunpack.c.l.b16 %v643
    %v1526 = vunpack.c.h.b16 %v643
    %v1527 = vunpack.c.l.b16 %v644
    %v1528 = vunpack.c.h.b16 %v644
    %v1529 = vunpack.c.l.b16 %v645
    %v1530 = vunpack.c.h.b16 %v645
    %v1531 = vunpack.c.l.b16 %v646
    %v1532 = vunpack.c.h.b16 %v646
    %v1533 = vunpack.c.l.b16 %v647
    %v1534 = vunpack.c.h.b16 %v647
    %v1535 = vunpack.c.l.b16 %v648
    %v1536 = vunpack.c.h.b16 %v648
    %v1537 = vunpack.c.l.b16 %v649
    %v1538 = vunpack.c.h.b16 %v649
    %v1539 = vunpack.c.l.b16 %v650
    %v1540 = vunpack.c.h.b16 %v650
    %v1541 = vunpack.c.l.b16 %v651
    %v1542 = vunpack.c.h.b16 %v651
    %v1543 = vunpack.c.l.b16 %v652
    %v1544 = vunpack.c.h.b16 %v652
    %v1545 = vunpack.c.l.b16 %v653
    %v1546 = vunpack.c.h.b16 %v653
    %v1547 = vunpack.c.l.b16 %v654
    %v1548 = vunpack.c.h.b16 %v654
    %v1549 = vunpack.c.l.b16 %v655
    %v1550 = vunpack.c.h.b16 %v655
    %v1551 = vunpack.c.l.b16 %v656
    %v1552 = vunpack.c.h.b16 %v656
    %v1553 = vunpack.c.l.b16 %v657
    %v1554 = vunpack.c.h.b16 %v657
    %v1555 = vunpack.c.l.b16 %v658
    %v1556 = vunpack.c.h.b16 %v658
    %v1557 = vunpack.c.l.b16 %v659
    %v1558 = vunpack.c.h.b16 %v659
    %v1559 = vunpack.c.l.b16 %v660
    %v1560 = vunpack.c.h.b16 %v660
    %v1561 = vunpack.c.l.b16 %v661
    %v1562 = vunpack.c.h.b16 %v661
    %v1563 = vunpack.c.l.b16 %v662
    %v1564 = vunpack.c.h.b16 %v662
    %v1565 = vunpack.c.l.b16 %v663
    %v1566 = vunpack.c.h.b16 %v663
    %v1567 = vunpack.c.l.b16 %v664
    %v1568 = vunpack.c.h.b16 %v664
    %v1569 = vunpack.c.l.b16 %v665
    %v1570 = vunpack.c.h.b16 %v665
    %v1571 = vunpack.c.l.b16 %v666
    %v1572 = vunpack.c.h.b16 %v666
    %v1573 = vunpack.c.l.b16 %v667
    %v1574 = vunpack.c.h.b16 %v667
    %v1575 = vunpack.c.l.b16 %v668
    %v1576 = vunpack.c.h.b16 %v668
    %v1577 = vunpack.c.l.b16 %v669
    %v1578 = vunpack.c.h.b16 %v669
    %v1579 = vunpack.c.l.b16 %v670
    %v1580 = vunpack.c.h.b16 %v670
    %v1581 = vunpack.c.l.b16 %v671
    %v1582 = vunpack.c.h.b16 %v671
    %v1583 = vunpack.c.l.b16 %v672
    %v1584 = vunpack.c.h.b16 %v672
    %v1585 = vunpack.c.l.b16 %v673
    %v1586 = vunpack.c.h.b16 %v673
    %v1587 = vpack.c.b16 %v1205, %v1203
    %v1588 = vpack.c.b16 %v1206, %v1204
    %v1589 = vpack.c.b16 %v1209, %v1207
    %v1590 = vpack.c.b16 %v1210, %v1208
    %v1591 = vpack.c.b16 %v1213, %v1211
    %v1592 = vpack.c.b16 %v1214, %v1212
    %v1593 = vpack.c.b16 %v1217, %v1215
    %v1594 = vpack.c.b16 %v1218, %v1216
    %v1595 = vpack.c.b16 %v1221, %v1219
    %v1596 = vpack.c.b16 %v1222, %v1220
    %v1597 = vpack.c.b16 %v1225, %v1223
    %v1598 = vpack.c.b16 %v1226, %v1224
    %v1599 = vpack.c.b16 %v1229, %v1227
    %v1600 = vpack.c.b16 %v1230, %v1228
    %v1601 = vpack.c.b16 %v1233, %v1231
    %v1602 = vpack.c.b16 %v1234, %v1232
    %v1603 = vpack.c.b16 %v1237, %v1235
    %v1604 = vpack.c.b16 %v1238, %v1236
    %v1605 = vpack.c.b16 %v1241, %v1239
    %v1606 = vpack.c.b16 %v1242, %v1240
    %v1607 = vpack.c.b16 %v1245, %v1243
    %v1608 = vpack.c.b16 %v1246, %v1244
    %v1609 = vpack.c.b16 %v1249, %v1247
    %v1610 = vpack.c.b16 %v1250, %v1248
    %v1611 = vpack.c.b16 %v1253, %v1251
    %v1612 = vpack.c.b16 %v1254, %v1252
    %v1613 = vpack.c.b16 %v1257, %v1255
    %v1614 = vpack.c.b16 %v1258, %v1256
    %v1615 = vpack.c.b16 %v1261, %v1259
    %v1616 = vpack.c.b16 %v1262, %v1260
    %v1617 = vpack.c.b16 %v1265, %v1263
    %v1618 = vpack.c.b16 %v1266, %v1264
    %v1619 = vpack.c.b16 %v1269, %v1267
    %v1620 = vpack.c.b16 %v1270, %v1268
    %v1621 = vpack.c.b16 %v1273, %v1271
    %v1622 = vpack.c.b16 %v1274, %v1272
    %v1623 = vpack.c.b16 %v1277, %v1275
    %v1624 = vpack.c.b16 %v1278, %v1276
    %v1625 = vpack.c.b16 %v1281, %v1279
    %v1626 = vpack.c.b16 %v1282, %v1280
    %v1627 = vpack.c.b16 %v1285, %v1283
    %v1628 = vpack.c.b16 %v1286, %v1284
    %v1629 = vpack.c.b16 %v1289, %v1287
    %v1630 = vpack.c.b16 %v1290, %v1288
    %v1631 = vpack.c.b16 %v1293, %v1291
    %v1632 = vpack.c.b16 %v1294, %v1292
    %v1633 = vpack.c.b16 %v1297, %v1295
    %v1634 = vpack.c.b16 %v1298, %v1296
    %v1635 = vpack.c.b16 %v1301, %v1299
    %v1636 = vpack.c.b16 %v1302, %v1300
    %v1637 = vpack.c.b16 %v1305, %v1303
    %v1638 = vpack.c.b16 %v1306, %v1304
    %v1639 = vpack.c.b16 %v1309, %v1307
    %v1640 = vpack.c.b16 %v1310, %v1308
    %v1641 = vpack.c.b16 %v1313, %v1311
    %v1642 = vpack.c.b16 %v1314, %v1312
    %v1643 = vpack.c.b16 %v1317, %v1315
    %v1644 = vpack.c.b16 %v1318, %v1316
    %v1645 = vpack.c.b16 %v1321, %v1319
    %v1646 = vpack.c.b16 %v1322, %v1320
    %v1647 = vpack.c.b16 %v1325, %v1323
    %v1648 = vpack.c.b16 %v1326, %v1324
    %v1649 = vpack.c.b16 %v1329, %v1327
    %v1650 = vpack.c.b16 %v1330, %v1328
    %v1651 = vpack.c.b16 %v1333, %v1331
    %v1652 = vpack.c.b16 %v1334, %v1332
    %v1653 = vpack.c.b16 %v1337, %v1335
    %v1654 = vpack.c.b16 %v1338, %v1336
    %v1655 = vpack.c.b16 %v1341, %v1339
    %v1656 = vpack.c.b16 %v1342, %v1340
    %v1657 = vpack.c.b16 %v1345, %v1343
    %v1658 = vpack.c.b16 %v1346, %v1344
    %v1659 = vpack.c.b16 %v1349, %v1347
    %v1660 = vpack.c.b16 %v1350, %v1348
    %v1661 = vpack.c.b16 %v1353, %v1351
    %v1662 = vpack.c.b16 %v1354, %v1352
    %v1663 = vpack.c.b16 %v1357, %v1355
    %v1664 = vpack.c.b16 %v1358, %v1356
    %v1665 = vpack.c.b16 %v1361, %v1359
    %v1666 = vpack.c.b16 %v1362, %v1360
    %v1667 = vpack.c.b16 %v1365, %v1363
    %v1668 = vpack.c.b16 %v1366, %v1364
    %v1669 = vpack.c.b16 %v1369, %v1367
    %v1670 = vpack.c.b16 %v1370, %v1368
    %v1671 = vpack.c.b16 %v1373, %v1371
    %v1672 = vpack.c.b16 %v1374, %v1372
    %v1673 = vpack.c.b16 %v1377, %v1375
    %v1674 = vpack.c.b16 %v1378, %v1376
    %v1675 = vpack.c.b16 %v1381, %v1379
    %v1676 = vpack.c.b16 %v1382, %v1380
    %v1677 = vpack.c.b16 %v1385, %v1383
    %v1678 = vpack.c.b16 %v1386, %v1384
    %v1679 = vpack.c.b16 %v1389, %v1387
    %v1680 = vpack.c.b16 %v1390, %v1388
    %v1681 = vpack.c.b16 %v1393, %v1391
    %v1682 = vpack.c.b16 %v1394, %v1392
    %v1683 = vpack.c.b16 %v1397, %v1395
    %v1684 = vpack.c.b16 %v1398, %v1396
    %v1685 = vpack.c.b16 %v1401, %v1399
    %v1686 = vpack.c.b16 %v1402, %v1400
    %v1687 = vpack.c.b16 %v1405, %v1403
    %v1688 = vpack.c.b16 %v1406, %v1404
    %v1689 = vpack.c.b16 %v1409, %v1407
    %v1690 = vpack.c.b16 %v1410, %v1408
    %v1691 = vpack.c.b16 %v1413, %v1411
    %v1692 = vpack.c.b16 %v1414, %v1412
    %v1693 = vpack.c.b16 %v1417, %v1415
    %v1694 = vpack.c.b16 %v1418, %v1416
    %v1695 = vpack.c.b16 %v1421, %v1419
    %v1696 = vpack.c.b16 %v1422, %v1420
    %v1697 = vpack.c.b16 %v1425, %v1423
    %v1698 = vpack.c.b16 %v1426, %v1424
    %v1699 = vpack.c.b16 %v1429, %v1427
    %v1700 = vpack.c.b16 %v1430, %v1428
    %v1701 = vpack.c.b16 %v1433, %v1431
    %v1702 = vpack.c.b16 %v1434, %v1432
    %v1703 = vpack.c.b16 %v1437, %v1435
    %v1704 = vpack.c.b16 %v1438, %v1436
    %v1705 = vpack.c.b16 %v1441, %v1439
    %v1706 = vpack.c.b16 %v1442, %v1440
    %v1707 = vpack.c.b16 %v1445, %v1443
    %v1708 = vpack.c.b16 %v1446, %v1444
    %v1709 = vpack.c.b16 %v1449, %v1447
    %v1710 = vpack.c.b16 %v1450, %v1448
    %v1711 = vpack.c.b16 %v1453, %v1451
    %v1712 = vpack.c.b16 %v1454, %v1452
    %v1713 = vpack.c.b16 %v1457, %v1455
    %v1714 = vpack.c.b16 %v1458, %v1456
    %v1715 = vpack.c.b16 %v1461, %v1459
    %v1716 = vpack.c.b16 %v1462, %v1460
    %v1717 = vpack.c.b16 %v1465, %v1463
    %v1718 = vpack.c.b16 %v1466, %v1464
    %v1719 = vpack.c.b16 %v1469, %v1467
    %v1720 = vpack.c.b16 %v1470, %v1468
    %v1721 = vpack.c.b16 %v1473, %v1471
    %v1722 = vpack.c.b16 %v1474, %v1472
    %v1723 = vpack.c.b16 %v1477, %v1475
    %v1724 = vpack.c.b16 %v1478, %v1476
    %v1725 = vpack.c.b16 %v1481, %v1479
    %v1726 = vpack.c.b16 %v1482, %v1480
    %v1727 = vpack.c.b16 %v1485, %v1483
    %v1728 = vpack.c.b16 %v1486, %v1484
    %v1729 = vpack.c.b16 %v1489, %v1487
    %v1730 = vpack.c.b16 %v1490, %v1488
    %v1731 = vpack.c.b16 %v1493, %v1491
    %v1732 = vpack.c.b16 %v1494, %v1492
    %v1733 = vpack.c.b16 %v1497, %v1495
    %v1734 = vpack.c.b16 %v1498, %v1496
    %v1735 = vpack.c.b16 %v1501, %v1499
    %v1736 = vpack.c.b16 %v1502, %v1500
    %v1737 = vpack.c.b16 %v1505, %v1503
    %v1738 = vpack.c.b16 %v1506, %v1504
    %v1739 = vpack.c.b16 %v1509, %v1507
    %v1740 = vpack.c.b16 %v1510, %v1508
    %v1741 = vpack.c.b16 %v1513, %v1511
    %v1742 = vpack.c.b16 %v1514, %v1512
    %v1743 = vpack.c.b16 %v1517, %v1515
    %v1744 = vpack.c.b16 %v1518, %v1516
    %v1745 = vpack.c.b16 %v1521, %v1519
    %v1746 = vpack.c.b16 %v1522, %v1520
    %v1747 = vpack.c.b16 %v1525, %v1523
    %v1748 = vpack.c.b16 %v1526, %v1524
    %v1749 = vpack.c.b16 %v1529, %v1527
    %v1750 = vpack.c.b16 %v1530, %v1528
    %v1751 = vpack.c.b16 %v1533, %v1531
    %v1752 = vpack.c.b16 %v1534, %v1532
    %v1753 = vpack.c.b16 %v1537, %v1535
    %v1754 = vpack.c.b16 %v1538, %v1536
    %v1755 = vpack.c.b16 %v1541, %v1539
    %v1756 = vpack.c.b16 %v1542, %v1540
    %v1757 = vpack.c.b16 %v1545, %v1543
    %v1758 = vpack.c.b16 %v1546, %v1544
    %v1759 = vpack.c.b16 %v1549, %v1547
    %v1760 = vpack.c.b16 %v1550, %v1548
    %v1761 = vpack.c.b16 %v1553, %v1551
    %v1762 = vpack.c.b16 %v1554, %v1552
    %v1763 = vpack.c.b16 %v1557, %v1555
    %v1764 = vpack.c.b16 %v1558, %v1556
    %v1765 = vpack.c.b16 %v1561, %v1559
    %v1766 = vpack.c.b16 %v1562, %v1560
    %v1767 = vpack.c.b16 %v1565, %v1563
    %v1768 = vpack.c.b16 %v1566, %v1564
    %v1769 = vpack.c.b16 %v1569, %v1567
    %v1770 = vpack.c.b16 %v1570, %v1568
    %v1771 = vpack.c.b16 %v1573, %v1571
    %v1772 = vpack.c.b16 %v1574, %v1572
    %v1773 = vpack.c.b16 %v1577, %v1575
    %v1774 = vpack.c.b16 %v1578, %v1576
    %v1775 = vpack.c.b16 %v1581, %v1579
    %v1776 = vpack.c.b16 %v1582, %v1580
    %v1777 = vpack.c.b16 %v1585, %v1583
    %v1778 = vpack.c.b16 %v1586, %v1584
    %1971 = vmatprep.subr.bf16.mxu0 %v1588
    %1972 = vmatpush1.bf16.msra.mxu0 %v1587
    %1973 = vmatprep.subr.bf16.mxu0 %v1590
    %1974 = vmatpush1.bf16.msra.mxu0 %v1589
    %1975 = vmatprep.subr.bf16.mxu0 %v1592
    %1976 = vmatpush1.bf16.msra.mxu0 %v1591
    %1977 = vmatprep.subr.bf16.mxu0 %v1594
    %1978 = vmatpush1.bf16.msra.mxu0 %v1593
    %1979 = vmatprep.subr.bf16.mxu0 %v1596
    %1980 = vmatpush1.bf16.msra.mxu0 %v1595
    %1981 = vmatprep.subr.bf16.mxu0 %v1598
    %1982 = vmatpush1.bf16.msra.mxu0 %v1597
    %1983 = vmatprep.subr.bf16.mxu0 %v1600
    %1984 = vmatpush1.bf16.msra.mxu0 %v1599
    %1985 = vmatprep.subr.bf16.mxu0 %v1602
    %1986 = vmatpush1.bf16.msra.mxu0 %v1601
    %1987 = vmatprep.subr.bf16.mxu0 %v1604
    %1988 = vmatpush1.bf16.msra.mxu0 %v1603
    %1989 = vmatprep.subr.bf16.mxu0 %v1606
    %1990 = vmatpush1.bf16.msra.mxu0 %v1605
    %1991 = vmatprep.subr.bf16.mxu0 %v1608
    %1992 = vmatpush1.bf16.msra.mxu0 %v1607
    %1993 = vmatprep.subr.bf16.mxu0 %v1610
    %1994 = vmatpush1.bf16.msra.mxu0 %v1609
    %1995 = vmatprep.subr.bf16.mxu0 %v1612
    %1996 = vmatpush1.bf16.msra.mxu0 %v1611
    %1997 = vmatprep.subr.bf16.mxu0 %v1614
    %1998 = vmatpush1.bf16.msra.mxu0 %v1613
    %1999 = vmatprep.subr.bf16.mxu0 %v1616
    %2000 = vmatpush1.bf16.msra.mxu0 %v1615
    %2001 = vmatprep.subr.bf16.mxu0 %v1618
    %2002 = vmatpush1.bf16.msra.mxu0 %v1617
    %2003 = vmatprep.mubr.bf16.mxu0 %v708
    %2004 = vmatmul.mubr.bf16.gmra.mrb[0].mxu0 %v691
    %v2005 = vpop.f32.mrb[0].mxu0
    %v2006 = vadd.f32 0.0, %v2005
    %v2007 = vpop.f32.mrb[0].mxu0
    %v2008 = vadd.f32 0.0, %v2007
    %v2009 = vpop.f32.mrb[0].mxu0
    %v2010 = vadd.f32 0.0, %v2009
    %v2011 = vpop.f32.mrb[0].mxu0
    %v2012 = vadd.f32 0.0, %v2011
    %2013 = vmatprep.mubr.bf16.mxu0 %v896
    %2014 = vmatmul.mubr.bf16.gmra.mrb[0].mxu0 %v887
    %v2015 = vpop.f32.mrb[0].mxu0
    %v2016 = vadd.f32 0.0, %v2015
    %v2017 = vpop.f32.mrb[0].mxu0
    %v2018 = vadd.f32 0.0, %v2017
    %v2019 = vpop.f32.mrb[0].mxu0
    %v2020 = vadd.f32 0.0, %v2019
    %v2021 = vpop.f32.mrb[0].mxu0
    %v2022 = vadd.f32 0.0, %v2021
    %2023 = vdwg.mxu0
    %2024 = vmatprep.subr.bf16.mxu0 %v1620
    %2025 = vmatpush1.bf16.msra.mxu0 %v1619
    %2026 = vmatprep.subr.bf16.mxu0 %v1622
    %2027 = vmatpush1.bf16.msra.mxu0 %v1621
    %2028 = vmatprep.subr.bf16.mxu0 %v1624
    %2029 = vmatpush1.bf16.msra.mxu0 %v1623
    %2030 = vmatprep.subr.bf16.mxu0 %v1626
    %2031 = vmatpush1.bf16.msra.mxu0 %v1625
    %2032 = vmatprep.subr.bf16.mxu0 %v1628
    %2033 = vmatpush1.bf16.msra.mxu0 %v1627
    %2034 = vmatprep.subr.bf16.mxu0 %v1630
    %2035 = vmatpush1.bf16.msra.mxu0 %v1629
    %2036 = vmatprep.subr.bf16.mxu0 %v1632
    %2037 = vmatpush1.bf16.msra.mxu0 %v1631
    %2038 = vmatprep.subr.bf16.mxu0 %v1634
    %2039 = vmatpush1.bf16.msra.mxu0 %v1633
    %2040 = vmatprep.subr.bf16.mxu0 %v1636
    %2041 = vmatpush1.bf16.msra.mxu0 %v1635
    %2042 = vmatprep.subr.bf16.mxu0 %v1638
    %2043 = vmatpush1.bf16.msra.mxu0 %v1637
    %2044 = vmatprep.subr.bf16.mxu0 %v1640
    %2045 = vmatpush1.bf16.msra.mxu0 %v1639
    %2046 = vmatprep.subr.bf16.mxu0 %v1642
    %2047 = vmatpush1.bf16.msra.mxu0 %v1641
    %2048 = vmatprep.subr.bf16.mxu0 %v1644
    %2049 = vmatpush1.bf16.msra.mxu0 %v1643
    %2050 = vmatprep.subr.bf16.mxu0 %v1646
    %2051 = vmatpush1.bf16.msra.mxu0 %v1645
    %2052 = vmatprep.subr.bf16.mxu0 %v1648
    %2053 = vmatpush1.bf16.msra.mxu0 %v1647
    %2054 = vmatprep.subr.bf16.mxu0 %v1650
    %2055 = vmatpush1.bf16.msra.mxu0 %v1649
    %2056 = vmatprep.mubr.bf16.mxu0 %v742
    %2057 = vmatmul.mubr.bf16.gmra.mrb[0].mxu0 %v725
    %v2058 = vpop.f32.mrb[0].mxu0
    %v2059 = vadd.f32 %v2006, %v2058
    %v2060 = vpop.f32.mrb[0].mxu0
    %v2061 = vadd.f32 %v2008, %v2060
    %v2062 = vpop.f32.mrb[0].mxu0
    %v2063 = vadd.f32 %v2010, %v2062
    %v2064 = vpop.f32.mrb[0].mxu0
    %v2065 = vadd.f32 %v2012, %v2064
    %2066 = vmatprep.mubr.bf16.mxu0 %v914
    %2067 = vmatmul.mubr.bf16.gmra.mrb[0].mxu0 %v905
    %v2068 = vpop.f32.mrb[0].mxu0
    %v2069 = vadd.f32 %v2016, %v2068
    %v2070 = vpop.f32.mrb[0].mxu0
    %v2071 = vadd.f32 %v2018, %v2070
    %v2072 = vpop.f32.mrb[0].mxu0
    %v2073 = vadd.f32 %v2020, %v2072
    %v2074 = vpop.f32.mrb[0].mxu0
    %v2075 = vadd.f32 %v2022, %v2074
    %2076 = vdwg.mxu0
    %2077 = vmatprep.subr.bf16.mxu0 %v1652
    %2078 = vmatpush1.bf16.msra.mxu0 %v1651
    %2079 = vmatprep.subr.bf16.mxu0 %v1654
    %2080 = vmatpush1.bf16.msra.mxu0 %v1653
    %2081 = vmatprep.subr.bf16.mxu0 %v1656
    %2082 = vmatpush1.bf16.msra.mxu0 %v1655
    %2083 = vmatprep.subr.bf16.mxu0 %v1658
    %2084 = vmatpush1.bf16.msra.mxu0 %v1657
    %2085 = vmatprep.subr.bf16.mxu0 %v1660
    %2086 = vmatpush1.bf16.msra.mxu0 %v1659
    %2087 = vmatprep.subr.bf16.mxu0 %v1662
    %2088 = vmatpush1.bf16.msra.mxu0 %v1661
    %2089 = vmatprep.subr.bf16.mxu0 %v1664
    %2090 = vmatpush1.bf16.msra.mxu0 %v1663
    %2091 = vmatprep.subr.bf16.mxu0 %v1666
    %2092 = vmatpush1.bf16.msra.mxu0 %v1665
    %2093 = vmatprep.subr.bf16.mxu0 %v1668
    %2094 = vmatpush1.bf16.msra.mxu0 %v1667
    %2095 = vmatprep.subr.bf16.mxu0 %v1670
    %2096 = vmatpush1.bf16.msra.mxu0 %v1669
    %2097 = vmatprep.subr.bf16.mxu0 %v1672
    %2098 = vmatpush1.bf16.msra.mxu0 %v1671
    %2099 = vmatprep.subr.bf16.mxu0 %v1674
    %2100 = vmatpush1.bf16.msra.mxu0 %v1673
    %2101 = vmatprep.subr.bf16.mxu0 %v1676
    %2102 = vmatpush1.bf16.msra.mxu0 %v1675
    %2103 = vmatprep.subr.bf16.mxu0 %v1678
    %2104 = vmatpush1.bf16.msra.mxu0 %v1677
    %2105 = vmatprep.subr.bf16.mxu0 %v1680
    %2106 = vmatpush1.bf16.msra.mxu0 %v1679
    %2107 = vmatprep.subr.bf16.mxu0 %v1682
    %2108 = vmatpush1.bf16.msra.mxu0 %v1681
    %2109 = vmatprep.mubr.bf16.mxu0 %v776
    %2110 = vmatmul.mubr.bf16.gmra.mrb[0].mxu0 %v759
    %v2111 = vpop.f32.mrb[0].mxu0
    %v2112 = vadd.f32 %v2059, %v2111
    %v2113 = vpop.f32.mrb[0].mxu0
    %v2114 = vadd.f32 %v2061, %v2113
    %v2115 = vpop.f32.mrb[0].mxu0
    %v2116 = vadd.f32 %v2063, %v2115
    %v2117 = vpop.f32.mrb[0].mxu0
    %v2118 = vadd.f32 %v2065, %v2117
    %2119 = vmatprep.mubr.bf16.mxu0 %v932
    %2120 = vmatmul.mubr.bf16.gmra.mrb[0].mxu0 %v923
    %v2121 = vpop.f32.mrb[0].mxu0
    %v2122 = vadd.f32 %v2069, %v2121
    %v2123 = vpop.f32.mrb[0].mxu0
    %v2124 = vadd.f32 %v2071, %v2123
    %v2125 = vpop.f32.mrb[0].mxu0
    %v2126 = vadd.f32 %v2073, %v2125
    %v2127 = vpop.f32.mrb[0].mxu0
    %v2128 = vadd.f32 %v2075, %v2127
    %2129 = vdwg.mxu0
    %2130 = vmatprep.subr.bf16.mxu0 %v1684
    %2131 = vmatpush1.bf16.msra.mxu0 %v1683
    %2132 = vmatprep.subr.bf16.mxu0 %v1686
    %2133 = vmatpush1.bf16.msra.mxu0 %v1685
    %2134 = vmatprep.subr.bf16.mxu0 %v1688
    %2135 = vmatpush1.bf16.msra.mxu0 %v1687
    %2136 = vmatprep.subr.bf16.mxu0 %v1690
    %2137 = vmatpush1.bf16.msra.mxu0 %v1689
    %2138 = vmatprep.subr.bf16.mxu0 %v1692
    %2139 = vmatpush1.bf16.msra.mxu0 %v1691
    %2140 = vmatprep.subr.bf16.mxu0 %v1694
    %2141 = vmatpush1.bf16.msra.mxu0 %v1693
    %2142 = vmatprep.subr.bf16.mxu0 %v1696
    %2143 = vmatpush1.bf16.msra.mxu0 %v1695
    %2144 = vmatprep.subr.bf16.mxu0 %v1698
    %2145 = vmatpush1.bf16.msra.mxu0 %v1697
    %2146 = vmatprep.subr.bf16.mxu0 %v1700
    %2147 = vmatpush1.bf16.msra.mxu0 %v1699
    %2148 = vmatprep.subr.bf16.mxu0 %v1702
    %2149 = vmatpush1.bf16.msra.mxu0 %v1701
    %2150 = vmatprep.subr.bf16.mxu0 %v1704
    %2151 = vmatpush1.bf16.msra.mxu0 %v1703
    %2152 = vmatprep.subr.bf16.mxu0 %v1706
    %2153 = vmatpush1.bf16.msra.mxu0 %v1705
    %2154 = vmatprep.subr.bf16.mxu0 %v1708
    %2155 = vmatpush1.bf16.msra.mxu0 %v1707
    %2156 = vmatprep.subr.bf16.mxu0 %v1710
    %2157 = vmatpush1.bf16.msra.mxu0 %v1709
    %2158 = vmatprep.subr.bf16.mxu0 %v1712
    %2159 = vmatpush1.bf16.msra.mxu0 %v1711
    %2160 = vmatprep.subr.bf16.mxu0 %v1714
    %2161 = vmatpush1.bf16.msra.mxu0 %v1713
    %2162 = vmatprep.mubr.bf16.mxu0 %v810
    %2163 = vmatmul.mubr.bf16.gmra.mrb[0].mxu0 %v793
    %v2164 = vpop.f32.mrb[0].mxu0
    %v2165 = vadd.f32 %v2112, %v2164
    %v2166 = vpop.f32.mrb[0].mxu0
    %v2167 = vadd.f32 %v2114, %v2166
    %v2168 = vpop.f32.mrb[0].mxu0
    %v2169 = vadd.f32 %v2116, %v2168
    %v2170 = vpop.f32.mrb[0].mxu0
    %v2171 = vadd.f32 %v2118, %v2170
    %2172 = vmatprep.mubr.bf16.mxu0 %v950
    %2173 = vmatmul.mubr.bf16.gmra.mrb[0].mxu0 %v941
    %v2174 = vpop.f32.mrb[0].mxu0
    %v2175 = vadd.f32 %v2122, %v2174
    %v2176 = vpop.f32.mrb[0].mxu0
    %v2177 = vadd.f32 %v2124, %v2176
    %v2178 = vpop.f32.mrb[0].mxu0
    %v2179 = vadd.f32 %v2126, %v2178
    %v2180 = vpop.f32.mrb[0].mxu0
    %v2181 = vadd.f32 %v2128, %v2180
    %2182 = vdwg.mxu0
    %2183 = vmatprep.subr.bf16.mxu0 %v1716
    %2184 = vmatpush1.bf16.msra.mxu0 %v1715
    %2185 = vmatprep.subr.bf16.mxu0 %v1718
    %2186 = vmatpush1.bf16.msra.mxu0 %v1717
    %2187 = vmatprep.subr.bf16.mxu0 %v1720
    %2188 = vmatpush1.bf16.msra.mxu0 %v1719
    %2189 = vmatprep.subr.bf16.mxu0 %v1722
    %2190 = vmatpush1.bf16.msra.mxu0 %v1721
    %2191 = vmatprep.subr.bf16.mxu0 %v1724
    %2192 = vmatpush1.bf16.msra.mxu0 %v1723
    %2193 = vmatprep.subr.bf16.mxu0 %v1726
    %2194 = vmatpush1.bf16.msra.mxu0 %v1725
    %2195 = vmatprep.subr.bf16.mxu0 %v1728
    %2196 = vmatpush1.bf16.msra.mxu0 %v1727
    %2197 = vmatprep.subr.bf16.mxu0 %v1730
    %2198 = vmatpush1.bf16.msra.mxu0 %v1729
    %2199 = vmatprep.subr.bf16.mxu0 %v1732
    %2200 = vmatpush1.bf16.msra.mxu0 %v1731
    %2201 = vmatprep.subr.bf16.mxu0 %v1734
    %2202 = vmatpush1.bf16.msra.mxu0 %v1733
    %2203 = vmatprep.subr.bf16.mxu0 %v1736
    %2204 = vmatpush1.bf16.msra.mxu0 %v1735
    %2205 = vmatprep.subr.bf16.mxu0 %v1738
    %2206 = vmatpush1.bf16.msra.mxu0 %v1737
    %2207 = vmatprep.subr.bf16.mxu0 %v1740
    %2208 = vmatpush1.bf16.msra.mxu0 %v1739
    %2209 = vmatprep.subr.bf16.mxu0 %v1742
    %2210 = vmatpush1.bf16.msra.mxu0 %v1741
    %2211 = vmatprep.subr.bf16.mxu0 %v1744
    %2212 = vmatpush1.bf16.msra.mxu0 %v1743
    %2213 = vmatprep.subr.bf16.mxu0 %v1746
    %2214 = vmatpush1.bf16.msra.mxu0 %v1745
    %2215 = vmatprep.mubr.bf16.mxu0 %v844
    %2216 = vmatmul.mubr.bf16.gmra.mrb[0].mxu0 %v827
    %v2217 = vpop.f32.mrb[0].mxu0
    %v2218 = vadd.f32 %v2165, %v2217
    %v2219 = vpop.f32.mrb[0].mxu0
    %v2220 = vadd.f32 %v2167, %v2219
    %v2221 = vpop.f32.mrb[0].mxu0
    %v2222 = vadd.f32 %v2169, %v2221
    %v2223 = vpop.f32.mrb[0].mxu0
    %v2224 = vadd.f32 %v2171, %v2223
    %2225 = vmatprep.mubr.bf16.mxu0 %v968
    %2226 = vmatmul.mubr.bf16.gmra.mrb[0].mxu0 %v959
    %v2227 = vpop.f32.mrb[0].mxu0
    %v2228 = vadd.f32 %v2175, %v2227
    %v2229 = vpop.f32.mrb[0].mxu0
    %v2230 = vadd.f32 %v2177, %v2229
    %v2231 = vpop.f32.mrb[0].mxu0
    %v2232 = vadd.f32 %v2179, %v2231
    %v2233 = vpop.f32.mrb[0].mxu0
    %v2234 = vadd.f32 %v2181, %v2233
    %2235 = vdwg.mxu0
    %2236 = vmatprep.subr.bf16.mxu0 %v1748
    %2237 = vmatpush1.bf16.msra.mxu0 %v1747
    %2238 = vmatprep.subr.bf16.mxu0 %v1750
    %2239 = vmatpush1.bf16.msra.mxu0 %v1749
    %2240 = vmatprep.subr.bf16.mxu0 %v1752
    %2241 = vmatpush1.bf16.msra.mxu0 %v1751
    %2242 = vmatprep.subr.bf16.mxu0 %v1754
    %2243 = vmatpush1.bf16.msra.mxu0 %v1753
    %2244 = vmatprep.subr.bf16.mxu0 %v1756
    %2245 = vmatpush1.bf16.msra.mxu0 %v1755
    %2246 = vmatprep.subr.bf16.mxu0 %v1758
    %2247 = vmatpush1.bf16.msra.mxu0 %v1757
    %2248 = vmatprep.subr.bf16.mxu0 %v1760
    %2249 = vmatpush1.bf16.msra.mxu0 %v1759
    %2250 = vmatprep.subr.bf16.mxu0 %v1762
    %2251 = vmatpush1.bf16.msra.mxu0 %v1761
    %2252 = vmatprep.subr.bf16.mxu0 %v1764
    %2253 = vmatpush1.bf16.msra.mxu0 %v1763
    %2254 = vmatprep.subr.bf16.mxu0 %v1766
    %2255 = vmatpush1.bf16.msra.mxu0 %v1765
    %2256 = vmatprep.subr.bf16.mxu0 %v1768
    %2257 = vmatpush1.bf16.msra.mxu0 %v1767
    %2258 = vmatprep.subr.bf16.mxu0 %v1770
    %2259 = vmatpush1.bf16.msra.mxu0 %v1769
    %2260 = vmatprep.subr.bf16.mxu0 %v1772
    %2261 = vmatpush1.bf16.msra.mxu0 %v1771
    %2262 = vmatprep.subr.bf16.mxu0 %v1774
    %2263 = vmatpush1.bf16.msra.mxu0 %v1773
    %2264 = vmatprep.subr.bf16.mxu0 %v1776
    %2265 = vmatpush1.bf16.msra.mxu0 %v1775
    %2266 = vmatprep.subr.bf16.mxu0 %v1778
    %2267 = vmatpush1.bf16.msra.mxu0 %v1777
    %2268 = vmatprep.mubr.bf16.mxu0 %v878
    %2269 = vmatmul.mubr.bf16.gmra.mrb[0].mxu0 %v861
    %v2270 = vpop.f32.mrb[0].mxu0
    %v2271 = vadd.f32 %v2218, %v2270
    %v2272 = vpop.f32.mrb[0].mxu0
    %v2273 = vadd.f32 %v2220, %v2272
    %v2274 = vpop.f32.mrb[0].mxu0
    %v2275 = vadd.f32 %v2222, %v2274
    %v2276 = vpop.f32.mrb[0].mxu0
    %v2277 = vadd.f32 %v2224, %v2276
    %2278 = vmatprep.mubr.bf16.mxu0 %v986
    %2279 = vmatmul.mubr.bf16.gmra.mrb[0].mxu0 %v977
    %v2280 = vpop.f32.mrb[0].mxu0
    %v2281 = vadd.f32 %v2228, %v2280
    %v2282 = vpop.f32.mrb[0].mxu0
    %v2283 = vadd.f32 %v2230, %v2282
    %v2284 = vpop.f32.mrb[0].mxu0
    %v2285 = vadd.f32 %v2232, %v2284
    %v2286 = vpop.f32.mrb[0].mxu0
    %v2287 = vadd.f32 %v2234, %v2286
    %2288 = vdwg.mxu0
    %v2289 = vadd.f32 %v2271, %v2275
    %v2290 = vadd.f32 %v2289, %v2281
    %v2291 = vadd.f32 %v2290, %v2285
    %v2292 = vrot.slane %v2291, 4
    %v2293 = vadd.f32 %v2291, %v2292
    %v2294 = vrot.slane %v2293, 2
    %v2295 = vadd.f32 %v2293, %v2294
    %v2296 = vrot.slane %v2295, 1
    %v2297 = vadd.f32 %v2295, %v2296
    %v2298 = vadd.f32 %v2273, %v2277
    %v2299 = vadd.f32 %v2298, %v2283
    %v2300 = vadd.f32 %v2299, %v2287
    %v2301 = vrot.slane %v2300, 4
    %v2302 = vadd.f32 %v2300, %v2301
    %v2303 = vrot.slane %v2302, 2
    %v2304 = vadd.f32 %v2302, %v2303
    %v2305 = vrot.slane %v2304, 1
    %v2306 = vadd.f32 %v2304, %v2305
    %v2307 = vmul.f32 %v2271, %v2271
    %v2308 = vmul.f32 %v2273, %v2273
    %v2309 = vmul.f32 %v2275, %v2275
    %v2310 = vmul.f32 %v2277, %v2277
    %v2311 = vmul.f32 %v2281, %v2281
    %v2312 = vmul.f32 %v2283, %v2283
    %v2313 = vmul.f32 %v2285, %v2285
    %v2314 = vmul.f32 %v2287, %v2287
    %v2315 = vadd.f32 %v2307, %v2309
    %v2316 = vadd.f32 %v2315, %v2311
    %v2317 = vadd.f32 %v2316, %v2313
    %v2318 = vrot.slane %v2317, 4
    %v2319 = vadd.f32 %v2317, %v2318
    %v2320 = vrot.slane %v2319, 2
    %v2321 = vadd.f32 %v2319, %v2320
    %v2322 = vrot.slane %v2321, 1
    %v2323 = vadd.f32 %v2321, %v2322
    %v2324 = vadd.f32 %v2308, %v2310
    %v2325 = vadd.f32 %v2324, %v2312
    %v2326 = vadd.f32 %v2325, %v2314
    %v2327 = vrot.slane %v2326, 4
    %v2328 = vadd.f32 %v2326, %v2327
    %v2329 = vrot.slane %v2328, 2
    %v2330 = vadd.f32 %v2328, %v2329
    %v2331 = vrot.slane %v2330, 1
    %v2332 = vadd.f32 %v2330, %v2331
    %vm2333 = vcmask 1040384
    %v2334 = vsel %vm2333, %v2297, %v2323
    %v2335 = vsel %vm2333, %v2306, %v2332
    %v2336 = vld [vmem:[%s4] sm:$0xff]
    %v2337 = vld [vmem:[%s4 + $0x8] sm:$0xff]
    %v2338 = vld [vmem:[%s4 + $0x10] sm:$0xff]
    %v2339 = vld [vmem:[%s4 + $0x18] sm:$0xff]
    %v2340 = vld [vmem:[%s4 + $0x20] sm:$0xff]
    %v2341 = vld [vmem:[%s4 + $0x28] sm:$0xff]
    %v2342 = vld [vmem:[%s4 + $0x30] sm:$0xff]
    %v2343 = vld [vmem:[%s4 + $0x38] sm:$0xff]
    %v2344 = vld [vmem:[%s4 + $0x40] sm:$0xff]
    %v2345 = vld [vmem:[%s4 + $0x48] sm:$0xff]
    %v2346 = vld [vmem:[%s4 + $0x50] sm:$0xff]
    %v2347 = vld [vmem:[%s4 + $0x58] sm:$0xff]
    %v2348 = vld [vmem:[%s4 + $0x60] sm:$0xff]
    %v2349 = vld [vmem:[%s4 + $0x68] sm:$0xff]
    %v2350 = vld [vmem:[%s4 + $0x70] sm:$0xff]
    %v2351 = vld [vmem:[%s4 + $0x78] sm:$0xff]
    %v2352 = vld [vmem:[%s4 + $0x80] sm:$0xff]
    %v2353 = vld [vmem:[%s4 + $0x88] sm:$0xff]
    %v2354 = vld [vmem:[%s4 + $0x90] sm:$0xff]
    %v2355 = vld [vmem:[%s4 + $0x98] sm:$0xff]
    %v2356 = vld [vmem:[%s4 + $0xa0] sm:$0xff]
    %v2357 = vld [vmem:[%s4 + $0xa8] sm:$0xff]
    %v2358 = vld [vmem:[%s4 + $0xb0] sm:$0xff]
    %v2359 = vld [vmem:[%s4 + $0xb8] sm:$0xff]
    %v2360 = vld [vmem:[%s4 + $0xc0] sm:$0xff]
    %v2361 = vld [vmem:[%s4 + $0xc8] sm:$0xff]
    %v2362 = vld [vmem:[%s4 + $0xd0] sm:$0xff]
    %v2363 = vld [vmem:[%s4 + $0xd8] sm:$0xff]
    %v2364 = vld [vmem:[%s4 + $0xe0] sm:$0xff]
    %v2365 = vld [vmem:[%s4 + $0xe8] sm:$0xff]
    %v2366 = vld [vmem:[%s4 + $0xf0] sm:$0xff]
    %v2367 = vld [vmem:[%s4 + $0xf8] sm:$0xff]
    %2368 = vmatprep.subr.mxu0 0.0
    %v2369 = vand.u32 %v2336, 4294901760
    %2370 = vmatpush1.msra.mxu0 %v2369
    %2371 = vmatprep.subr.mxu0 0.0
    %v2372 = vand.u32 %v2337, 4294901760
    %2373 = vmatpush1.msra.mxu0 %v2372
    %2374 = vmatprep.subr.mxu0 0.0
    %v2375 = vand.u32 %v2338, 4294901760
    %2376 = vmatpush1.msra.mxu0 %v2375
    %2377 = vmatprep.subr.mxu0 0.0
    %v2378 = vand.u32 %v2339, 4294901760
    %2379 = vmatpush1.msra.mxu0 %v2378
    %2380 = vmatprep.subr.mxu0 0.0
    %v2381 = vand.u32 %v2340, 4294901760
    %2382 = vmatpush1.msra.mxu0 %v2381
    %2383 = vmatprep.subr.mxu0 0.0
    %v2384 = vand.u32 %v2341, 4294901760
    %2385 = vmatpush1.msra.mxu0 %v2384
    %2386 = vmatprep.subr.mxu0 0.0
    %v2387 = vand.u32 %v2342, 4294901760
    %2388 = vmatpush1.msra.mxu0 %v2387
    %2389 = vmatprep.subr.mxu0 0.0
    %v2390 = vand.u32 %v2343, 4294901760
    %2391 = vmatpush1.msra.mxu0 %v2390
    %2392 = vmatprep.subr.mxu0 0.0
    %v2393 = vand.u32 %v2344, 4294901760
    %2394 = vmatpush1.msra.mxu0 %v2393
    %2395 = vmatprep.subr.mxu0 0.0
    %v2396 = vand.u32 %v2345, 4294901760
    %2397 = vmatpush1.msra.mxu0 %v2396
    %2398 = vmatprep.subr.mxu0 0.0
    %v2399 = vand.u32 %v2346, 4294901760
    %2400 = vmatpush1.msra.mxu0 %v2399
    %2401 = vmatprep.subr.mxu0 0.0
    %v2402 = vand.u32 %v2347, 4294901760
    %2403 = vmatpush1.msra.mxu0 %v2402
    %2404 = vmatprep.subr.mxu0 0.0
    %v2405 = vand.u32 %v2348, 4294901760
    %2406 = vmatpush1.msra.mxu0 %v2405
    %2407 = vmatprep.subr.mxu0 0.0
    %v2408 = vand.u32 %v2349, 4294901760
    %2409 = vmatpush1.msra.mxu0 %v2408
    %2410 = vmatprep.subr.mxu0 0.0
    %v2411 = vand.u32 %v2350, 4294901760
    %2412 = vmatpush1.msra.mxu0 %v2411
    %2413 = vmatprep.subr.mxu0 0.0
    %v2414 = vand.u32 %v2351, 4294901760
    %2415 = vmatpush1.msra.mxu0 %v2414
    %2416 = vmatprep.subr.mxu0 0.0
    %v2417 = vand.u32 %v2352, 4294901760
    %2418 = vmatpush1.msra.mxu0 %v2417
    %2419 = vmatprep.subr.mxu0 0.0
    %v2420 = vand.u32 %v2353, 4294901760
    %2421 = vmatpush1.msra.mxu0 %v2420
    %2422 = vmatprep.subr.mxu0 0.0
    %v2423 = vand.u32 %v2354, 4294901760
    %2424 = vmatpush1.msra.mxu0 %v2423
    %2425 = vmatprep.subr.mxu0 0.0
    %v2426 = vand.u32 %v2355, 4294901760
    %2427 = vmatpush1.msra.mxu0 %v2426
    %2428 = vmatprep.subr.mxu0 0.0
    %v2429 = vand.u32 %v2356, 4294901760
    %2430 = vmatpush1.msra.mxu0 %v2429
    %2431 = vmatprep.subr.mxu0 0.0
    %v2432 = vand.u32 %v2357, 4294901760
    %2433 = vmatpush1.msra.mxu0 %v2432
    %2434 = vmatprep.subr.mxu0 0.0
    %v2435 = vand.u32 %v2358, 4294901760
    %2436 = vmatpush1.msra.mxu0 %v2435
    %2437 = vmatprep.subr.mxu0 0.0
    %v2438 = vand.u32 %v2359, 4294901760
    %2439 = vmatpush1.msra.mxu0 %v2438
    %2440 = vmatprep.subr.mxu0 0.0
    %v2441 = vand.u32 %v2360, 4294901760
    %2442 = vmatpush1.msra.mxu0 %v2441
    %2443 = vmatprep.subr.mxu0 0.0
    %v2444 = vand.u32 %v2361, 4294901760
    %2445 = vmatpush1.msra.mxu0 %v2444
    %2446 = vmatprep.subr.mxu0 0.0
    %v2447 = vand.u32 %v2362, 4294901760
    %2448 = vmatpush1.msra.mxu0 %v2447
    %2449 = vmatprep.subr.mxu0 0.0
    %v2450 = vand.u32 %v2363, 4294901760
    %2451 = vmatpush1.msra.mxu0 %v2450
    %2452 = vmatprep.subr.mxu0 0.0
    %v2453 = vand.u32 %v2364, 4294901760
    %2454 = vmatpush1.msra.mxu0 %v2453
    %2455 = vmatprep.subr.mxu0 0.0
    %v2456 = vand.u32 %v2365, 4294901760
    %2457 = vmatpush1.msra.mxu0 %v2456
    %2458 = vmatprep.subr.mxu0 0.0
    %v2459 = vand.u32 %v2366, 4294901760
    %2460 = vmatpush1.msra.mxu0 %v2459
    %2461 = vmatprep.subr.mxu0 0.0
    %v2462 = vand.u32 %v2367, 4294901760
    %2463 = vmatpush1.msra.mxu0 %v2462
    %v2464 = vand.u32 %v2335, 4294901760
    %v2465 = vsub.f32 %v2335, %v2464
    %v2466 = vand.u32 %v2465, 4294901760
    %v2467 = vsub.f32 %v2465, %v2466
    %v2468 = vand.u32 %v2467, 4294901760
    %2469 = vmatprep.mubr.f32.mxu0 %v2468
    %v2470 = vand.u32 %v2334, 4294901760
    %v2471 = vsub.f32 %v2334, %v2470
    %v2472 = vand.u32 %v2471, 4294901760
    %v2473 = vsub.f32 %v2471, %v2472
    %v2474 = vand.u32 %v2473, 4294901760
    %2475 = vmatmul.mubr.f32.gmra.mrb[0].mxu0 %v2474
    %v2476 = vpop.f32.mrb[0].mxu0
    %v2477 = vadd.f32 0.0, %v2476
    %v2478 = vpop.f32.mrb[0].mxu0
    %2479 = vdwg.mxu0
    %2480 = vmatprep.subr.mxu0 0.0
    %v2481 = vand.u32 %v2336, 4294901760
    %v2482 = vsub.f32 %v2336, %v2481
    %v2483 = vand.u32 %v2482, 4294901760
    %v2484 = vsub.f32 %v2482, %v2483
    %v2485 = vand.u32 %v2484, 4294901760
    %2486 = vmatpush1.msra.mxu0 %v2485
    %2487 = vmatprep.subr.mxu0 0.0
    %v2488 = vand.u32 %v2337, 4294901760
    %v2489 = vsub.f32 %v2337, %v2488
    %v2490 = vand.u32 %v2489, 4294901760
    %v2491 = vsub.f32 %v2489, %v2490
    %v2492 = vand.u32 %v2491, 4294901760
    %2493 = vmatpush1.msra.mxu0 %v2492
    %2494 = vmatprep.subr.mxu0 0.0
    %v2495 = vand.u32 %v2338, 4294901760
    %v2496 = vsub.f32 %v2338, %v2495
    %v2497 = vand.u32 %v2496, 4294901760
    %v2498 = vsub.f32 %v2496, %v2497
    %v2499 = vand.u32 %v2498, 4294901760
    %2500 = vmatpush1.msra.mxu0 %v2499
    %2501 = vmatprep.subr.mxu0 0.0
    %v2502 = vand.u32 %v2339, 4294901760
    %v2503 = vsub.f32 %v2339, %v2502
    %v2504 = vand.u32 %v2503, 4294901760
    %v2505 = vsub.f32 %v2503, %v2504
    %v2506 = vand.u32 %v2505, 4294901760
    %2507 = vmatpush1.msra.mxu0 %v2506
    %2508 = vmatprep.subr.mxu0 0.0
    %v2509 = vand.u32 %v2340, 4294901760
    %v2510 = vsub.f32 %v2340, %v2509
    %v2511 = vand.u32 %v2510, 4294901760
    %v2512 = vsub.f32 %v2510, %v2511
    %v2513 = vand.u32 %v2512, 4294901760
    %2514 = vmatpush1.msra.mxu0 %v2513
    %2515 = vmatprep.subr.mxu0 0.0
    %v2516 = vand.u32 %v2341, 4294901760
    %v2517 = vsub.f32 %v2341, %v2516
    %v2518 = vand.u32 %v2517, 4294901760
    %v2519 = vsub.f32 %v2517, %v2518
    %v2520 = vand.u32 %v2519, 4294901760
    %2521 = vmatpush1.msra.mxu0 %v2520
    %2522 = vmatprep.subr.mxu0 0.0
    %v2523 = vand.u32 %v2342, 4294901760
    %v2524 = vsub.f32 %v2342, %v2523
    %v2525 = vand.u32 %v2524, 4294901760
    %v2526 = vsub.f32 %v2524, %v2525
    %v2527 = vand.u32 %v2526, 4294901760
    %2528 = vmatpush1.msra.mxu0 %v2527
    %2529 = vmatprep.subr.mxu0 0.0
    %v2530 = vand.u32 %v2343, 4294901760
    %v2531 = vsub.f32 %v2343, %v2530
    %v2532 = vand.u32 %v2531, 4294901760
    %v2533 = vsub.f32 %v2531, %v2532
    %v2534 = vand.u32 %v2533, 4294901760
    %2535 = vmatpush1.msra.mxu0 %v2534
    %2536 = vmatprep.subr.mxu0 0.0
    %v2537 = vand.u32 %v2344, 4294901760
    %v2538 = vsub.f32 %v2344, %v2537
    %v2539 = vand.u32 %v2538, 4294901760
    %v2540 = vsub.f32 %v2538, %v2539
    %v2541 = vand.u32 %v2540, 4294901760
    %2542 = vmatpush1.msra.mxu0 %v2541
    %2543 = vmatprep.subr.mxu0 0.0
    %v2544 = vand.u32 %v2345, 4294901760
    %v2545 = vsub.f32 %v2345, %v2544
    %v2546 = vand.u32 %v2545, 4294901760
    %v2547 = vsub.f32 %v2545, %v2546
    %v2548 = vand.u32 %v2547, 4294901760
    %2549 = vmatpush1.msra.mxu0 %v2548
    %2550 = vmatprep.subr.mxu0 0.0
    %v2551 = vand.u32 %v2346, 4294901760
    %v2552 = vsub.f32 %v2346, %v2551
    %v2553 = vand.u32 %v2552, 4294901760
    %v2554 = vsub.f32 %v2552, %v2553
    %v2555 = vand.u32 %v2554, 4294901760
    %2556 = vmatpush1.msra.mxu0 %v2555
    %2557 = vmatprep.subr.mxu0 0.0
    %v2558 = vand.u32 %v2347, 4294901760
    %v2559 = vsub.f32 %v2347, %v2558
    %v2560 = vand.u32 %v2559, 4294901760
    %v2561 = vsub.f32 %v2559, %v2560
    %v2562 = vand.u32 %v2561, 4294901760
    %2563 = vmatpush1.msra.mxu0 %v2562
    %2564 = vmatprep.subr.mxu0 0.0
    %v2565 = vand.u32 %v2348, 4294901760
    %v2566 = vsub.f32 %v2348, %v2565
    %v2567 = vand.u32 %v2566, 4294901760
    %v2568 = vsub.f32 %v2566, %v2567
    %v2569 = vand.u32 %v2568, 4294901760
    %2570 = vmatpush1.msra.mxu0 %v2569
    %2571 = vmatprep.subr.mxu0 0.0
    %v2572 = vand.u32 %v2349, 4294901760
    %v2573 = vsub.f32 %v2349, %v2572
    %v2574 = vand.u32 %v2573, 4294901760
    %v2575 = vsub.f32 %v2573, %v2574
    %v2576 = vand.u32 %v2575, 4294901760
    %2577 = vmatpush1.msra.mxu0 %v2576
    %2578 = vmatprep.subr.mxu0 0.0
    %v2579 = vand.u32 %v2350, 4294901760
    %v2580 = vsub.f32 %v2350, %v2579
    %v2581 = vand.u32 %v2580, 4294901760
    %v2582 = vsub.f32 %v2580, %v2581
    %v2583 = vand.u32 %v2582, 4294901760
    %2584 = vmatpush1.msra.mxu0 %v2583
    %2585 = vmatprep.subr.mxu0 0.0
    %v2586 = vand.u32 %v2351, 4294901760
    %v2587 = vsub.f32 %v2351, %v2586
    %v2588 = vand.u32 %v2587, 4294901760
    %v2589 = vsub.f32 %v2587, %v2588
    %v2590 = vand.u32 %v2589, 4294901760
    %2591 = vmatpush1.msra.mxu0 %v2590
    %2592 = vmatprep.subr.mxu0 0.0
    %v2593 = vand.u32 %v2352, 4294901760
    %v2594 = vsub.f32 %v2352, %v2593
    %v2595 = vand.u32 %v2594, 4294901760
    %v2596 = vsub.f32 %v2594, %v2595
    %v2597 = vand.u32 %v2596, 4294901760
    %2598 = vmatpush1.msra.mxu0 %v2597
    %2599 = vmatprep.subr.mxu0 0.0
    %v2600 = vand.u32 %v2353, 4294901760
    %v2601 = vsub.f32 %v2353, %v2600
    %v2602 = vand.u32 %v2601, 4294901760
    %v2603 = vsub.f32 %v2601, %v2602
    %v2604 = vand.u32 %v2603, 4294901760
    %2605 = vmatpush1.msra.mxu0 %v2604
    %2606 = vmatprep.subr.mxu0 0.0
    %v2607 = vand.u32 %v2354, 4294901760
    %v2608 = vsub.f32 %v2354, %v2607
    %v2609 = vand.u32 %v2608, 4294901760
    %v2610 = vsub.f32 %v2608, %v2609
    %v2611 = vand.u32 %v2610, 4294901760
    %2612 = vmatpush1.msra.mxu0 %v2611
    %2613 = vmatprep.subr.mxu0 0.0
    %v2614 = vand.u32 %v2355, 4294901760
    %v2615 = vsub.f32 %v2355, %v2614
    %v2616 = vand.u32 %v2615, 4294901760
    %v2617 = vsub.f32 %v2615, %v2616
    %v2618 = vand.u32 %v2617, 4294901760
    %2619 = vmatpush1.msra.mxu0 %v2618
    %2620 = vmatprep.subr.mxu0 0.0
    %v2621 = vand.u32 %v2356, 4294901760
    %v2622 = vsub.f32 %v2356, %v2621
    %v2623 = vand.u32 %v2622, 4294901760
    %v2624 = vsub.f32 %v2622, %v2623
    %v2625 = vand.u32 %v2624, 4294901760
    %2626 = vmatpush1.msra.mxu0 %v2625
    %2627 = vmatprep.subr.mxu0 0.0
    %v2628 = vand.u32 %v2357, 4294901760
    %v2629 = vsub.f32 %v2357, %v2628
    %v2630 = vand.u32 %v2629, 4294901760
    %v2631 = vsub.f32 %v2629, %v2630
    %v2632 = vand.u32 %v2631, 4294901760
    %2633 = vmatpush1.msra.mxu0 %v2632
    %2634 = vmatprep.subr.mxu0 0.0
    %v2635 = vand.u32 %v2358, 4294901760
    %v2636 = vsub.f32 %v2358, %v2635
    %v2637 = vand.u32 %v2636, 4294901760
    %v2638 = vsub.f32 %v2636, %v2637
    %v2639 = vand.u32 %v2638, 4294901760
    %2640 = vmatpush1.msra.mxu0 %v2639
    %2641 = vmatprep.subr.mxu0 0.0
    %v2642 = vand.u32 %v2359, 4294901760
    %v2643 = vsub.f32 %v2359, %v2642
    %v2644 = vand.u32 %v2643, 4294901760
    %v2645 = vsub.f32 %v2643, %v2644
    %v2646 = vand.u32 %v2645, 4294901760
    %2647 = vmatpush1.msra.mxu0 %v2646
    %2648 = vmatprep.subr.mxu0 0.0
    %v2649 = vand.u32 %v2360, 4294901760
    %v2650 = vsub.f32 %v2360, %v2649
    %v2651 = vand.u32 %v2650, 4294901760
    %v2652 = vsub.f32 %v2650, %v2651
    %v2653 = vand.u32 %v2652, 4294901760
    %2654 = vmatpush1.msra.mxu0 %v2653
    %2655 = vmatprep.subr.mxu0 0.0
    %v2656 = vand.u32 %v2361, 4294901760
    %v2657 = vsub.f32 %v2361, %v2656
    %v2658 = vand.u32 %v2657, 4294901760
    %v2659 = vsub.f32 %v2657, %v2658
    %v2660 = vand.u32 %v2659, 4294901760
    %2661 = vmatpush1.msra.mxu0 %v2660
    %2662 = vmatprep.subr.mxu0 0.0
    %v2663 = vand.u32 %v2362, 4294901760
    %v2664 = vsub.f32 %v2362, %v2663
    %v2665 = vand.u32 %v2664, 4294901760
    %v2666 = vsub.f32 %v2664, %v2665
    %v2667 = vand.u32 %v2666, 4294901760
    %2668 = vmatpush1.msra.mxu0 %v2667
    %2669 = vmatprep.subr.mxu0 0.0
    %v2670 = vand.u32 %v2363, 4294901760
    %v2671 = vsub.f32 %v2363, %v2670
    %v2672 = vand.u32 %v2671, 4294901760
    %v2673 = vsub.f32 %v2671, %v2672
    %v2674 = vand.u32 %v2673, 4294901760
    %2675 = vmatpush1.msra.mxu0 %v2674
    %2676 = vmatprep.subr.mxu0 0.0
    %v2677 = vand.u32 %v2364, 4294901760
    %v2678 = vsub.f32 %v2364, %v2677
    %v2679 = vand.u32 %v2678, 4294901760
    %v2680 = vsub.f32 %v2678, %v2679
    %v2681 = vand.u32 %v2680, 4294901760
    %2682 = vmatpush1.msra.mxu0 %v2681
    %2683 = vmatprep.subr.mxu0 0.0
    %v2684 = vand.u32 %v2365, 4294901760
    %v2685 = vsub.f32 %v2365, %v2684
    %v2686 = vand.u32 %v2685, 4294901760
    %v2687 = vsub.f32 %v2685, %v2686
    %v2688 = vand.u32 %v2687, 4294901760
    %2689 = vmatpush1.msra.mxu0 %v2688
    %2690 = vmatprep.subr.mxu0 0.0
    %v2691 = vand.u32 %v2366, 4294901760
    %v2692 = vsub.f32 %v2366, %v2691
    %v2693 = vand.u32 %v2692, 4294901760
    %v2694 = vsub.f32 %v2692, %v2693
    %v2695 = vand.u32 %v2694, 4294901760
    %2696 = vmatpush1.msra.mxu0 %v2695
    %2697 = vmatprep.subr.mxu0 0.0
    %v2698 = vand.u32 %v2367, 4294901760
    %v2699 = vsub.f32 %v2367, %v2698
    %v2700 = vand.u32 %v2699, 4294901760
    %v2701 = vsub.f32 %v2699, %v2700
    %v2702 = vand.u32 %v2701, 4294901760
    %2703 = vmatpush1.msra.mxu0 %v2702
    %v2704 = vand.u32 %v2335, 4294901760
    %2705 = vmatprep.mubr.f32.mxu0 %v2704
    %v2706 = vand.u32 %v2334, 4294901760
    %2707 = vmatmul.mubr.f32.gmra.mrb[0].mxu0 %v2706
    %v2708 = vpop.f32.mrb[0].mxu0
    %v2709 = vadd.f32 %v2477, %v2708
    %v2710 = vpop.f32.mrb[0].mxu0
    %2711 = vdwg.mxu0
    %2712 = vmatprep.subr.mxu0 0.0
    %v2713 = vand.u32 %v2336, 4294901760
    %v2714 = vsub.f32 %v2336, %v2713
    %2715 = vmatpush1.msra.mxu0 %v2714
    %2716 = vmatprep.subr.mxu0 0.0
    %v2717 = vand.u32 %v2337, 4294901760
    %v2718 = vsub.f32 %v2337, %v2717
    %2719 = vmatpush1.msra.mxu0 %v2718
    %2720 = vmatprep.subr.mxu0 0.0
    %v2721 = vand.u32 %v2338, 4294901760
    %v2722 = vsub.f32 %v2338, %v2721
    %2723 = vmatpush1.msra.mxu0 %v2722
    %2724 = vmatprep.subr.mxu0 0.0
    %v2725 = vand.u32 %v2339, 4294901760
    %v2726 = vsub.f32 %v2339, %v2725
    %2727 = vmatpush1.msra.mxu0 %v2726
    %2728 = vmatprep.subr.mxu0 0.0
    %v2729 = vand.u32 %v2340, 4294901760
    %v2730 = vsub.f32 %v2340, %v2729
    %2731 = vmatpush1.msra.mxu0 %v2730
    %2732 = vmatprep.subr.mxu0 0.0
    %v2733 = vand.u32 %v2341, 4294901760
    %v2734 = vsub.f32 %v2341, %v2733
    %2735 = vmatpush1.msra.mxu0 %v2734
    %2736 = vmatprep.subr.mxu0 0.0
    %v2737 = vand.u32 %v2342, 4294901760
    %v2738 = vsub.f32 %v2342, %v2737
    %2739 = vmatpush1.msra.mxu0 %v2738
    %2740 = vmatprep.subr.mxu0 0.0
    %v2741 = vand.u32 %v2343, 4294901760
    %v2742 = vsub.f32 %v2343, %v2741
    %2743 = vmatpush1.msra.mxu0 %v2742
    %2744 = vmatprep.subr.mxu0 0.0
    %v2745 = vand.u32 %v2344, 4294901760
    %v2746 = vsub.f32 %v2344, %v2745
    %2747 = vmatpush1.msra.mxu0 %v2746
    %2748 = vmatprep.subr.mxu0 0.0
    %v2749 = vand.u32 %v2345, 4294901760
    %v2750 = vsub.f32 %v2345, %v2749
    %2751 = vmatpush1.msra.mxu0 %v2750
    %2752 = vmatprep.subr.mxu0 0.0
    %v2753 = vand.u32 %v2346, 4294901760
    %v2754 = vsub.f32 %v2346, %v2753
    %2755 = vmatpush1.msra.mxu0 %v2754
    %2756 = vmatprep.subr.mxu0 0.0
    %v2757 = vand.u32 %v2347, 4294901760
    %v2758 = vsub.f32 %v2347, %v2757
    %2759 = vmatpush1.msra.mxu0 %v2758
    %2760 = vmatprep.subr.mxu0 0.0
    %v2761 = vand.u32 %v2348, 4294901760
    %v2762 = vsub.f32 %v2348, %v2761
    %2763 = vmatpush1.msra.mxu0 %v2762
    %2764 = vmatprep.subr.mxu0 0.0
    %v2765 = vand.u32 %v2349, 4294901760
    %v2766 = vsub.f32 %v2349, %v2765
    %2767 = vmatpush1.msra.mxu0 %v2766
    %2768 = vmatprep.subr.mxu0 0.0
    %v2769 = vand.u32 %v2350, 4294901760
    %v2770 = vsub.f32 %v2350, %v2769
    %2771 = vmatpush1.msra.mxu0 %v2770
    %2772 = vmatprep.subr.mxu0 0.0
    %v2773 = vand.u32 %v2351, 4294901760
    %v2774 = vsub.f32 %v2351, %v2773
    %2775 = vmatpush1.msra.mxu0 %v2774
    %2776 = vmatprep.subr.mxu0 0.0
    %v2777 = vand.u32 %v2352, 4294901760
    %v2778 = vsub.f32 %v2352, %v2777
    %2779 = vmatpush1.msra.mxu0 %v2778
    %2780 = vmatprep.subr.mxu0 0.0
    %v2781 = vand.u32 %v2353, 4294901760
    %v2782 = vsub.f32 %v2353, %v2781
    %2783 = vmatpush1.msra.mxu0 %v2782
    %2784 = vmatprep.subr.mxu0 0.0
    %v2785 = vand.u32 %v2354, 4294901760
    %v2786 = vsub.f32 %v2354, %v2785
    %2787 = vmatpush1.msra.mxu0 %v2786
    %2788 = vmatprep.subr.mxu0 0.0
    %v2789 = vand.u32 %v2355, 4294901760
    %v2790 = vsub.f32 %v2355, %v2789
    %2791 = vmatpush1.msra.mxu0 %v2790
    %2792 = vmatprep.subr.mxu0 0.0
    %v2793 = vand.u32 %v2356, 4294901760
    %v2794 = vsub.f32 %v2356, %v2793
    %2795 = vmatpush1.msra.mxu0 %v2794
    %2796 = vmatprep.subr.mxu0 0.0
    %v2797 = vand.u32 %v2357, 4294901760
    %v2798 = vsub.f32 %v2357, %v2797
    %2799 = vmatpush1.msra.mxu0 %v2798
    %2800 = vmatprep.subr.mxu0 0.0
    %v2801 = vand.u32 %v2358, 4294901760
    %v2802 = vsub.f32 %v2358, %v2801
    %2803 = vmatpush1.msra.mxu0 %v2802
    %2804 = vmatprep.subr.mxu0 0.0
    %v2805 = vand.u32 %v2359, 4294901760
    %v2806 = vsub.f32 %v2359, %v2805
    %2807 = vmatpush1.msra.mxu0 %v2806
    %2808 = vmatprep.subr.mxu0 0.0
    %v2809 = vand.u32 %v2360, 4294901760
    %v2810 = vsub.f32 %v2360, %v2809
    %2811 = vmatpush1.msra.mxu0 %v2810
    %2812 = vmatprep.subr.mxu0 0.0
    %v2813 = vand.u32 %v2361, 4294901760
    %v2814 = vsub.f32 %v2361, %v2813
    %2815 = vmatpush1.msra.mxu0 %v2814
    %2816 = vmatprep.subr.mxu0 0.0
    %v2817 = vand.u32 %v2362, 4294901760
    %v2818 = vsub.f32 %v2362, %v2817
    %2819 = vmatpush1.msra.mxu0 %v2818
    %2820 = vmatprep.subr.mxu0 0.0
    %v2821 = vand.u32 %v2363, 4294901760
    %v2822 = vsub.f32 %v2363, %v2821
    %2823 = vmatpush1.msra.mxu0 %v2822
    %2824 = vmatprep.subr.mxu0 0.0
    %v2825 = vand.u32 %v2364, 4294901760
    %v2826 = vsub.f32 %v2364, %v2825
    %2827 = vmatpush1.msra.mxu0 %v2826
    %2828 = vmatprep.subr.mxu0 0.0
    %v2829 = vand.u32 %v2365, 4294901760
    %v2830 = vsub.f32 %v2365, %v2829
    %2831 = vmatpush1.msra.mxu0 %v2830
    %2832 = vmatprep.subr.mxu0 0.0
    %v2833 = vand.u32 %v2366, 4294901760
    %v2834 = vsub.f32 %v2366, %v2833
    %2835 = vmatpush1.msra.mxu0 %v2834
    %2836 = vmatprep.subr.mxu0 0.0
    %v2837 = vand.u32 %v2367, 4294901760
    %v2838 = vsub.f32 %v2367, %v2837
    %2839 = vmatpush1.msra.mxu0 %v2838
    %v2840 = vand.u32 %v2335, 4294901760
    %v2841 = vsub.f32 %v2335, %v2840
    %2842 = vmatprep.mubr.f32.mxu0 %v2841
    %v2843 = vand.u32 %v2334, 4294901760
    %v2844 = vsub.f32 %v2334, %v2843
    %2845 = vmatmul.mubr.f32.gmra.mrb[0].mxu0 %v2844
    %v2846 = vpop.f32.mrb[0].mxu0
    %v2847 = vadd.f32 %v2709, %v2846
    %v2848 = vpop.f32.mrb[0].mxu0
    %2849 = vdwg.mxu0
    %2850 = vmatprep.subr.mxu0 0.0
    %v2851 = vand.u32 %v2336, 4294901760
    %2852 = vmatpush1.msra.mxu0 %v2851
    %2853 = vmatprep.subr.mxu0 0.0
    %v2854 = vand.u32 %v2337, 4294901760
    %2855 = vmatpush1.msra.mxu0 %v2854
    %2856 = vmatprep.subr.mxu0 0.0
    %v2857 = vand.u32 %v2338, 4294901760
    %2858 = vmatpush1.msra.mxu0 %v2857
    %2859 = vmatprep.subr.mxu0 0.0
    %v2860 = vand.u32 %v2339, 4294901760
    %2861 = vmatpush1.msra.mxu0 %v2860
    %2862 = vmatprep.subr.mxu0 0.0
    %v2863 = vand.u32 %v2340, 4294901760
    %2864 = vmatpush1.msra.mxu0 %v2863
    %2865 = vmatprep.subr.mxu0 0.0
    %v2866 = vand.u32 %v2341, 4294901760
    %2867 = vmatpush1.msra.mxu0 %v2866
    %2868 = vmatprep.subr.mxu0 0.0
    %v2869 = vand.u32 %v2342, 4294901760
    %2870 = vmatpush1.msra.mxu0 %v2869
    %2871 = vmatprep.subr.mxu0 0.0
    %v2872 = vand.u32 %v2343, 4294901760
    %2873 = vmatpush1.msra.mxu0 %v2872
    %2874 = vmatprep.subr.mxu0 0.0
    %v2875 = vand.u32 %v2344, 4294901760
    %2876 = vmatpush1.msra.mxu0 %v2875
    %2877 = vmatprep.subr.mxu0 0.0
    %v2878 = vand.u32 %v2345, 4294901760
    %2879 = vmatpush1.msra.mxu0 %v2878
    %2880 = vmatprep.subr.mxu0 0.0
    %v2881 = vand.u32 %v2346, 4294901760
    %2882 = vmatpush1.msra.mxu0 %v2881
    %2883 = vmatprep.subr.mxu0 0.0
    %v2884 = vand.u32 %v2347, 4294901760
    %2885 = vmatpush1.msra.mxu0 %v2884
    %2886 = vmatprep.subr.mxu0 0.0
    %v2887 = vand.u32 %v2348, 4294901760
    %2888 = vmatpush1.msra.mxu0 %v2887
    %2889 = vmatprep.subr.mxu0 0.0
    %v2890 = vand.u32 %v2349, 4294901760
    %2891 = vmatpush1.msra.mxu0 %v2890
    %2892 = vmatprep.subr.mxu0 0.0
    %v2893 = vand.u32 %v2350, 4294901760
    %2894 = vmatpush1.msra.mxu0 %v2893
    %2895 = vmatprep.subr.mxu0 0.0
    %v2896 = vand.u32 %v2351, 4294901760
    %2897 = vmatpush1.msra.mxu0 %v2896
    %2898 = vmatprep.subr.mxu0 0.0
    %v2899 = vand.u32 %v2352, 4294901760
    %2900 = vmatpush1.msra.mxu0 %v2899
    %2901 = vmatprep.subr.mxu0 0.0
    %v2902 = vand.u32 %v2353, 4294901760
    %2903 = vmatpush1.msra.mxu0 %v2902
    %2904 = vmatprep.subr.mxu0 0.0
    %v2905 = vand.u32 %v2354, 4294901760
    %2906 = vmatpush1.msra.mxu0 %v2905
    %2907 = vmatprep.subr.mxu0 0.0
    %v2908 = vand.u32 %v2355, 4294901760
    %2909 = vmatpush1.msra.mxu0 %v2908
    %2910 = vmatprep.subr.mxu0 0.0
    %v2911 = vand.u32 %v2356, 4294901760
    %2912 = vmatpush1.msra.mxu0 %v2911
    %2913 = vmatprep.subr.mxu0 0.0
    %v2914 = vand.u32 %v2357, 4294901760
    %2915 = vmatpush1.msra.mxu0 %v2914
    %2916 = vmatprep.subr.mxu0 0.0
    %v2917 = vand.u32 %v2358, 4294901760
    %2918 = vmatpush1.msra.mxu0 %v2917
    %2919 = vmatprep.subr.mxu0 0.0
    %v2920 = vand.u32 %v2359, 4294901760
    %2921 = vmatpush1.msra.mxu0 %v2920
    %2922 = vmatprep.subr.mxu0 0.0
    %v2923 = vand.u32 %v2360, 4294901760
    %2924 = vmatpush1.msra.mxu0 %v2923
    %2925 = vmatprep.subr.mxu0 0.0
    %v2926 = vand.u32 %v2361, 4294901760
    %2927 = vmatpush1.msra.mxu0 %v2926
    %2928 = vmatprep.subr.mxu0 0.0
    %v2929 = vand.u32 %v2362, 4294901760
    %2930 = vmatpush1.msra.mxu0 %v2929
    %2931 = vmatprep.subr.mxu0 0.0
    %v2932 = vand.u32 %v2363, 4294901760
    %2933 = vmatpush1.msra.mxu0 %v2932
    %2934 = vmatprep.subr.mxu0 0.0
    %v2935 = vand.u32 %v2364, 4294901760
    %2936 = vmatpush1.msra.mxu0 %v2935
    %2937 = vmatprep.subr.mxu0 0.0
    %v2938 = vand.u32 %v2365, 4294901760
    %2939 = vmatpush1.msra.mxu0 %v2938
    %2940 = vmatprep.subr.mxu0 0.0
    %v2941 = vand.u32 %v2366, 4294901760
    %2942 = vmatpush1.msra.mxu0 %v2941
    %2943 = vmatprep.subr.mxu0 0.0
    %v2944 = vand.u32 %v2367, 4294901760
    %2945 = vmatpush1.msra.mxu0 %v2944
    %v2946 = vand.u32 %v2335, 4294901760
    %v2947 = vsub.f32 %v2335, %v2946
    %v2948 = vand.u32 %v2947, 4294901760
    %2949 = vmatprep.mubr.f32.mxu0 %v2948
    %v2950 = vand.u32 %v2334, 4294901760
    %v2951 = vsub.f32 %v2334, %v2950
    %v2952 = vand.u32 %v2951, 4294901760
    %2953 = vmatmul.mubr.f32.gmra.mrb[0].mxu0 %v2952
    %v2954 = vpop.f32.mrb[0].mxu0
    %v2955 = vadd.f32 %v2847, %v2954
    %v2956 = vpop.f32.mrb[0].mxu0
    %2957 = vdwg.mxu0
    %2958 = vmatprep.subr.mxu0 0.0
    %v2959 = vand.u32 %v2336, 4294901760
    %v2960 = vsub.f32 %v2336, %v2959
    %v2961 = vand.u32 %v2960, 4294901760
    %2962 = vmatpush1.msra.mxu0 %v2961
    %2963 = vmatprep.subr.mxu0 0.0
    %v2964 = vand.u32 %v2337, 4294901760
    %v2965 = vsub.f32 %v2337, %v2964
    %v2966 = vand.u32 %v2965, 4294901760
    %2967 = vmatpush1.msra.mxu0 %v2966
    %2968 = vmatprep.subr.mxu0 0.0
    %v2969 = vand.u32 %v2338, 4294901760
    %v2970 = vsub.f32 %v2338, %v2969
    %v2971 = vand.u32 %v2970, 4294901760
    %2972 = vmatpush1.msra.mxu0 %v2971
    %2973 = vmatprep.subr.mxu0 0.0
    %v2974 = vand.u32 %v2339, 4294901760
    %v2975 = vsub.f32 %v2339, %v2974
    %v2976 = vand.u32 %v2975, 4294901760
    %2977 = vmatpush1.msra.mxu0 %v2976
    %2978 = vmatprep.subr.mxu0 0.0
    %v2979 = vand.u32 %v2340, 4294901760
    %v2980 = vsub.f32 %v2340, %v2979
    %v2981 = vand.u32 %v2980, 4294901760
    %2982 = vmatpush1.msra.mxu0 %v2981
    %2983 = vmatprep.subr.mxu0 0.0
    %v2984 = vand.u32 %v2341, 4294901760
    %v2985 = vsub.f32 %v2341, %v2984
    %v2986 = vand.u32 %v2985, 4294901760
    %2987 = vmatpush1.msra.mxu0 %v2986
    %2988 = vmatprep.subr.mxu0 0.0
    %v2989 = vand.u32 %v2342, 4294901760
    %v2990 = vsub.f32 %v2342, %v2989
    %v2991 = vand.u32 %v2990, 4294901760
    %2992 = vmatpush1.msra.mxu0 %v2991
    %2993 = vmatprep.subr.mxu0 0.0
    %v2994 = vand.u32 %v2343, 4294901760
    %v2995 = vsub.f32 %v2343, %v2994
    %v2996 = vand.u32 %v2995, 4294901760
    %2997 = vmatpush1.msra.mxu0 %v2996
    %2998 = vmatprep.subr.mxu0 0.0
    %v2999 = vand.u32 %v2344, 4294901760
    %v3000 = vsub.f32 %v2344, %v2999
    %v3001 = vand.u32 %v3000, 4294901760
    %3002 = vmatpush1.msra.mxu0 %v3001
    %3003 = vmatprep.subr.mxu0 0.0
    %v3004 = vand.u32 %v2345, 4294901760
    %v3005 = vsub.f32 %v2345, %v3004
    %v3006 = vand.u32 %v3005, 4294901760
    %3007 = vmatpush1.msra.mxu0 %v3006
    %3008 = vmatprep.subr.mxu0 0.0
    %v3009 = vand.u32 %v2346, 4294901760
    %v3010 = vsub.f32 %v2346, %v3009
    %v3011 = vand.u32 %v3010, 4294901760
    %3012 = vmatpush1.msra.mxu0 %v3011
    %3013 = vmatprep.subr.mxu0 0.0
    %v3014 = vand.u32 %v2347, 4294901760
    %v3015 = vsub.f32 %v2347, %v3014
    %v3016 = vand.u32 %v3015, 4294901760
    %3017 = vmatpush1.msra.mxu0 %v3016
    %3018 = vmatprep.subr.mxu0 0.0
    %v3019 = vand.u32 %v2348, 4294901760
    %v3020 = vsub.f32 %v2348, %v3019
    %v3021 = vand.u32 %v3020, 4294901760
    %3022 = vmatpush1.msra.mxu0 %v3021
    %3023 = vmatprep.subr.mxu0 0.0
    %v3024 = vand.u32 %v2349, 4294901760
    %v3025 = vsub.f32 %v2349, %v3024
    %v3026 = vand.u32 %v3025, 4294901760
    %3027 = vmatpush1.msra.mxu0 %v3026
    %3028 = vmatprep.subr.mxu0 0.0
    %v3029 = vand.u32 %v2350, 4294901760
    %v3030 = vsub.f32 %v2350, %v3029
    %v3031 = vand.u32 %v3030, 4294901760
    %3032 = vmatpush1.msra.mxu0 %v3031
    %3033 = vmatprep.subr.mxu0 0.0
    %v3034 = vand.u32 %v2351, 4294901760
    %v3035 = vsub.f32 %v2351, %v3034
    %v3036 = vand.u32 %v3035, 4294901760
    %3037 = vmatpush1.msra.mxu0 %v3036
    %3038 = vmatprep.subr.mxu0 0.0
    %v3039 = vand.u32 %v2352, 4294901760
    %v3040 = vsub.f32 %v2352, %v3039
    %v3041 = vand.u32 %v3040, 4294901760
    %3042 = vmatpush1.msra.mxu0 %v3041
    %3043 = vmatprep.subr.mxu0 0.0
    %v3044 = vand.u32 %v2353, 4294901760
    %v3045 = vsub.f32 %v2353, %v3044
    %v3046 = vand.u32 %v3045, 4294901760
    %3047 = vmatpush1.msra.mxu0 %v3046
    %3048 = vmatprep.subr.mxu0 0.0
    %v3049 = vand.u32 %v2354, 4294901760
    %v3050 = vsub.f32 %v2354, %v3049
    %v3051 = vand.u32 %v3050, 4294901760
    %3052 = vmatpush1.msra.mxu0 %v3051
    %3053 = vmatprep.subr.mxu0 0.0
    %v3054 = vand.u32 %v2355, 4294901760
    %v3055 = vsub.f32 %v2355, %v3054
    %v3056 = vand.u32 %v3055, 4294901760
    %3057 = vmatpush1.msra.mxu0 %v3056
    %3058 = vmatprep.subr.mxu0 0.0
    %v3059 = vand.u32 %v2356, 4294901760
    %v3060 = vsub.f32 %v2356, %v3059
    %v3061 = vand.u32 %v3060, 4294901760
    %3062 = vmatpush1.msra.mxu0 %v3061
    %3063 = vmatprep.subr.mxu0 0.0
    %v3064 = vand.u32 %v2357, 4294901760
    %v3065 = vsub.f32 %v2357, %v3064
    %v3066 = vand.u32 %v3065, 4294901760
    %3067 = vmatpush1.msra.mxu0 %v3066
    %3068 = vmatprep.subr.mxu0 0.0
    %v3069 = vand.u32 %v2358, 4294901760
    %v3070 = vsub.f32 %v2358, %v3069
    %v3071 = vand.u32 %v3070, 4294901760
    %3072 = vmatpush1.msra.mxu0 %v3071
    %3073 = vmatprep.subr.mxu0 0.0
    %v3074 = vand.u32 %v2359, 4294901760
    %v3075 = vsub.f32 %v2359, %v3074
    %v3076 = vand.u32 %v3075, 4294901760
    %3077 = vmatpush1.msra.mxu0 %v3076
    %3078 = vmatprep.subr.mxu0 0.0
    %v3079 = vand.u32 %v2360, 4294901760
    %v3080 = vsub.f32 %v2360, %v3079
    %v3081 = vand.u32 %v3080, 4294901760
    %3082 = vmatpush1.msra.mxu0 %v3081
    %3083 = vmatprep.subr.mxu0 0.0
    %v3084 = vand.u32 %v2361, 4294901760
    %v3085 = vsub.f32 %v2361, %v3084
    %v3086 = vand.u32 %v3085, 4294901760
    %3087 = vmatpush1.msra.mxu0 %v3086
    %3088 = vmatprep.subr.mxu0 0.0
    %v3089 = vand.u32 %v2362, 4294901760
    %v3090 = vsub.f32 %v2362, %v3089
    %v3091 = vand.u32 %v3090, 4294901760
    %3092 = vmatpush1.msra.mxu0 %v3091
    %3093 = vmatprep.subr.mxu0 0.0
    %v3094 = vand.u32 %v2363, 4294901760
    %v3095 = vsub.f32 %v2363, %v3094
    %v3096 = vand.u32 %v3095, 4294901760
    %3097 = vmatpush1.msra.mxu0 %v3096
    %3098 = vmatprep.subr.mxu0 0.0
    %v3099 = vand.u32 %v2364, 4294901760
    %v3100 = vsub.f32 %v2364, %v3099
    %v3101 = vand.u32 %v3100, 4294901760
    %3102 = vmatpush1.msra.mxu0 %v3101
    %3103 = vmatprep.subr.mxu0 0.0
    %v3104 = vand.u32 %v2365, 4294901760
    %v3105 = vsub.f32 %v2365, %v3104
    %v3106 = vand.u32 %v3105, 4294901760
    %3107 = vmatpush1.msra.mxu0 %v3106
    %3108 = vmatprep.subr.mxu0 0.0
    %v3109 = vand.u32 %v2366, 4294901760
    %v3110 = vsub.f32 %v2366, %v3109
    %v3111 = vand.u32 %v3110, 4294901760
    %3112 = vmatpush1.msra.mxu0 %v3111
    %3113 = vmatprep.subr.mxu0 0.0
    %v3114 = vand.u32 %v2367, 4294901760
    %v3115 = vsub.f32 %v2367, %v3114
    %v3116 = vand.u32 %v3115, 4294901760
    %3117 = vmatpush1.msra.mxu0 %v3116
    %v3118 = vand.u32 %v2335, 4294901760
    %3119 = vmatprep.mubr.f32.mxu0 %v3118
    %v3120 = vand.u32 %v2334, 4294901760
    %3121 = vmatmul.mubr.f32.gmra.mrb[0].mxu0 %v3120
    %v3122 = vpop.f32.mrb[0].mxu0
    %v3123 = vadd.f32 %v2955, %v3122
    %v3124 = vpop.f32.mrb[0].mxu0
    %3125 = vdwg.mxu0
    %3126 = vmatprep.subr.mxu0 0.0
    %v3127 = vand.u32 %v2336, 4294901760
    %3128 = vmatpush1.msra.mxu0 %v3127
    %3129 = vmatprep.subr.mxu0 0.0
    %v3130 = vand.u32 %v2337, 4294901760
    %3131 = vmatpush1.msra.mxu0 %v3130
    %3132 = vmatprep.subr.mxu0 0.0
    %v3133 = vand.u32 %v2338, 4294901760
    %3134 = vmatpush1.msra.mxu0 %v3133
    %3135 = vmatprep.subr.mxu0 0.0
    %v3136 = vand.u32 %v2339, 4294901760
    %3137 = vmatpush1.msra.mxu0 %v3136
    %3138 = vmatprep.subr.mxu0 0.0
    %v3139 = vand.u32 %v2340, 4294901760
    %3140 = vmatpush1.msra.mxu0 %v3139
    %3141 = vmatprep.subr.mxu0 0.0
    %v3142 = vand.u32 %v2341, 4294901760
    %3143 = vmatpush1.msra.mxu0 %v3142
    %3144 = vmatprep.subr.mxu0 0.0
    %v3145 = vand.u32 %v2342, 4294901760
    %3146 = vmatpush1.msra.mxu0 %v3145
    %3147 = vmatprep.subr.mxu0 0.0
    %v3148 = vand.u32 %v2343, 4294901760
    %3149 = vmatpush1.msra.mxu0 %v3148
    %3150 = vmatprep.subr.mxu0 0.0
    %v3151 = vand.u32 %v2344, 4294901760
    %3152 = vmatpush1.msra.mxu0 %v3151
    %3153 = vmatprep.subr.mxu0 0.0
    %v3154 = vand.u32 %v2345, 4294901760
    %3155 = vmatpush1.msra.mxu0 %v3154
    %3156 = vmatprep.subr.mxu0 0.0
    %v3157 = vand.u32 %v2346, 4294901760
    %3158 = vmatpush1.msra.mxu0 %v3157
    %3159 = vmatprep.subr.mxu0 0.0
    %v3160 = vand.u32 %v2347, 4294901760
    %3161 = vmatpush1.msra.mxu0 %v3160
    %3162 = vmatprep.subr.mxu0 0.0
    %v3163 = vand.u32 %v2348, 4294901760
    %3164 = vmatpush1.msra.mxu0 %v3163
    %3165 = vmatprep.subr.mxu0 0.0
    %v3166 = vand.u32 %v2349, 4294901760
    %3167 = vmatpush1.msra.mxu0 %v3166
    %3168 = vmatprep.subr.mxu0 0.0
    %v3169 = vand.u32 %v2350, 4294901760
    %3170 = vmatpush1.msra.mxu0 %v3169
    %3171 = vmatprep.subr.mxu0 0.0
    %v3172 = vand.u32 %v2351, 4294901760
    %3173 = vmatpush1.msra.mxu0 %v3172
    %3174 = vmatprep.subr.mxu0 0.0
    %v3175 = vand.u32 %v2352, 4294901760
    %3176 = vmatpush1.msra.mxu0 %v3175
    %3177 = vmatprep.subr.mxu0 0.0
    %v3178 = vand.u32 %v2353, 4294901760
    %3179 = vmatpush1.msra.mxu0 %v3178
    %3180 = vmatprep.subr.mxu0 0.0
    %v3181 = vand.u32 %v2354, 4294901760
    %3182 = vmatpush1.msra.mxu0 %v3181
    %3183 = vmatprep.subr.mxu0 0.0
    %v3184 = vand.u32 %v2355, 4294901760
    %3185 = vmatpush1.msra.mxu0 %v3184
    %3186 = vmatprep.subr.mxu0 0.0
    %v3187 = vand.u32 %v2356, 4294901760
    %3188 = vmatpush1.msra.mxu0 %v3187
    %3189 = vmatprep.subr.mxu0 0.0
    %v3190 = vand.u32 %v2357, 4294901760
    %3191 = vmatpush1.msra.mxu0 %v3190
    %3192 = vmatprep.subr.mxu0 0.0
    %v3193 = vand.u32 %v2358, 4294901760
    %3194 = vmatpush1.msra.mxu0 %v3193
    %3195 = vmatprep.subr.mxu0 0.0
    %v3196 = vand.u32 %v2359, 4294901760
    %3197 = vmatpush1.msra.mxu0 %v3196
    %3198 = vmatprep.subr.mxu0 0.0
    %v3199 = vand.u32 %v2360, 4294901760
    %3200 = vmatpush1.msra.mxu0 %v3199
    %3201 = vmatprep.subr.mxu0 0.0
    %v3202 = vand.u32 %v2361, 4294901760
    %3203 = vmatpush1.msra.mxu0 %v3202
    %3204 = vmatprep.subr.mxu0 0.0
    %v3205 = vand.u32 %v2362, 4294901760
    %3206 = vmatpush1.msra.mxu0 %v3205
    %3207 = vmatprep.subr.mxu0 0.0
    %v3208 = vand.u32 %v2363, 4294901760
    %3209 = vmatpush1.msra.mxu0 %v3208
    %3210 = vmatprep.subr.mxu0 0.0
    %v3211 = vand.u32 %v2364, 4294901760
    %3212 = vmatpush1.msra.mxu0 %v3211
    %3213 = vmatprep.subr.mxu0 0.0
    %v3214 = vand.u32 %v2365, 4294901760
    %3215 = vmatpush1.msra.mxu0 %v3214
    %3216 = vmatprep.subr.mxu0 0.0
    %v3217 = vand.u32 %v2366, 4294901760
    %3218 = vmatpush1.msra.mxu0 %v3217
    %3219 = vmatprep.subr.mxu0 0.0
    %v3220 = vand.u32 %v2367, 4294901760
    %3221 = vmatpush1.msra.mxu0 %v3220
    %v3222 = vand.u32 %v2335, 4294901760
    %3223 = vmatprep.mubr.f32.mxu0 %v3222
    %v3224 = vand.u32 %v2334, 4294901760
    %3225 = vmatmul.mubr.f32.gmra.mrb[0].mxu0 %v3224
    %v3226 = vpop.f32.mrb[0].mxu0
    %v3227 = vadd.f32 %v3123, %v3226
    %v3228 = vpop.f32.mrb[0].mxu0
    %3229 = vdwg.mxu0
    %v3230 = vmul.f32 %v3227, 0.001953125
    %v3231 = vmul.f32 %v3230, %v3230
    %v3233 = vrot.slane %v3231, 7
    %v3235 = vsub.f32 %v3230, %v3233
    %v3236 = vmax.f32 %v3235, 0.0
    %v3237 = vld [vmem:[%s2] sm:$0x1]
    %v3238 = vadd.f32 %v3236, 1e-05
    %v3239 = vrsqrt.pop %v3238
    %v3242 = vunpack.c.l.s4 1966171168
    %v3243 = vunpack.c.0.s8 %v3242
    %v3244 = vlaneseq
    %v3245 = vshrl.u32 %v3244, 7
    %v3246 = vsub.s32 %v3243, %v3245
    %v3247 = vrot.slane %v3239, %v3246
    %v3248 = vcombine.high %v3247, %v3247
    %v3250 = vunpack.c.l.s4 1966171168
    %v3251 = vunpack.c.0.s8 %v3250
    %v3252 = vlaneseq
    %v3253 = vshrl.u32 %v3252, 7
    %v3254 = vsub.s32 %v3251, %v3253
    %v3255 = vrot.slane %v3248, %v3254
    %v3257 = vmul.f32 %v3237, %v3255
    %v3258 = vld [vmem:[%s3] sm:$0x1]
    %v3259 = vmul.f32 %v3230, %v3257
    %v3260 = vsub.f32 %v3258, %v3259
    %v3262 = vlaneseq
    %v3263 = vshrl.u32 %v3262, 7
    %v3264 = vsub.s32 0, %v3263
    %v3265 = vrot.slane %v3260, %v3264
    %v3267 = vsel %vm2333, %v3257, %v3265
    %v3268 = vld [vmem:[%s5] sm:$0xff]
    %v3269 = vld [vmem:[%s5 + $0x8] sm:$0xff]
    %v3270 = vld [vmem:[%s5 + $0x10] sm:$0xff]
    %v3271 = vld [vmem:[%s5 + $0x18] sm:$0xff]
    %vm3272 = vcmask 130048
    %v3274 = vsel %vm3272, %v3267, 0
    %v3276 = vand.u32 %v3269, 4294901760
    %3277 = vmatprep.subr.mxu0 %v3276
    %v3278 = vand.u32 %v3268, 4294901760
    %3279 = vmatpush1.msra.mxu0 %v3278
    %v3280 = vand.u32 %v3271, 4294901760
    %3281 = vmatprep.subr.mxu0 %v3280
    %v3282 = vand.u32 %v3270, 4294901760
    %3283 = vmatpush1.msra.mxu0 %v3282
    %3284 = vmatprep.subr.mxu0 0.0
    %3285 = vmatpush1.msra.mxu0 0.0
    %3286 = vmatprep.subr.mxu0 0.0
    %3287 = vmatpush1.msra.mxu0 0.0
    %3288 = vmatprep.subr.mxu0 0.0
    %3289 = vmatpush1.msra.mxu0 0.0
    %3290 = vmatprep.subr.mxu0 0.0
    %3291 = vmatpush1.msra.mxu0 0.0
    %3292 = vmatprep.subr.mxu0 0.0
    %3293 = vmatpush1.msra.mxu0 0.0
    %3294 = vmatprep.subr.mxu0 0.0
    %3295 = vmatpush1.msra.mxu0 0.0
    %3296 = vmatprep.subr.mxu0 0.0
    %3297 = vmatpush1.msra.mxu0 0.0
    %3298 = vmatprep.subr.mxu0 0.0
    %3299 = vmatpush1.msra.mxu0 0.0
    %3300 = vmatprep.subr.mxu0 0.0
    %3301 = vmatpush1.msra.mxu0 0.0
    %3302 = vmatprep.subr.mxu0 0.0
    %3303 = vmatpush1.msra.mxu0 0.0
    %3304 = vmatprep.subr.mxu0 0.0
    %3305 = vmatpush1.msra.mxu0 0.0
    %3306 = vmatprep.subr.mxu0 0.0
    %3307 = vmatpush1.msra.mxu0 0.0
    %3308 = vmatprep.subr.mxu0 0.0
    %3309 = vmatpush1.msra.mxu0 0.0
    %3310 = vmatprep.subr.mxu0 0.0
    %3311 = vmatpush1.msra.mxu0 0.0
    %3312 = vmatprep.subr.mxu0 0.0
    %3313 = vmatpush1.msra.mxu0 0.0
    %3314 = vmatprep.subr.mxu0 0.0
    %3315 = vmatpush1.msra.mxu0 0.0
    %3316 = vmatprep.subr.mxu0 0.0
    %3317 = vmatpush1.msra.mxu0 0.0
    %3318 = vmatprep.subr.mxu0 0.0
    %3319 = vmatpush1.msra.mxu0 0.0
    %3320 = vmatprep.subr.mxu0 0.0
    %3321 = vmatpush1.msra.mxu0 0.0
    %3322 = vmatprep.subr.mxu0 0.0
    %3323 = vmatpush1.msra.mxu0 0.0
    %3324 = vmatprep.subr.mxu0 0.0
    %3325 = vmatpush1.msra.mxu0 0.0
    %3326 = vmatprep.subr.mxu0 0.0
    %3327 = vmatpush1.msra.mxu0 0.0
    %3328 = vmatprep.subr.mxu0 0.0
    %3329 = vmatpush1.msra.mxu0 0.0
    %3330 = vmatprep.subr.mxu0 0.0
    %3331 = vmatpush1.msra.mxu0 0.0
    %3332 = vmatprep.subr.mxu0 0.0
    %3333 = vmatpush1.msra.mxu0 0.0
    %3334 = vmatprep.subr.mxu0 0.0
    %3335 = vmatpush1.msra.mxu0 0.0
    %3336 = vmatprep.subr.mxu0 0.0
    %3337 = vmatpush1.msra.mxu0 0.0
    %3338 = vmatprep.subr.mxu0 0.0
    %3339 = vmatpush1.msra.mxu0 0.0
    %3340 = vmatprep.subr.mxu0 0.0
    %3341 = vmatpush1.msra.mxu0 0.0
    %3342 = vmatprep.subr.mxu0 0.0
    %3343 = vmatpush1.msra.mxu0 0.0
    %3344 = vmatprep.mubr.f32.mxu0 0.0
    %v3345 = vand.u32 %v3274, 4294901760
    %v3346 = vsub.f32 %v3274, %v3345
    %v3347 = vand.u32 %v3346, 4294901760
    %v3348 = vsub.f32 %v3346, %v3347
    %v3349 = vand.u32 %v3348, 4294901760
    %3350 = vmatmul.mubr.f32.gmra.mrb[0].mxu0 %v3349
    %v3351 = vpop.f32.mrb[0].mxu0
    %v3352 = vadd.f32 0.0, %v3351
    %v3353 = vpop.f32.mrb[0].mxu0
    %v3354 = vadd.f32 0.0, %v3353
    %3355 = vdwg.mxu0
    %v3356 = vand.u32 %v3269, 4294901760
    %v3357 = vsub.f32 %v3269, %v3356
    %v3358 = vand.u32 %v3357, 4294901760
    %v3359 = vsub.f32 %v3357, %v3358
    %v3360 = vand.u32 %v3359, 4294901760
    %3361 = vmatprep.subr.mxu0 %v3360
    %v3362 = vand.u32 %v3268, 4294901760
    %v3363 = vsub.f32 %v3268, %v3362
    %v3364 = vand.u32 %v3363, 4294901760
    %v3365 = vsub.f32 %v3363, %v3364
    %v3366 = vand.u32 %v3365, 4294901760
    %3367 = vmatpush1.msra.mxu0 %v3366
    %v3368 = vand.u32 %v3271, 4294901760
    %v3369 = vsub.f32 %v3271, %v3368
    %v3370 = vand.u32 %v3369, 4294901760
    %v3371 = vsub.f32 %v3369, %v3370
    %v3372 = vand.u32 %v3371, 4294901760
    %3373 = vmatprep.subr.mxu0 %v3372
    %v3374 = vand.u32 %v3270, 4294901760
    %v3375 = vsub.f32 %v3270, %v3374
    %v3376 = vand.u32 %v3375, 4294901760
    %v3377 = vsub.f32 %v3375, %v3376
    %v3378 = vand.u32 %v3377, 4294901760
    %3379 = vmatpush1.msra.mxu0 %v3378
    %3380 = vmatprep.subr.mxu0 0.0
    %3381 = vmatpush1.msra.mxu0 0.0
    %3382 = vmatprep.subr.mxu0 0.0
    %3383 = vmatpush1.msra.mxu0 0.0
    %3384 = vmatprep.subr.mxu0 0.0
    %3385 = vmatpush1.msra.mxu0 0.0
    %3386 = vmatprep.subr.mxu0 0.0
    %3387 = vmatpush1.msra.mxu0 0.0
    %3388 = vmatprep.subr.mxu0 0.0
    %3389 = vmatpush1.msra.mxu0 0.0
    %3390 = vmatprep.subr.mxu0 0.0
    %3391 = vmatpush1.msra.mxu0 0.0
    %3392 = vmatprep.subr.mxu0 0.0
    %3393 = vmatpush1.msra.mxu0 0.0
    %3394 = vmatprep.subr.mxu0 0.0
    %3395 = vmatpush1.msra.mxu0 0.0
    %3396 = vmatprep.subr.mxu0 0.0
    %3397 = vmatpush1.msra.mxu0 0.0
    %3398 = vmatprep.subr.mxu0 0.0
    %3399 = vmatpush1.msra.mxu0 0.0
    %3400 = vmatprep.subr.mxu0 0.0
    %3401 = vmatpush1.msra.mxu0 0.0
    %3402 = vmatprep.subr.mxu0 0.0
    %3403 = vmatpush1.msra.mxu0 0.0
    %3404 = vmatprep.subr.mxu0 0.0
    %3405 = vmatpush1.msra.mxu0 0.0
    %3406 = vmatprep.subr.mxu0 0.0
    %3407 = vmatpush1.msra.mxu0 0.0
    %3408 = vmatprep.subr.mxu0 0.0
    %3409 = vmatpush1.msra.mxu0 0.0
    %3410 = vmatprep.subr.mxu0 0.0
    %3411 = vmatpush1.msra.mxu0 0.0
    %3412 = vmatprep.subr.mxu0 0.0
    %3413 = vmatpush1.msra.mxu0 0.0
    %3414 = vmatprep.subr.mxu0 0.0
    %3415 = vmatpush1.msra.mxu0 0.0
    %3416 = vmatprep.subr.mxu0 0.0
    %3417 = vmatpush1.msra.mxu0 0.0
    %3418 = vmatprep.subr.mxu0 0.0
    %3419 = vmatpush1.msra.mxu0 0.0
    %3420 = vmatprep.subr.mxu0 0.0
    %3421 = vmatpush1.msra.mxu0 0.0
    %3422 = vmatprep.subr.mxu0 0.0
    %3423 = vmatpush1.msra.mxu0 0.0
    %3424 = vmatprep.subr.mxu0 0.0
    %3425 = vmatpush1.msra.mxu0 0.0
    %3426 = vmatprep.subr.mxu0 0.0
    %3427 = vmatpush1.msra.mxu0 0.0
    %3428 = vmatprep.subr.mxu0 0.0
    %3429 = vmatpush1.msra.mxu0 0.0
    %3430 = vmatprep.subr.mxu0 0.0
    %3431 = vmatpush1.msra.mxu0 0.0
    %3432 = vmatprep.subr.mxu0 0.0
    %3433 = vmatpush1.msra.mxu0 0.0
    %3434 = vmatprep.subr.mxu0 0.0
    %3435 = vmatpush1.msra.mxu0 0.0
    %3436 = vmatprep.subr.mxu0 0.0
    %3437 = vmatpush1.msra.mxu0 0.0
    %3438 = vmatprep.subr.mxu0 0.0
    %3439 = vmatpush1.msra.mxu0 0.0
    %3440 = vmatprep.mubr.f32.mxu0 0.0
    %v3441 = vand.u32 %v3274, 4294901760
    %3442 = vmatmul.mubr.f32.gmra.mrb[0].mxu0 %v3441
    %v3443 = vpop.f32.mrb[0].mxu0
    %v3444 = vadd.f32 %v3352, %v3443
    %v3445 = vpop.f32.mrb[0].mxu0
    %v3446 = vadd.f32 %v3354, %v3445
    %3447 = vdwg.mxu0
    %v3448 = vand.u32 %v3269, 4294901760
    %v3449 = vsub.f32 %v3269, %v3448
    %3450 = vmatprep.subr.mxu0 %v3449
    %v3451 = vand.u32 %v3268, 4294901760
    %v3452 = vsub.f32 %v3268, %v3451
    %3453 = vmatpush1.msra.mxu0 %v3452
    %v3454 = vand.u32 %v3271, 4294901760
    %v3455 = vsub.f32 %v3271, %v3454
    %3456 = vmatprep.subr.mxu0 %v3455
    %v3457 = vand.u32 %v3270, 4294901760
    %v3458 = vsub.f32 %v3270, %v3457
    %3459 = vmatpush1.msra.mxu0 %v3458
    %3460 = vmatprep.subr.mxu0 0.0
    %3461 = vmatpush1.msra.mxu0 0.0
    %3462 = vmatprep.subr.mxu0 0.0
    %3463 = vmatpush1.msra.mxu0 0.0
    %3464 = vmatprep.subr.mxu0 0.0
    %3465 = vmatpush1.msra.mxu0 0.0
    %3466 = vmatprep.subr.mxu0 0.0
    %3467 = vmatpush1.msra.mxu0 0.0
    %3468 = vmatprep.subr.mxu0 0.0
    %3469 = vmatpush1.msra.mxu0 0.0
    %3470 = vmatprep.subr.mxu0 0.0
    %3471 = vmatpush1.msra.mxu0 0.0
    %3472 = vmatprep.subr.mxu0 0.0
    %3473 = vmatpush1.msra.mxu0 0.0
    %3474 = vmatprep.subr.mxu0 0.0
    %3475 = vmatpush1.msra.mxu0 0.0
    %3476 = vmatprep.subr.mxu0 0.0
    %3477 = vmatpush1.msra.mxu0 0.0
    %3478 = vmatprep.subr.mxu0 0.0
    %3479 = vmatpush1.msra.mxu0 0.0
    %3480 = vmatprep.subr.mxu0 0.0
    %3481 = vmatpush1.msra.mxu0 0.0
    %3482 = vmatprep.subr.mxu0 0.0
    %3483 = vmatpush1.msra.mxu0 0.0
    %3484 = vmatprep.subr.mxu0 0.0
    %3485 = vmatpush1.msra.mxu0 0.0
    %3486 = vmatprep.subr.mxu0 0.0
    %3487 = vmatpush1.msra.mxu0 0.0
    %3488 = vmatprep.subr.mxu0 0.0
    %3489 = vmatpush1.msra.mxu0 0.0
    %3490 = vmatprep.subr.mxu0 0.0
    %3491 = vmatpush1.msra.mxu0 0.0
    %3492 = vmatprep.subr.mxu0 0.0
    %3493 = vmatpush1.msra.mxu0 0.0
    %3494 = vmatprep.subr.mxu0 0.0
    %3495 = vmatpush1.msra.mxu0 0.0
    %3496 = vmatprep.subr.mxu0 0.0
    %3497 = vmatpush1.msra.mxu0 0.0
    %3498 = vmatprep.subr.mxu0 0.0
    %3499 = vmatpush1.msra.mxu0 0.0
    %3500 = vmatprep.subr.mxu0 0.0
    %3501 = vmatpush1.msra.mxu0 0.0
    %3502 = vmatprep.subr.mxu0 0.0
    %3503 = vmatpush1.msra.mxu0 0.0
    %3504 = vmatprep.subr.mxu0 0.0
    %3505 = vmatpush1.msra.mxu0 0.0
    %3506 = vmatprep.subr.mxu0 0.0
    %3507 = vmatpush1.msra.mxu0 0.0
    %3508 = vmatprep.subr.mxu0 0.0
    %3509 = vmatpush1.msra.mxu0 0.0
    %3510 = vmatprep.subr.mxu0 0.0
    %3511 = vmatpush1.msra.mxu0 0.0
    %3512 = vmatprep.subr.mxu0 0.0
    %3513 = vmatpush1.msra.mxu0 0.0
    %3514 = vmatprep.subr.mxu0 0.0
    %3515 = vmatpush1.msra.mxu0 0.0
    %3516 = vmatprep.subr.mxu0 0.0
    %3517 = vmatpush1.msra.mxu0 0.0
    %3518 = vmatprep.subr.mxu0 0.0
    %3519 = vmatpush1.msra.mxu0 0.0
    %3520 = vmatprep.mubr.f32.mxu0 0.0
    %v3521 = vand.u32 %v3274, 4294901760
    %v3522 = vsub.f32 %v3274, %v3521
    %3523 = vmatmul.mubr.f32.gmra.mrb[0].mxu0 %v3522
    %v3524 = vpop.f32.mrb[0].mxu0
    %v3525 = vadd.f32 %v3444, %v3524
    %v3526 = vpop.f32.mrb[0].mxu0
    %v3527 = vadd.f32 %v3446, %v3526
    %3528 = vdwg.mxu0
    %v3529 = vand.u32 %v3269, 4294901760
    %3530 = vmatprep.subr.mxu0 %v3529
    %v3531 = vand.u32 %v3268, 4294901760
    %3532 = vmatpush1.msra.mxu0 %v3531
    %v3533 = vand.u32 %v3271, 4294901760
    %3534 = vmatprep.subr.mxu0 %v3533
    %v3535 = vand.u32 %v3270, 4294901760
    %3536 = vmatpush1.msra.mxu0 %v3535
    %3537 = vmatprep.subr.mxu0 0.0
    %3538 = vmatpush1.msra.mxu0 0.0
    %3539 = vmatprep.subr.mxu0 0.0
    %3540 = vmatpush1.msra.mxu0 0.0
    %3541 = vmatprep.subr.mxu0 0.0
    %3542 = vmatpush1.msra.mxu0 0.0
    %3543 = vmatprep.subr.mxu0 0.0
    %3544 = vmatpush1.msra.mxu0 0.0
    %3545 = vmatprep.subr.mxu0 0.0
    %3546 = vmatpush1.msra.mxu0 0.0
    %3547 = vmatprep.subr.mxu0 0.0
    %3548 = vmatpush1.msra.mxu0 0.0
    %3549 = vmatprep.subr.mxu0 0.0
    %3550 = vmatpush1.msra.mxu0 0.0
    %3551 = vmatprep.subr.mxu0 0.0
    %3552 = vmatpush1.msra.mxu0 0.0
    %3553 = vmatprep.subr.mxu0 0.0
    %3554 = vmatpush1.msra.mxu0 0.0
    %3555 = vmatprep.subr.mxu0 0.0
    %3556 = vmatpush1.msra.mxu0 0.0
    %3557 = vmatprep.subr.mxu0 0.0
    %3558 = vmatpush1.msra.mxu0 0.0
    %3559 = vmatprep.subr.mxu0 0.0
    %3560 = vmatpush1.msra.mxu0 0.0
    %3561 = vmatprep.subr.mxu0 0.0
    %3562 = vmatpush1.msra.mxu0 0.0
    %3563 = vmatprep.subr.mxu0 0.0
    %3564 = vmatpush1.msra.mxu0 0.0
    %3565 = vmatprep.subr.mxu0 0.0
    %3566 = vmatpush1.msra.mxu0 0.0
    %3567 = vmatprep.subr.mxu0 0.0
    %3568 = vmatpush1.msra.mxu0 0.0
    %3569 = vmatprep.subr.mxu0 0.0
    %3570 = vmatpush1.msra.mxu0 0.0
    %3571 = vmatprep.subr.mxu0 0.0
    %3572 = vmatpush1.msra.mxu0 0.0
    %3573 = vmatprep.subr.mxu0 0.0
    %3574 = vmatpush1.msra.mxu0 0.0
    %3575 = vmatprep.subr.mxu0 0.0
    %3576 = vmatpush1.msra.mxu0 0.0
    %3577 = vmatprep.subr.mxu0 0.0
    %3578 = vmatpush1.msra.mxu0 0.0
    %3579 = vmatprep.subr.mxu0 0.0
    %3580 = vmatpush1.msra.mxu0 0.0
    %3581 = vmatprep.subr.mxu0 0.0
    %3582 = vmatpush1.msra.mxu0 0.0
    %3583 = vmatprep.subr.mxu0 0.0
    %3584 = vmatpush1.msra.mxu0 0.0
    %3585 = vmatprep.subr.mxu0 0.0
    %3586 = vmatpush1.msra.mxu0 0.0
    %3587 = vmatprep.subr.mxu0 0.0
    %3588 = vmatpush1.msra.mxu0 0.0
    %3589 = vmatprep.subr.mxu0 0.0
    %3590 = vmatpush1.msra.mxu0 0.0
    %3591 = vmatprep.subr.mxu0 0.0
    %3592 = vmatpush1.msra.mxu0 0.0
    %3593 = vmatprep.subr.mxu0 0.0
    %3594 = vmatpush1.msra.mxu0 0.0
    %3595 = vmatprep.subr.mxu0 0.0
    %3596 = vmatpush1.msra.mxu0 0.0
    %3597 = vmatprep.mubr.f32.mxu0 0.0
    %v3598 = vand.u32 %v3274, 4294901760
    %v3599 = vsub.f32 %v3274, %v3598
    %v3600 = vand.u32 %v3599, 4294901760
    %3601 = vmatmul.mubr.f32.gmra.mrb[0].mxu0 %v3600
    %v3602 = vpop.f32.mrb[0].mxu0
    %v3603 = vadd.f32 %v3525, %v3602
    %v3604 = vpop.f32.mrb[0].mxu0
    %v3605 = vadd.f32 %v3527, %v3604
    %3606 = vdwg.mxu0
    %v3607 = vand.u32 %v3269, 4294901760
    %v3608 = vsub.f32 %v3269, %v3607
    %v3609 = vand.u32 %v3608, 4294901760
    %3610 = vmatprep.subr.mxu0 %v3609
    %v3611 = vand.u32 %v3268, 4294901760
    %v3612 = vsub.f32 %v3268, %v3611
    %v3613 = vand.u32 %v3612, 4294901760
    %3614 = vmatpush1.msra.mxu0 %v3613
    %v3615 = vand.u32 %v3271, 4294901760
    %v3616 = vsub.f32 %v3271, %v3615
    %v3617 = vand.u32 %v3616, 4294901760
    %3618 = vmatprep.subr.mxu0 %v3617
    %v3619 = vand.u32 %v3270, 4294901760
    %v3620 = vsub.f32 %v3270, %v3619
    %v3621 = vand.u32 %v3620, 4294901760
    %3622 = vmatpush1.msra.mxu0 %v3621
    %3623 = vmatprep.subr.mxu0 0.0
    %3624 = vmatpush1.msra.mxu0 0.0
    %3625 = vmatprep.subr.mxu0 0.0
    %3626 = vmatpush1.msra.mxu0 0.0
    %3627 = vmatprep.subr.mxu0 0.0
    %3628 = vmatpush1.msra.mxu0 0.0
    %3629 = vmatprep.subr.mxu0 0.0
    %3630 = vmatpush1.msra.mxu0 0.0
    %3631 = vmatprep.subr.mxu0 0.0
    %3632 = vmatpush1.msra.mxu0 0.0
    %3633 = vmatprep.subr.mxu0 0.0
    %3634 = vmatpush1.msra.mxu0 0.0
    %3635 = vmatprep.subr.mxu0 0.0
    %3636 = vmatpush1.msra.mxu0 0.0
    %3637 = vmatprep.subr.mxu0 0.0
    %3638 = vmatpush1.msra.mxu0 0.0
    %3639 = vmatprep.subr.mxu0 0.0
    %3640 = vmatpush1.msra.mxu0 0.0
    %3641 = vmatprep.subr.mxu0 0.0
    %3642 = vmatpush1.msra.mxu0 0.0
    %3643 = vmatprep.subr.mxu0 0.0
    %3644 = vmatpush1.msra.mxu0 0.0
    %3645 = vmatprep.subr.mxu0 0.0
    %3646 = vmatpush1.msra.mxu0 0.0
    %3647 = vmatprep.subr.mxu0 0.0
    %3648 = vmatpush1.msra.mxu0 0.0
    %3649 = vmatprep.subr.mxu0 0.0
    %3650 = vmatpush1.msra.mxu0 0.0
    %3651 = vmatprep.subr.mxu0 0.0
    %3652 = vmatpush1.msra.mxu0 0.0
    %3653 = vmatprep.subr.mxu0 0.0
    %3654 = vmatpush1.msra.mxu0 0.0
    %3655 = vmatprep.subr.mxu0 0.0
    %3656 = vmatpush1.msra.mxu0 0.0
    %3657 = vmatprep.subr.mxu0 0.0
    %3658 = vmatpush1.msra.mxu0 0.0
    %3659 = vmatprep.subr.mxu0 0.0
    %3660 = vmatpush1.msra.mxu0 0.0
    %3661 = vmatprep.subr.mxu0 0.0
    %3662 = vmatpush1.msra.mxu0 0.0
    %3663 = vmatprep.subr.mxu0 0.0
    %3664 = vmatpush1.msra.mxu0 0.0
    %3665 = vmatprep.subr.mxu0 0.0
    %3666 = vmatpush1.msra.mxu0 0.0
    %3667 = vmatprep.subr.mxu0 0.0
    %3668 = vmatpush1.msra.mxu0 0.0
    %3669 = vmatprep.subr.mxu0 0.0
    %3670 = vmatpush1.msra.mxu0 0.0
    %3671 = vmatprep.subr.mxu0 0.0
    %3672 = vmatpush1.msra.mxu0 0.0
    %3673 = vmatprep.subr.mxu0 0.0
    %3674 = vmatpush1.msra.mxu0 0.0
    %3675 = vmatprep.subr.mxu0 0.0
    %3676 = vmatpush1.msra.mxu0 0.0
    %3677 = vmatprep.subr.mxu0 0.0
    %3678 = vmatpush1.msra.mxu0 0.0
    %3679 = vmatprep.subr.mxu0 0.0
    %3680 = vmatpush1.msra.mxu0 0.0
    %3681 = vmatprep.subr.mxu0 0.0
    %3682 = vmatpush1.msra.mxu0 0.0
    %3683 = vmatprep.mubr.f32.mxu0 0.0
    %v3684 = vand.u32 %v3274, 4294901760
    %3685 = vmatmul.mubr.f32.gmra.mrb[0].mxu0 %v3684
    %v3686 = vpop.f32.mrb[0].mxu0
    %v3687 = vadd.f32 %v3603, %v3686
    %v3688 = vpop.f32.mrb[0].mxu0
    %v3689 = vadd.f32 %v3605, %v3688
    %3690 = vdwg.mxu0
    %v3691 = vand.u32 %v3269, 4294901760
    %3692 = vmatprep.subr.mxu0 %v3691
    %v3693 = vand.u32 %v3268, 4294901760
    %3694 = vmatpush1.msra.mxu0 %v3693
    %v3695 = vand.u32 %v3271, 4294901760
    %3696 = vmatprep.subr.mxu0 %v3695
    %v3697 = vand.u32 %v3270, 4294901760
    %3698 = vmatpush1.msra.mxu0 %v3697
    %3699 = vmatprep.subr.mxu0 0.0
    %3700 = vmatpush1.msra.mxu0 0.0
    %3701 = vmatprep.subr.mxu0 0.0
    %3702 = vmatpush1.msra.mxu0 0.0
    %3703 = vmatprep.subr.mxu0 0.0
    %3704 = vmatpush1.msra.mxu0 0.0
    %3705 = vmatprep.subr.mxu0 0.0
    %3706 = vmatpush1.msra.mxu0 0.0
    %3707 = vmatprep.subr.mxu0 0.0
    %3708 = vmatpush1.msra.mxu0 0.0
    %3709 = vmatprep.subr.mxu0 0.0
    %3710 = vmatpush1.msra.mxu0 0.0
    %3711 = vmatprep.subr.mxu0 0.0
    %3712 = vmatpush1.msra.mxu0 0.0
    %3713 = vmatprep.subr.mxu0 0.0
    %3714 = vmatpush1.msra.mxu0 0.0
    %3715 = vmatprep.subr.mxu0 0.0
    %3716 = vmatpush1.msra.mxu0 0.0
    %3717 = vmatprep.subr.mxu0 0.0
    %3718 = vmatpush1.msra.mxu0 0.0
    %3719 = vmatprep.subr.mxu0 0.0
    %3720 = vmatpush1.msra.mxu0 0.0
    %3721 = vmatprep.subr.mxu0 0.0
    %3722 = vmatpush1.msra.mxu0 0.0
    %3723 = vmatprep.subr.mxu0 0.0
    %3724 = vmatpush1.msra.mxu0 0.0
    %3725 = vmatprep.subr.mxu0 0.0
    %3726 = vmatpush1.msra.mxu0 0.0
    %3727 = vmatprep.subr.mxu0 0.0
    %3728 = vmatpush1.msra.mxu0 0.0
    %3729 = vmatprep.subr.mxu0 0.0
    %3730 = vmatpush1.msra.mxu0 0.0
    %3731 = vmatprep.subr.mxu0 0.0
    %3732 = vmatpush1.msra.mxu0 0.0
    %3733 = vmatprep.subr.mxu0 0.0
    %3734 = vmatpush1.msra.mxu0 0.0
    %3735 = vmatprep.subr.mxu0 0.0
    %3736 = vmatpush1.msra.mxu0 0.0
    %3737 = vmatprep.subr.mxu0 0.0
    %3738 = vmatpush1.msra.mxu0 0.0
    %3739 = vmatprep.subr.mxu0 0.0
    %3740 = vmatpush1.msra.mxu0 0.0
    %3741 = vmatprep.subr.mxu0 0.0
    %3742 = vmatpush1.msra.mxu0 0.0
    %3743 = vmatprep.subr.mxu0 0.0
    %3744 = vmatpush1.msra.mxu0 0.0
    %3745 = vmatprep.subr.mxu0 0.0
    %3746 = vmatpush1.msra.mxu0 0.0
    %3747 = vmatprep.subr.mxu0 0.0
    %3748 = vmatpush1.msra.mxu0 0.0
    %3749 = vmatprep.subr.mxu0 0.0
    %3750 = vmatpush1.msra.mxu0 0.0
    %3751 = vmatprep.subr.mxu0 0.0
    %3752 = vmatpush1.msra.mxu0 0.0
    %3753 = vmatprep.subr.mxu0 0.0
    %3754 = vmatpush1.msra.mxu0 0.0
    %3755 = vmatprep.subr.mxu0 0.0
    %3756 = vmatpush1.msra.mxu0 0.0
    %3757 = vmatprep.subr.mxu0 0.0
    %3758 = vmatpush1.msra.mxu0 0.0
    %3759 = vmatprep.mubr.f32.mxu0 0.0
    %v3760 = vand.u32 %v3274, 4294901760
    %3761 = vmatmul.mubr.f32.gmra.mrb[0].mxu0 %v3760
    %v3762 = vpop.f32.mrb[0].mxu0
    %v3763 = vadd.f32 %v3687, %v3762
    %v3764 = vpop.f32.mrb[0].mxu0
    %v3765 = vadd.f32 %v3689, %v3764
    %3766 = vdwg.mxu0
    %v3767 = vlaneseq
    %v3768 = vshrl.u32 %v3767, 7
    %v3769 = vsub.s32 0, %v3768
    %v3770 = vrot.slane %v3763, %v3769
    %v3771 = vlaneseq
    %v3772 = vshrl.u32 %v3771, 7
    %v3773 = vsub.s32 0, %v3772
    %v3774 = vrot.slane %v3765, %v3773
    %v3775 = vmul.f32 %v2271, %v3770
    %v3776 = vmul.f32 %v2273, %v3774
    %v3777 = vmul.f32 %v2275, %v3770
    %v3778 = vmul.f32 %v2277, %v3774
    %v3779 = vmul.f32 %v2281, %v3770
    %v3780 = vmul.f32 %v2283, %v3774
    %v3781 = vmul.f32 %v2285, %v3770
    %v3782 = vmul.f32 %v2287, %v3774
    %v3783 = vlaneseq
    %v3784 = vshrl.u32 %v3783, 7
    %v3785 = vsub.s32 1, %v3784
    %v3786 = vrot.slane %v3763, %v3785
    %v3787 = vlaneseq
    %v3788 = vshrl.u32 %v3787, 7
    %v3789 = vsub.s32 1, %v3788
    %v3790 = vrot.slane %v3765, %v3789
    %v3791 = vadd.f32 %v3775, %v3786
    %v3792 = vadd.f32 %v3776, %v3790
    %v3793 = vadd.f32 %v3777, %v3786
    %v3794 = vadd.f32 %v3778, %v3790
    %v3795 = vadd.f32 %v3779, %v3786
    %v3796 = vadd.f32 %v3780, %v3790
    %v3797 = vadd.f32 %v3781, %v3786
    %v3798 = vadd.f32 %v3782, %v3790
    %v3799 = vmax.f32 %v3791, 0.0
    %v3800 = vmax.f32 %v3792, 0.0
    %v3801 = vmax.f32 %v3793, 0.0
    %v3802 = vmax.f32 %v3794, 0.0
    %v3803 = vmax.f32 %v3795, 0.0
    %v3804 = vmax.f32 %v3796, 0.0
    %v3805 = vmax.f32 %v3797, 0.0
    %v3806 = vmax.f32 %v3798, 0.0
    %3807 = vst [vmem:[#allocation2] sm:$0xf] 0
    %3808 = vst [vmem:[#allocation2 + $0x8] sm:$0xf] 0
    %3809 = vst [vmem:[#allocation2 + $0x20] sm:$0xf0] 0
    %3810 = vst [vmem:[#allocation2 + $0x28] sm:$0xf0] 0
    %v3811 = vpack.c.bf16 %v3801, %v3799
    %v3812 = vpack.c.bf16 %v3802, %v3800
    %v3813 = vpack.c.bf16 %v3805, %v3803
    %v3814 = vpack.c.bf16 %v3806, %v3804
    %vm3819 = vcmask 1043456
    %v3820 = vrot.slane %v3811, 4
    %v3821 = vrot.slane %v3812, 4
    %v3822 = vrot.slane %v3813, 4
    %v3823 = vsel %vm3819, %v3820, %v3822
    %v3824 = vrot.slane %v3814, 4
    %v3825 = vsel %vm3819, %v3821, %v3824
    %3832 = vst [vmem:[#allocation2] sm:$0xf0] %v3820
    %3833 = vst [vmem:[#allocation2 + $0x8] sm:$0xf0] %v3821
    %3834 = vst [vmem:[#allocation2 + $0x10] sm:$0xff] %v3823
    %3835 = vst [vmem:[#allocation2 + $0x18] sm:$0xff] %v3825
    %3836 = vst [vmem:[#allocation2 + $0x20] sm:$0xf] %v3822
    %3837 = vst [vmem:[#allocation2 + $0x28] sm:$0xf] %v3824
    %v3838 = vld [vmem:[#allocation2] sm:$0xf8]
    %v3839 = vld [vmem:[#allocation2 + $0x8] sm:$0xf8]
    %v3840 = vld [vmem:[#allocation2 + $0x10] sm:$0xff]
    %v3841 = vld [vmem:[#allocation2 + $0x18] sm:$0xff]
    %v3842 = vld [vmem:[#allocation2 + $0x20] sm:$0xf]
    %v3843 = vld [vmem:[#allocation2 + $0x28] sm:$0xf]
    %v3844 = vunpack.c.l.b16 %v141
    %v3845 = vunpack.c.l.b16 %v142
    %v3846 = vunpack.c.l.b16 %v143
    %v3847 = vunpack.c.l.b16 %v144
    %v3848 = vpack.c.b16 %v3845, %v3844
    %v3849 = vpack.c.b16 %v3847, %v3846
    %v3851 = vshrl.u32 %v3848, 16
    %v3853 = vrot.slane %v3851, 4
    %v3854 = vshll.u32 %v3848, 16
    %v3856 = vrot.slane %v3854, 5
    %v3857 = vor.u32 %v3853, %v3856
    %v3859 = vshrl.u32 %v3849, 16
    %v3861 = vrot.slane %v3859, 4
    %v3862 = vshll.u32 %v3849, 16
    %v3864 = vrot.slane %v3862, 5
    %v3865 = vor.u32 %v3861, %v3864
    %v3866 = vsel %vm145, %v3857, %v3865
    %vm3867 = vcmp.ne.s16.totalorder %v3857, 0
    %vm3868 = vcmp.ne.s16.totalorder %v3866, 0
    %vm3869 = vcmp.ne.s16.totalorder %v3865, 0
    %v3870 = vsel %vm3867, 0, %v3838
    %v3871 = vsel %vm3867, 0, %v3839
    %v3872 = vsel %vm3868, 0, %v3840
    %v3873 = vsel %vm3868, 0, %v3841
    %v3874 = vsel %vm3869, 0, %v3842
    %v3875 = vsel %vm3869, 0, %v3843
    %v3876 = vld [vmem:[#allocation2] sm:$0xf0]
    %v3877 = vld [vmem:[#allocation2 + $0x8] sm:$0xf0]
    %v3878 = vld [vmem:[#allocation2 + $0x20] sm:$0x1f]
    %v3879 = vld [vmem:[#allocation2 + $0x28] sm:$0x1f]
    %v3880 = vunpack.c.l.b16 %v220
    %v3881 = vunpack.c.l.b16 %v221
    %v3882 = vunpack.c.l.b16 %v222
    %v3883 = vunpack.c.l.b16 %v223
    %v3884 = vpack.c.b16 %v3881, %v3880
    %v3885 = vpack.c.b16 %v3883, %v3882
    %v3887 = vshrl.u32 %v3884, 16
    %v3889 = vrot.slane %v3887, 3
    %v3890 = vshll.u32 %v3884, 16
    %v3892 = vrot.slane %v3890, 4
    %v3893 = vor.u32 %v3889, %v3892
    %v3895 = vshrl.u32 %v3885, 16
    %v3897 = vrot.slane %v3895, 3
    %v3898 = vshll.u32 %v3885, 16
    %v3900 = vrot.slane %v3898, 4
    %v3901 = vor.u32 %v3897, %v3900
    %v3902 = vsel %vm674, %v3893, %v3901
    %vm3903 = vcmp.ne.s16.totalorder %v3893, 0
    %vm3904 = vcmp.ne.s16.totalorder %v3902, 0
    %vm3905 = vcmp.ne.s16.totalorder %v3901, 0
    %v3906 = vsel %vm3903, 0, %v3876
    %v3907 = vsel %vm3903, 0, %v3877
    %v3908 = vsel %vm3904, 0, %v3840
    %v3909 = vsel %vm3904, 0, %v3841
    %v3910 = vsel %vm3905, 0, %v3878
    %v3911 = vsel %vm3905, 0, %v3879
    %vm3912 = vsmask.f32 7424
    %v3914 = vshrl.u32 %v3876, 16
    %v3916 = vshll.u32 %v3876, 16
    %v3918 = vrot.slane %v3916, 1
    %v3919 = vor.u32 %v3914, %v3918
    %v3921 = vshll.u32 %v3840, 16
    %v3923 = vrot.slane %v3921, 1
    %v3924 = vsel %vm3912, %v3919, %v3923
    %v3926 = vshrl.u32 %v3877, 16
    %v3928 = vshll.u32 %v3877, 16
    %v3930 = vrot.slane %v3928, 1
    %v3931 = vor.u32 %v3926, %v3930
    %v3933 = vshll.u32 %v3841, 16
    %v3935 = vrot.slane %v3933, 1
    %v3936 = vsel %vm3912, %v3931, %v3935
    %v3937 = vshrl.u32 %v3840, 16
    %v3939 = vor.u32 %v3937, %v3923
    %v3941 = vshll.u32 %v3842, 16
    %v3943 = vrot.slane %v3941, 1
    %v3944 = vsel %vm3912, %v3939, %v3943
    %v3945 = vshrl.u32 %v3841, 16
    %v3947 = vor.u32 %v3945, %v3935
    %v3949 = vshll.u32 %v3843, 16
    %v3951 = vrot.slane %v3949, 1
    %v3952 = vsel %vm3912, %v3947, %v3951
    %v3953 = vshrl.u32 %v3842, 16
    %v3955 = vor.u32 %v3953, %v3943
    %v3956 = vshrl.u32 %v3843, 16
    %v3958 = vor.u32 %v3956, %v3951
    %vm3965 = vcmask 1046528
    %v3966 = vrot.slane %v3906, 1
    %v3967 = vrot.slane %v3908, 1
    %v3968 = vsel %vm3965, %v3966, %v3967
    %v3969 = vrot.slane %v3907, 1
    %v3970 = vrot.slane %v3909, 1
    %v3971 = vsel %vm3965, %v3969, %v3970
    %v3972 = vrot.slane %v3910, 1
    %v3973 = vsel %vm3965, %v3967, %v3972
    %v3974 = vrot.slane %v3911, 1
    %v3975 = vsel %vm3965, %v3970, %v3974
    %v3976 = vld [vmem:[#allocation6] sm:$0xff]
    %v3977 = vld [vmem:[#allocation6 + $0x8] sm:$0xff]
    %v3978 = vld [vmem:[#allocation6 + $0x10] sm:$0xff]
    %v3979 = vld [vmem:[#allocation6 + $0x18] sm:$0xff]
    %v3980 = vld [vmem:[#allocation6 + $0x20] sm:$0xff]
    %v3981 = vld [vmem:[#allocation6 + $0x28] sm:$0xff]
    %v3982 = vld [vmem:[#allocation6 + $0x30] sm:$0xff]
    %v3983 = vld [vmem:[#allocation6 + $0x38] sm:$0xff]
    %v3984 = vld [vmem:[#allocation6 + $0x40] sm:$0xff]
    %v3985 = vld [vmem:[#allocation6 + $0x48] sm:$0xff]
    %v3986 = vld [vmem:[#allocation6 + $0x50] sm:$0xff]
    %v3987 = vld [vmem:[#allocation6 + $0x58] sm:$0xff]
    %v3988 = vld [vmem:[#allocation6 + $0x60] sm:$0xff]
    %v3989 = vld [vmem:[#allocation6 + $0x68] sm:$0xff]
    %v3990 = vld [vmem:[#allocation6 + $0x70] sm:$0xff]
    %v3991 = vld [vmem:[#allocation6 + $0x78] sm:$0xff]
    %v3992 = vld [vmem:[#allocation6 + $0x80] sm:$0xff]
    %v3993 = vld [vmem:[#allocation6 + $0x88] sm:$0xff]
    %v3994 = vld [vmem:[#allocation6 + $0x90] sm:$0xff]
    %v3995 = vld [vmem:[#allocation6 + $0x98] sm:$0xff]
    %v3996 = vld [vmem:[#allocation6 + $0xa0] sm:$0xff]
    %v3997 = vld [vmem:[#allocation6 + $0xa8] sm:$0xff]
    %v3998 = vld [vmem:[#allocation6 + $0xb0] sm:$0xff]
    %v3999 = vld [vmem:[#allocation6 + $0xb8] sm:$0xff]
    %v4000 = vld [vmem:[#allocation6 + $0xc0] sm:$0xff]
    %v4001 = vld [vmem:[#allocation6 + $0xc8] sm:$0xff]
    %v4002 = vld [vmem:[#allocation6 + $0xd0] sm:$0xff]
    %v4003 = vld [vmem:[#allocation6 + $0xd8] sm:$0xff]
    %v4004 = vld [vmem:[#allocation6 + $0xe0] sm:$0xff]
    %v4005 = vld [vmem:[#allocation6 + $0xe8] sm:$0xff]
    %v4006 = vld [vmem:[#allocation6 + $0xf0] sm:$0xff]
    %v4007 = vld [vmem:[#allocation6 + $0xf8] sm:$0xff]
    %v4008 = vld [vmem:[#allocation6 + $0x100] sm:$0xff]
    %v4009 = vld [vmem:[#allocation6 + $0x108] sm:$0xff]
    %v4010 = vld [vmem:[#allocation6 + $0x110] sm:$0xff]
    %v4011 = vld [vmem:[#allocation6 + $0x118] sm:$0xff]
    %v4012 = vld [vmem:[#allocation6 + $0x120] sm:$0xff]
    %v4013 = vld [vmem:[#allocation6 + $0x128] sm:$0xff]
    %v4014 = vld [vmem:[#allocation6 + $0x130] sm:$0xff]
    %v4015 = vld [vmem:[#allocation6 + $0x138] sm:$0xff]
    %v4016 = vld [vmem:[#allocation6 + $0x140] sm:$0xff]
    %v4017 = vld [vmem:[#allocation6 + $0x148] sm:$0xff]
    %v4018 = vld [vmem:[#allocation6 + $0x150] sm:$0xff]
    %v4019 = vld [vmem:[#allocation6 + $0x158] sm:$0xff]
    %v4020 = vld [vmem:[#allocation6 + $0x160] sm:$0xff]
    %v4021 = vld [vmem:[#allocation6 + $0x168] sm:$0xff]
    %v4022 = vld [vmem:[#allocation6 + $0x170] sm:$0xff]
    %v4023 = vld [vmem:[#allocation6 + $0x178] sm:$0xff]
    %v4024 = vld [vmem:[#allocation6 + $0x180] sm:$0xff]
    %v4025 = vld [vmem:[#allocation6 + $0x188] sm:$0xff]
    %v4026 = vld [vmem:[#allocation6 + $0x190] sm:$0xff]
    %v4027 = vld [vmem:[#allocation6 + $0x198] sm:$0xff]
    %v4028 = vld [vmem:[#allocation6 + $0x1a0] sm:$0xff]
    %v4029 = vld [vmem:[#allocation6 + $0x1a8] sm:$0xff]
    %v4030 = vld [vmem:[#allocation6 + $0x1b0] sm:$0xff]
    %v4031 = vld [vmem:[#allocation6 + $0x1b8] sm:$0xff]
    %v4032 = vld [vmem:[#allocation6 + $0x1c0] sm:$0xff]
    %v4033 = vld [vmem:[#allocation6 + $0x1c8] sm:$0xff]
    %v4034 = vld [vmem:[#allocation6 + $0x1d0] sm:$0xff]
    %v4035 = vld [vmem:[#allocation6 + $0x1d8] sm:$0xff]
    %v4036 = vld [vmem:[#allocation6 + $0x1e0] sm:$0xff]
    %v4037 = vld [vmem:[#allocation6 + $0x1e8] sm:$0xff]
    %v4038 = vld [vmem:[#allocation6 + $0x1f0] sm:$0xff]
    %v4039 = vld [vmem:[#allocation6 + $0x1f8] sm:$0xff]
    %v4040 = vld [vmem:[#allocation6 + $0x200] sm:$0xff]
    %v4041 = vld [vmem:[#allocation6 + $0x208] sm:$0xff]
    %v4042 = vld [vmem:[#allocation6 + $0x210] sm:$0xff]
    %v4043 = vld [vmem:[#allocation6 + $0x218] sm:$0xff]
    %v4044 = vld [vmem:[#allocation6 + $0x220] sm:$0xff]
    %v4045 = vld [vmem:[#allocation6 + $0x228] sm:$0xff]
    %v4046 = vld [vmem:[#allocation6 + $0x230] sm:$0xff]
    %v4047 = vld [vmem:[#allocation6 + $0x238] sm:$0xff]
    %v4048 = vld [vmem:[#allocation6 + $0x240] sm:$0xff]
    %v4049 = vld [vmem:[#allocation6 + $0x248] sm:$0xff]
    %v4050 = vld [vmem:[#allocation6 + $0x250] sm:$0xff]
    %v4051 = vld [vmem:[#allocation6 + $0x258] sm:$0xff]
    %v4052 = vld [vmem:[#allocation6 + $0x260] sm:$0xff]
    %v4053 = vld [vmem:[#allocation6 + $0x268] sm:$0xff]
    %v4054 = vld [vmem:[#allocation6 + $0x270] sm:$0xff]
    %v4055 = vld [vmem:[#allocation6 + $0x278] sm:$0xff]
    %v4056 = vld [vmem:[#allocation6 + $0x280] sm:$0xff]
    %v4057 = vld [vmem:[#allocation6 + $0x288] sm:$0xff]
    %v4058 = vld [vmem:[#allocation6 + $0x290] sm:$0xff]
    %v4059 = vld [vmem:[#allocation6 + $0x298] sm:$0xff]
    %v4060 = vld [vmem:[#allocation6 + $0x2a0] sm:$0xff]
    %v4061 = vld [vmem:[#allocation6 + $0x2a8] sm:$0xff]
    %v4062 = vld [vmem:[#allocation6 + $0x2b0] sm:$0xff]
    %v4063 = vld [vmem:[#allocation6 + $0x2b8] sm:$0xff]
    %v4064 = vld [vmem:[#allocation6 + $0x2c0] sm:$0xff]
    %v4065 = vld [vmem:[#allocation6 + $0x2c8] sm:$0xff]
    %v4066 = vld [vmem:[#allocation6 + $0x2d0] sm:$0xff]
    %v4067 = vld [vmem:[#allocation6 + $0x2d8] sm:$0xff]
    %v4068 = vld [vmem:[#allocation6 + $0x2e0] sm:$0xff]
    %v4069 = vld [vmem:[#allocation6 + $0x2e8] sm:$0xff]
    %v4070 = vld [vmem:[#allocation6 + $0x2f0] sm:$0xff]
    %v4071 = vld [vmem:[#allocation6 + $0x2f8] sm:$0xff]
    %v4072 = vld [vmem:[#allocation6 + $0x300] sm:$0xff]
    %v4073 = vld [vmem:[#allocation6 + $0x308] sm:$0xff]
    %v4074 = vld [vmem:[#allocation6 + $0x310] sm:$0xff]
    %v4075 = vld [vmem:[#allocation6 + $0x318] sm:$0xff]
    %v4076 = vld [vmem:[#allocation6 + $0x320] sm:$0xff]
    %v4077 = vld [vmem:[#allocation6 + $0x328] sm:$0xff]
    %v4078 = vld [vmem:[#allocation6 + $0x330] sm:$0xff]
    %v4079 = vld [vmem:[#allocation6 + $0x338] sm:$0xff]
    %v4080 = vld [vmem:[#allocation6 + $0x340] sm:$0xff]
    %v4081 = vld [vmem:[#allocation6 + $0x348] sm:$0xff]
    %v4082 = vld [vmem:[#allocation6 + $0x350] sm:$0xff]
    %v4083 = vld [vmem:[#allocation6 + $0x358] sm:$0xff]
    %v4084 = vld [vmem:[#allocation6 + $0x360] sm:$0xff]
    %v4085 = vld [vmem:[#allocation6 + $0x368] sm:$0xff]
    %v4086 = vld [vmem:[#allocation6 + $0x370] sm:$0xff]
    %v4087 = vld [vmem:[#allocation6 + $0x378] sm:$0xff]
    %v4088 = vld [vmem:[#allocation6 + $0x380] sm:$0xff]
    %v4089 = vld [vmem:[#allocation6 + $0x388] sm:$0xff]
    %v4090 = vld [vmem:[#allocation6 + $0x390] sm:$0xff]
    %v4091 = vld [vmem:[#allocation6 + $0x398] sm:$0xff]
    %v4092 = vld [vmem:[#allocation6 + $0x3a0] sm:$0xff]
    %v4093 = vld [vmem:[#allocation6 + $0x3a8] sm:$0xff]
    %v4094 = vld [vmem:[#allocation6 + $0x3b0] sm:$0xff]
    %v4095 = vld [vmem:[#allocation6 + $0x3b8] sm:$0xff]
    %v4096 = vld [vmem:[#allocation6 + $0x3c0] sm:$0xff]
    %v4097 = vld [vmem:[#allocation6 + $0x3c8] sm:$0xff]
    %v4098 = vld [vmem:[#allocation6 + $0x3d0] sm:$0xff]
    %v4099 = vld [vmem:[#allocation6 + $0x3d8] sm:$0xff]
    %v4100 = vld [vmem:[#allocation6 + $0x3e0] sm:$0xff]
    %v4101 = vld [vmem:[#allocation6 + $0x3e8] sm:$0xff]
    %v4102 = vld [vmem:[#allocation6 + $0x3f0] sm:$0xff]
    %v4103 = vld [vmem:[#allocation6 + $0x3f8] sm:$0xff]
    %v4104 = vld [vmem:[#allocation6 + $0x400] sm:$0xff]
    %v4105 = vld [vmem:[#allocation6 + $0x408] sm:$0xff]
    %v4106 = vld [vmem:[#allocation6 + $0x410] sm:$0xff]
    %v4107 = vld [vmem:[#allocation6 + $0x418] sm:$0xff]
    %v4108 = vld [vmem:[#allocation6 + $0x420] sm:$0xff]
    %v4109 = vld [vmem:[#allocation6 + $0x428] sm:$0xff]
    %v4110 = vld [vmem:[#allocation6 + $0x430] sm:$0xff]
    %v4111 = vld [vmem:[#allocation6 + $0x438] sm:$0xff]
    %v4112 = vld [vmem:[#allocation6 + $0x440] sm:$0xff]
    %v4113 = vld [vmem:[#allocation6 + $0x448] sm:$0xff]
    %v4114 = vld [vmem:[#allocation6 + $0x450] sm:$0xff]
    %v4115 = vld [vmem:[#allocation6 + $0x458] sm:$0xff]
    %v4116 = vld [vmem:[#allocation6 + $0x460] sm:$0xff]
    %v4117 = vld [vmem:[#allocation6 + $0x468] sm:$0xff]
    %v4118 = vld [vmem:[#allocation6 + $0x470] sm:$0xff]
    %v4119 = vld [vmem:[#allocation6 + $0x478] sm:$0xff]
    %v4120 = vld [vmem:[#allocation6 + $0x480] sm:$0xff]
    %v4121 = vld [vmem:[#allocation6 + $0x488] sm:$0xff]
    %v4122 = vld [vmem:[#allocation6 + $0x490] sm:$0xff]
    %v4123 = vld [vmem:[#allocation6 + $0x498] sm:$0xff]
    %v4124 = vld [vmem:[#allocation6 + $0x4a0] sm:$0xff]
    %v4125 = vld [vmem:[#allocation6 + $0x4a8] sm:$0xff]
    %v4126 = vld [vmem:[#allocation6 + $0x4b0] sm:$0xff]
    %v4127 = vld [vmem:[#allocation6 + $0x4b8] sm:$0xff]
    %v4128 = vld [vmem:[#allocation6 + $0x4c0] sm:$0xff]
    %v4129 = vld [vmem:[#allocation6 + $0x4c8] sm:$0xff]
    %v4130 = vld [vmem:[#allocation6 + $0x4d0] sm:$0xff]
    %v4131 = vld [vmem:[#allocation6 + $0x4d8] sm:$0xff]
    %v4132 = vld [vmem:[#allocation6 + $0x4e0] sm:$0xff]
    %v4133 = vld [vmem:[#allocation6 + $0x4e8] sm:$0xff]
    %v4134 = vld [vmem:[#allocation6 + $0x4f0] sm:$0xff]
    %v4135 = vld [vmem:[#allocation6 + $0x4f8] sm:$0xff]
    %v4136 = vld [vmem:[#allocation6 + $0x500] sm:$0xff]
    %v4137 = vld [vmem:[#allocation6 + $0x508] sm:$0xff]
    %v4138 = vld [vmem:[#allocation6 + $0x510] sm:$0xff]
    %v4139 = vld [vmem:[#allocation6 + $0x518] sm:$0xff]
    %v4140 = vld [vmem:[#allocation6 + $0x520] sm:$0xff]
    %v4141 = vld [vmem:[#allocation6 + $0x528] sm:$0xff]
    %v4142 = vld [vmem:[#allocation6 + $0x530] sm:$0xff]
    %v4143 = vld [vmem:[#allocation6 + $0x538] sm:$0xff]
    %v4144 = vld [vmem:[#allocation6 + $0x540] sm:$0xff]
    %v4145 = vld [vmem:[#allocation6 + $0x548] sm:$0xff]
    %v4146 = vld [vmem:[#allocation6 + $0x550] sm:$0xff]
    %v4147 = vld [vmem:[#allocation6 + $0x558] sm:$0xff]
    %v4148 = vld [vmem:[#allocation6 + $0x560] sm:$0xff]
    %v4149 = vld [vmem:[#allocation6 + $0x568] sm:$0xff]
    %v4150 = vld [vmem:[#allocation6 + $0x570] sm:$0xff]
    %v4151 = vld [vmem:[#allocation6 + $0x578] sm:$0xff]
    %v4152 = vld [vmem:[#allocation6 + $0x580] sm:$0xff]
    %v4153 = vld [vmem:[#allocation6 + $0x588] sm:$0xff]
    %v4154 = vld [vmem:[#allocation6 + $0x590] sm:$0xff]
    %v4155 = vld [vmem:[#allocation6 + $0x598] sm:$0xff]
    %v4156 = vld [vmem:[#allocation6 + $0x5a0] sm:$0xff]
    %v4157 = vld [vmem:[#allocation6 + $0x5a8] sm:$0xff]
    %v4158 = vld [vmem:[#allocation6 + $0x5b0] sm:$0xff]
    %v4159 = vld [vmem:[#allocation6 + $0x5b8] sm:$0xff]
    %v4160 = vld [vmem:[#allocation6 + $0x5c0] sm:$0xff]
    %v4161 = vld [vmem:[#allocation6 + $0x5c8] sm:$0xff]
    %v4162 = vld [vmem:[#allocation6 + $0x5d0] sm:$0xff]
    %v4163 = vld [vmem:[#allocation6 + $0x5d8] sm:$0xff]
    %v4164 = vld [vmem:[#allocation6 + $0x5e0] sm:$0xff]
    %v4165 = vld [vmem:[#allocation6 + $0x5e8] sm:$0xff]
    %v4166 = vld [vmem:[#allocation6 + $0x5f0] sm:$0xff]
    %v4167 = vld [vmem:[#allocation6 + $0x5f8] sm:$0xff]
    %v4169 = vshrl.u32 %v3870, 16
    %v4171 = vrot.slane %v4169, 3
    %v4172 = vshll.u32 %v3870, 16
    %v4174 = vrot.slane %v4172, 4
    %v4175 = vor.u32 %v4171, %v4174
    %v4177 = vshrl.u32 %v3872, 16
    %v4179 = vrot.slane %v4177, 3
    %v4180 = vshll.u32 %v3872, 16
    %v4182 = vrot.slane %v4180, 4
    %v4183 = vor.u32 %v4179, %v4182
    %v4184 = vsel %vm674, %v4175, %v4183
    %v4186 = vshrl.u32 %v3871, 16
    %v4188 = vrot.slane %v4186, 3
    %v4189 = vshll.u32 %v3871, 16
    %v4191 = vrot.slane %v4189, 4
    %v4192 = vor.u32 %v4188, %v4191
    %v4194 = vshrl.u32 %v3873, 16
    %v4196 = vrot.slane %v4194, 3
    %v4197 = vshll.u32 %v3873, 16
    %v4199 = vrot.slane %v4197, 4
    %v4200 = vor.u32 %v4196, %v4199
    %v4201 = vsel %vm674, %v4192, %v4200
    %v4203 = vshrl.u32 %v3924, 16
    %v4205 = vrot.slane %v4203, 3
    %v4206 = vshll.u32 %v3924, 16
    %v4208 = vrot.slane %v4206, 4
    %v4209 = vor.u32 %v4205, %v4208
    %v4211 = vshrl.u32 %v3944, 16
    %v4213 = vrot.slane %v4211, 3
    %v4214 = vshll.u32 %v3944, 16
    %v4216 = vrot.slane %v4214, 4
    %v4217 = vor.u32 %v4213, %v4216
    %v4218 = vsel %vm674, %v4209, %v4217
    %v4220 = vshrl.u32 %v3936, 16
    %v4222 = vrot.slane %v4220, 3
    %v4223 = vshll.u32 %v3936, 16
    %v4225 = vrot.slane %v4223, 4
    %v4226 = vor.u32 %v4222, %v4225
    %v4228 = vshrl.u32 %v3952, 16
    %v4230 = vrot.slane %v4228, 3
    %v4231 = vshll.u32 %v3952, 16
    %v4233 = vrot.slane %v4231, 4
    %v4234 = vor.u32 %v4230, %v4233
    %v4235 = vsel %vm674, %v4226, %v4234
    %v4237 = vshrl.u32 %v3968, 16
    %v4239 = vrot.slane %v4237, 3
    %v4240 = vshll.u32 %v3968, 16
    %v4242 = vrot.slane %v4240, 4
    %v4243 = vor.u32 %v4239, %v4242
    %v4245 = vshrl.u32 %v3973, 16
    %v4247 = vrot.slane %v4245, 3
    %v4248 = vshll.u32 %v3973, 16
    %v4250 = vrot.slane %v4248, 4
    %v4251 = vor.u32 %v4247, %v4250
    %v4252 = vsel %vm674, %v4243, %v4251
    %v4254 = vshrl.u32 %v3971, 16
    %v4256 = vrot.slane %v4254, 3
    %v4257 = vshll.u32 %v3971, 16
    %v4259 = vrot.slane %v4257, 4
    %v4260 = vor.u32 %v4256, %v4259
    %v4262 = vshrl.u32 %v3975, 16
    %v4264 = vrot.slane %v4262, 3
    %v4265 = vshll.u32 %v3975, 16
    %v4267 = vrot.slane %v4265, 4
    %v4268 = vor.u32 %v4264, %v4267
    %v4269 = vsel %vm674, %v4260, %v4268
    %v4271 = vshrl.u32 %v3874, 16
    %v4273 = vrot.slane %v4271, 3
    %v4274 = vshll.u32 %v3874, 16
    %v4276 = vrot.slane %v4274, 4
    %v4277 = vor.u32 %v4273, %v4276
    %v4278 = vsel %vm674, %v4183, %v4277
    %v4280 = vshrl.u32 %v3875, 16
    %v4282 = vrot.slane %v4280, 3
    %v4283 = vshll.u32 %v3875, 16
    %v4285 = vrot.slane %v4283, 4
    %v4286 = vor.u32 %v4282, %v4285
    %v4287 = vsel %vm674, %v4200, %v4286
    %v4289 = vshrl.u32 %v3955, 16
    %v4291 = vrot.slane %v4289, 3
    %v4292 = vshll.u32 %v3955, 16
    %v4294 = vrot.slane %v4292, 4
    %v4295 = vor.u32 %v4291, %v4294
    %v4296 = vsel %vm674, %v4217, %v4295
    %v4298 = vshrl.u32 %v3958, 16
    %v4300 = vrot.slane %v4298, 3
    %v4301 = vshll.u32 %v3958, 16
    %v4303 = vrot.slane %v4301, 4
    %v4304 = vor.u32 %v4300, %v4303
    %v4305 = vsel %vm674, %v4234, %v4304
    %v4307 = vshrl.u32 %v3972, 16
    %v4309 = vrot.slane %v4307, 3
    %v4310 = vshll.u32 %v3972, 16
    %v4312 = vrot.slane %v4310, 4
    %v4313 = vor.u32 %v4309, %v4312
    %v4314 = vsel %vm674, %v4251, %v4313
    %v4316 = vshrl.u32 %v3974, 16
    %v4318 = vrot.slane %v4316, 3
    %v4319 = vshll.u32 %v3974, 16
    %v4321 = vrot.slane %v4319, 4
    %v4322 = vor.u32 %v4318, %v4321
    %v4323 = vsel %vm674, %v4268, %v4322
    %v4528 = vunpack.c.l.b16 %v3976
    %v4529 = vunpack.c.h.b16 %v3976
    %v4530 = vunpack.c.l.b16 %v3977
    %v4531 = vunpack.c.h.b16 %v3977
    %v4532 = vunpack.c.l.b16 %v3978
    %v4533 = vunpack.c.h.b16 %v3978
    %v4534 = vunpack.c.l.b16 %v3979
    %v4535 = vunpack.c.h.b16 %v3979
    %v4536 = vunpack.c.l.b16 %v3980
    %v4537 = vunpack.c.h.b16 %v3980
    %v4538 = vunpack.c.l.b16 %v3981
    %v4539 = vunpack.c.h.b16 %v3981
    %v4540 = vunpack.c.l.b16 %v3982
    %v4541 = vunpack.c.h.b16 %v3982
    %v4542 = vunpack.c.l.b16 %v3983
    %v4543 = vunpack.c.h.b16 %v3983
    %v4544 = vunpack.c.l.b16 %v3984
    %v4545 = vunpack.c.h.b16 %v3984
    %v4546 = vunpack.c.l.b16 %v3985
    %v4547 = vunpack.c.h.b16 %v3985
    %v4548 = vunpack.c.l.b16 %v3986
    %v4549 = vunpack.c.h.b16 %v3986
    %v4550 = vunpack.c.l.b16 %v3987
    %v4551 = vunpack.c.h.b16 %v3987
    %v4552 = vunpack.c.l.b16 %v3988
    %v4553 = vunpack.c.h.b16 %v3988
    %v4554 = vunpack.c.l.b16 %v3989
    %v4555 = vunpack.c.h.b16 %v3989
    %v4556 = vunpack.c.l.b16 %v3990
    %v4557 = vunpack.c.h.b16 %v3990
    %v4558 = vunpack.c.l.b16 %v3991
    %v4559 = vunpack.c.h.b16 %v3991
    %v4560 = vunpack.c.l.b16 %v3992
    %v4561 = vunpack.c.h.b16 %v3992
    %v4562 = vunpack.c.l.b16 %v3993
    %v4563 = vunpack.c.h.b16 %v3993
    %v4564 = vunpack.c.l.b16 %v3994
    %v4565 = vunpack.c.h.b16 %v3994
    %v4566 = vunpack.c.l.b16 %v3995
    %v4567 = vunpack.c.h.b16 %v3995
    %v4568 = vunpack.c.l.b16 %v3996
    %v4569 = vunpack.c.h.b16 %v3996
    %v4570 = vunpack.c.l.b16 %v3997
    %v4571 = vunpack.c.h.b16 %v3997
    %v4572 = vunpack.c.l.b16 %v3998
    %v4573 = vunpack.c.h.b16 %v3998
    %v4574 = vunpack.c.l.b16 %v3999
    %v4575 = vunpack.c.h.b16 %v3999
    %v4576 = vunpack.c.l.b16 %v4000
    %v4577 = vunpack.c.h.b16 %v4000
    %v4578 = vunpack.c.l.b16 %v4001
    %v4579 = vunpack.c.h.b16 %v4001
    %v4580 = vunpack.c.l.b16 %v4002
    %v4581 = vunpack.c.h.b16 %v4002
    %v4582 = vunpack.c.l.b16 %v4003
    %v4583 = vunpack.c.h.b16 %v4003
    %v4584 = vunpack.c.l.b16 %v4004
    %v4585 = vunpack.c.h.b16 %v4004
    %v4586 = vunpack.c.l.b16 %v4005
    %v4587 = vunpack.c.h.b16 %v4005
    %v4588 = vunpack.c.l.b16 %v4006
    %v4589 = vunpack.c.h.b16 %v4006
    %v4590 = vunpack.c.l.b16 %v4007
    %v4591 = vunpack.c.h.b16 %v4007
    %v4592 = vunpack.c.l.b16 %v4008
    %v4593 = vunpack.c.h.b16 %v4008
    %v4594 = vunpack.c.l.b16 %v4009
    %v4595 = vunpack.c.h.b16 %v4009
    %v4596 = vunpack.c.l.b16 %v4010
    %v4597 = vunpack.c.h.b16 %v4010
    %v4598 = vunpack.c.l.b16 %v4011
    %v4599 = vunpack.c.h.b16 %v4011
    %v4600 = vunpack.c.l.b16 %v4012
    %v4601 = vunpack.c.h.b16 %v4012
    %v4602 = vunpack.c.l.b16 %v4013
    %v4603 = vunpack.c.h.b16 %v4013
    %v4604 = vunpack.c.l.b16 %v4014
    %v4605 = vunpack.c.h.b16 %v4014
    %v4606 = vunpack.c.l.b16 %v4015
    %v4607 = vunpack.c.h.b16 %v4015
    %v4608 = vunpack.c.l.b16 %v4016
    %v4609 = vunpack.c.h.b16 %v4016
    %v4610 = vunpack.c.l.b16 %v4017
    %v4611 = vunpack.c.h.b16 %v4017
    %v4612 = vunpack.c.l.b16 %v4018
    %v4613 = vunpack.c.h.b16 %v4018
    %v4614 = vunpack.c.l.b16 %v4019
    %v4615 = vunpack.c.h.b16 %v4019
    %v4616 = vunpack.c.l.b16 %v4020
    %v4617 = vunpack.c.h.b16 %v4020
    %v4618 = vunpack.c.l.b16 %v4021
    %v4619 = vunpack.c.h.b16 %v4021
    %v4620 = vunpack.c.l.b16 %v4022
    %v4621 = vunpack.c.h.b16 %v4022
    %v4622 = vunpack.c.l.b16 %v4023
    %v4623 = vunpack.c.h.b16 %v4023
    %v4624 = vunpack.c.l.b16 %v4024
    %v4625 = vunpack.c.h.b16 %v4024
    %v4626 = vunpack.c.l.b16 %v4025
    %v4627 = vunpack.c.h.b16 %v4025
    %v4628 = vunpack.c.l.b16 %v4026
    %v4629 = vunpack.c.h.b16 %v4026
    %v4630 = vunpack.c.l.b16 %v4027
    %v4631 = vunpack.c.h.b16 %v4027
    %v4632 = vunpack.c.l.b16 %v4028
    %v4633 = vunpack.c.h.b16 %v4028
    %v4634 = vunpack.c.l.b16 %v4029
    %v4635 = vunpack.c.h.b16 %v4029
    %v4636 = vunpack.c.l.b16 %v4030
    %v4637 = vunpack.c.h.b16 %v4030
    %v4638 = vunpack.c.l.b16 %v4031
    %v4639 = vunpack.c.h.b16 %v4031
    %v4640 = vunpack.c.l.b16 %v4032
    %v4641 = vunpack.c.h.b16 %v4032
    %v4642 = vunpack.c.l.b16 %v4033
    %v4643 = vunpack.c.h.b16 %v4033
    %v4644 = vunpack.c.l.b16 %v4034
    %v4645 = vunpack.c.h.b16 %v4034
    %v4646 = vunpack.c.l.b16 %v4035
    %v4647 = vunpack.c.h.b16 %v4035
    %v4648 = vunpack.c.l.b16 %v4036
    %v4649 = vunpack.c.h.b16 %v4036
    %v4650 = vunpack.c.l.b16 %v4037
    %v4651 = vunpack.c.h.b16 %v4037
    %v4652 = vunpack.c.l.b16 %v4038
    %v4653 = vunpack.c.h.b16 %v4038
    %v4654 = vunpack.c.l.b16 %v4039
    %v4655 = vunpack.c.h.b16 %v4039
    %v4656 = vunpack.c.l.b16 %v4040
    %v4657 = vunpack.c.h.b16 %v4040
    %v4658 = vunpack.c.l.b16 %v4041
    %v4659 = vunpack.c.h.b16 %v4041
    %v4660 = vunpack.c.l.b16 %v4042
    %v4661 = vunpack.c.h.b16 %v4042
    %v4662 = vunpack.c.l.b16 %v4043
    %v4663 = vunpack.c.h.b16 %v4043
    %v4664 = vunpack.c.l.b16 %v4044
    %v4665 = vunpack.c.h.b16 %v4044
    %v4666 = vunpack.c.l.b16 %v4045
    %v4667 = vunpack.c.h.b16 %v4045
    %v4668 = vunpack.c.l.b16 %v4046
    %v4669 = vunpack.c.h.b16 %v4046
    %v4670 = vunpack.c.l.b16 %v4047
    %v4671 = vunpack.c.h.b16 %v4047
    %v4672 = vunpack.c.l.b16 %v4048
    %v4673 = vunpack.c.h.b16 %v4048
    %v4674 = vunpack.c.l.b16 %v4049
    %v4675 = vunpack.c.h.b16 %v4049
    %v4676 = vunpack.c.l.b16 %v4050
    %v4677 = vunpack.c.h.b16 %v4050
    %v4678 = vunpack.c.l.b16 %v4051
    %v4679 = vunpack.c.h.b16 %v4051
    %v4680 = vunpack.c.l.b16 %v4052
    %v4681 = vunpack.c.h.b16 %v4052
    %v4682 = vunpack.c.l.b16 %v4053
    %v4683 = vunpack.c.h.b16 %v4053
    %v4684 = vunpack.c.l.b16 %v4054
    %v4685 = vunpack.c.h.b16 %v4054
    %v4686 = vunpack.c.l.b16 %v4055
    %v4687 = vunpack.c.h.b16 %v4055
    %v4688 = vunpack.c.l.b16 %v4056
    %v4689 = vunpack.c.h.b16 %v4056
    %v4690 = vunpack.c.l.b16 %v4057
    %v4691 = vunpack.c.h.b16 %v4057
    %v4692 = vunpack.c.l.b16 %v4058
    %v4693 = vunpack.c.h.b16 %v4058
    %v4694 = vunpack.c.l.b16 %v4059
    %v4695 = vunpack.c.h.b16 %v4059
    %v4696 = vunpack.c.l.b16 %v4060
    %v4697 = vunpack.c.h.b16 %v4060
    %v4698 = vunpack.c.l.b16 %v4061
    %v4699 = vunpack.c.h.b16 %v4061
    %v4700 = vunpack.c.l.b16 %v4062
    %v4701 = vunpack.c.h.b16 %v4062
    %v4702 = vunpack.c.l.b16 %v4063
    %v4703 = vunpack.c.h.b16 %v4063
    %v4704 = vunpack.c.l.b16 %v4064
    %v4705 = vunpack.c.h.b16 %v4064
    %v4706 = vunpack.c.l.b16 %v4065
    %v4707 = vunpack.c.h.b16 %v4065
    %v4708 = vunpack.c.l.b16 %v4066
    %v4709 = vunpack.c.h.b16 %v4066
    %v4710 = vunpack.c.l.b16 %v4067
    %v4711 = vunpack.c.h.b16 %v4067
    %v4712 = vunpack.c.l.b16 %v4068
    %v4713 = vunpack.c.h.b16 %v4068
    %v4714 = vunpack.c.l.b16 %v4069
    %v4715 = vunpack.c.h.b16 %v4069
    %v4716 = vunpack.c.l.b16 %v4070
    %v4717 = vunpack.c.h.b16 %v4070
    %v4718 = vunpack.c.l.b16 %v4071
    %v4719 = vunpack.c.h.b16 %v4071
    %v4720 = vunpack.c.l.b16 %v4072
    %v4721 = vunpack.c.h.b16 %v4072
    %v4722 = vunpack.c.l.b16 %v4073
    %v4723 = vunpack.c.h.b16 %v4073
    %v4724 = vunpack.c.l.b16 %v4074
    %v4725 = vunpack.c.h.b16 %v4074
    %v4726 = vunpack.c.l.b16 %v4075
    %v4727 = vunpack.c.h.b16 %v4075
    %v4728 = vunpack.c.l.b16 %v4076
    %v4729 = vunpack.c.h.b16 %v4076
    %v4730 = vunpack.c.l.b16 %v4077
    %v4731 = vunpack.c.h.b16 %v4077
    %v4732 = vunpack.c.l.b16 %v4078
    %v4733 = vunpack.c.h.b16 %v4078
    %v4734 = vunpack.c.l.b16 %v4079
    %v4735 = vunpack.c.h.b16 %v4079
    %v4736 = vunpack.c.l.b16 %v4080
    %v4737 = vunpack.c.h.b16 %v4080
    %v4738 = vunpack.c.l.b16 %v4081
    %v4739 = vunpack.c.h.b16 %v4081
    %v4740 = vunpack.c.l.b16 %v4082
    %v4741 = vunpack.c.h.b16 %v4082
    %v4742 = vunpack.c.l.b16 %v4083
    %v4743 = vunpack.c.h.b16 %v4083
    %v4744 = vunpack.c.l.b16 %v4084
    %v4745 = vunpack.c.h.b16 %v4084
    %v4746 = vunpack.c.l.b16 %v4085
    %v4747 = vunpack.c.h.b16 %v4085
    %v4748 = vunpack.c.l.b16 %v4086
    %v4749 = vunpack.c.h.b16 %v4086
    %v4750 = vunpack.c.l.b16 %v4087
    %v4751 = vunpack.c.h.b16 %v4087
    %v4752 = vunpack.c.l.b16 %v4088
    %v4753 = vunpack.c.h.b16 %v4088
    %v4754 = vunpack.c.l.b16 %v4089
    %v4755 = vunpack.c.h.b16 %v4089
    %v4756 = vunpack.c.l.b16 %v4090
    %v4757 = vunpack.c.h.b16 %v4090
    %v4758 = vunpack.c.l.b16 %v4091
    %v4759 = vunpack.c.h.b16 %v4091
    %v4760 = vunpack.c.l.b16 %v4092
    %v4761 = vunpack.c.h.b16 %v4092
    %v4762 = vunpack.c.l.b16 %v4093
    %v4763 = vunpack.c.h.b16 %v4093
    %v4764 = vunpack.c.l.b16 %v4094
    %v4765 = vunpack.c.h.b16 %v4094
    %v4766 = vunpack.c.l.b16 %v4095
    %v4767 = vunpack.c.h.b16 %v4095
    %v4768 = vunpack.c.l.b16 %v4096
    %v4769 = vunpack.c.h.b16 %v4096
    %v4770 = vunpack.c.l.b16 %v4097
    %v4771 = vunpack.c.h.b16 %v4097
    %v4772 = vunpack.c.l.b16 %v4098
    %v4773 = vunpack.c.h.b16 %v4098
    %v4774 = vunpack.c.l.b16 %v4099
    %v4775 = vunpack.c.h.b16 %v4099
    %v4776 = vunpack.c.l.b16 %v4100
    %v4777 = vunpack.c.h.b16 %v4100
    %v4778 = vunpack.c.l.b16 %v4101
    %v4779 = vunpack.c.h.b16 %v4101
    %v4780 = vunpack.c.l.b16 %v4102
    %v4781 = vunpack.c.h.b16 %v4102
    %v4782 = vunpack.c.l.b16 %v4103
    %v4783 = vunpack.c.h.b16 %v4103
    %v4784 = vunpack.c.l.b16 %v4104
    %v4785 = vunpack.c.h.b16 %v4104
    %v4786 = vunpack.c.l.b16 %v4105
    %v4787 = vunpack.c.h.b16 %v4105
    %v4788 = vunpack.c.l.b16 %v4106
    %v4789 = vunpack.c.h.b16 %v4106
    %v4790 = vunpack.c.l.b16 %v4107
    %v4791 = vunpack.c.h.b16 %v4107
    %v4792 = vunpack.c.l.b16 %v4108
    %v4793 = vunpack.c.h.b16 %v4108
    %v4794 = vunpack.c.l.b16 %v4109
    %v4795 = vunpack.c.h.b16 %v4109
    %v4796 = vunpack.c.l.b16 %v4110
    %v4797 = vunpack.c.h.b16 %v4110
    %v4798 = vunpack.c.l.b16 %v4111
    %v4799 = vunpack.c.h.b16 %v4111
    %v4800 = vunpack.c.l.b16 %v4112
    %v4801 = vunpack.c.h.b16 %v4112
    %v4802 = vunpack.c.l.b16 %v4113
    %v4803 = vunpack.c.h.b16 %v4113
    %v4804 = vunpack.c.l.b16 %v4114
    %v4805 = vunpack.c.h.b16 %v4114
    %v4806 = vunpack.c.l.b16 %v4115
    %v4807 = vunpack.c.h.b16 %v4115
    %v4808 = vunpack.c.l.b16 %v4116
    %v4809 = vunpack.c.h.b16 %v4116
    %v4810 = vunpack.c.l.b16 %v4117
    %v4811 = vunpack.c.h.b16 %v4117
    %v4812 = vunpack.c.l.b16 %v4118
    %v4813 = vunpack.c.h.b16 %v4118
    %v4814 = vunpack.c.l.b16 %v4119
    %v4815 = vunpack.c.h.b16 %v4119
    %v4816 = vunpack.c.l.b16 %v4120
    %v4817 = vunpack.c.h.b16 %v4120
    %v4818 = vunpack.c.l.b16 %v4121
    %v4819 = vunpack.c.h.b16 %v4121
    %v4820 = vunpack.c.l.b16 %v4122
    %v4821 = vunpack.c.h.b16 %v4122
    %v4822 = vunpack.c.l.b16 %v4123
    %v4823 = vunpack.c.h.b16 %v4123
    %v4824 = vunpack.c.l.b16 %v4124
    %v4825 = vunpack.c.h.b16 %v4124
    %v4826 = vunpack.c.l.b16 %v4125
    %v4827 = vunpack.c.h.b16 %v4125
    %v4828 = vunpack.c.l.b16 %v4126
    %v4829 = vunpack.c.h.b16 %v4126
    %v4830 = vunpack.c.l.b16 %v4127
    %v4831 = vunpack.c.h.b16 %v4127
    %v4832 = vunpack.c.l.b16 %v4128
    %v4833 = vunpack.c.h.b16 %v4128
    %v4834 = vunpack.c.l.b16 %v4129
    %v4835 = vunpack.c.h.b16 %v4129
    %v4836 = vunpack.c.l.b16 %v4130
    %v4837 = vunpack.c.h.b16 %v4130
    %v4838 = vunpack.c.l.b16 %v4131
    %v4839 = vunpack.c.h.b16 %v4131
    %v4840 = vunpack.c.l.b16 %v4132
    %v4841 = vunpack.c.h.b16 %v4132
    %v4842 = vunpack.c.l.b16 %v4133
    %v4843 = vunpack.c.h.b16 %v4133
    %v4844 = vunpack.c.l.b16 %v4134
    %v4845 = vunpack.c.h.b16 %v4134
    %v4846 = vunpack.c.l.b16 %v4135
    %v4847 = vunpack.c.h.b16 %v4135
    %v4848 = vunpack.c.l.b16 %v4136
    %v4849 = vunpack.c.h.b16 %v4136
    %v4850 = vunpack.c.l.b16 %v4137
    %v4851 = vunpack.c.h.b16 %v4137
    %v4852 = vunpack.c.l.b16 %v4138
    %v4853 = vunpack.c.h.b16 %v4138
    %v4854 = vunpack.c.l.b16 %v4139
    %v4855 = vunpack.c.h.b16 %v4139
    %v4856 = vunpack.c.l.b16 %v4140
    %v4857 = vunpack.c.h.b16 %v4140
    %v4858 = vunpack.c.l.b16 %v4141
    %v4859 = vunpack.c.h.b16 %v4141
    %v4860 = vunpack.c.l.b16 %v4142
    %v4861 = vunpack.c.h.b16 %v4142
    %v4862 = vunpack.c.l.b16 %v4143
    %v4863 = vunpack.c.h.b16 %v4143
    %v4864 = vunpack.c.l.b16 %v4144
    %v4865 = vunpack.c.h.b16 %v4144
    %v4866 = vunpack.c.l.b16 %v4145
    %v4867 = vunpack.c.h.b16 %v4145
    %v4868 = vunpack.c.l.b16 %v4146
    %v4869 = vunpack.c.h.b16 %v4146
    %v4870 = vunpack.c.l.b16 %v4147
    %v4871 = vunpack.c.h.b16 %v4147
    %v4872 = vunpack.c.l.b16 %v4148
    %v4873 = vunpack.c.h.b16 %v4148
    %v4874 = vunpack.c.l.b16 %v4149
    %v4875 = vunpack.c.h.b16 %v4149
    %v4876 = vunpack.c.l.b16 %v4150
    %v4877 = vunpack.c.h.b16 %v4150
    %v4878 = vunpack.c.l.b16 %v4151
    %v4879 = vunpack.c.h.b16 %v4151
    %v4880 = vunpack.c.l.b16 %v4152
    %v4881 = vunpack.c.h.b16 %v4152
    %v4882 = vunpack.c.l.b16 %v4153
    %v4883 = vunpack.c.h.b16 %v4153
    %v4884 = vunpack.c.l.b16 %v4154
    %v4885 = vunpack.c.h.b16 %v4154
    %v4886 = vunpack.c.l.b16 %v4155
    %v4887 = vunpack.c.h.b16 %v4155
    %v4888 = vunpack.c.l.b16 %v4156
    %v4889 = vunpack.c.h.b16 %v4156
    %v4890 = vunpack.c.l.b16 %v4157
    %v4891 = vunpack.c.h.b16 %v4157
    %v4892 = vunpack.c.l.b16 %v4158
    %v4893 = vunpack.c.h.b16 %v4158
    %v4894 = vunpack.c.l.b16 %v4159
    %v4895 = vunpack.c.h.b16 %v4159
    %v4896 = vunpack.c.l.b16 %v4160
    %v4897 = vunpack.c.h.b16 %v4160
    %v4898 = vunpack.c.l.b16 %v4161
    %v4899 = vunpack.c.h.b16 %v4161
    %v4900 = vunpack.c.l.b16 %v4162
    %v4901 = vunpack.c.h.b16 %v4162
    %v4902 = vunpack.c.l.b16 %v4163
    %v4903 = vunpack.c.h.b16 %v4163
    %v4904 = vunpack.c.l.b16 %v4164
    %v4905 = vunpack.c.h.b16 %v4164
    %v4906 = vunpack.c.l.b16 %v4165
    %v4907 = vunpack.c.h.b16 %v4165
    %v4908 = vunpack.c.l.b16 %v4166
    %v4909 = vunpack.c.h.b16 %v4166
    %v4910 = vunpack.c.l.b16 %v4167
    %v4911 = vunpack.c.h.b16 %v4167
    %v4912 = vpack.c.b16 %v4532, %v4528
    %v4913 = vpack.c.b16 %v4533, %v4529
    %v4914 = vpack.c.b16 %v4534, %v4530
    %v4915 = vpack.c.b16 %v4535, %v4531
    %v4916 = vpack.c.b16 %v4540, %v4536
    %v4917 = vpack.c.b16 %v4541, %v4537
    %v4918 = vpack.c.b16 %v4542, %v4538
    %v4919 = vpack.c.b16 %v4543, %v4539
    %v4920 = vpack.c.b16 %v4548, %v4544
    %v4921 = vpack.c.b16 %v4549, %v4545
    %v4922 = vpack.c.b16 %v4550, %v4546
    %v4923 = vpack.c.b16 %v4551, %v4547
    %v4924 = vpack.c.b16 %v4556, %v4552
    %v4925 = vpack.c.b16 %v4557, %v4553
    %v4926 = vpack.c.b16 %v4558, %v4554
    %v4927 = vpack.c.b16 %v4559, %v4555
    %v4928 = vpack.c.b16 %v4564, %v4560
    %v4929 = vpack.c.b16 %v4565, %v4561
    %v4930 = vpack.c.b16 %v4566, %v4562
    %v4931 = vpack.c.b16 %v4567, %v4563
    %v4932 = vpack.c.b16 %v4572, %v4568
    %v4933 = vpack.c.b16 %v4573, %v4569
    %v4934 = vpack.c.b16 %v4574, %v4570
    %v4935 = vpack.c.b16 %v4575, %v4571
    %v4936 = vpack.c.b16 %v4580, %v4576
    %v4937 = vpack.c.b16 %v4581, %v4577
    %v4938 = vpack.c.b16 %v4582, %v4578
    %v4939 = vpack.c.b16 %v4583, %v4579
    %v4940 = vpack.c.b16 %v4588, %v4584
    %v4941 = vpack.c.b16 %v4589, %v4585
    %v4942 = vpack.c.b16 %v4590, %v4586
    %v4943 = vpack.c.b16 %v4591, %v4587
    %v4944 = vpack.c.b16 %v4596, %v4592
    %v4945 = vpack.c.b16 %v4597, %v4593
    %v4946 = vpack.c.b16 %v4598, %v4594
    %v4947 = vpack.c.b16 %v4599, %v4595
    %v4948 = vpack.c.b16 %v4604, %v4600
    %v4949 = vpack.c.b16 %v4605, %v4601
    %v4950 = vpack.c.b16 %v4606, %v4602
    %v4951 = vpack.c.b16 %v4607, %v4603
    %v4952 = vpack.c.b16 %v4612, %v4608
    %v4953 = vpack.c.b16 %v4613, %v4609
    %v4954 = vpack.c.b16 %v4614, %v4610
    %v4955 = vpack.c.b16 %v4615, %v4611
    %v4956 = vpack.c.b16 %v4620, %v4616
    %v4957 = vpack.c.b16 %v4621, %v4617
    %v4958 = vpack.c.b16 %v4622, %v4618
    %v4959 = vpack.c.b16 %v4623, %v4619
    %v4960 = vpack.c.b16 %v4628, %v4624
    %v4961 = vpack.c.b16 %v4629, %v4625
    %v4962 = vpack.c.b16 %v4630, %v4626
    %v4963 = vpack.c.b16 %v4631, %v4627
    %v4964 = vpack.c.b16 %v4636, %v4632
    %v4965 = vpack.c.b16 %v4637, %v4633
    %v4966 = vpack.c.b16 %v4638, %v4634
    %v4967 = vpack.c.b16 %v4639, %v4635
    %v4968 = vpack.c.b16 %v4644, %v4640
    %v4969 = vpack.c.b16 %v4645, %v4641
    %v4970 = vpack.c.b16 %v4646, %v4642
    %v4971 = vpack.c.b16 %v4647, %v4643
    %v4972 = vpack.c.b16 %v4652, %v4648
    %v4973 = vpack.c.b16 %v4653, %v4649
    %v4974 = vpack.c.b16 %v4654, %v4650
    %v4975 = vpack.c.b16 %v4655, %v4651
    %v4976 = vpack.c.b16 %v4660, %v4656
    %v4977 = vpack.c.b16 %v4661, %v4657
    %v4978 = vpack.c.b16 %v4662, %v4658
    %v4979 = vpack.c.b16 %v4663, %v4659
    %v4980 = vpack.c.b16 %v4668, %v4664
    %v4981 = vpack.c.b16 %v4669, %v4665
    %v4982 = vpack.c.b16 %v4670, %v4666
    %v4983 = vpack.c.b16 %v4671, %v4667
    %v4984 = vpack.c.b16 %v4676, %v4672
    %v4985 = vpack.c.b16 %v4677, %v4673
    %v4986 = vpack.c.b16 %v4678, %v4674
    %v4987 = vpack.c.b16 %v4679, %v4675
    %v4988 = vpack.c.b16 %v4684, %v4680
    %v4989 = vpack.c.b16 %v4685, %v4681
    %v4990 = vpack.c.b16 %v4686, %v4682
    %v4991 = vpack.c.b16 %v4687, %v4683
    %v4992 = vpack.c.b16 %v4692, %v4688
    %v4993 = vpack.c.b16 %v4693, %v4689
    %v4994 = vpack.c.b16 %v4694, %v4690
    %v4995 = vpack.c.b16 %v4695, %v4691
    %v4996 = vpack.c.b16 %v4700, %v4696
    %v4997 = vpack.c.b16 %v4701, %v4697
    %v4998 = vpack.c.b16 %v4702, %v4698
    %v4999 = vpack.c.b16 %v4703, %v4699
    %v5000 = vpack.c.b16 %v4708, %v4704
    %v5001 = vpack.c.b16 %v4709, %v4705
    %v5002 = vpack.c.b16 %v4710, %v4706
    %v5003 = vpack.c.b16 %v4711, %v4707
    %v5004 = vpack.c.b16 %v4716, %v4712
    %v5005 = vpack.c.b16 %v4717, %v4713
    %v5006 = vpack.c.b16 %v4718, %v4714
    %v5007 = vpack.c.b16 %v4719, %v4715
    %v5008 = vpack.c.b16 %v4724, %v4720
    %v5009 = vpack.c.b16 %v4725, %v4721
    %v5010 = vpack.c.b16 %v4726, %v4722
    %v5011 = vpack.c.b16 %v4727, %v4723
    %v5012 = vpack.c.b16 %v4732, %v4728
    %v5013 = vpack.c.b16 %v4733, %v4729
    %v5014 = vpack.c.b16 %v4734, %v4730
    %v5015 = vpack.c.b16 %v4735, %v4731
    %v5016 = vpack.c.b16 %v4740, %v4736
    %v5017 = vpack.c.b16 %v4741, %v4737
    %v5018 = vpack.c.b16 %v4742, %v4738
    %v5019 = vpack.c.b16 %v4743, %v4739
    %v5020 = vpack.c.b16 %v4748, %v4744
    %v5021 = vpack.c.b16 %v4749, %v4745
    %v5022 = vpack.c.b16 %v4750, %v4746
    %v5023 = vpack.c.b16 %v4751, %v4747
    %v5024 = vpack.c.b16 %v4756, %v4752
    %v5025 = vpack.c.b16 %v4757, %v4753
    %v5026 = vpack.c.b16 %v4758, %v4754
    %v5027 = vpack.c.b16 %v4759, %v4755
    %v5028 = vpack.c.b16 %v4764, %v4760
    %v5029 = vpack.c.b16 %v4765, %v4761
    %v5030 = vpack.c.b16 %v4766, %v4762
    %v5031 = vpack.c.b16 %v4767, %v4763
    %v5032 = vpack.c.b16 %v4772, %v4768
    %v5033 = vpack.c.b16 %v4773, %v4769
    %v5034 = vpack.c.b16 %v4774, %v4770
    %v5035 = vpack.c.b16 %v4775, %v4771
    %v5036 = vpack.c.b16 %v4780, %v4776
    %v5037 = vpack.c.b16 %v4781, %v4777
    %v5038 = vpack.c.b16 %v4782, %v4778
    %v5039 = vpack.c.b16 %v4783, %v4779
    %v5040 = vpack.c.b16 %v4788, %v4784
    %v5041 = vpack.c.b16 %v4789, %v4785
    %v5042 = vpack.c.b16 %v4790, %v4786
    %v5043 = vpack.c.b16 %v4791, %v4787
    %v5044 = vpack.c.b16 %v4796, %v4792
    %v5045 = vpack.c.b16 %v4797, %v4793
    %v5046 = vpack.c.b16 %v4798, %v4794
    %v5047 = vpack.c.b16 %v4799, %v4795
    %v5048 = vpack.c.b16 %v4804, %v4800
    %v5049 = vpack.c.b16 %v4805, %v4801
    %v5050 = vpack.c.b16 %v4806, %v4802
    %v5051 = vpack.c.b16 %v4807, %v4803
    %v5052 = vpack.c.b16 %v4812, %v4808
    %v5053 = vpack.c.b16 %v4813, %v4809
    %v5054 = vpack.c.b16 %v4814, %v4810
    %v5055 = vpack.c.b16 %v4815, %v4811
    %v5056 = vpack.c.b16 %v4820, %v4816
    %v5057 = vpack.c.b16 %v4821, %v4817
    %v5058 = vpack.c.b16 %v4822, %v4818
    %v5059 = vpack.c.b16 %v4823, %v4819
    %v5060 = vpack.c.b16 %v4828, %v4824
    %v5061 = vpack.c.b16 %v4829, %v4825
    %v5062 = vpack.c.b16 %v4830, %v4826
    %v5063 = vpack.c.b16 %v4831, %v4827
    %v5064 = vpack.c.b16 %v4836, %v4832
    %v5065 = vpack.c.b16 %v4837, %v4833
    %v5066 = vpack.c.b16 %v4838, %v4834
    %v5067 = vpack.c.b16 %v4839, %v4835
    %v5068 = vpack.c.b16 %v4844, %v4840
    %v5069 = vpack.c.b16 %v4845, %v4841
    %v5070 = vpack.c.b16 %v4846, %v4842
    %v5071 = vpack.c.b16 %v4847, %v4843
    %v5072 = vpack.c.b16 %v4852, %v4848
    %v5073 = vpack.c.b16 %v4853, %v4849
    %v5074 = vpack.c.b16 %v4854, %v4850
    %v5075 = vpack.c.b16 %v4855, %v4851
    %v5076 = vpack.c.b16 %v4860, %v4856
    %v5077 = vpack.c.b16 %v4861, %v4857
    %v5078 = vpack.c.b16 %v4862, %v4858
    %v5079 = vpack.c.b16 %v4863, %v4859
    %v5080 = vpack.c.b16 %v4868, %v4864
    %v5081 = vpack.c.b16 %v4869, %v4865
    %v5082 = vpack.c.b16 %v4870, %v4866
    %v5083 = vpack.c.b16 %v4871, %v4867
    %v5084 = vpack.c.b16 %v4876, %v4872
    %v5085 = vpack.c.b16 %v4877, %v4873
    %v5086 = vpack.c.b16 %v4878, %v4874
    %v5087 = vpack.c.b16 %v4879, %v4875
    %v5088 = vpack.c.b16 %v4884, %v4880
    %v5089 = vpack.c.b16 %v4885, %v4881
    %v5090 = vpack.c.b16 %v4886, %v4882
    %v5091 = vpack.c.b16 %v4887, %v4883
    %v5092 = vpack.c.b16 %v4892, %v4888
    %v5093 = vpack.c.b16 %v4893, %v4889
    %v5094 = vpack.c.b16 %v4894, %v4890
    %v5095 = vpack.c.b16 %v4895, %v4891
    %v5096 = vpack.c.b16 %v4900, %v4896
    %v5097 = vpack.c.b16 %v4901, %v4897
    %v5098 = vpack.c.b16 %v4902, %v4898
    %v5099 = vpack.c.b16 %v4903, %v4899
    %v5100 = vpack.c.b16 %v4908, %v4904
    %v5101 = vpack.c.b16 %v4909, %v4905
    %v5102 = vpack.c.b16 %v4910, %v4906
    %v5103 = vpack.c.b16 %v4911, %v4907
    %5296 = vmatprep.subr.bf16.mxu0 %v4913
    %5297 = vmatpush1.bf16.msra.mxu0 %v4912
    %5298 = vmatprep.subr.bf16.mxu0 %v4917
    %5299 = vmatpush1.bf16.msra.mxu0 %v4916
    %5300 = vmatprep.subr.bf16.mxu0 %v4921
    %5301 = vmatpush1.bf16.msra.mxu0 %v4920
    %5302 = vmatprep.subr.bf16.mxu0 %v4925
    %5303 = vmatpush1.bf16.msra.mxu0 %v4924
    %5304 = vmatprep.subr.bf16.mxu0 %v4929
    %5305 = vmatpush1.bf16.msra.mxu0 %v4928
    %5306 = vmatprep.subr.bf16.mxu0 %v4933
    %5307 = vmatpush1.bf16.msra.mxu0 %v4932
    %5308 = vmatprep.subr.bf16.mxu0 %v4937
    %5309 = vmatpush1.bf16.msra.mxu0 %v4936
    %5310 = vmatprep.subr.bf16.mxu0 %v4941
    %5311 = vmatpush1.bf16.msra.mxu0 %v4940
    %5312 = vmatprep.subr.bf16.mxu0 %v4945
    %5313 = vmatpush1.bf16.msra.mxu0 %v4944
    %5314 = vmatprep.subr.bf16.mxu0 %v4949
    %5315 = vmatpush1.bf16.msra.mxu0 %v4948
    %5316 = vmatprep.subr.bf16.mxu0 %v4953
    %5317 = vmatpush1.bf16.msra.mxu0 %v4952
    %5318 = vmatprep.subr.bf16.mxu0 %v4957
    %5319 = vmatpush1.bf16.msra.mxu0 %v4956
    %5320 = vmatprep.subr.bf16.mxu0 %v4961
    %5321 = vmatpush1.bf16.msra.mxu0 %v4960
    %5322 = vmatprep.subr.bf16.mxu0 %v4965
    %5323 = vmatpush1.bf16.msra.mxu0 %v4964
    %5324 = vmatprep.subr.bf16.mxu0 %v4969
    %5325 = vmatpush1.bf16.msra.mxu0 %v4968
    %5326 = vmatprep.subr.bf16.mxu0 %v4973
    %5327 = vmatpush1.bf16.msra.mxu0 %v4972
    %5328 = vmatprep.mubr.bf16.mxu0 %v4201
    %5329 = vmatmul.mubr.bf16.gmra.mrb[0].mxu0 %v4184
    %v5330 = vpop.f32.mrb[0].mxu0
    %v5331 = vadd.f32 0.0, %v5330
    %v5332 = vpop.f32.mrb[0].mxu0
    %v5333 = vadd.f32 0.0, %v5332
    %v5334 = vpop.f32.mrb[0].mxu0
    %v5335 = vadd.f32 0.0, %v5334
    %v5336 = vpop.f32.mrb[0].mxu0
    %v5337 = vadd.f32 0.0, %v5336
    %5338 = vmatprep.mubr.bf16.mxu0 %v4287
    %5339 = vmatmul.mubr.bf16.gmra.mrb[0].mxu0 %v4278
    %v5340 = vpop.f32.mrb[0].mxu0
    %v5341 = vadd.f32 0.0, %v5340
    %v5342 = vpop.f32.mrb[0].mxu0
    %v5343 = vadd.f32 0.0, %v5342
    %v5344 = vpop.f32.mrb[0].mxu0
    %v5345 = vadd.f32 0.0, %v5344
    %v5346 = vpop.f32.mrb[0].mxu0
    %v5347 = vadd.f32 0.0, %v5346
    %5348 = vdwg.mxu0
    %5349 = vmatprep.subr.bf16.mxu0 %v4977
    %5350 = vmatpush1.bf16.msra.mxu0 %v4976
    %5351 = vmatprep.subr.bf16.mxu0 %v4981
    %5352 = vmatpush1.bf16.msra.mxu0 %v4980
    %5353 = vmatprep.subr.bf16.mxu0 %v4985
    %5354 = vmatpush1.bf16.msra.mxu0 %v4984
    %5355 = vmatprep.subr.bf16.mxu0 %v4989
    %5356 = vmatpush1.bf16.msra.mxu0 %v4988
    %5357 = vmatprep.subr.bf16.mxu0 %v4993
    %5358 = vmatpush1.bf16.msra.mxu0 %v4992
    %5359 = vmatprep.subr.bf16.mxu0 %v4997
    %5360 = vmatpush1.bf16.msra.mxu0 %v4996
    %5361 = vmatprep.subr.bf16.mxu0 %v5001
    %5362 = vmatpush1.bf16.msra.mxu0 %v5000
    %5363 = vmatprep.subr.bf16.mxu0 %v5005
    %5364 = vmatpush1.bf16.msra.mxu0 %v5004
    %5365 = vmatprep.subr.bf16.mxu0 %v5009
    %5366 = vmatpush1.bf16.msra.mxu0 %v5008
    %5367 = vmatprep.subr.bf16.mxu0 %v5013
    %5368 = vmatpush1.bf16.msra.mxu0 %v5012
    %5369 = vmatprep.subr.bf16.mxu0 %v5017
    %5370 = vmatpush1.bf16.msra.mxu0 %v5016
    %5371 = vmatprep.subr.bf16.mxu0 %v5021
    %5372 = vmatpush1.bf16.msra.mxu0 %v5020
    %5373 = vmatprep.subr.bf16.mxu0 %v5025
    %5374 = vmatpush1.bf16.msra.mxu0 %v5024
    %5375 = vmatprep.subr.bf16.mxu0 %v5029
    %5376 = vmatpush1.bf16.msra.mxu0 %v5028
    %5377 = vmatprep.subr.bf16.mxu0 %v5033
    %5378 = vmatpush1.bf16.msra.mxu0 %v5032
    %5379 = vmatprep.subr.bf16.mxu0 %v5037
    %5380 = vmatpush1.bf16.msra.mxu0 %v5036
    %5381 = vmatprep.mubr.bf16.mxu0 %v4235
    %5382 = vmatmul.mubr.bf16.gmra.mrb[0].mxu0 %v4218
    %v5383 = vpop.f32.mrb[0].mxu0
    %v5384 = vadd.f32 %v5331, %v5383
    %v5385 = vpop.f32.mrb[0].mxu0
    %v5386 = vadd.f32 %v5333, %v5385
    %v5387 = vpop.f32.mrb[0].mxu0
    %v5388 = vadd.f32 %v5335, %v5387
    %v5389 = vpop.f32.mrb[0].mxu0
    %v5390 = vadd.f32 %v5337, %v5389
    %5391 = vmatprep.mubr.bf16.mxu0 %v4305
    %5392 = vmatmul.mubr.bf16.gmra.mrb[0].mxu0 %v4296
    %v5393 = vpop.f32.mrb[0].mxu0
    %v5394 = vadd.f32 %v5341, %v5393
    %v5395 = vpop.f32.mrb[0].mxu0
    %v5396 = vadd.f32 %v5343, %v5395
    %v5397 = vpop.f32.mrb[0].mxu0
    %v5398 = vadd.f32 %v5345, %v5397
    %v5399 = vpop.f32.mrb[0].mxu0
    %v5400 = vadd.f32 %v5347, %v5399
    %5401 = vdwg.mxu0
    %5402 = vmatprep.subr.bf16.mxu0 %v5041
    %5403 = vmatpush1.bf16.msra.mxu0 %v5040
    %5404 = vmatprep.subr.bf16.mxu0 %v5045
    %5405 = vmatpush1.bf16.msra.mxu0 %v5044
    %5406 = vmatprep.subr.bf16.mxu0 %v5049
    %5407 = vmatpush1.bf16.msra.mxu0 %v5048
    %5408 = vmatprep.subr.bf16.mxu0 %v5053
    %5409 = vmatpush1.bf16.msra.mxu0 %v5052
    %5410 = vmatprep.subr.bf16.mxu0 %v5057
    %5411 = vmatpush1.bf16.msra.mxu0 %v5056
    %5412 = vmatprep.subr.bf16.mxu0 %v5061
    %5413 = vmatpush1.bf16.msra.mxu0 %v5060
    %5414 = vmatprep.subr.bf16.mxu0 %v5065
    %5415 = vmatpush1.bf16.msra.mxu0 %v5064
    %5416 = vmatprep.subr.bf16.mxu0 %v5069
    %5417 = vmatpush1.bf16.msra.mxu0 %v5068
    %5418 = vmatprep.subr.bf16.mxu0 %v5073
    %5419 = vmatpush1.bf16.msra.mxu0 %v5072
    %5420 = vmatprep.subr.bf16.mxu0 %v5077
    %5421 = vmatpush1.bf16.msra.mxu0 %v5076
    %5422 = vmatprep.subr.bf16.mxu0 %v5081
    %5423 = vmatpush1.bf16.msra.mxu0 %v5080
    %5424 = vmatprep.subr.bf16.mxu0 %v5085
    %5425 = vmatpush1.bf16.msra.mxu0 %v5084
    %5426 = vmatprep.subr.bf16.mxu0 %v5089
    %5427 = vmatpush1.bf16.msra.mxu0 %v5088
    %5428 = vmatprep.subr.bf16.mxu0 %v5093
    %5429 = vmatpush1.bf16.msra.mxu0 %v5092
    %5430 = vmatprep.subr.bf16.mxu0 %v5097
    %5431 = vmatpush1.bf16.msra.mxu0 %v5096
    %5432 = vmatprep.subr.bf16.mxu0 %v5101
    %5433 = vmatpush1.bf16.msra.mxu0 %v5100
    %5434 = vmatprep.mubr.bf16.mxu0 %v4269
    %5435 = vmatmul.mubr.bf16.gmra.mrb[0].mxu0 %v4252
    %v5436 = vpop.f32.mrb[0].mxu0
    %v5437 = vadd.f32 %v5384, %v5436
    %v5438 = vpop.f32.mrb[0].mxu0
    %v5439 = vadd.f32 %v5386, %v5438
    %v5440 = vpop.f32.mrb[0].mxu0
    %v5441 = vadd.f32 %v5388, %v5440
    %v5442 = vpop.f32.mrb[0].mxu0
    %v5443 = vadd.f32 %v5390, %v5442
    %5444 = vmatprep.mubr.bf16.mxu0 %v4323
    %5445 = vmatmul.mubr.bf16.gmra.mrb[0].mxu0 %v4314
    %v5446 = vpop.f32.mrb[0].mxu0
    %v5447 = vadd.f32 %v5394, %v5446
    %v5448 = vpop.f32.mrb[0].mxu0
    %v5449 = vadd.f32 %v5396, %v5448
    %v5450 = vpop.f32.mrb[0].mxu0
    %v5451 = vadd.f32 %v5398, %v5450
    %v5452 = vpop.f32.mrb[0].mxu0
    %v5453 = vadd.f32 %v5400, %v5452
    %5454 = vdwg.mxu0
    %5455 = vmatprep.subr.bf16.mxu0 %v4915
    %5456 = vmatpush1.bf16.msra.mxu0 %v4914
    %5457 = vmatprep.subr.bf16.mxu0 %v4919
    %5458 = vmatpush1.bf16.msra.mxu0 %v4918
    %5459 = vmatprep.subr.bf16.mxu0 %v4923
    %5460 = vmatpush1.bf16.msra.mxu0 %v4922
    %5461 = vmatprep.subr.bf16.mxu0 %v4927
    %5462 = vmatpush1.bf16.msra.mxu0 %v4926
    %5463 = vmatprep.subr.bf16.mxu0 %v4931
    %5464 = vmatpush1.bf16.msra.mxu0 %v4930
    %5465 = vmatprep.subr.bf16.mxu0 %v4935
    %5466 = vmatpush1.bf16.msra.mxu0 %v4934
    %5467 = vmatprep.subr.bf16.mxu0 %v4939
    %5468 = vmatpush1.bf16.msra.mxu0 %v4938
    %5469 = vmatprep.subr.bf16.mxu0 %v4943
    %5470 = vmatpush1.bf16.msra.mxu0 %v4942
    %5471 = vmatprep.subr.bf16.mxu0 %v4947
    %5472 = vmatpush1.bf16.msra.mxu0 %v4946
    %5473 = vmatprep.subr.bf16.mxu0 %v4951
    %5474 = vmatpush1.bf16.msra.mxu0 %v4950
    %5475 = vmatprep.subr.bf16.mxu0 %v4955
    %5476 = vmatpush1.bf16.msra.mxu0 %v4954
    %5477 = vmatprep.subr.bf16.mxu0 %v4959
    %5478 = vmatpush1.bf16.msra.mxu0 %v4958
    %5479 = vmatprep.subr.bf16.mxu0 %v4963
    %5480 = vmatpush1.bf16.msra.mxu0 %v4962
    %5481 = vmatprep.subr.bf16.mxu0 %v4967
    %5482 = vmatpush1.bf16.msra.mxu0 %v4966
    %5483 = vmatprep.subr.bf16.mxu0 %v4971
    %5484 = vmatpush1.bf16.msra.mxu0 %v4970
    %5485 = vmatprep.subr.bf16.mxu0 %v4975
    %5486 = vmatpush1.bf16.msra.mxu0 %v4974
    %5487 = vmatprep.mubr.bf16.mxu0 %v4201
    %5488 = vmatmul.mubr.bf16.gmra.mrb[0].mxu0 %v4184
    %v5489 = vpop.f32.mrb[0].mxu0
    %v5490 = vadd.f32 0.0, %v5489
    %v5491 = vpop.f32.mrb[0].mxu0
    %v5492 = vadd.f32 0.0, %v5491
    %v5493 = vpop.f32.mrb[0].mxu0
    %v5494 = vadd.f32 0.0, %v5493
    %v5495 = vpop.f32.mrb[0].mxu0
    %v5496 = vadd.f32 0.0, %v5495
    %5497 = vmatprep.mubr.bf16.mxu0 %v4287
    %5498 = vmatmul.mubr.bf16.gmra.mrb[0].mxu0 %v4278
    %v5499 = vpop.f32.mrb[0].mxu0
    %v5500 = vadd.f32 0.0, %v5499
    %v5501 = vpop.f32.mrb[0].mxu0
    %v5502 = vadd.f32 0.0, %v5501
    %v5503 = vpop.f32.mrb[0].mxu0
    %v5504 = vadd.f32 0.0, %v5503
    %v5505 = vpop.f32.mrb[0].mxu0
    %v5506 = vadd.f32 0.0, %v5505
    %5507 = vdwg.mxu0
    %5508 = vmatprep.subr.bf16.mxu0 %v4979
    %5509 = vmatpush1.bf16.msra.mxu0 %v4978
    %5510 = vmatprep.subr.bf16.mxu0 %v4983
    %5511 = vmatpush1.bf16.msra.mxu0 %v4982
    %5512 = vmatprep.subr.bf16.mxu0 %v4987
    %5513 = vmatpush1.bf16.msra.mxu0 %v4986
    %5514 = vmatprep.subr.bf16.mxu0 %v4991
    %5515 = vmatpush1.bf16.msra.mxu0 %v4990
    %5516 = vmatprep.subr.bf16.mxu0 %v4995
    %5517 = vmatpush1.bf16.msra.mxu0 %v4994
    %5518 = vmatprep.subr.bf16.mxu0 %v4999
    %5519 = vmatpush1.bf16.msra.mxu0 %v4998
    %5520 = vmatprep.subr.bf16.mxu0 %v5003
    %5521 = vmatpush1.bf16.msra.mxu0 %v5002
    %5522 = vmatprep.subr.bf16.mxu0 %v5007
    %5523 = vmatpush1.bf16.msra.mxu0 %v5006
    %5524 = vmatprep.subr.bf16.mxu0 %v5011
    %5525 = vmatpush1.bf16.msra.mxu0 %v5010
    %5526 = vmatprep.subr.bf16.mxu0 %v5015
    %5527 = vmatpush1.bf16.msra.mxu0 %v5014
    %5528 = vmatprep.subr.bf16.mxu0 %v5019
    %5529 = vmatpush1.bf16.msra.mxu0 %v5018
    %5530 = vmatprep.subr.bf16.mxu0 %v5023
    %5531 = vmatpush1.bf16.msra.mxu0 %v5022
    %5532 = vmatprep.subr.bf16.mxu0 %v5027
    %5533 = vmatpush1.bf16.msra.mxu0 %v5026
    %5534 = vmatprep.subr.bf16.mxu0 %v5031
    %5535 = vmatpush1.bf16.msra.mxu0 %v5030
    %5536 = vmatprep.subr.bf16.mxu0 %v5035
    %5537 = vmatpush1.bf16.msra.mxu0 %v5034
    %5538 = vmatprep.subr.bf16.mxu0 %v5039
    %5539 = vmatpush1.bf16.msra.mxu0 %v5038
    %5540 = vmatprep.mubr.bf16.mxu0 %v4235
    %5541 = vmatmul.mubr.bf16.gmra.mrb[0].mxu0 %v4218
    %v5542 = vpop.f32.mrb[0].mxu0
    %v5543 = vadd.f32 %v5490, %v5542
    %v5544 = vpop.f32.mrb[0].mxu0
    %v5545 = vadd.f32 %v5492, %v5544
    %v5546 = vpop.f32.mrb[0].mxu0
    %v5547 = vadd.f32 %v5494, %v5546
    %v5548 = vpop.f32.mrb[0].mxu0
    %v5549 = vadd.f32 %v5496, %v5548
    %5550 = vmatprep.mubr.bf16.mxu0 %v4305
    %5551 = vmatmul.mubr.bf16.gmra.mrb[0].mxu0 %v4296
    %v5552 = vpop.f32.mrb[0].mxu0
    %v5553 = vadd.f32 %v5500, %v5552
    %v5554 = vpop.f32.mrb[0].mxu0
    %v5555 = vadd.f32 %v5502, %v5554
    %v5556 = vpop.f32.mrb[0].mxu0
    %v5557 = vadd.f32 %v5504, %v5556
    %v5558 = vpop.f32.mrb[0].mxu0
    %v5559 = vadd.f32 %v5506, %v5558
    %5560 = vdwg.mxu0
    %5561 = vmatprep.subr.bf16.mxu0 %v5043
    %5562 = vmatpush1.bf16.msra.mxu0 %v5042
    %5563 = vmatprep.subr.bf16.mxu0 %v5047
    %5564 = vmatpush1.bf16.msra.mxu0 %v5046
    %5565 = vmatprep.subr.bf16.mxu0 %v5051
    %5566 = vmatpush1.bf16.msra.mxu0 %v5050
    %5567 = vmatprep.subr.bf16.mxu0 %v5055
    %5568 = vmatpush1.bf16.msra.mxu0 %v5054
    %5569 = vmatprep.subr.bf16.mxu0 %v5059
    %5570 = vmatpush1.bf16.msra.mxu0 %v5058
    %5571 = vmatprep.subr.bf16.mxu0 %v5063
    %5572 = vmatpush1.bf16.msra.mxu0 %v5062
    %5573 = vmatprep.subr.bf16.mxu0 %v5067
    %5574 = vmatpush1.bf16.msra.mxu0 %v5066
    %5575 = vmatprep.subr.bf16.mxu0 %v5071
    %5576 = vmatpush1.bf16.msra.mxu0 %v5070
    %5577 = vmatprep.subr.bf16.mxu0 %v5075
    %5578 = vmatpush1.bf16.msra.mxu0 %v5074
    %5579 = vmatprep.subr.bf16.mxu0 %v5079
    %5580 = vmatpush1.bf16.msra.mxu0 %v5078
    %5581 = vmatprep.subr.bf16.mxu0 %v5083
    %5582 = vmatpush1.bf16.msra.mxu0 %v5082
    %5583 = vmatprep.subr.bf16.mxu0 %v5087
    %5584 = vmatpush1.bf16.msra.mxu0 %v5086
    %5585 = vmatprep.subr.bf16.mxu0 %v5091
    %5586 = vmatpush1.bf16.msra.mxu0 %v5090
    %5587 = vmatprep.subr.bf16.mxu0 %v5095
    %5588 = vmatpush1.bf16.msra.mxu0 %v5094
    %5589 = vmatprep.subr.bf16.mxu0 %v5099
    %5590 = vmatpush1.bf16.msra.mxu0 %v5098
    %5591 = vmatprep.subr.bf16.mxu0 %v5103
    %5592 = vmatpush1.bf16.msra.mxu0 %v5102
    %5593 = vmatprep.mubr.bf16.mxu0 %v4269
    %5594 = vmatmul.mubr.bf16.gmra.mrb[0].mxu0 %v4252
    %v5595 = vpop.f32.mrb[0].mxu0
    %v5596 = vadd.f32 %v5543, %v5595
    %v5597 = vpop.f32.mrb[0].mxu0
    %v5598 = vadd.f32 %v5545, %v5597
    %v5599 = vpop.f32.mrb[0].mxu0
    %v5600 = vadd.f32 %v5547, %v5599
    %v5601 = vpop.f32.mrb[0].mxu0
    %v5602 = vadd.f32 %v5549, %v5601
    %5603 = vmatprep.mubr.bf16.mxu0 %v4323
    %5604 = vmatmul.mubr.bf16.gmra.mrb[0].mxu0 %v4314
    %v5605 = vpop.f32.mrb[0].mxu0
    %v5606 = vadd.f32 %v5553, %v5605
    %v5607 = vpop.f32.mrb[0].mxu0
    %v5608 = vadd.f32 %v5555, %v5607
    %v5609 = vpop.f32.mrb[0].mxu0
    %v5610 = vadd.f32 %v5557, %v5609
    %v5611 = vpop.f32.mrb[0].mxu0
    %v5612 = vadd.f32 %v5559, %v5611
    %5613 = vdwg.mxu0
    %v5614 = vadd.f32 %v5437, %v5441
    %v5615 = vadd.f32 %v5614, %v5447
    %v5616 = vadd.f32 %v5615, %v5451
    %v5617 = vrot.slane %v5616, 4
    %v5618 = vadd.f32 %v5616, %v5617
    %v5619 = vrot.slane %v5618, 2
    %v5620 = vadd.f32 %v5618, %v5619
    %v5621 = vrot.slane %v5620, 1
    %v5622 = vadd.f32 %v5620, %v5621
    %v5623 = vadd.f32 %v5439, %v5443
    %v5624 = vadd.f32 %v5623, %v5449
    %v5625 = vadd.f32 %v5624, %v5453
    %v5626 = vrot.slane %v5625, 4
    %v5627 = vadd.f32 %v5625, %v5626
    %v5628 = vrot.slane %v5627, 2
    %v5629 = vadd.f32 %v5627, %v5628
    %v5630 = vrot.slane %v5629, 1
    %v5631 = vadd.f32 %v5629, %v5630
    %v5632 = vadd.f32 %v5596, %v5600
    %v5633 = vadd.f32 %v5632, %v5606
    %v5634 = vadd.f32 %v5633, %v5610
    %v5635 = vrot.slane %v5634, 4
    %v5636 = vadd.f32 %v5634, %v5635
    %v5637 = vrot.slane %v5636, 2
    %v5638 = vadd.f32 %v5636, %v5637
    %v5639 = vrot.slane %v5638, 1
    %v5640 = vadd.f32 %v5638, %v5639
    %v5641 = vadd.f32 %v5598, %v5602
    %v5642 = vadd.f32 %v5641, %v5608
    %v5643 = vadd.f32 %v5642, %v5612
    %v5644 = vrot.slane %v5643, 4
    %v5645 = vadd.f32 %v5643, %v5644
    %v5646 = vrot.slane %v5645, 2
    %v5647 = vadd.f32 %v5645, %v5646
    %v5648 = vrot.slane %v5647, 1
    %v5649 = vadd.f32 %v5647, %v5648
    %v5650 = vmul.f32 %v5437, %v5437
    %v5651 = vmul.f32 %v5439, %v5439
    %v5652 = vmul.f32 %v5596, %v5596
    %v5653 = vmul.f32 %v5598, %v5598
    %v5654 = vmul.f32 %v5441, %v5441
    %v5655 = vmul.f32 %v5443, %v5443
    %v5656 = vmul.f32 %v5600, %v5600
    %v5657 = vmul.f32 %v5602, %v5602
    %v5658 = vmul.f32 %v5447, %v5447
    %v5659 = vmul.f32 %v5449, %v5449
    %v5660 = vmul.f32 %v5606, %v5606
    %v5661 = vmul.f32 %v5608, %v5608
    %v5662 = vmul.f32 %v5451, %v5451
    %v5663 = vmul.f32 %v5453, %v5453
    %v5664 = vmul.f32 %v5610, %v5610
    %v5665 = vmul.f32 %v5612, %v5612
    %v5666 = vadd.f32 %v5650, %v5654
    %v5667 = vadd.f32 %v5666, %v5658
    %v5668 = vadd.f32 %v5667, %v5662
    %v5669 = vrot.slane %v5668, 4
    %v5670 = vadd.f32 %v5668, %v5669
    %v5671 = vrot.slane %v5670, 2
    %v5672 = vadd.f32 %v5670, %v5671
    %v5673 = vrot.slane %v5672, 1
    %v5674 = vadd.f32 %v5672, %v5673
    %v5675 = vadd.f32 %v5651, %v5655
    %v5676 = vadd.f32 %v5675, %v5659
    %v5677 = vadd.f32 %v5676, %v5663
    %v5678 = vrot.slane %v5677, 4
    %v5679 = vadd.f32 %v5677, %v5678
    %v5680 = vrot.slane %v5679, 2
    %v5681 = vadd.f32 %v5679, %v5680
    %v5682 = vrot.slane %v5681, 1
    %v5683 = vadd.f32 %v5681, %v5682
    %v5684 = vadd.f32 %v5652, %v5656
    %v5685 = vadd.f32 %v5684, %v5660
    %v5686 = vadd.f32 %v5685, %v5664
    %v5687 = vrot.slane %v5686, 4
    %v5688 = vadd.f32 %v5686, %v5687
    %v5689 = vrot.slane %v5688, 2
    %v5690 = vadd.f32 %v5688, %v5689
    %v5691 = vrot.slane %v5690, 1
    %v5692 = vadd.f32 %v5690, %v5691
    %v5693 = vadd.f32 %v5653, %v5657
    %v5694 = vadd.f32 %v5693, %v5661
    %v5695 = vadd.f32 %v5694, %v5665
    %v5696 = vrot.slane %v5695, 4
    %v5697 = vadd.f32 %v5695, %v5696
    %v5698 = vrot.slane %v5697, 2
    %v5699 = vadd.f32 %v5697, %v5698
    %v5700 = vrot.slane %v5699, 1
    %v5701 = vadd.f32 %v5699, %v5700
    %v5702 = vsel %vm2333, %v5622, %v5674
    %v5703 = vsel %vm2333, %v5631, %v5683
    %v5704 = vsel %vm2333, %v5640, %v5692
    %v5705 = vsel %vm2333, %v5649, %v5701
    %v5706 = vld [vmem:[%s9] sm:$0xff]
    %v5707 = vld [vmem:[%s9 + $0x8] sm:$0xff]
    %v5708 = vld [vmem:[%s9 + $0x10] sm:$0xff]
    %v5709 = vld [vmem:[%s9 + $0x18] sm:$0xff]
    %v5710 = vld [vmem:[%s9 + $0x20] sm:$0xff]
    %v5711 = vld [vmem:[%s9 + $0x28] sm:$0xff]
    %v5712 = vld [vmem:[%s9 + $0x30] sm:$0xff]
    %v5713 = vld [vmem:[%s9 + $0x38] sm:$0xff]
    %v5714 = vld [vmem:[%s9 + $0x40] sm:$0xff]
    %v5715 = vld [vmem:[%s9 + $0x48] sm:$0xff]
    %v5716 = vld [vmem:[%s9 + $0x50] sm:$0xff]
    %v5717 = vld [vmem:[%s9 + $0x58] sm:$0xff]
    %v5718 = vld [vmem:[%s9 + $0x60] sm:$0xff]
    %v5719 = vld [vmem:[%s9 + $0x68] sm:$0xff]
    %v5720 = vld [vmem:[%s9 + $0x70] sm:$0xff]
    %v5721 = vld [vmem:[%s9 + $0x78] sm:$0xff]
    %v5722 = vld [vmem:[%s9 + $0x80] sm:$0xff]
    %v5723 = vld [vmem:[%s9 + $0x88] sm:$0xff]
    %v5724 = vld [vmem:[%s9 + $0x90] sm:$0xff]
    %v5725 = vld [vmem:[%s9 + $0x98] sm:$0xff]
    %v5726 = vld [vmem:[%s9 + $0xa0] sm:$0xff]
    %v5727 = vld [vmem:[%s9 + $0xa8] sm:$0xff]
    %v5728 = vld [vmem:[%s9 + $0xb0] sm:$0xff]
    %v5729 = vld [vmem:[%s9 + $0xb8] sm:$0xff]
    %v5730 = vld [vmem:[%s9 + $0xc0] sm:$0xff]
    %v5731 = vld [vmem:[%s9 + $0xc8] sm:$0xff]
    %v5732 = vld [vmem:[%s9 + $0xd0] sm:$0xff]
    %v5733 = vld [vmem:[%s9 + $0xd8] sm:$0xff]
    %v5734 = vld [vmem:[%s9 + $0xe0] sm:$0xff]
    %v5735 = vld [vmem:[%s9 + $0xe8] sm:$0xff]
    %v5736 = vld [vmem:[%s9 + $0xf0] sm:$0xff]
    %v5737 = vld [vmem:[%s9 + $0xf8] sm:$0xff]
    %v5738 = vld [vmem:[%s9 + $0x100] sm:$0xff]
    %v5739 = vld [vmem:[%s9 + $0x108] sm:$0xff]
    %v5740 = vld [vmem:[%s9 + $0x110] sm:$0xff]
    %v5741 = vld [vmem:[%s9 + $0x118] sm:$0xff]
    %v5742 = vld [vmem:[%s9 + $0x120] sm:$0xff]
    %v5743 = vld [vmem:[%s9 + $0x128] sm:$0xff]
    %v5744 = vld [vmem:[%s9 + $0x130] sm:$0xff]
    %v5745 = vld [vmem:[%s9 + $0x138] sm:$0xff]
    %v5746 = vld [vmem:[%s9 + $0x140] sm:$0xff]
    %v5747 = vld [vmem:[%s9 + $0x148] sm:$0xff]
    %v5748 = vld [vmem:[%s9 + $0x150] sm:$0xff]
    %v5749 = vld [vmem:[%s9 + $0x158] sm:$0xff]
    %v5750 = vld [vmem:[%s9 + $0x160] sm:$0xff]
    %v5751 = vld [vmem:[%s9 + $0x168] sm:$0xff]
    %v5752 = vld [vmem:[%s9 + $0x170] sm:$0xff]
    %v5753 = vld [vmem:[%s9 + $0x178] sm:$0xff]
    %v5754 = vld [vmem:[%s9 + $0x180] sm:$0xff]
    %v5755 = vld [vmem:[%s9 + $0x188] sm:$0xff]
    %v5756 = vld [vmem:[%s9 + $0x190] sm:$0xff]
    %v5757 = vld [vmem:[%s9 + $0x198] sm:$0xff]
    %v5758 = vld [vmem:[%s9 + $0x1a0] sm:$0xff]
    %v5759 = vld [vmem:[%s9 + $0x1a8] sm:$0xff]
    %v5760 = vld [vmem:[%s9 + $0x1b0] sm:$0xff]
    %v5761 = vld [vmem:[%s9 + $0x1b8] sm:$0xff]
    %v5762 = vld [vmem:[%s9 + $0x1c0] sm:$0xff]
    %v5763 = vld [vmem:[%s9 + $0x1c8] sm:$0xff]
    %v5764 = vld [vmem:[%s9 + $0x1d0] sm:$0xff]
    %v5765 = vld [vmem:[%s9 + $0x1d8] sm:$0xff]
    %v5766 = vld [vmem:[%s9 + $0x1e0] sm:$0xff]
    %v5767 = vld [vmem:[%s9 + $0x1e8] sm:$0xff]
    %v5768 = vld [vmem:[%s9 + $0x1f0] sm:$0xff]
    %v5769 = vld [vmem:[%s9 + $0x1f8] sm:$0xff]
    %5770 = vmatprep.subr.mxu0 0.0
    %v5771 = vand.u32 %v5706, 4294901760
    %5772 = vmatpush1.msra.mxu0 %v5771
    %5773 = vmatprep.subr.mxu0 0.0
    %v5774 = vand.u32 %v5707, 4294901760
    %5775 = vmatpush1.msra.mxu0 %v5774
    %5776 = vmatprep.subr.mxu0 0.0
    %v5777 = vand.u32 %v5708, 4294901760
    %5778 = vmatpush1.msra.mxu0 %v5777
    %5779 = vmatprep.subr.mxu0 0.0
    %v5780 = vand.u32 %v5709, 4294901760
    %5781 = vmatpush1.msra.mxu0 %v5780
    %5782 = vmatprep.subr.mxu0 0.0
    %v5783 = vand.u32 %v5710, 4294901760
    %5784 = vmatpush1.msra.mxu0 %v5783
    %5785 = vmatprep.subr.mxu0 0.0
    %v5786 = vand.u32 %v5711, 4294901760
    %5787 = vmatpush1.msra.mxu0 %v5786
    %5788 = vmatprep.subr.mxu0 0.0
    %v5789 = vand.u32 %v5712, 4294901760
    %5790 = vmatpush1.msra.mxu0 %v5789
    %5791 = vmatprep.subr.mxu0 0.0
    %v5792 = vand.u32 %v5713, 4294901760
    %5793 = vmatpush1.msra.mxu0 %v5792
    %5794 = vmatprep.subr.mxu0 0.0
    %v5795 = vand.u32 %v5714, 4294901760
    %5796 = vmatpush1.msra.mxu0 %v5795
    %5797 = vmatprep.subr.mxu0 0.0
    %v5798 = vand.u32 %v5715, 4294901760
    %5799 = vmatpush1.msra.mxu0 %v5798
    %5800 = vmatprep.subr.mxu0 0.0
    %v5801 = vand.u32 %v5716, 4294901760
    %5802 = vmatpush1.msra.mxu0 %v5801
    %5803 = vmatprep.subr.mxu0 0.0
    %v5804 = vand.u32 %v5717, 4294901760
    %5805 = vmatpush1.msra.mxu0 %v5804
    %5806 = vmatprep.subr.mxu0 0.0
    %v5807 = vand.u32 %v5718, 4294901760
    %5808 = vmatpush1.msra.mxu0 %v5807
    %5809 = vmatprep.subr.mxu0 0.0
    %v5810 = vand.u32 %v5719, 4294901760
    %5811 = vmatpush1.msra.mxu0 %v5810
    %5812 = vmatprep.subr.mxu0 0.0
    %v5813 = vand.u32 %v5720, 4294901760
    %5814 = vmatpush1.msra.mxu0 %v5813
    %5815 = vmatprep.subr.mxu0 0.0
    %v5816 = vand.u32 %v5721, 4294901760
    %5817 = vmatpush1.msra.mxu0 %v5816
    %5818 = vmatprep.subr.mxu0 0.0
    %v5819 = vand.u32 %v5722, 4294901760
    %5820 = vmatpush1.msra.mxu0 %v5819
    %5821 = vmatprep.subr.mxu0 0.0
    %v5822 = vand.u32 %v5723, 4294901760
    %5823 = vmatpush1.msra.mxu0 %v5822
    %5824 = vmatprep.subr.mxu0 0.0
    %v5825 = vand.u32 %v5724, 4294901760
    %5826 = vmatpush1.msra.mxu0 %v5825
    %5827 = vmatprep.subr.mxu0 0.0
    %v5828 = vand.u32 %v5725, 4294901760
    %5829 = vmatpush1.msra.mxu0 %v5828
    %5830 = vmatprep.subr.mxu0 0.0
    %v5831 = vand.u32 %v5726, 4294901760
    %5832 = vmatpush1.msra.mxu0 %v5831
    %5833 = vmatprep.subr.mxu0 0.0
    %v5834 = vand.u32 %v5727, 4294901760
    %5835 = vmatpush1.msra.mxu0 %v5834
    %5836 = vmatprep.subr.mxu0 0.0
    %v5837 = vand.u32 %v5728, 4294901760
    %5838 = vmatpush1.msra.mxu0 %v5837
    %5839 = vmatprep.subr.mxu0 0.0
    %v5840 = vand.u32 %v5729, 4294901760
    %5841 = vmatpush1.msra.mxu0 %v5840
    %5842 = vmatprep.subr.mxu0 0.0
    %v5843 = vand.u32 %v5730, 4294901760
    %5844 = vmatpush1.msra.mxu0 %v5843
    %5845 = vmatprep.subr.mxu0 0.0
    %v5846 = vand.u32 %v5731, 4294901760
    %5847 = vmatpush1.msra.mxu0 %v5846
    %5848 = vmatprep.subr.mxu0 0.0
    %v5849 = vand.u32 %v5732, 4294901760
    %5850 = vmatpush1.msra.mxu0 %v5849
    %5851 = vmatprep.subr.mxu0 0.0
    %v5852 = vand.u32 %v5733, 4294901760
    %5853 = vmatpush1.msra.mxu0 %v5852
    %5854 = vmatprep.subr.mxu0 0.0
    %v5855 = vand.u32 %v5734, 4294901760
    %5856 = vmatpush1.msra.mxu0 %v5855
    %5857 = vmatprep.subr.mxu0 0.0
    %v5858 = vand.u32 %v5735, 4294901760
    %5859 = vmatpush1.msra.mxu0 %v5858
    %5860 = vmatprep.subr.mxu0 0.0
    %v5861 = vand.u32 %v5736, 4294901760
    %5862 = vmatpush1.msra.mxu0 %v5861
    %5863 = vmatprep.subr.mxu0 0.0
    %v5864 = vand.u32 %v5737, 4294901760
    %5865 = vmatpush1.msra.mxu0 %v5864
    %v5866 = vand.u32 %v5703, 4294901760
    %v5867 = vsub.f32 %v5703, %v5866
    %v5868 = vand.u32 %v5867, 4294901760
    %v5869 = vsub.f32 %v5867, %v5868
    %v5870 = vand.u32 %v5869, 4294901760
    %5871 = vmatprep.mubr.f32.mxu0 %v5870
    %v5872 = vand.u32 %v5702, 4294901760
    %v5873 = vsub.f32 %v5702, %v5872
    %v5874 = vand.u32 %v5873, 4294901760
    %v5875 = vsub.f32 %v5873, %v5874
    %v5876 = vand.u32 %v5875, 4294901760
    %5877 = vmatmul.mubr.f32.gmra.mrb[0].mxu0 %v5876
    %v5878 = vpop.f32.mrb[0].mxu0
    %v5879 = vadd.f32 0.0, %v5878
    %v5880 = vpop.f32.mrb[0].mxu0
    %5881 = vdwg.mxu0
    %5882 = vmatprep.subr.mxu0 0.0
    %v5883 = vand.u32 %v5706, 4294901760
    %v5884 = vsub.f32 %v5706, %v5883
    %v5885 = vand.u32 %v5884, 4294901760
    %v5886 = vsub.f32 %v5884, %v5885
    %v5887 = vand.u32 %v5886, 4294901760
    %5888 = vmatpush1.msra.mxu0 %v5887
    %5889 = vmatprep.subr.mxu0 0.0
    %v5890 = vand.u32 %v5707, 4294901760
    %v5891 = vsub.f32 %v5707, %v5890
    %v5892 = vand.u32 %v5891, 4294901760
    %v5893 = vsub.f32 %v5891, %v5892
    %v5894 = vand.u32 %v5893, 4294901760
    %5895 = vmatpush1.msra.mxu0 %v5894
    %5896 = vmatprep.subr.mxu0 0.0
    %v5897 = vand.u32 %v5708, 4294901760
    %v5898 = vsub.f32 %v5708, %v5897
    %v5899 = vand.u32 %v5898, 4294901760
    %v5900 = vsub.f32 %v5898, %v5899
    %v5901 = vand.u32 %v5900, 4294901760
    %5902 = vmatpush1.msra.mxu0 %v5901
    %5903 = vmatprep.subr.mxu0 0.0
    %v5904 = vand.u32 %v5709, 4294901760
    %v5905 = vsub.f32 %v5709, %v5904
    %v5906 = vand.u32 %v5905, 4294901760
    %v5907 = vsub.f32 %v5905, %v5906
    %v5908 = vand.u32 %v5907, 4294901760
    %5909 = vmatpush1.msra.mxu0 %v5908
    %5910 = vmatprep.subr.mxu0 0.0
    %v5911 = vand.u32 %v5710, 4294901760
    %v5912 = vsub.f32 %v5710, %v5911
    %v5913 = vand.u32 %v5912, 4294901760
    %v5914 = vsub.f32 %v5912, %v5913
    %v5915 = vand.u32 %v5914, 4294901760
    %5916 = vmatpush1.msra.mxu0 %v5915
    %5917 = vmatprep.subr.mxu0 0.0
    %v5918 = vand.u32 %v5711, 4294901760
    %v5919 = vsub.f32 %v5711, %v5918
    %v5920 = vand.u32 %v5919, 4294901760
    %v5921 = vsub.f32 %v5919, %v5920
    %v5922 = vand.u32 %v5921, 4294901760
    %5923 = vmatpush1.msra.mxu0 %v5922
    %5924 = vmatprep.subr.mxu0 0.0
    %v5925 = vand.u32 %v5712, 4294901760
    %v5926 = vsub.f32 %v5712, %v5925
    %v5927 = vand.u32 %v5926, 4294901760
    %v5928 = vsub.f32 %v5926, %v5927
    %v5929 = vand.u32 %v5928, 4294901760
    %5930 = vmatpush1.msra.mxu0 %v5929
    %5931 = vmatprep.subr.mxu0 0.0
    %v5932 = vand.u32 %v5713, 4294901760
    %v5933 = vsub.f32 %v5713, %v5932
    %v5934 = vand.u32 %v5933, 4294901760
    %v5935 = vsub.f32 %v5933, %v5934
    %v5936 = vand.u32 %v5935, 4294901760
    %5937 = vmatpush1.msra.mxu0 %v5936
    %5938 = vmatprep.subr.mxu0 0.0
    %v5939 = vand.u32 %v5714, 4294901760
    %v5940 = vsub.f32 %v5714, %v5939
    %v5941 = vand.u32 %v5940, 4294901760
    %v5942 = vsub.f32 %v5940, %v5941
    %v5943 = vand.u32 %v5942, 4294901760
    %5944 = vmatpush1.msra.mxu0 %v5943
    %5945 = vmatprep.subr.mxu0 0.0
    %v5946 = vand.u32 %v5715, 4294901760
    %v5947 = vsub.f32 %v5715, %v5946
    %v5948 = vand.u32 %v5947, 4294901760
    %v5949 = vsub.f32 %v5947, %v5948
    %v5950 = vand.u32 %v5949, 4294901760
    %5951 = vmatpush1.msra.mxu0 %v5950
    %5952 = vmatprep.subr.mxu0 0.0
    %v5953 = vand.u32 %v5716, 4294901760
    %v5954 = vsub.f32 %v5716, %v5953
    %v5955 = vand.u32 %v5954, 4294901760
    %v5956 = vsub.f32 %v5954, %v5955
    %v5957 = vand.u32 %v5956, 4294901760
    %5958 = vmatpush1.msra.mxu0 %v5957
    %5959 = vmatprep.subr.mxu0 0.0
    %v5960 = vand.u32 %v5717, 4294901760
    %v5961 = vsub.f32 %v5717, %v5960
    %v5962 = vand.u32 %v5961, 4294901760
    %v5963 = vsub.f32 %v5961, %v5962
    %v5964 = vand.u32 %v5963, 4294901760
    %5965 = vmatpush1.msra.mxu0 %v5964
    %5966 = vmatprep.subr.mxu0 0.0
    %v5967 = vand.u32 %v5718, 4294901760
    %v5968 = vsub.f32 %v5718, %v5967
    %v5969 = vand.u32 %v5968, 4294901760
    %v5970 = vsub.f32 %v5968, %v5969
    %v5971 = vand.u32 %v5970, 4294901760
    %5972 = vmatpush1.msra.mxu0 %v5971
    %5973 = vmatprep.subr.mxu0 0.0
    %v5974 = vand.u32 %v5719, 4294901760
    %v5975 = vsub.f32 %v5719, %v5974
    %v5976 = vand.u32 %v5975, 4294901760
    %v5977 = vsub.f32 %v5975, %v5976
    %v5978 = vand.u32 %v5977, 4294901760
    %5979 = vmatpush1.msra.mxu0 %v5978
    %5980 = vmatprep.subr.mxu0 0.0
    %v5981 = vand.u32 %v5720, 4294901760
    %v5982 = vsub.f32 %v5720, %v5981
    %v5983 = vand.u32 %v5982, 4294901760
    %v5984 = vsub.f32 %v5982, %v5983
    %v5985 = vand.u32 %v5984, 4294901760
    %5986 = vmatpush1.msra.mxu0 %v5985
    %5987 = vmatprep.subr.mxu0 0.0
    %v5988 = vand.u32 %v5721, 4294901760
    %v5989 = vsub.f32 %v5721, %v5988
    %v5990 = vand.u32 %v5989, 4294901760
    %v5991 = vsub.f32 %v5989, %v5990
    %v5992 = vand.u32 %v5991, 4294901760
    %5993 = vmatpush1.msra.mxu0 %v5992
    %5994 = vmatprep.subr.mxu0 0.0
    %v5995 = vand.u32 %v5722, 4294901760
    %v5996 = vsub.f32 %v5722, %v5995
    %v5997 = vand.u32 %v5996, 4294901760
    %v5998 = vsub.f32 %v5996, %v5997
    %v5999 = vand.u32 %v5998, 4294901760
    %6000 = vmatpush1.msra.mxu0 %v5999
    %6001 = vmatprep.subr.mxu0 0.0
    %v6002 = vand.u32 %v5723, 4294901760
    %v6003 = vsub.f32 %v5723, %v6002
    %v6004 = vand.u32 %v6003, 4294901760
    %v6005 = vsub.f32 %v6003, %v6004
    %v6006 = vand.u32 %v6005, 4294901760
    %6007 = vmatpush1.msra.mxu0 %v6006
    %6008 = vmatprep.subr.mxu0 0.0
    %v6009 = vand.u32 %v5724, 4294901760
    %v6010 = vsub.f32 %v5724, %v6009
    %v6011 = vand.u32 %v6010, 4294901760
    %v6012 = vsub.f32 %v6010, %v6011
    %v6013 = vand.u32 %v6012, 4294901760
    %6014 = vmatpush1.msra.mxu0 %v6013
    %6015 = vmatprep.subr.mxu0 0.0
    %v6016 = vand.u32 %v5725, 4294901760
    %v6017 = vsub.f32 %v5725, %v6016
    %v6018 = vand.u32 %v6017, 4294901760
    %v6019 = vsub.f32 %v6017, %v6018
    %v6020 = vand.u32 %v6019, 4294901760
    %6021 = vmatpush1.msra.mxu0 %v6020
    %6022 = vmatprep.subr.mxu0 0.0
    %v6023 = vand.u32 %v5726, 4294901760
    %v6024 = vsub.f32 %v5726, %v6023
    %v6025 = vand.u32 %v6024, 4294901760
    %v6026 = vsub.f32 %v6024, %v6025
    %v6027 = vand.u32 %v6026, 4294901760
    %6028 = vmatpush1.msra.mxu0 %v6027
    %6029 = vmatprep.subr.mxu0 0.0
    %v6030 = vand.u32 %v5727, 4294901760
    %v6031 = vsub.f32 %v5727, %v6030
    %v6032 = vand.u32 %v6031, 4294901760
    %v6033 = vsub.f32 %v6031, %v6032
    %v6034 = vand.u32 %v6033, 4294901760
    %6035 = vmatpush1.msra.mxu0 %v6034
    %6036 = vmatprep.subr.mxu0 0.0
    %v6037 = vand.u32 %v5728, 4294901760
    %v6038 = vsub.f32 %v5728, %v6037
    %v6039 = vand.u32 %v6038, 4294901760
    %v6040 = vsub.f32 %v6038, %v6039
    %v6041 = vand.u32 %v6040, 4294901760
    %6042 = vmatpush1.msra.mxu0 %v6041
    %6043 = vmatprep.subr.mxu0 0.0
    %v6044 = vand.u32 %v5729, 4294901760
    %v6045 = vsub.f32 %v5729, %v6044
    %v6046 = vand.u32 %v6045, 4294901760
    %v6047 = vsub.f32 %v6045, %v6046
    %v6048 = vand.u32 %v6047, 4294901760
    %6049 = vmatpush1.msra.mxu0 %v6048
    %6050 = vmatprep.subr.mxu0 0.0
    %v6051 = vand.u32 %v5730, 4294901760
    %v6052 = vsub.f32 %v5730, %v6051
    %v6053 = vand.u32 %v6052, 4294901760
    %v6054 = vsub.f32 %v6052, %v6053
    %v6055 = vand.u32 %v6054, 4294901760
    %6056 = vmatpush1.msra.mxu0 %v6055
    %6057 = vmatprep.subr.mxu0 0.0
    %v6058 = vand.u32 %v5731, 4294901760
    %v6059 = vsub.f32 %v5731, %v6058
    %v6060 = vand.u32 %v6059, 4294901760
    %v6061 = vsub.f32 %v6059, %v6060
    %v6062 = vand.u32 %v6061, 4294901760
    %6063 = vmatpush1.msra.mxu0 %v6062
    %6064 = vmatprep.subr.mxu0 0.0
    %v6065 = vand.u32 %v5732, 4294901760
    %v6066 = vsub.f32 %v5732, %v6065
    %v6067 = vand.u32 %v6066, 4294901760
    %v6068 = vsub.f32 %v6066, %v6067
    %v6069 = vand.u32 %v6068, 4294901760
    %6070 = vmatpush1.msra.mxu0 %v6069
    %6071 = vmatprep.subr.mxu0 0.0
    %v6072 = vand.u32 %v5733, 4294901760
    %v6073 = vsub.f32 %v5733, %v6072
    %v6074 = vand.u32 %v6073, 4294901760
    %v6075 = vsub.f32 %v6073, %v6074
    %v6076 = vand.u32 %v6075, 4294901760
    %6077 = vmatpush1.msra.mxu0 %v6076
    %6078 = vmatprep.subr.mxu0 0.0
    %v6079 = vand.u32 %v5734, 4294901760
    %v6080 = vsub.f32 %v5734, %v6079
    %v6081 = vand.u32 %v6080, 4294901760
    %v6082 = vsub.f32 %v6080, %v6081
    %v6083 = vand.u32 %v6082, 4294901760
    %6084 = vmatpush1.msra.mxu0 %v6083
    %6085 = vmatprep.subr.mxu0 0.0
    %v6086 = vand.u32 %v5735, 4294901760
    %v6087 = vsub.f32 %v5735, %v6086
    %v6088 = vand.u32 %v6087, 4294901760
    %v6089 = vsub.f32 %v6087, %v6088
    %v6090 = vand.u32 %v6089, 4294901760
    %6091 = vmatpush1.msra.mxu0 %v6090
    %6092 = vmatprep.subr.mxu0 0.0
    %v6093 = vand.u32 %v5736, 4294901760
    %v6094 = vsub.f32 %v5736, %v6093
    %v6095 = vand.u32 %v6094, 4294901760
    %v6096 = vsub.f32 %v6094, %v6095
    %v6097 = vand.u32 %v6096, 4294901760
    %6098 = vmatpush1.msra.mxu0 %v6097
    %6099 = vmatprep.subr.mxu0 0.0
    %v6100 = vand.u32 %v5737, 4294901760
    %v6101 = vsub.f32 %v5737, %v6100
    %v6102 = vand.u32 %v6101, 4294901760
    %v6103 = vsub.f32 %v6101, %v6102
    %v6104 = vand.u32 %v6103, 4294901760
    %6105 = vmatpush1.msra.mxu0 %v6104
    %v6106 = vand.u32 %v5703, 4294901760
    %6107 = vmatprep.mubr.f32.mxu0 %v6106
    %v6108 = vand.u32 %v5702, 4294901760
    %6109 = vmatmul.mubr.f32.gmra.mrb[0].mxu0 %v6108
    %v6110 = vpop.f32.mrb[0].mxu0
    %v6111 = vadd.f32 %v5879, %v6110
    %v6112 = vpop.f32.mrb[0].mxu0
    %6113 = vdwg.mxu0
    %6114 = vmatprep.subr.mxu0 0.0
    %v6115 = vand.u32 %v5706, 4294901760
    %v6116 = vsub.f32 %v5706, %v6115
    %6117 = vmatpush1.msra.mxu0 %v6116
    %6118 = vmatprep.subr.mxu0 0.0
    %v6119 = vand.u32 %v5707, 4294901760
    %v6120 = vsub.f32 %v5707, %v6119
    %6121 = vmatpush1.msra.mxu0 %v6120
    %6122 = vmatprep.subr.mxu0 0.0
    %v6123 = vand.u32 %v5708, 4294901760
    %v6124 = vsub.f32 %v5708, %v6123
    %6125 = vmatpush1.msra.mxu0 %v6124
    %6126 = vmatprep.subr.mxu0 0.0
    %v6127 = vand.u32 %v5709, 4294901760
    %v6128 = vsub.f32 %v5709, %v6127
    %6129 = vmatpush1.msra.mxu0 %v6128
    %6130 = vmatprep.subr.mxu0 0.0
    %v6131 = vand.u32 %v5710, 4294901760
    %v6132 = vsub.f32 %v5710, %v6131
    %6133 = vmatpush1.msra.mxu0 %v6132
    %6134 = vmatprep.subr.mxu0 0.0
    %v6135 = vand.u32 %v5711, 4294901760
    %v6136 = vsub.f32 %v5711, %v6135
    %6137 = vmatpush1.msra.mxu0 %v6136
    %6138 = vmatprep.subr.mxu0 0.0
    %v6139 = vand.u32 %v5712, 4294901760
    %v6140 = vsub.f32 %v5712, %v6139
    %6141 = vmatpush1.msra.mxu0 %v6140
    %6142 = vmatprep.subr.mxu0 0.0
    %v6143 = vand.u32 %v5713, 4294901760
    %v6144 = vsub.f32 %v5713, %v6143
    %6145 = vmatpush1.msra.mxu0 %v6144
    %6146 = vmatprep.subr.mxu0 0.0
    %v6147 = vand.u32 %v5714, 4294901760
    %v6148 = vsub.f32 %v5714, %v6147
    %6149 = vmatpush1.msra.mxu0 %v6148
    %6150 = vmatprep.subr.mxu0 0.0
    %v6151 = vand.u32 %v5715, 4294901760
    %v6152 = vsub.f32 %v5715, %v6151
    %6153 = vmatpush1.msra.mxu0 %v6152
    %6154 = vmatprep.subr.mxu0 0.0
    %v6155 = vand.u32 %v5716, 4294901760
    %v6156 = vsub.f32 %v5716, %v6155
    %6157 = vmatpush1.msra.mxu0 %v6156
    %6158 = vmatprep.subr.mxu0 0.0
    %v6159 = vand.u32 %v5717, 4294901760
    %v6160 = vsub.f32 %v5717, %v6159
    %6161 = vmatpush1.msra.mxu0 %v6160
    %6162 = vmatprep.subr.mxu0 0.0
    %v6163 = vand.u32 %v5718, 4294901760
    %v6164 = vsub.f32 %v5718, %v6163
    %6165 = vmatpush1.msra.mxu0 %v6164
    %6166 = vmatprep.subr.mxu0 0.0
    %v6167 = vand.u32 %v5719, 4294901760
    %v6168 = vsub.f32 %v5719, %v6167
    %6169 = vmatpush1.msra.mxu0 %v6168
    %6170 = vmatprep.subr.mxu0 0.0
    %v6171 = vand.u32 %v5720, 4294901760
    %v6172 = vsub.f32 %v5720, %v6171
    %6173 = vmatpush1.msra.mxu0 %v6172
    %6174 = vmatprep.subr.mxu0 0.0
    %v6175 = vand.u32 %v5721, 4294901760
    %v6176 = vsub.f32 %v5721, %v6175
    %6177 = vmatpush1.msra.mxu0 %v6176
    %6178 = vmatprep.subr.mxu0 0.0
    %v6179 = vand.u32 %v5722, 4294901760
    %v6180 = vsub.f32 %v5722, %v6179
    %6181 = vmatpush1.msra.mxu0 %v6180
    %6182 = vmatprep.subr.mxu0 0.0
    %v6183 = vand.u32 %v5723, 4294901760
    %v6184 = vsub.f32 %v5723, %v6183
    %6185 = vmatpush1.msra.mxu0 %v6184
    %6186 = vmatprep.subr.mxu0 0.0
    %v6187 = vand.u32 %v5724, 4294901760
    %v6188 = vsub.f32 %v5724, %v6187
    %6189 = vmatpush1.msra.mxu0 %v6188
    %6190 = vmatprep.subr.mxu0 0.0
    %v6191 = vand.u32 %v5725, 4294901760
    %v6192 = vsub.f32 %v5725, %v6191
    %6193 = vmatpush1.msra.mxu0 %v6192
    %6194 = vmatprep.subr.mxu0 0.0
    %v6195 = vand.u32 %v5726, 4294901760
    %v6196 = vsub.f32 %v5726, %v6195
    %6197 = vmatpush1.msra.mxu0 %v6196
    %6198 = vmatprep.subr.mxu0 0.0
    %v6199 = vand.u32 %v5727, 4294901760
    %v6200 = vsub.f32 %v5727, %v6199
    %6201 = vmatpush1.msra.mxu0 %v6200
    %6202 = vmatprep.subr.mxu0 0.0
    %v6203 = vand.u32 %v5728, 4294901760
    %v6204 = vsub.f32 %v5728, %v6203
    %6205 = vmatpush1.msra.mxu0 %v6204
    %6206 = vmatprep.subr.mxu0 0.0
    %v6207 = vand.u32 %v5729, 4294901760
    %v6208 = vsub.f32 %v5729, %v6207
    %6209 = vmatpush1.msra.mxu0 %v6208
    %6210 = vmatprep.subr.mxu0 0.0
    %v6211 = vand.u32 %v5730, 4294901760
    %v6212 = vsub.f32 %v5730, %v6211
    %6213 = vmatpush1.msra.mxu0 %v6212
    %6214 = vmatprep.subr.mxu0 0.0
    %v6215 = vand.u32 %v5731, 4294901760
    %v6216 = vsub.f32 %v5731, %v6215
    %6217 = vmatpush1.msra.mxu0 %v6216
    %6218 = vmatprep.subr.mxu0 0.0
    %v6219 = vand.u32 %v5732, 4294901760
    %v6220 = vsub.f32 %v5732, %v6219
    %6221 = vmatpush1.msra.mxu0 %v6220
    %6222 = vmatprep.subr.mxu0 0.0
    %v6223 = vand.u32 %v5733, 4294901760
    %v6224 = vsub.f32 %v5733, %v6223
    %6225 = vmatpush1.msra.mxu0 %v6224
    %6226 = vmatprep.subr.mxu0 0.0
    %v6227 = vand.u32 %v5734, 4294901760
    %v6228 = vsub.f32 %v5734, %v6227
    %6229 = vmatpush1.msra.mxu0 %v6228
    %6230 = vmatprep.subr.mxu0 0.0
    %v6231 = vand.u32 %v5735, 4294901760
    %v6232 = vsub.f32 %v5735, %v6231
    %6233 = vmatpush1.msra.mxu0 %v6232
    %6234 = vmatprep.subr.mxu0 0.0
    %v6235 = vand.u32 %v5736, 4294901760
    %v6236 = vsub.f32 %v5736, %v6235
    %6237 = vmatpush1.msra.mxu0 %v6236
    %6238 = vmatprep.subr.mxu0 0.0
    %v6239 = vand.u32 %v5737, 4294901760
    %v6240 = vsub.f32 %v5737, %v6239
    %6241 = vmatpush1.msra.mxu0 %v6240
    %v6242 = vand.u32 %v5703, 4294901760
    %v6243 = vsub.f32 %v5703, %v6242
    %6244 = vmatprep.mubr.f32.mxu0 %v6243
    %v6245 = vand.u32 %v5702, 4294901760
    %v6246 = vsub.f32 %v5702, %v6245
    %6247 = vmatmul.mubr.f32.gmra.mrb[0].mxu0 %v6246
    %v6248 = vpop.f32.mrb[0].mxu0
    %v6249 = vadd.f32 %v6111, %v6248
    %v6250 = vpop.f32.mrb[0].mxu0
    %6251 = vdwg.mxu0
    %6252 = vmatprep.subr.mxu0 0.0
    %v6253 = vand.u32 %v5706, 4294901760
    %6254 = vmatpush1.msra.mxu0 %v6253
    %6255 = vmatprep.subr.mxu0 0.0
    %v6256 = vand.u32 %v5707, 4294901760
    %6257 = vmatpush1.msra.mxu0 %v6256
    %6258 = vmatprep.subr.mxu0 0.0
    %v6259 = vand.u32 %v5708, 4294901760
    %6260 = vmatpush1.msra.mxu0 %v6259
    %6261 = vmatprep.subr.mxu0 0.0
    %v6262 = vand.u32 %v5709, 4294901760
    %6263 = vmatpush1.msra.mxu0 %v6262
    %6264 = vmatprep.subr.mxu0 0.0
    %v6265 = vand.u32 %v5710, 4294901760
    %6266 = vmatpush1.msra.mxu0 %v6265
    %6267 = vmatprep.subr.mxu0 0.0
    %v6268 = vand.u32 %v5711, 4294901760
    %6269 = vmatpush1.msra.mxu0 %v6268
    %6270 = vmatprep.subr.mxu0 0.0
    %v6271 = vand.u32 %v5712, 4294901760
    %6272 = vmatpush1.msra.mxu0 %v6271
    %6273 = vmatprep.subr.mxu0 0.0
    %v6274 = vand.u32 %v5713, 4294901760
    %6275 = vmatpush1.msra.mxu0 %v6274
    %6276 = vmatprep.subr.mxu0 0.0
    %v6277 = vand.u32 %v5714, 4294901760
    %6278 = vmatpush1.msra.mxu0 %v6277
    %6279 = vmatprep.subr.mxu0 0.0
    %v6280 = vand.u32 %v5715, 4294901760
    %6281 = vmatpush1.msra.mxu0 %v6280
    %6282 = vmatprep.subr.mxu0 0.0
    %v6283 = vand.u32 %v5716, 4294901760
    %6284 = vmatpush1.msra.mxu0 %v6283
    %6285 = vmatprep.subr.mxu0 0.0
    %v6286 = vand.u32 %v5717, 4294901760
    %6287 = vmatpush1.msra.mxu0 %v6286
    %6288 = vmatprep.subr.mxu0 0.0
    %v6289 = vand.u32 %v5718, 4294901760
    %6290 = vmatpush1.msra.mxu0 %v6289
    %6291 = vmatprep.subr.mxu0 0.0
    %v6292 = vand.u32 %v5719, 4294901760
    %6293 = vmatpush1.msra.mxu0 %v6292
    %6294 = vmatprep.subr.mxu0 0.0
    %v6295 = vand.u32 %v5720, 4294901760
    %6296 = vmatpush1.msra.mxu0 %v6295
    %6297 = vmatprep.subr.mxu0 0.0
    %v6298 = vand.u32 %v5721, 4294901760
    %6299 = vmatpush1.msra.mxu0 %v6298
    %6300 = vmatprep.subr.mxu0 0.0
    %v6301 = vand.u32 %v5722, 4294901760
    %6302 = vmatpush1.msra.mxu0 %v6301
    %6303 = vmatprep.subr.mxu0 0.0
    %v6304 = vand.u32 %v5723, 4294901760
    %6305 = vmatpush1.msra.mxu0 %v6304
    %6306 = vmatprep.subr.mxu0 0.0
    %v6307 = vand.u32 %v5724, 4294901760
    %6308 = vmatpush1.msra.mxu0 %v6307
    %6309 = vmatprep.subr.mxu0 0.0
    %v6310 = vand.u32 %v5725, 4294901760
    %6311 = vmatpush1.msra.mxu0 %v6310
    %6312 = vmatprep.subr.mxu0 0.0
    %v6313 = vand.u32 %v5726, 4294901760
    %6314 = vmatpush1.msra.mxu0 %v6313
    %6315 = vmatprep.subr.mxu0 0.0
    %v6316 = vand.u32 %v5727, 4294901760
    %6317 = vmatpush1.msra.mxu0 %v6316
    %6318 = vmatprep.subr.mxu0 0.0
    %v6319 = vand.u32 %v5728, 4294901760
    %6320 = vmatpush1.msra.mxu0 %v6319
    %6321 = vmatprep.subr.mxu0 0.0
    %v6322 = vand.u32 %v5729, 4294901760
    %6323 = vmatpush1.msra.mxu0 %v6322
    %6324 = vmatprep.subr.mxu0 0.0
    %v6325 = vand.u32 %v5730, 4294901760
    %6326 = vmatpush1.msra.mxu0 %v6325
    %6327 = vmatprep.subr.mxu0 0.0
    %v6328 = vand.u32 %v5731, 4294901760
    %6329 = vmatpush1.msra.mxu0 %v6328
    %6330 = vmatprep.subr.mxu0 0.0
    %v6331 = vand.u32 %v5732, 4294901760
    %6332 = vmatpush1.msra.mxu0 %v6331
    %6333 = vmatprep.subr.mxu0 0.0
    %v6334 = vand.u32 %v5733, 4294901760
    %6335 = vmatpush1.msra.mxu0 %v6334
    %6336 = vmatprep.subr.mxu0 0.0
    %v6337 = vand.u32 %v5734, 4294901760
    %6338 = vmatpush1.msra.mxu0 %v6337
    %6339 = vmatprep.subr.mxu0 0.0
    %v6340 = vand.u32 %v5735, 4294901760
    %6341 = vmatpush1.msra.mxu0 %v6340
    %6342 = vmatprep.subr.mxu0 0.0
    %v6343 = vand.u32 %v5736, 4294901760
    %6344 = vmatpush1.msra.mxu0 %v6343
    %6345 = vmatprep.subr.mxu0 0.0
    %v6346 = vand.u32 %v5737, 4294901760
    %6347 = vmatpush1.msra.mxu0 %v6346
    %v6348 = vand.u32 %v5703, 4294901760
    %v6349 = vsub.f32 %v5703, %v6348
    %v6350 = vand.u32 %v6349, 4294901760
    %6351 = vmatprep.mubr.f32.mxu0 %v6350
    %v6352 = vand.u32 %v5702, 4294901760
    %v6353 = vsub.f32 %v5702, %v6352
    %v6354 = vand.u32 %v6353, 4294901760
    %6355 = vmatmul.mubr.f32.gmra.mrb[0].mxu0 %v6354
    %v6356 = vpop.f32.mrb[0].mxu0
    %v6357 = vadd.f32 %v6249, %v6356
    %v6358 = vpop.f32.mrb[0].mxu0
    %6359 = vdwg.mxu0
    %6360 = vmatprep.subr.mxu0 0.0
    %v6361 = vand.u32 %v5706, 4294901760
    %v6362 = vsub.f32 %v5706, %v6361
    %v6363 = vand.u32 %v6362, 4294901760
    %6364 = vmatpush1.msra.mxu0 %v6363
    %6365 = vmatprep.subr.mxu0 0.0
    %v6366 = vand.u32 %v5707, 4294901760
    %v6367 = vsub.f32 %v5707, %v6366
    %v6368 = vand.u32 %v6367, 4294901760
    %6369 = vmatpush1.msra.mxu0 %v6368
    %6370 = vmatprep.subr.mxu0 0.0
    %v6371 = vand.u32 %v5708, 4294901760
    %v6372 = vsub.f32 %v5708, %v6371
    %v6373 = vand.u32 %v6372, 4294901760
    %6374 = vmatpush1.msra.mxu0 %v6373
    %6375 = vmatprep.subr.mxu0 0.0
    %v6376 = vand.u32 %v5709, 4294901760
    %v6377 = vsub.f32 %v5709, %v6376
    %v6378 = vand.u32 %v6377, 4294901760
    %6379 = vmatpush1.msra.mxu0 %v6378
    %6380 = vmatprep.subr.mxu0 0.0
    %v6381 = vand.u32 %v5710, 4294901760
    %v6382 = vsub.f32 %v5710, %v6381
    %v6383 = vand.u32 %v6382, 4294901760
    %6384 = vmatpush1.msra.mxu0 %v6383
    %6385 = vmatprep.subr.mxu0 0.0
    %v6386 = vand.u32 %v5711, 4294901760
    %v6387 = vsub.f32 %v5711, %v6386
    %v6388 = vand.u32 %v6387, 4294901760
    %6389 = vmatpush1.msra.mxu0 %v6388
    %6390 = vmatprep.subr.mxu0 0.0
    %v6391 = vand.u32 %v5712, 4294901760
    %v6392 = vsub.f32 %v5712, %v6391
    %v6393 = vand.u32 %v6392, 4294901760
    %6394 = vmatpush1.msra.mxu0 %v6393
    %6395 = vmatprep.subr.mxu0 0.0
    %v6396 = vand.u32 %v5713, 4294901760
    %v6397 = vsub.f32 %v5713, %v6396
    %v6398 = vand.u32 %v6397, 4294901760
    %6399 = vmatpush1.msra.mxu0 %v6398
    %6400 = vmatprep.subr.mxu0 0.0
    %v6401 = vand.u32 %v5714, 4294901760
    %v6402 = vsub.f32 %v5714, %v6401
    %v6403 = vand.u32 %v6402, 4294901760
    %6404 = vmatpush1.msra.mxu0 %v6403
    %6405 = vmatprep.subr.mxu0 0.0
    %v6406 = vand.u32 %v5715, 4294901760
    %v6407 = vsub.f32 %v5715, %v6406
    %v6408 = vand.u32 %v6407, 4294901760
    %6409 = vmatpush1.msra.mxu0 %v6408
    %6410 = vmatprep.subr.mxu0 0.0
    %v6411 = vand.u32 %v5716, 4294901760
    %v6412 = vsub.f32 %v5716, %v6411
    %v6413 = vand.u32 %v6412, 4294901760
    %6414 = vmatpush1.msra.mxu0 %v6413
    %6415 = vmatprep.subr.mxu0 0.0
    %v6416 = vand.u32 %v5717, 4294901760
    %v6417 = vsub.f32 %v5717, %v6416
    %v6418 = vand.u32 %v6417, 4294901760
    %6419 = vmatpush1.msra.mxu0 %v6418
    %6420 = vmatprep.subr.mxu0 0.0
    %v6421 = vand.u32 %v5718, 4294901760
    %v6422 = vsub.f32 %v5718, %v6421
    %v6423 = vand.u32 %v6422, 4294901760
    %6424 = vmatpush1.msra.mxu0 %v6423
    %6425 = vmatprep.subr.mxu0 0.0
    %v6426 = vand.u32 %v5719, 4294901760
    %v6427 = vsub.f32 %v5719, %v6426
    %v6428 = vand.u32 %v6427, 4294901760
    %6429 = vmatpush1.msra.mxu0 %v6428
    %6430 = vmatprep.subr.mxu0 0.0
    %v6431 = vand.u32 %v5720, 4294901760
    %v6432 = vsub.f32 %v5720, %v6431
    %v6433 = vand.u32 %v6432, 4294901760
    %6434 = vmatpush1.msra.mxu0 %v6433
    %6435 = vmatprep.subr.mxu0 0.0
    %v6436 = vand.u32 %v5721, 4294901760
    %v6437 = vsub.f32 %v5721, %v6436
    %v6438 = vand.u32 %v6437, 4294901760
    %6439 = vmatpush1.msra.mxu0 %v6438
    %6440 = vmatprep.subr.mxu0 0.0
    %v6441 = vand.u32 %v5722, 4294901760
    %v6442 = vsub.f32 %v5722, %v6441
    %v6443 = vand.u32 %v6442, 4294901760
    %6444 = vmatpush1.msra.mxu0 %v6443
    %6445 = vmatprep.subr.mxu0 0.0
    %v6446 = vand.u32 %v5723, 4294901760
    %v6447 = vsub.f32 %v5723, %v6446
    %v6448 = vand.u32 %v6447, 4294901760
    %6449 = vmatpush1.msra.mxu0 %v6448
    %6450 = vmatprep.subr.mxu0 0.0
    %v6451 = vand.u32 %v5724, 4294901760
    %v6452 = vsub.f32 %v5724, %v6451
    %v6453 = vand.u32 %v6452, 4294901760
    %6454 = vmatpush1.msra.mxu0 %v6453
    %6455 = vmatprep.subr.mxu0 0.0
    %v6456 = vand.u32 %v5725, 4294901760
    %v6457 = vsub.f32 %v5725, %v6456
    %v6458 = vand.u32 %v6457, 4294901760
    %6459 = vmatpush1.msra.mxu0 %v6458
    %6460 = vmatprep.subr.mxu0 0.0
    %v6461 = vand.u32 %v5726, 4294901760
    %v6462 = vsub.f32 %v5726, %v6461
    %v6463 = vand.u32 %v6462, 4294901760
    %6464 = vmatpush1.msra.mxu0 %v6463
    %6465 = vmatprep.subr.mxu0 0.0
    %v6466 = vand.u32 %v5727, 4294901760
    %v6467 = vsub.f32 %v5727, %v6466
    %v6468 = vand.u32 %v6467, 4294901760
    %6469 = vmatpush1.msra.mxu0 %v6468
    %6470 = vmatprep.subr.mxu0 0.0
    %v6471 = vand.u32 %v5728, 4294901760
    %v6472 = vsub.f32 %v5728, %v6471
    %v6473 = vand.u32 %v6472, 4294901760
    %6474 = vmatpush1.msra.mxu0 %v6473
    %6475 = vmatprep.subr.mxu0 0.0
    %v6476 = vand.u32 %v5729, 4294901760
    %v6477 = vsub.f32 %v5729, %v6476
    %v6478 = vand.u32 %v6477, 4294901760
    %6479 = vmatpush1.msra.mxu0 %v6478
    %6480 = vmatprep.subr.mxu0 0.0
    %v6481 = vand.u32 %v5730, 4294901760
    %v6482 = vsub.f32 %v5730, %v6481
    %v6483 = vand.u32 %v6482, 4294901760
    %6484 = vmatpush1.msra.mxu0 %v6483
    %6485 = vmatprep.subr.mxu0 0.0
    %v6486 = vand.u32 %v5731, 4294901760
    %v6487 = vsub.f32 %v5731, %v6486
    %v6488 = vand.u32 %v6487, 4294901760
    %6489 = vmatpush1.msra.mxu0 %v6488
    %6490 = vmatprep.subr.mxu0 0.0
    %v6491 = vand.u32 %v5732, 4294901760
    %v6492 = vsub.f32 %v5732, %v6491
    %v6493 = vand.u32 %v6492, 4294901760
    %6494 = vmatpush1.msra.mxu0 %v6493
    %6495 = vmatprep.subr.mxu0 0.0
    %v6496 = vand.u32 %v5733, 4294901760
    %v6497 = vsub.f32 %v5733, %v6496
    %v6498 = vand.u32 %v6497, 4294901760
    %6499 = vmatpush1.msra.mxu0 %v6498
    %6500 = vmatprep.subr.mxu0 0.0
    %v6501 = vand.u32 %v5734, 4294901760
    %v6502 = vsub.f32 %v5734, %v6501
    %v6503 = vand.u32 %v6502, 4294901760
    %6504 = vmatpush1.msra.mxu0 %v6503
    %6505 = vmatprep.subr.mxu0 0.0
    %v6506 = vand.u32 %v5735, 4294901760
    %v6507 = vsub.f32 %v5735, %v6506
    %v6508 = vand.u32 %v6507, 4294901760
    %6509 = vmatpush1.msra.mxu0 %v6508
    %6510 = vmatprep.subr.mxu0 0.0
    %v6511 = vand.u32 %v5736, 4294901760
    %v6512 = vsub.f32 %v5736, %v6511
    %v6513 = vand.u32 %v6512, 4294901760
    %6514 = vmatpush1.msra.mxu0 %v6513
    %6515 = vmatprep.subr.mxu0 0.0
    %v6516 = vand.u32 %v5737, 4294901760
    %v6517 = vsub.f32 %v5737, %v6516
    %v6518 = vand.u32 %v6517, 4294901760
    %6519 = vmatpush1.msra.mxu0 %v6518
    %v6520 = vand.u32 %v5703, 4294901760
    %6521 = vmatprep.mubr.f32.mxu0 %v6520
    %v6522 = vand.u32 %v5702, 4294901760
    %6523 = vmatmul.mubr.f32.gmra.mrb[0].mxu0 %v6522
    %v6524 = vpop.f32.mrb[0].mxu0
    %v6525 = vadd.f32 %v6357, %v6524
    %v6526 = vpop.f32.mrb[0].mxu0
    %6527 = vdwg.mxu0
    %6528 = vmatprep.subr.mxu0 0.0
    %v6529 = vand.u32 %v5706, 4294901760
    %6530 = vmatpush1.msra.mxu0 %v6529
    %6531 = vmatprep.subr.mxu0 0.0
    %v6532 = vand.u32 %v5707, 4294901760
    %6533 = vmatpush1.msra.mxu0 %v6532
    %6534 = vmatprep.subr.mxu0 0.0
    %v6535 = vand.u32 %v5708, 4294901760
    %6536 = vmatpush1.msra.mxu0 %v6535
    %6537 = vmatprep.subr.mxu0 0.0
    %v6538 = vand.u32 %v5709, 4294901760
    %6539 = vmatpush1.msra.mxu0 %v6538
    %6540 = vmatprep.subr.mxu0 0.0
    %v6541 = vand.u32 %v5710, 4294901760
    %6542 = vmatpush1.msra.mxu0 %v6541
    %6543 = vmatprep.subr.mxu0 0.0
    %v6544 = vand.u32 %v5711, 4294901760
    %6545 = vmatpush1.msra.mxu0 %v6544
    %6546 = vmatprep.subr.mxu0 0.0
    %v6547 = vand.u32 %v5712, 4294901760
    %6548 = vmatpush1.msra.mxu0 %v6547
    %6549 = vmatprep.subr.mxu0 0.0
    %v6550 = vand.u32 %v5713, 4294901760
    %6551 = vmatpush1.msra.mxu0 %v6550
    %6552 = vmatprep.subr.mxu0 0.0
    %v6553 = vand.u32 %v5714, 4294901760
    %6554 = vmatpush1.msra.mxu0 %v6553
    %6555 = vmatprep.subr.mxu0 0.0
    %v6556 = vand.u32 %v5715, 4294901760
    %6557 = vmatpush1.msra.mxu0 %v6556
    %6558 = vmatprep.subr.mxu0 0.0
    %v6559 = vand.u32 %v5716, 4294901760
    %6560 = vmatpush1.msra.mxu0 %v6559
    %6561 = vmatprep.subr.mxu0 0.0
    %v6562 = vand.u32 %v5717, 4294901760
    %6563 = vmatpush1.msra.mxu0 %v6562
    %6564 = vmatprep.subr.mxu0 0.0
    %v6565 = vand.u32 %v5718, 4294901760
    %6566 = vmatpush1.msra.mxu0 %v6565
    %6567 = vmatprep.subr.mxu0 0.0
    %v6568 = vand.u32 %v5719, 4294901760
    %6569 = vmatpush1.msra.mxu0 %v6568
    %6570 = vmatprep.subr.mxu0 0.0
    %v6571 = vand.u32 %v5720, 4294901760
    %6572 = vmatpush1.msra.mxu0 %v6571
    %6573 = vmatprep.subr.mxu0 0.0
    %v6574 = vand.u32 %v5721, 4294901760
    %6575 = vmatpush1.msra.mxu0 %v6574
    %6576 = vmatprep.subr.mxu0 0.0
    %v6577 = vand.u32 %v5722, 4294901760
    %6578 = vmatpush1.msra.mxu0 %v6577
    %6579 = vmatprep.subr.mxu0 0.0
    %v6580 = vand.u32 %v5723, 4294901760
    %6581 = vmatpush1.msra.mxu0 %v6580
    %6582 = vmatprep.subr.mxu0 0.0
    %v6583 = vand.u32 %v5724, 4294901760
    %6584 = vmatpush1.msra.mxu0 %v6583
    %6585 = vmatprep.subr.mxu0 0.0
    %v6586 = vand.u32 %v5725, 4294901760
    %6587 = vmatpush1.msra.mxu0 %v6586
    %6588 = vmatprep.subr.mxu0 0.0
    %v6589 = vand.u32 %v5726, 4294901760
    %6590 = vmatpush1.msra.mxu0 %v6589
    %6591 = vmatprep.subr.mxu0 0.0
    %v6592 = vand.u32 %v5727, 4294901760
    %6593 = vmatpush1.msra.mxu0 %v6592
    %6594 = vmatprep.subr.mxu0 0.0
    %v6595 = vand.u32 %v5728, 4294901760
    %6596 = vmatpush1.msra.mxu0 %v6595
    %6597 = vmatprep.subr.mxu0 0.0
    %v6598 = vand.u32 %v5729, 4294901760
    %6599 = vmatpush1.msra.mxu0 %v6598
    %6600 = vmatprep.subr.mxu0 0.0
    %v6601 = vand.u32 %v5730, 4294901760
    %6602 = vmatpush1.msra.mxu0 %v6601
    %6603 = vmatprep.subr.mxu0 0.0
    %v6604 = vand.u32 %v5731, 4294901760
    %6605 = vmatpush1.msra.mxu0 %v6604
    %6606 = vmatprep.subr.mxu0 0.0
    %v6607 = vand.u32 %v5732, 4294901760
    %6608 = vmatpush1.msra.mxu0 %v6607
    %6609 = vmatprep.subr.mxu0 0.0
    %v6610 = vand.u32 %v5733, 4294901760
    %6611 = vmatpush1.msra.mxu0 %v6610
    %6612 = vmatprep.subr.mxu0 0.0
    %v6613 = vand.u32 %v5734, 4294901760
    %6614 = vmatpush1.msra.mxu0 %v6613
    %6615 = vmatprep.subr.mxu0 0.0
    %v6616 = vand.u32 %v5735, 4294901760
    %6617 = vmatpush1.msra.mxu0 %v6616
    %6618 = vmatprep.subr.mxu0 0.0
    %v6619 = vand.u32 %v5736, 4294901760
    %6620 = vmatpush1.msra.mxu0 %v6619
    %6621 = vmatprep.subr.mxu0 0.0
    %v6622 = vand.u32 %v5737, 4294901760
    %6623 = vmatpush1.msra.mxu0 %v6622
    %v6624 = vand.u32 %v5703, 4294901760
    %6625 = vmatprep.mubr.f32.mxu0 %v6624
    %v6626 = vand.u32 %v5702, 4294901760
    %6627 = vmatmul.mubr.f32.gmra.mrb[0].mxu0 %v6626
    %v6628 = vpop.f32.mrb[0].mxu0
    %v6629 = vadd.f32 %v6525, %v6628
    %v6630 = vpop.f32.mrb[0].mxu0
    %6631 = vdwg.mxu0
    %6632 = vmatprep.subr.mxu0 0.0
    %v6633 = vand.u32 %v5738, 4294901760
    %6634 = vmatpush1.msra.mxu0 %v6633
    %6635 = vmatprep.subr.mxu0 0.0
    %v6636 = vand.u32 %v5739, 4294901760
    %6637 = vmatpush1.msra.mxu0 %v6636
    %6638 = vmatprep.subr.mxu0 0.0
    %v6639 = vand.u32 %v5740, 4294901760
    %6640 = vmatpush1.msra.mxu0 %v6639
    %6641 = vmatprep.subr.mxu0 0.0
    %v6642 = vand.u32 %v5741, 4294901760
    %6643 = vmatpush1.msra.mxu0 %v6642
    %6644 = vmatprep.subr.mxu0 0.0
    %v6645 = vand.u32 %v5742, 4294901760
    %6646 = vmatpush1.msra.mxu0 %v6645
    %6647 = vmatprep.subr.mxu0 0.0
    %v6648 = vand.u32 %v5743, 4294901760
    %6649 = vmatpush1.msra.mxu0 %v6648
    %6650 = vmatprep.subr.mxu0 0.0
    %v6651 = vand.u32 %v5744, 4294901760
    %6652 = vmatpush1.msra.mxu0 %v6651
    %6653 = vmatprep.subr.mxu0 0.0
    %v6654 = vand.u32 %v5745, 4294901760
    %6655 = vmatpush1.msra.mxu0 %v6654
    %6656 = vmatprep.subr.mxu0 0.0
    %v6657 = vand.u32 %v5746, 4294901760
    %6658 = vmatpush1.msra.mxu0 %v6657
    %6659 = vmatprep.subr.mxu0 0.0
    %v6660 = vand.u32 %v5747, 4294901760
    %6661 = vmatpush1.msra.mxu0 %v6660
    %6662 = vmatprep.subr.mxu0 0.0
    %v6663 = vand.u32 %v5748, 4294901760
    %6664 = vmatpush1.msra.mxu0 %v6663
    %6665 = vmatprep.subr.mxu0 0.0
    %v6666 = vand.u32 %v5749, 4294901760
    %6667 = vmatpush1.msra.mxu0 %v6666
    %6668 = vmatprep.subr.mxu0 0.0
    %v6669 = vand.u32 %v5750, 4294901760
    %6670 = vmatpush1.msra.mxu0 %v6669
    %6671 = vmatprep.subr.mxu0 0.0
    %v6672 = vand.u32 %v5751, 4294901760
    %6673 = vmatpush1.msra.mxu0 %v6672
    %6674 = vmatprep.subr.mxu0 0.0
    %v6675 = vand.u32 %v5752, 4294901760
    %6676 = vmatpush1.msra.mxu0 %v6675
    %6677 = vmatprep.subr.mxu0 0.0
    %v6678 = vand.u32 %v5753, 4294901760
    %6679 = vmatpush1.msra.mxu0 %v6678
    %6680 = vmatprep.subr.mxu0 0.0
    %v6681 = vand.u32 %v5754, 4294901760
    %6682 = vmatpush1.msra.mxu0 %v6681
    %6683 = vmatprep.subr.mxu0 0.0
    %v6684 = vand.u32 %v5755, 4294901760
    %6685 = vmatpush1.msra.mxu0 %v6684
    %6686 = vmatprep.subr.mxu0 0.0
    %v6687 = vand.u32 %v5756, 4294901760
    %6688 = vmatpush1.msra.mxu0 %v6687
    %6689 = vmatprep.subr.mxu0 0.0
    %v6690 = vand.u32 %v5757, 4294901760
    %6691 = vmatpush1.msra.mxu0 %v6690
    %6692 = vmatprep.subr.mxu0 0.0
    %v6693 = vand.u32 %v5758, 4294901760
    %6694 = vmatpush1.msra.mxu0 %v6693
    %6695 = vmatprep.subr.mxu0 0.0
    %v6696 = vand.u32 %v5759, 4294901760
    %6697 = vmatpush1.msra.mxu0 %v6696
    %6698 = vmatprep.subr.mxu0 0.0
    %v6699 = vand.u32 %v5760, 4294901760
    %6700 = vmatpush1.msra.mxu0 %v6699
    %6701 = vmatprep.subr.mxu0 0.0
    %v6702 = vand.u32 %v5761, 4294901760
    %6703 = vmatpush1.msra.mxu0 %v6702
    %6704 = vmatprep.subr.mxu0 0.0
    %v6705 = vand.u32 %v5762, 4294901760
    %6706 = vmatpush1.msra.mxu0 %v6705
    %6707 = vmatprep.subr.mxu0 0.0
    %v6708 = vand.u32 %v5763, 4294901760
    %6709 = vmatpush1.msra.mxu0 %v6708
    %6710 = vmatprep.subr.mxu0 0.0
    %v6711 = vand.u32 %v5764, 4294901760
    %6712 = vmatpush1.msra.mxu0 %v6711
    %6713 = vmatprep.subr.mxu0 0.0
    %v6714 = vand.u32 %v5765, 4294901760
    %6715 = vmatpush1.msra.mxu0 %v6714
    %6716 = vmatprep.subr.mxu0 0.0
    %v6717 = vand.u32 %v5766, 4294901760
    %6718 = vmatpush1.msra.mxu0 %v6717
    %6719 = vmatprep.subr.mxu0 0.0
    %v6720 = vand.u32 %v5767, 4294901760
    %6721 = vmatpush1.msra.mxu0 %v6720
    %6722 = vmatprep.subr.mxu0 0.0
    %v6723 = vand.u32 %v5768, 4294901760
    %6724 = vmatpush1.msra.mxu0 %v6723
    %6725 = vmatprep.subr.mxu0 0.0
    %v6726 = vand.u32 %v5769, 4294901760
    %6727 = vmatpush1.msra.mxu0 %v6726
    %v6728 = vand.u32 %v5705, 4294901760
    %v6729 = vsub.f32 %v5705, %v6728
    %v6730 = vand.u32 %v6729, 4294901760
    %v6731 = vsub.f32 %v6729, %v6730
    %v6732 = vand.u32 %v6731, 4294901760
    %6733 = vmatprep.mubr.f32.mxu0 %v6732
    %v6734 = vand.u32 %v5704, 4294901760
    %v6735 = vsub.f32 %v5704, %v6734
    %v6736 = vand.u32 %v6735, 4294901760
    %v6737 = vsub.f32 %v6735, %v6736
    %v6738 = vand.u32 %v6737, 4294901760
    %6739 = vmatmul.mubr.f32.gmra.mrb[0].mxu0 %v6738
    %v6740 = vpop.f32.mrb[0].mxu0
    %v6741 = vadd.f32 %v6629, %v6740
    %v6742 = vpop.f32.mrb[0].mxu0
    %6743 = vdwg.mxu0
    %6744 = vmatprep.subr.mxu0 0.0
    %v6745 = vand.u32 %v5738, 4294901760
    %v6746 = vsub.f32 %v5738, %v6745
    %v6747 = vand.u32 %v6746, 4294901760
    %v6748 = vsub.f32 %v6746, %v6747
    %v6749 = vand.u32 %v6748, 4294901760
    %6750 = vmatpush1.msra.mxu0 %v6749
    %6751 = vmatprep.subr.mxu0 0.0
    %v6752 = vand.u32 %v5739, 4294901760
    %v6753 = vsub.f32 %v5739, %v6752
    %v6754 = vand.u32 %v6753, 4294901760
    %v6755 = vsub.f32 %v6753, %v6754
    %v6756 = vand.u32 %v6755, 4294901760
    %6757 = vmatpush1.msra.mxu0 %v6756
    %6758 = vmatprep.subr.mxu0 0.0
    %v6759 = vand.u32 %v5740, 4294901760
    %v6760 = vsub.f32 %v5740, %v6759
    %v6761 = vand.u32 %v6760, 4294901760
    %v6762 = vsub.f32 %v6760, %v6761
    %v6763 = vand.u32 %v6762, 4294901760
    %6764 = vmatpush1.msra.mxu0 %v6763
    %6765 = vmatprep.subr.mxu0 0.0
    %v6766 = vand.u32 %v5741, 4294901760
    %v6767 = vsub.f32 %v5741, %v6766
    %v6768 = vand.u32 %v6767, 4294901760
    %v6769 = vsub.f32 %v6767, %v6768
    %v6770 = vand.u32 %v6769, 4294901760
    %6771 = vmatpush1.msra.mxu0 %v6770
    %6772 = vmatprep.subr.mxu0 0.0
    %v6773 = vand.u32 %v5742, 4294901760
    %v6774 = vsub.f32 %v5742, %v6773
    %v6775 = vand.u32 %v6774, 4294901760
    %v6776 = vsub.f32 %v6774, %v6775
    %v6777 = vand.u32 %v6776, 4294901760
    %6778 = vmatpush1.msra.mxu0 %v6777
    %6779 = vmatprep.subr.mxu0 0.0
    %v6780 = vand.u32 %v5743, 4294901760
    %v6781 = vsub.f32 %v5743, %v6780
    %v6782 = vand.u32 %v6781, 4294901760
    %v6783 = vsub.f32 %v6781, %v6782
    %v6784 = vand.u32 %v6783, 4294901760
    %6785 = vmatpush1.msra.mxu0 %v6784
    %6786 = vmatprep.subr.mxu0 0.0
    %v6787 = vand.u32 %v5744, 4294901760
    %v6788 = vsub.f32 %v5744, %v6787
    %v6789 = vand.u32 %v6788, 4294901760
    %v6790 = vsub.f32 %v6788, %v6789
    %v6791 = vand.u32 %v6790, 4294901760
    %6792 = vmatpush1.msra.mxu0 %v6791
    %6793 = vmatprep.subr.mxu0 0.0
    %v6794 = vand.u32 %v5745, 4294901760
    %v6795 = vsub.f32 %v5745, %v6794
    %v6796 = vand.u32 %v6795, 4294901760
    %v6797 = vsub.f32 %v6795, %v6796
    %v6798 = vand.u32 %v6797, 4294901760
    %6799 = vmatpush1.msra.mxu0 %v6798
    %6800 = vmatprep.subr.mxu0 0.0
    %v6801 = vand.u32 %v5746, 4294901760
    %v6802 = vsub.f32 %v5746, %v6801
    %v6803 = vand.u32 %v6802, 4294901760
    %v6804 = vsub.f32 %v6802, %v6803
    %v6805 = vand.u32 %v6804, 4294901760
    %6806 = vmatpush1.msra.mxu0 %v6805
    %6807 = vmatprep.subr.mxu0 0.0
    %v6808 = vand.u32 %v5747, 4294901760
    %v6809 = vsub.f32 %v5747, %v6808
    %v6810 = vand.u32 %v6809, 4294901760
    %v6811 = vsub.f32 %v6809, %v6810
    %v6812 = vand.u32 %v6811, 4294901760
    %6813 = vmatpush1.msra.mxu0 %v6812
    %6814 = vmatprep.subr.mxu0 0.0
    %v6815 = vand.u32 %v5748, 4294901760
    %v6816 = vsub.f32 %v5748, %v6815
    %v6817 = vand.u32 %v6816, 4294901760
    %v6818 = vsub.f32 %v6816, %v6817
    %v6819 = vand.u32 %v6818, 4294901760
    %6820 = vmatpush1.msra.mxu0 %v6819
    %6821 = vmatprep.subr.mxu0 0.0
    %v6822 = vand.u32 %v5749, 4294901760
    %v6823 = vsub.f32 %v5749, %v6822
    %v6824 = vand.u32 %v6823, 4294901760
    %v6825 = vsub.f32 %v6823, %v6824
    %v6826 = vand.u32 %v6825, 4294901760
    %6827 = vmatpush1.msra.mxu0 %v6826
    %6828 = vmatprep.subr.mxu0 0.0
    %v6829 = vand.u32 %v5750, 4294901760
    %v6830 = vsub.f32 %v5750, %v6829
    %v6831 = vand.u32 %v6830, 4294901760
    %v6832 = vsub.f32 %v6830, %v6831
    %v6833 = vand.u32 %v6832, 4294901760
    %6834 = vmatpush1.msra.mxu0 %v6833
    %6835 = vmatprep.subr.mxu0 0.0
    %v6836 = vand.u32 %v5751, 4294901760
    %v6837 = vsub.f32 %v5751, %v6836
    %v6838 = vand.u32 %v6837, 4294901760
    %v6839 = vsub.f32 %v6837, %v6838
    %v6840 = vand.u32 %v6839, 4294901760
    %6841 = vmatpush1.msra.mxu0 %v6840
    %6842 = vmatprep.subr.mxu0 0.0
    %v6843 = vand.u32 %v5752, 4294901760
    %v6844 = vsub.f32 %v5752, %v6843
    %v6845 = vand.u32 %v6844, 4294901760
    %v6846 = vsub.f32 %v6844, %v6845
    %v6847 = vand.u32 %v6846, 4294901760
    %6848 = vmatpush1.msra.mxu0 %v6847
    %6849 = vmatprep.subr.mxu0 0.0
    %v6850 = vand.u32 %v5753, 4294901760
    %v6851 = vsub.f32 %v5753, %v6850
    %v6852 = vand.u32 %v6851, 4294901760
    %v6853 = vsub.f32 %v6851, %v6852
    %v6854 = vand.u32 %v6853, 4294901760
    %6855 = vmatpush1.msra.mxu0 %v6854
    %6856 = vmatprep.subr.mxu0 0.0
    %v6857 = vand.u32 %v5754, 4294901760
    %v6858 = vsub.f32 %v5754, %v6857
    %v6859 = vand.u32 %v6858, 4294901760
    %v6860 = vsub.f32 %v6858, %v6859
    %v6861 = vand.u32 %v6860, 4294901760
    %6862 = vmatpush1.msra.mxu0 %v6861
    %6863 = vmatprep.subr.mxu0 0.0
    %v6864 = vand.u32 %v5755, 4294901760
    %v6865 = vsub.f32 %v5755, %v6864
    %v6866 = vand.u32 %v6865, 4294901760
    %v6867 = vsub.f32 %v6865, %v6866
    %v6868 = vand.u32 %v6867, 4294901760
    %6869 = vmatpush1.msra.mxu0 %v6868
    %6870 = vmatprep.subr.mxu0 0.0
    %v6871 = vand.u32 %v5756, 4294901760
    %v6872 = vsub.f32 %v5756, %v6871
    %v6873 = vand.u32 %v6872, 4294901760
    %v6874 = vsub.f32 %v6872, %v6873
    %v6875 = vand.u32 %v6874, 4294901760
    %6876 = vmatpush1.msra.mxu0 %v6875
    %6877 = vmatprep.subr.mxu0 0.0
    %v6878 = vand.u32 %v5757, 4294901760
    %v6879 = vsub.f32 %v5757, %v6878
    %v6880 = vand.u32 %v6879, 4294901760
    %v6881 = vsub.f32 %v6879, %v6880
    %v6882 = vand.u32 %v6881, 4294901760
    %6883 = vmatpush1.msra.mxu0 %v6882
    %6884 = vmatprep.subr.mxu0 0.0
    %v6885 = vand.u32 %v5758, 4294901760
    %v6886 = vsub.f32 %v5758, %v6885
    %v6887 = vand.u32 %v6886, 4294901760
    %v6888 = vsub.f32 %v6886, %v6887
    %v6889 = vand.u32 %v6888, 4294901760
    %6890 = vmatpush1.msra.mxu0 %v6889
    %6891 = vmatprep.subr.mxu0 0.0
    %v6892 = vand.u32 %v5759, 4294901760
    %v6893 = vsub.f32 %v5759, %v6892
    %v6894 = vand.u32 %v6893, 4294901760
    %v6895 = vsub.f32 %v6893, %v6894
    %v6896 = vand.u32 %v6895, 4294901760
    %6897 = vmatpush1.msra.mxu0 %v6896
    %6898 = vmatprep.subr.mxu0 0.0
    %v6899 = vand.u32 %v5760, 4294901760
    %v6900 = vsub.f32 %v5760, %v6899
    %v6901 = vand.u32 %v6900, 4294901760
    %v6902 = vsub.f32 %v6900, %v6901
    %v6903 = vand.u32 %v6902, 4294901760
    %6904 = vmatpush1.msra.mxu0 %v6903
    %6905 = vmatprep.subr.mxu0 0.0
    %v6906 = vand.u32 %v5761, 4294901760
    %v6907 = vsub.f32 %v5761, %v6906
    %v6908 = vand.u32 %v6907, 4294901760
    %v6909 = vsub.f32 %v6907, %v6908
    %v6910 = vand.u32 %v6909, 4294901760
    %6911 = vmatpush1.msra.mxu0 %v6910
    %6912 = vmatprep.subr.mxu0 0.0
    %v6913 = vand.u32 %v5762, 4294901760
    %v6914 = vsub.f32 %v5762, %v6913
    %v6915 = vand.u32 %v6914, 4294901760
    %v6916 = vsub.f32 %v6914, %v6915
    %v6917 = vand.u32 %v6916, 4294901760
    %6918 = vmatpush1.msra.mxu0 %v6917
    %6919 = vmatprep.subr.mxu0 0.0
    %v6920 = vand.u32 %v5763, 4294901760
    %v6921 = vsub.f32 %v5763, %v6920
    %v6922 = vand.u32 %v6921, 4294901760
    %v6923 = vsub.f32 %v6921, %v6922
    %v6924 = vand.u32 %v6923, 4294901760
    %6925 = vmatpush1.msra.mxu0 %v6924
    %6926 = vmatprep.subr.mxu0 0.0
    %v6927 = vand.u32 %v5764, 4294901760
    %v6928 = vsub.f32 %v5764, %v6927
    %v6929 = vand.u32 %v6928, 4294901760
    %v6930 = vsub.f32 %v6928, %v6929
    %v6931 = vand.u32 %v6930, 4294901760
    %6932 = vmatpush1.msra.mxu0 %v6931
    %6933 = vmatprep.subr.mxu0 0.0
    %v6934 = vand.u32 %v5765, 4294901760
    %v6935 = vsub.f32 %v5765, %v6934
    %v6936 = vand.u32 %v6935, 4294901760
    %v6937 = vsub.f32 %v6935, %v6936
    %v6938 = vand.u32 %v6937, 4294901760
    %6939 = vmatpush1.msra.mxu0 %v6938
    %6940 = vmatprep.subr.mxu0 0.0
    %v6941 = vand.u32 %v5766, 4294901760
    %v6942 = vsub.f32 %v5766, %v6941
    %v6943 = vand.u32 %v6942, 4294901760
    %v6944 = vsub.f32 %v6942, %v6943
    %v6945 = vand.u32 %v6944, 4294901760
    %6946 = vmatpush1.msra.mxu0 %v6945
    %6947 = vmatprep.subr.mxu0 0.0
    %v6948 = vand.u32 %v5767, 4294901760
    %v6949 = vsub.f32 %v5767, %v6948
    %v6950 = vand.u32 %v6949, 4294901760
    %v6951 = vsub.f32 %v6949, %v6950
    %v6952 = vand.u32 %v6951, 4294901760
    %6953 = vmatpush1.msra.mxu0 %v6952
    %6954 = vmatprep.subr.mxu0 0.0
    %v6955 = vand.u32 %v5768, 4294901760
    %v6956 = vsub.f32 %v5768, %v6955
    %v6957 = vand.u32 %v6956, 4294901760
    %v6958 = vsub.f32 %v6956, %v6957
    %v6959 = vand.u32 %v6958, 4294901760
    %6960 = vmatpush1.msra.mxu0 %v6959
    %6961 = vmatprep.subr.mxu0 0.0
    %v6962 = vand.u32 %v5769, 4294901760
    %v6963 = vsub.f32 %v5769, %v6962
    %v6964 = vand.u32 %v6963, 4294901760
    %v6965 = vsub.f32 %v6963, %v6964
    %v6966 = vand.u32 %v6965, 4294901760
    %6967 = vmatpush1.msra.mxu0 %v6966
    %v6968 = vand.u32 %v5705, 4294901760
    %6969 = vmatprep.mubr.f32.mxu0 %v6968
    %v6970 = vand.u32 %v5704, 4294901760
    %6971 = vmatmul.mubr.f32.gmra.mrb[0].mxu0 %v6970
    %v6972 = vpop.f32.mrb[0].mxu0
    %v6973 = vadd.f32 %v6741, %v6972
    %v6974 = vpop.f32.mrb[0].mxu0
    %6975 = vdwg.mxu0
    %6976 = vmatprep.subr.mxu0 0.0
    %v6977 = vand.u32 %v5738, 4294901760
    %v6978 = vsub.f32 %v5738, %v6977
    %6979 = vmatpush1.msra.mxu0 %v6978
    %6980 = vmatprep.subr.mxu0 0.0
    %v6981 = vand.u32 %v5739, 4294901760
    %v6982 = vsub.f32 %v5739, %v6981
    %6983 = vmatpush1.msra.mxu0 %v6982
    %6984 = vmatprep.subr.mxu0 0.0
    %v6985 = vand.u32 %v5740, 4294901760
    %v6986 = vsub.f32 %v5740, %v6985
    %6987 = vmatpush1.msra.mxu0 %v6986
    %6988 = vmatprep.subr.mxu0 0.0
    %v6989 = vand.u32 %v5741, 4294901760
    %v6990 = vsub.f32 %v5741, %v6989
    %6991 = vmatpush1.msra.mxu0 %v6990
    %6992 = vmatprep.subr.mxu0 0.0
    %v6993 = vand.u32 %v5742, 4294901760
    %v6994 = vsub.f32 %v5742, %v6993
    %6995 = vmatpush1.msra.mxu0 %v6994
    %6996 = vmatprep.subr.mxu0 0.0
    %v6997 = vand.u32 %v5743, 4294901760
    %v6998 = vsub.f32 %v5743, %v6997
    %6999 = vmatpush1.msra.mxu0 %v6998
    %7000 = vmatprep.subr.mxu0 0.0
    %v7001 = vand.u32 %v5744, 4294901760
    %v7002 = vsub.f32 %v5744, %v7001
    %7003 = vmatpush1.msra.mxu0 %v7002
    %7004 = vmatprep.subr.mxu0 0.0
    %v7005 = vand.u32 %v5745, 4294901760
    %v7006 = vsub.f32 %v5745, %v7005
    %7007 = vmatpush1.msra.mxu0 %v7006
    %7008 = vmatprep.subr.mxu0 0.0
    %v7009 = vand.u32 %v5746, 4294901760
    %v7010 = vsub.f32 %v5746, %v7009
    %7011 = vmatpush1.msra.mxu0 %v7010
    %7012 = vmatprep.subr.mxu0 0.0
    %v7013 = vand.u32 %v5747, 4294901760
    %v7014 = vsub.f32 %v5747, %v7013
    %7015 = vmatpush1.msra.mxu0 %v7014
    %7016 = vmatprep.subr.mxu0 0.0
    %v7017 = vand.u32 %v5748, 4294901760
    %v7018 = vsub.f32 %v5748, %v7017
    %7019 = vmatpush1.msra.mxu0 %v7018
    %7020 = vmatprep.subr.mxu0 0.0
    %v7021 = vand.u32 %v5749, 4294901760
    %v7022 = vsub.f32 %v5749, %v7021
    %7023 = vmatpush1.msra.mxu0 %v7022
    %7024 = vmatprep.subr.mxu0 0.0
    %v7025 = vand.u32 %v5750, 4294901760
    %v7026 = vsub.f32 %v5750, %v7025
    %7027 = vmatpush1.msra.mxu0 %v7026
    %7028 = vmatprep.subr.mxu0 0.0
    %v7029 = vand.u32 %v5751, 4294901760
    %v7030 = vsub.f32 %v5751, %v7029
    %7031 = vmatpush1.msra.mxu0 %v7030
    %7032 = vmatprep.subr.mxu0 0.0
    %v7033 = vand.u32 %v5752, 4294901760
    %v7034 = vsub.f32 %v5752, %v7033
    %7035 = vmatpush1.msra.mxu0 %v7034
    %7036 = vmatprep.subr.mxu0 0.0
    %v7037 = vand.u32 %v5753, 4294901760
    %v7038 = vsub.f32 %v5753, %v7037
    %7039 = vmatpush1.msra.mxu0 %v7038
    %7040 = vmatprep.subr.mxu0 0.0
    %v7041 = vand.u32 %v5754, 4294901760
    %v7042 = vsub.f32 %v5754, %v7041
    %7043 = vmatpush1.msra.mxu0 %v7042
    %7044 = vmatprep.subr.mxu0 0.0
    %v7045 = vand.u32 %v5755, 4294901760
    %v7046 = vsub.f32 %v5755, %v7045
    %7047 = vmatpush1.msra.mxu0 %v7046
    %7048 = vmatprep.subr.mxu0 0.0
    %v7049 = vand.u32 %v5756, 4294901760
    %v7050 = vsub.f32 %v5756, %v7049
    %7051 = vmatpush1.msra.mxu0 %v7050
    %7052 = vmatprep.subr.mxu0 0.0
    %v7053 = vand.u32 %v5757, 4294901760
    %v7054 = vsub.f32 %v5757, %v7053
    %7055 = vmatpush1.msra.mxu0 %v7054
    %7056 = vmatprep.subr.mxu0 0.0
    %v7057 = vand.u32 %v5758, 4294901760
    %v7058 = vsub.f32 %v5758, %v7057
    %7059 = vmatpush1.msra.mxu0 %v7058
    %7060 = vmatprep.subr.mxu0 0.0
    %v7061 = vand.u32 %v5759, 4294901760
    %v7062 = vsub.f32 %v5759, %v7061
    %7063 = vmatpush1.msra.mxu0 %v7062
    %7064 = vmatprep.subr.mxu0 0.0
    %v7065 = vand.u32 %v5760, 4294901760
    %v7066 = vsub.f32 %v5760, %v7065
    %7067 = vmatpush1.msra.mxu0 %v7066
    %7068 = vmatprep.subr.mxu0 0.0
    %v7069 = vand.u32 %v5761, 4294901760
    %v7070 = vsub.f32 %v5761, %v7069
    %7071 = vmatpush1.msra.mxu0 %v7070
    %7072 = vmatprep.subr.mxu0 0.0
    %v7073 = vand.u32 %v5762, 4294901760
    %v7074 = vsub.f32 %v5762, %v7073
    %7075 = vmatpush1.msra.mxu0 %v7074
    %7076 = vmatprep.subr.mxu0 0.0
    %v7077 = vand.u32 %v5763, 4294901760
    %v7078 = vsub.f32 %v5763, %v7077
    %7079 = vmatpush1.msra.mxu0 %v7078
    %7080 = vmatprep.subr.mxu0 0.0
    %v7081 = vand.u32 %v5764, 4294901760
    %v7082 = vsub.f32 %v5764, %v7081
    %7083 = vmatpush1.msra.mxu0 %v7082
    %7084 = vmatprep.subr.mxu0 0.0
    %v7085 = vand.u32 %v5765, 4294901760
    %v7086 = vsub.f32 %v5765, %v7085
    %7087 = vmatpush1.msra.mxu0 %v7086
    %7088 = vmatprep.subr.mxu0 0.0
    %v7089 = vand.u32 %v5766, 4294901760
    %v7090 = vsub.f32 %v5766, %v7089
    %7091 = vmatpush1.msra.mxu0 %v7090
    %7092 = vmatprep.subr.mxu0 0.0
    %v7093 = vand.u32 %v5767, 4294901760
    %v7094 = vsub.f32 %v5767, %v7093
    %7095 = vmatpush1.msra.mxu0 %v7094
    %7096 = vmatprep.subr.mxu0 0.0
    %v7097 = vand.u32 %v5768, 4294901760
    %v7098 = vsub.f32 %v5768, %v7097
    %7099 = vmatpush1.msra.mxu0 %v7098
    %7100 = vmatprep.subr.mxu0 0.0
    %v7101 = vand.u32 %v5769, 4294901760
    %v7102 = vsub.f32 %v5769, %v7101
    %7103 = vmatpush1.msra.mxu0 %v7102
    %v7104 = vand.u32 %v5705, 4294901760
    %v7105 = vsub.f32 %v5705, %v7104
    %7106 = vmatprep.mubr.f32.mxu0 %v7105
    %v7107 = vand.u32 %v5704, 4294901760
    %v7108 = vsub.f32 %v5704, %v7107
    %7109 = vmatmul.mubr.f32.gmra.mrb[0].mxu0 %v7108
    %v7110 = vpop.f32.mrb[0].mxu0
    %v7111 = vadd.f32 %v6973, %v7110
    %v7112 = vpop.f32.mrb[0].mxu0
    %7113 = vdwg.mxu0
    %7114 = vmatprep.subr.mxu0 0.0
    %v7115 = vand.u32 %v5738, 4294901760
    %7116 = vmatpush1.msra.mxu0 %v7115
    %7117 = vmatprep.subr.mxu0 0.0
    %v7118 = vand.u32 %v5739, 4294901760
    %7119 = vmatpush1.msra.mxu0 %v7118
    %7120 = vmatprep.subr.mxu0 0.0
    %v7121 = vand.u32 %v5740, 4294901760
    %7122 = vmatpush1.msra.mxu0 %v7121
    %7123 = vmatprep.subr.mxu0 0.0
    %v7124 = vand.u32 %v5741, 4294901760
    %7125 = vmatpush1.msra.mxu0 %v7124
    %7126 = vmatprep.subr.mxu0 0.0
    %v7127 = vand.u32 %v5742, 4294901760
    %7128 = vmatpush1.msra.mxu0 %v7127
    %7129 = vmatprep.subr.mxu0 0.0
    %v7130 = vand.u32 %v5743, 4294901760
    %7131 = vmatpush1.msra.mxu0 %v7130
    %7132 = vmatprep.subr.mxu0 0.0
    %v7133 = vand.u32 %v5744, 4294901760
    %7134 = vmatpush1.msra.mxu0 %v7133
    %7135 = vmatprep.subr.mxu0 0.0
    %v7136 = vand.u32 %v5745, 4294901760
    %7137 = vmatpush1.msra.mxu0 %v7136
    %7138 = vmatprep.subr.mxu0 0.0
    %v7139 = vand.u32 %v5746, 4294901760
    %7140 = vmatpush1.msra.mxu0 %v7139
    %7141 = vmatprep.subr.mxu0 0.0
    %v7142 = vand.u32 %v5747, 4294901760
    %7143 = vmatpush1.msra.mxu0 %v7142
    %7144 = vmatprep.subr.mxu0 0.0
    %v7145 = vand.u32 %v5748, 4294901760
    %7146 = vmatpush1.msra.mxu0 %v7145
    %7147 = vmatprep.subr.mxu0 0.0
    %v7148 = vand.u32 %v5749, 4294901760
    %7149 = vmatpush1.msra.mxu0 %v7148
    %7150 = vmatprep.subr.mxu0 0.0
    %v7151 = vand.u32 %v5750, 4294901760
    %7152 = vmatpush1.msra.mxu0 %v7151
    %7153 = vmatprep.subr.mxu0 0.0
    %v7154 = vand.u32 %v5751, 4294901760
    %7155 = vmatpush1.msra.mxu0 %v7154
    %7156 = vmatprep.subr.mxu0 0.0
    %v7157 = vand.u32 %v5752, 4294901760
    %7158 = vmatpush1.msra.mxu0 %v7157
    %7159 = vmatprep.subr.mxu0 0.0
    %v7160 = vand.u32 %v5753, 4294901760
    %7161 = vmatpush1.msra.mxu0 %v7160
    %7162 = vmatprep.subr.mxu0 0.0
    %v7163 = vand.u32 %v5754, 4294901760
    %7164 = vmatpush1.msra.mxu0 %v7163
    %7165 = vmatprep.subr.mxu0 0.0
    %v7166 = vand.u32 %v5755, 4294901760
    %7167 = vmatpush1.msra.mxu0 %v7166
    %7168 = vmatprep.subr.mxu0 0.0
    %v7169 = vand.u32 %v5756, 4294901760
    %7170 = vmatpush1.msra.mxu0 %v7169
    %7171 = vmatprep.subr.mxu0 0.0
    %v7172 = vand.u32 %v5757, 4294901760
    %7173 = vmatpush1.msra.mxu0 %v7172
    %7174 = vmatprep.subr.mxu0 0.0
    %v7175 = vand.u32 %v5758, 4294901760
    %7176 = vmatpush1.msra.mxu0 %v7175
    %7177 = vmatprep.subr.mxu0 0.0
    %v7178 = vand.u32 %v5759, 4294901760
    %7179 = vmatpush1.msra.mxu0 %v7178
    %7180 = vmatprep.subr.mxu0 0.0
    %v7181 = vand.u32 %v5760, 4294901760
    %7182 = vmatpush1.msra.mxu0 %v7181
    %7183 = vmatprep.subr.mxu0 0.0
    %v7184 = vand.u32 %v5761, 4294901760
    %7185 = vmatpush1.msra.mxu0 %v7184
    %7186 = vmatprep.subr.mxu0 0.0
    %v7187 = vand.u32 %v5762, 4294901760
    %7188 = vmatpush1.msra.mxu0 %v7187
    %7189 = vmatprep.subr.mxu0 0.0
    %v7190 = vand.u32 %v5763, 4294901760
    %7191 = vmatpush1.msra.mxu0 %v7190
    %7192 = vmatprep.subr.mxu0 0.0
    %v7193 = vand.u32 %v5764, 4294901760
    %7194 = vmatpush1.msra.mxu0 %v7193
    %7195 = vmatprep.subr.mxu0 0.0
    %v7196 = vand.u32 %v5765, 4294901760
    %7197 = vmatpush1.msra.mxu0 %v7196
    %7198 = vmatprep.subr.mxu0 0.0
    %v7199 = vand.u32 %v5766, 4294901760
    %7200 = vmatpush1.msra.mxu0 %v7199
    %7201 = vmatprep.subr.mxu0 0.0
    %v7202 = vand.u32 %v5767, 4294901760
    %7203 = vmatpush1.msra.mxu0 %v7202
    %7204 = vmatprep.subr.mxu0 0.0
    %v7205 = vand.u32 %v5768, 4294901760
    %7206 = vmatpush1.msra.mxu0 %v7205
    %7207 = vmatprep.subr.mxu0 0.0
    %v7208 = vand.u32 %v5769, 4294901760
    %7209 = vmatpush1.msra.mxu0 %v7208
    %v7210 = vand.u32 %v5705, 4294901760
    %v7211 = vsub.f32 %v5705, %v7210
    %v7212 = vand.u32 %v7211, 4294901760
    %7213 = vmatprep.mubr.f32.mxu0 %v7212
    %v7214 = vand.u32 %v5704, 4294901760
    %v7215 = vsub.f32 %v5704, %v7214
    %v7216 = vand.u32 %v7215, 4294901760
    %7217 = vmatmul.mubr.f32.gmra.mrb[0].mxu0 %v7216
    %v7218 = vpop.f32.mrb[0].mxu0
    %v7219 = vadd.f32 %v7111, %v7218
    %v7220 = vpop.f32.mrb[0].mxu0
    %7221 = vdwg.mxu0
    %7222 = vmatprep.subr.mxu0 0.0
    %v7223 = vand.u32 %v5738, 4294901760
    %v7224 = vsub.f32 %v5738, %v7223
    %v7225 = vand.u32 %v7224, 4294901760
    %7226 = vmatpush1.msra.mxu0 %v7225
    %7227 = vmatprep.subr.mxu0 0.0
    %v7228 = vand.u32 %v5739, 4294901760
    %v7229 = vsub.f32 %v5739, %v7228
    %v7230 = vand.u32 %v7229, 4294901760
    %7231 = vmatpush1.msra.mxu0 %v7230
    %7232 = vmatprep.subr.mxu0 0.0
    %v7233 = vand.u32 %v5740, 4294901760
    %v7234 = vsub.f32 %v5740, %v7233
    %v7235 = vand.u32 %v7234, 4294901760
    %7236 = vmatpush1.msra.mxu0 %v7235
    %7237 = vmatprep.subr.mxu0 0.0
    %v7238 = vand.u32 %v5741, 4294901760
    %v7239 = vsub.f32 %v5741, %v7238
    %v7240 = vand.u32 %v7239, 4294901760
    %7241 = vmatpush1.msra.mxu0 %v7240
    %7242 = vmatprep.subr.mxu0 0.0
    %v7243 = vand.u32 %v5742, 4294901760
    %v7244 = vsub.f32 %v5742, %v7243
    %v7245 = vand.u32 %v7244, 4294901760
    %7246 = vmatpush1.msra.mxu0 %v7245
    %7247 = vmatprep.subr.mxu0 0.0
    %v7248 = vand.u32 %v5743, 4294901760
    %v7249 = vsub.f32 %v5743, %v7248
    %v7250 = vand.u32 %v7249, 4294901760
    %7251 = vmatpush1.msra.mxu0 %v7250
    %7252 = vmatprep.subr.mxu0 0.0
    %v7253 = vand.u32 %v5744, 4294901760
    %v7254 = vsub.f32 %v5744, %v7253
    %v7255 = vand.u32 %v7254, 4294901760
    %7256 = vmatpush1.msra.mxu0 %v7255
    %7257 = vmatprep.subr.mxu0 0.0
    %v7258 = vand.u32 %v5745, 4294901760
    %v7259 = vsub.f32 %v5745, %v7258
    %v7260 = vand.u32 %v7259, 4294901760
    %7261 = vmatpush1.msra.mxu0 %v7260
    %7262 = vmatprep.subr.mxu0 0.0
    %v7263 = vand.u32 %v5746, 4294901760
    %v7264 = vsub.f32 %v5746, %v7263
    %v7265 = vand.u32 %v7264, 4294901760
    %7266 = vmatpush1.msra.mxu0 %v7265
    %7267 = vmatprep.subr.mxu0 0.0
    %v7268 = vand.u32 %v5747, 4294901760
    %v7269 = vsub.f32 %v5747, %v7268
    %v7270 = vand.u32 %v7269, 4294901760
    %7271 = vmatpush1.msra.mxu0 %v7270
    %7272 = vmatprep.subr.mxu0 0.0
    %v7273 = vand.u32 %v5748, 4294901760
    %v7274 = vsub.f32 %v5748, %v7273
    %v7275 = vand.u32 %v7274, 4294901760
    %7276 = vmatpush1.msra.mxu0 %v7275
    %7277 = vmatprep.subr.mxu0 0.0
    %v7278 = vand.u32 %v5749, 4294901760
    %v7279 = vsub.f32 %v5749, %v7278
    %v7280 = vand.u32 %v7279, 4294901760
    %7281 = vmatpush1.msra.mxu0 %v7280
    %7282 = vmatprep.subr.mxu0 0.0
    %v7283 = vand.u32 %v5750, 4294901760
    %v7284 = vsub.f32 %v5750, %v7283
    %v7285 = vand.u32 %v7284, 4294901760
    %7286 = vmatpush1.msra.mxu0 %v7285
    %7287 = vmatprep.subr.mxu0 0.0
    %v7288 = vand.u32 %v5751, 4294901760
    %v7289 = vsub.f32 %v5751, %v7288
    %v7290 = vand.u32 %v7289, 4294901760
    %7291 = vmatpush1.msra.mxu0 %v7290
    %7292 = vmatprep.subr.mxu0 0.0
    %v7293 = vand.u32 %v5752, 4294901760
    %v7294 = vsub.f32 %v5752, %v7293
    %v7295 = vand.u32 %v7294, 4294901760
    %7296 = vmatpush1.msra.mxu0 %v7295
    %7297 = vmatprep.subr.mxu0 0.0
    %v7298 = vand.u32 %v5753, 4294901760
    %v7299 = vsub.f32 %v5753, %v7298
    %v7300 = vand.u32 %v7299, 4294901760
    %7301 = vmatpush1.msra.mxu0 %v7300
    %7302 = vmatprep.subr.mxu0 0.0
    %v7303 = vand.u32 %v5754, 4294901760
    %v7304 = vsub.f32 %v5754, %v7303
    %v7305 = vand.u32 %v7304, 4294901760
    %7306 = vmatpush1.msra.mxu0 %v7305
    %7307 = vmatprep.subr.mxu0 0.0
    %v7308 = vand.u32 %v5755, 4294901760
    %v7309 = vsub.f32 %v5755, %v7308
    %v7310 = vand.u32 %v7309, 4294901760
    %7311 = vmatpush1.msra.mxu0 %v7310
    %7312 = vmatprep.subr.mxu0 0.0
    %v7313 = vand.u32 %v5756, 4294901760
    %v7314 = vsub.f32 %v5756, %v7313
    %v7315 = vand.u32 %v7314, 4294901760
    %7316 = vmatpush1.msra.mxu0 %v7315
    %7317 = vmatprep.subr.mxu0 0.0
    %v7318 = vand.u32 %v5757, 4294901760
    %v7319 = vsub.f32 %v5757, %v7318
    %v7320 = vand.u32 %v7319, 4294901760
    %7321 = vmatpush1.msra.mxu0 %v7320
    %7322 = vmatprep.subr.mxu0 0.0
    %v7323 = vand.u32 %v5758, 4294901760
    %v7324 = vsub.f32 %v5758, %v7323
    %v7325 = vand.u32 %v7324, 4294901760
    %7326 = vmatpush1.msra.mxu0 %v7325
    %7327 = vmatprep.subr.mxu0 0.0
    %v7328 = vand.u32 %v5759, 4294901760
    %v7329 = vsub.f32 %v5759, %v7328
    %v7330 = vand.u32 %v7329, 4294901760
    %7331 = vmatpush1.msra.mxu0 %v7330
    %7332 = vmatprep.subr.mxu0 0.0
    %v7333 = vand.u32 %v5760, 4294901760
    %v7334 = vsub.f32 %v5760, %v7333
    %v7335 = vand.u32 %v7334, 4294901760
    %7336 = vmatpush1.msra.mxu0 %v7335
    %7337 = vmatprep.subr.mxu0 0.0
    %v7338 = vand.u32 %v5761, 4294901760
    %v7339 = vsub.f32 %v5761, %v7338
    %v7340 = vand.u32 %v7339, 4294901760
    %7341 = vmatpush1.msra.mxu0 %v7340
    %7342 = vmatprep.subr.mxu0 0.0
    %v7343 = vand.u32 %v5762, 4294901760
    %v7344 = vsub.f32 %v5762, %v7343
    %v7345 = vand.u32 %v7344, 4294901760
    %7346 = vmatpush1.msra.mxu0 %v7345
    %7347 = vmatprep.subr.mxu0 0.0
    %v7348 = vand.u32 %v5763, 4294901760
    %v7349 = vsub.f32 %v5763, %v7348
    %v7350 = vand.u32 %v7349, 4294901760
    %7351 = vmatpush1.msra.mxu0 %v7350
    %7352 = vmatprep.subr.mxu0 0.0
    %v7353 = vand.u32 %v5764, 4294901760
    %v7354 = vsub.f32 %v5764, %v7353
    %v7355 = vand.u32 %v7354, 4294901760
    %7356 = vmatpush1.msra.mxu0 %v7355
    %7357 = vmatprep.subr.mxu0 0.0
    %v7358 = vand.u32 %v5765, 4294901760
    %v7359 = vsub.f32 %v5765, %v7358
    %v7360 = vand.u32 %v7359, 4294901760
    %7361 = vmatpush1.msra.mxu0 %v7360
    %7362 = vmatprep.subr.mxu0 0.0
    %v7363 = vand.u32 %v5766, 4294901760
    %v7364 = vsub.f32 %v5766, %v7363
    %v7365 = vand.u32 %v7364, 4294901760
    %7366 = vmatpush1.msra.mxu0 %v7365
    %7367 = vmatprep.subr.mxu0 0.0
    %v7368 = vand.u32 %v5767, 4294901760
    %v7369 = vsub.f32 %v5767, %v7368
    %v7370 = vand.u32 %v7369, 4294901760
    %7371 = vmatpush1.msra.mxu0 %v7370
    %7372 = vmatprep.subr.mxu0 0.0
    %v7373 = vand.u32 %v5768, 4294901760
    %v7374 = vsub.f32 %v5768, %v7373
    %v7375 = vand.u32 %v7374, 4294901760
    %7376 = vmatpush1.msra.mxu0 %v7375
    %7377 = vmatprep.subr.mxu0 0.0
    %v7378 = vand.u32 %v5769, 4294901760
    %v7379 = vsub.f32 %v5769, %v7378
    %v7380 = vand.u32 %v7379, 4294901760
    %7381 = vmatpush1.msra.mxu0 %v7380
    %v7382 = vand.u32 %v5705, 4294901760
    %7383 = vmatprep.mubr.f32.mxu0 %v7382
    %v7384 = vand.u32 %v5704, 4294901760
    %7385 = vmatmul.mubr.f32.gmra.mrb[0].mxu0 %v7384
    %v7386 = vpop.f32.mrb[0].mxu0
    %v7387 = vadd.f32 %v7219, %v7386
    %v7388 = vpop.f32.mrb[0].mxu0
    %7389 = vdwg.mxu0
    %7390 = vmatprep.subr.mxu0 0.0
    %v7391 = vand.u32 %v5738, 4294901760
    %7392 = vmatpush1.msra.mxu0 %v7391
    %7393 = vmatprep.subr.mxu0 0.0
    %v7394 = vand.u32 %v5739, 4294901760
    %7395 = vmatpush1.msra.mxu0 %v7394
    %7396 = vmatprep.subr.mxu0 0.0
    %v7397 = vand.u32 %v5740, 4294901760
    %7398 = vmatpush1.msra.mxu0 %v7397
    %7399 = vmatprep.subr.mxu0 0.0
    %v7400 = vand.u32 %v5741, 4294901760
    %7401 = vmatpush1.msra.mxu0 %v7400
    %7402 = vmatprep.subr.mxu0 0.0
    %v7403 = vand.u32 %v5742, 4294901760
    %7404 = vmatpush1.msra.mxu0 %v7403
    %7405 = vmatprep.subr.mxu0 0.0
    %v7406 = vand.u32 %v5743, 4294901760
    %7407 = vmatpush1.msra.mxu0 %v7406
    %7408 = vmatprep.subr.mxu0 0.0
    %v7409 = vand.u32 %v5744, 4294901760
    %7410 = vmatpush1.msra.mxu0 %v7409
    %7411 = vmatprep.subr.mxu0 0.0
    %v7412 = vand.u32 %v5745, 4294901760
    %7413 = vmatpush1.msra.mxu0 %v7412
    %7414 = vmatprep.subr.mxu0 0.0
    %v7415 = vand.u32 %v5746, 4294901760
    %7416 = vmatpush1.msra.mxu0 %v7415
    %7417 = vmatprep.subr.mxu0 0.0
    %v7418 = vand.u32 %v5747, 4294901760
    %7419 = vmatpush1.msra.mxu0 %v7418
    %7420 = vmatprep.subr.mxu0 0.0
    %v7421 = vand.u32 %v5748, 4294901760
    %7422 = vmatpush1.msra.mxu0 %v7421
    %7423 = vmatprep.subr.mxu0 0.0
    %v7424 = vand.u32 %v5749, 4294901760
    %7425 = vmatpush1.msra.mxu0 %v7424
    %7426 = vmatprep.subr.mxu0 0.0
    %v7427 = vand.u32 %v5750, 4294901760
    %7428 = vmatpush1.msra.mxu0 %v7427
    %7429 = vmatprep.subr.mxu0 0.0
    %v7430 = vand.u32 %v5751, 4294901760
    %7431 = vmatpush1.msra.mxu0 %v7430
    %7432 = vmatprep.subr.mxu0 0.0
    %v7433 = vand.u32 %v5752, 4294901760
    %7434 = vmatpush1.msra.mxu0 %v7433
    %7435 = vmatprep.subr.mxu0 0.0
    %v7436 = vand.u32 %v5753, 4294901760
    %7437 = vmatpush1.msra.mxu0 %v7436
    %7438 = vmatprep.subr.mxu0 0.0
    %v7439 = vand.u32 %v5754, 4294901760
    %7440 = vmatpush1.msra.mxu0 %v7439
    %7441 = vmatprep.subr.mxu0 0.0
    %v7442 = vand.u32 %v5755, 4294901760
    %7443 = vmatpush1.msra.mxu0 %v7442
    %7444 = vmatprep.subr.mxu0 0.0
    %v7445 = vand.u32 %v5756, 4294901760
    %7446 = vmatpush1.msra.mxu0 %v7445
    %7447 = vmatprep.subr.mxu0 0.0
    %v7448 = vand.u32 %v5757, 4294901760
    %7449 = vmatpush1.msra.mxu0 %v7448
    %7450 = vmatprep.subr.mxu0 0.0
    %v7451 = vand.u32 %v5758, 4294901760
    %7452 = vmatpush1.msra.mxu0 %v7451
    %7453 = vmatprep.subr.mxu0 0.0
    %v7454 = vand.u32 %v5759, 4294901760
    %7455 = vmatpush1.msra.mxu0 %v7454
    %7456 = vmatprep.subr.mxu0 0.0
    %v7457 = vand.u32 %v5760, 4294901760
    %7458 = vmatpush1.msra.mxu0 %v7457
    %7459 = vmatprep.subr.mxu0 0.0
    %v7460 = vand.u32 %v5761, 4294901760
    %7461 = vmatpush1.msra.mxu0 %v7460
    %7462 = vmatprep.subr.mxu0 0.0
    %v7463 = vand.u32 %v5762, 4294901760
    %7464 = vmatpush1.msra.mxu0 %v7463
    %7465 = vmatprep.subr.mxu0 0.0
    %v7466 = vand.u32 %v5763, 4294901760
    %7467 = vmatpush1.msra.mxu0 %v7466
    %7468 = vmatprep.subr.mxu0 0.0
    %v7469 = vand.u32 %v5764, 4294901760
    %7470 = vmatpush1.msra.mxu0 %v7469
    %7471 = vmatprep.subr.mxu0 0.0
    %v7472 = vand.u32 %v5765, 4294901760
    %7473 = vmatpush1.msra.mxu0 %v7472
    %7474 = vmatprep.subr.mxu0 0.0
    %v7475 = vand.u32 %v5766, 4294901760
    %7476 = vmatpush1.msra.mxu0 %v7475
    %7477 = vmatprep.subr.mxu0 0.0
    %v7478 = vand.u32 %v5767, 4294901760
    %7479 = vmatpush1.msra.mxu0 %v7478
    %7480 = vmatprep.subr.mxu0 0.0
    %v7481 = vand.u32 %v5768, 4294901760
    %7482 = vmatpush1.msra.mxu0 %v7481
    %7483 = vmatprep.subr.mxu0 0.0
    %v7484 = vand.u32 %v5769, 4294901760
    %7485 = vmatpush1.msra.mxu0 %v7484
    %v7486 = vand.u32 %v5705, 4294901760
    %7487 = vmatprep.mubr.f32.mxu0 %v7486
    %v7488 = vand.u32 %v5704, 4294901760
    %7489 = vmatmul.mubr.f32.gmra.mrb[0].mxu0 %v7488
    %v7490 = vpop.f32.mrb[0].mxu0
    %v7491 = vadd.f32 %v7387, %v7490
    %v7492 = vpop.f32.mrb[0].mxu0
    %7493 = vdwg.mxu0
    %v7494 = vmul.f32 %v7491, 0.001953125
    %v7495 = vmul.f32 %v7494, %v7494
    %v7497 = vrot.slane %v7495, 7
    %v7499 = vsub.f32 %v7494, %v7497
    %v7500 = vmax.f32 %v7499, 0.0
    %v7501 = vld [vmem:[%s7] sm:$0x1]
    %v7502 = vadd.f32 %v7500, 1e-05
    %v7503 = vrsqrt.pop %v7502
    %v7506 = vunpack.c.l.s4 1966171168
    %v7507 = vunpack.c.0.s8 %v7506
    %v7508 = vlaneseq
    %v7509 = vshrl.u32 %v7508, 7
    %v7510 = vsub.s32 %v7507, %v7509
    %v7511 = vrot.slane %v7503, %v7510
    %v7512 = vcombine.high %v7511, %v7511
    %v7514 = vunpack.c.l.s4 1966171168
    %v7515 = vunpack.c.0.s8 %v7514
    %v7516 = vlaneseq
    %v7517 = vshrl.u32 %v7516, 7
    %v7518 = vsub.s32 %v7515, %v7517
    %v7519 = vrot.slane %v7512, %v7518
    %v7521 = vmul.f32 %v7501, %v7519
    %v7522 = vld [vmem:[%s8] sm:$0x1]
    %v7523 = vmul.f32 %v7494, %v7521
    %v7524 = vsub.f32 %v7522, %v7523
    %v7526 = vlaneseq
    %v7527 = vshrl.u32 %v7526, 7
    %v7528 = vsub.s32 0, %v7527
    %v7529 = vrot.slane %v7524, %v7528
    %v7531 = vsel %vm2333, %v7521, %v7529
    %v7532 = vld [vmem:[%s10] sm:$0xff]
    %v7533 = vld [vmem:[%s10 + $0x8] sm:$0xff]
    %v7534 = vld [vmem:[%s10 + $0x10] sm:$0xff]
    %v7535 = vld [vmem:[%s10 + $0x18] sm:$0xff]
    %v7536 = vld [vmem:[%s10 + $0x20] sm:$0xff]
    %v7537 = vld [vmem:[%s10 + $0x28] sm:$0xff]
    %v7538 = vld [vmem:[%s10 + $0x30] sm:$0xff]
    %v7539 = vld [vmem:[%s10 + $0x38] sm:$0xff]
    %v7540 = vld [vmem:[%s10 + $0x40] sm:$0xff]
    %v7541 = vld [vmem:[%s10 + $0x48] sm:$0xff]
    %v7542 = vld [vmem:[%s10 + $0x50] sm:$0xff]
    %v7543 = vld [vmem:[%s10 + $0x58] sm:$0xff]
    %v7544 = vld [vmem:[%s10 + $0x60] sm:$0xff]
    %v7545 = vld [vmem:[%s10 + $0x68] sm:$0xff]
    %v7546 = vld [vmem:[%s10 + $0x70] sm:$0xff]
    %v7547 = vld [vmem:[%s10 + $0x78] sm:$0xff]
    %vm7548 = vcmask 261120
    %v7550 = vsel %vm7548, %v7531, 0
    %v7552 = vand.u32 %v7533, 4294901760
    %7553 = vmatprep.subr.mxu0 %v7552
    %v7554 = vand.u32 %v7532, 4294901760
    %7555 = vmatpush1.msra.mxu0 %v7554
    %v7556 = vand.u32 %v7537, 4294901760
    %7557 = vmatprep.subr.mxu0 %v7556
    %v7558 = vand.u32 %v7536, 4294901760
    %7559 = vmatpush1.msra.mxu0 %v7558
    %v7560 = vand.u32 %v7541, 4294901760
    %7561 = vmatprep.subr.mxu0 %v7560
    %v7562 = vand.u32 %v7540, 4294901760
    %7563 = vmatpush1.msra.mxu0 %v7562
    %v7564 = vand.u32 %v7545, 4294901760
    %7565 = vmatprep.subr.mxu0 %v7564
    %v7566 = vand.u32 %v7544, 4294901760
    %7567 = vmatpush1.msra.mxu0 %v7566
    %7568 = vmatprep.subr.mxu0 0.0
    %7569 = vmatpush1.msra.mxu0 0.0
    %7570 = vmatprep.subr.mxu0 0.0
    %7571 = vmatpush1.msra.mxu0 0.0
    %7572 = vmatprep.subr.mxu0 0.0
    %7573 = vmatpush1.msra.mxu0 0.0
    %7574 = vmatprep.subr.mxu0 0.0
    %7575 = vmatpush1.msra.mxu0 0.0
    %7576 = vmatprep.subr.mxu0 0.0
    %7577 = vmatpush1.msra.mxu0 0.0
    %7578 = vmatprep.subr.mxu0 0.0
    %7579 = vmatpush1.msra.mxu0 0.0
    %7580 = vmatprep.subr.mxu0 0.0
    %7581 = vmatpush1.msra.mxu0 0.0
    %7582 = vmatprep.subr.mxu0 0.0
    %7583 = vmatpush1.msra.mxu0 0.0
    %7584 = vmatprep.subr.mxu0 0.0
    %7585 = vmatpush1.msra.mxu0 0.0
    %7586 = vmatprep.subr.mxu0 0.0
    %7587 = vmatpush1.msra.mxu0 0.0
    %7588 = vmatprep.subr.mxu0 0.0
    %7589 = vmatpush1.msra.mxu0 0.0
    %7590 = vmatprep.subr.mxu0 0.0
    %7591 = vmatpush1.msra.mxu0 0.0
    %7592 = vmatprep.subr.mxu0 0.0
    %7593 = vmatpush1.msra.mxu0 0.0
    %7594 = vmatprep.subr.mxu0 0.0
    %7595 = vmatpush1.msra.mxu0 0.0
    %7596 = vmatprep.subr.mxu0 0.0
    %7597 = vmatpush1.msra.mxu0 0.0
    %7598 = vmatprep.subr.mxu0 0.0
    %7599 = vmatpush1.msra.mxu0 0.0
    %7600 = vmatprep.subr.mxu0 0.0
    %7601 = vmatpush1.msra.mxu0 0.0
    %7602 = vmatprep.subr.mxu0 0.0
    %7603 = vmatpush1.msra.mxu0 0.0
    %7604 = vmatprep.subr.mxu0 0.0
    %7605 = vmatpush1.msra.mxu0 0.0
    %7606 = vmatprep.subr.mxu0 0.0
    %7607 = vmatpush1.msra.mxu0 0.0
    %7608 = vmatprep.subr.mxu0 0.0
    %7609 = vmatpush1.msra.mxu0 0.0
    %7610 = vmatprep.subr.mxu0 0.0
    %7611 = vmatpush1.msra.mxu0 0.0
    %7612 = vmatprep.subr.mxu0 0.0
    %7613 = vmatpush1.msra.mxu0 0.0
    %7614 = vmatprep.subr.mxu0 0.0
    %7615 = vmatpush1.msra.mxu0 0.0
    %7616 = vmatprep.subr.mxu0 0.0
    %7617 = vmatpush1.msra.mxu0 0.0
    %7618 = vmatprep.subr.mxu0 0.0
    %7619 = vmatpush1.msra.mxu0 0.0
    %7620 = vmatprep.subr.mxu0 0.0
    %7621 = vmatpush1.msra.mxu0 0.0
    %7622 = vmatprep.subr.mxu0 0.0
    %7623 = vmatpush1.msra.mxu0 0.0
    %7624 = vmatprep.mubr.f32.mxu0 0.0
    %v7625 = vand.u32 %v7550, 4294901760
    %v7626 = vsub.f32 %v7550, %v7625
    %v7627 = vand.u32 %v7626, 4294901760
    %v7628 = vsub.f32 %v7626, %v7627
    %v7629 = vand.u32 %v7628, 4294901760
    %7630 = vmatmul.mubr.f32.gmra.mrb[0].mxu0 %v7629
    %v7631 = vpop.f32.mrb[0].mxu0
    %v7632 = vadd.f32 0.0, %v7631
    %v7633 = vpop.f32.mrb[0].mxu0
    %v7634 = vadd.f32 0.0, %v7633
    %7635 = vdwg.mxu0
    %v7636 = vand.u32 %v7533, 4294901760
    %v7637 = vsub.f32 %v7533, %v7636
    %v7638 = vand.u32 %v7637, 4294901760
    %v7639 = vsub.f32 %v7637, %v7638
    %v7640 = vand.u32 %v7639, 4294901760
    %7641 = vmatprep.subr.mxu0 %v7640
    %v7642 = vand.u32 %v7532, 4294901760
    %v7643 = vsub.f32 %v7532, %v7642
    %v7644 = vand.u32 %v7643, 4294901760
    %v7645 = vsub.f32 %v7643, %v7644
    %v7646 = vand.u32 %v7645, 4294901760
    %7647 = vmatpush1.msra.mxu0 %v7646
    %v7648 = vand.u32 %v7537, 4294901760
    %v7649 = vsub.f32 %v7537, %v7648
    %v7650 = vand.u32 %v7649, 4294901760
    %v7651 = vsub.f32 %v7649, %v7650
    %v7652 = vand.u32 %v7651, 4294901760
    %7653 = vmatprep.subr.mxu0 %v7652
    %v7654 = vand.u32 %v7536, 4294901760
    %v7655 = vsub.f32 %v7536, %v7654
    %v7656 = vand.u32 %v7655, 4294901760
    %v7657 = vsub.f32 %v7655, %v7656
    %v7658 = vand.u32 %v7657, 4294901760
    %7659 = vmatpush1.msra.mxu0 %v7658
    %v7660 = vand.u32 %v7541, 4294901760
    %v7661 = vsub.f32 %v7541, %v7660
    %v7662 = vand.u32 %v7661, 4294901760
    %v7663 = vsub.f32 %v7661, %v7662
    %v7664 = vand.u32 %v7663, 4294901760
    %7665 = vmatprep.subr.mxu0 %v7664
    %v7666 = vand.u32 %v7540, 4294901760
    %v7667 = vsub.f32 %v7540, %v7666
    %v7668 = vand.u32 %v7667, 4294901760
    %v7669 = vsub.f32 %v7667, %v7668
    %v7670 = vand.u32 %v7669, 4294901760
    %7671 = vmatpush1.msra.mxu0 %v7670
    %v7672 = vand.u32 %v7545, 4294901760
    %v7673 = vsub.f32 %v7545, %v7672
    %v7674 = vand.u32 %v7673, 4294901760
    %v7675 = vsub.f32 %v7673, %v7674
    %v7676 = vand.u32 %v7675, 4294901760
    %7677 = vmatprep.subr.mxu0 %v7676
    %v7678 = vand.u32 %v7544, 4294901760
    %v7679 = vsub.f32 %v7544, %v7678
    %v7680 = vand.u32 %v7679, 4294901760
    %v7681 = vsub.f32 %v7679, %v7680
    %v7682 = vand.u32 %v7681, 4294901760
    %7683 = vmatpush1.msra.mxu0 %v7682
    %7684 = vmatprep.subr.mxu0 0.0
    %7685 = vmatpush1.msra.mxu0 0.0
    %7686 = vmatprep.subr.mxu0 0.0
    %7687 = vmatpush1.msra.mxu0 0.0
    %7688 = vmatprep.subr.mxu0 0.0
    %7689 = vmatpush1.msra.mxu0 0.0
    %7690 = vmatprep.subr.mxu0 0.0
    %7691 = vmatpush1.msra.mxu0 0.0
    %7692 = vmatprep.subr.mxu0 0.0
    %7693 = vmatpush1.msra.mxu0 0.0
    %7694 = vmatprep.subr.mxu0 0.0
    %7695 = vmatpush1.msra.mxu0 0.0
    %7696 = vmatprep.subr.mxu0 0.0
    %7697 = vmatpush1.msra.mxu0 0.0
    %7698 = vmatprep.subr.mxu0 0.0
    %7699 = vmatpush1.msra.mxu0 0.0
    %7700 = vmatprep.subr.mxu0 0.0
    %7701 = vmatpush1.msra.mxu0 0.0
    %7702 = vmatprep.subr.mxu0 0.0
    %7703 = vmatpush1.msra.mxu0 0.0
    %7704 = vmatprep.subr.mxu0 0.0
    %7705 = vmatpush1.msra.mxu0 0.0
    %7706 = vmatprep.subr.mxu0 0.0
    %7707 = vmatpush1.msra.mxu0 0.0
    %7708 = vmatprep.subr.mxu0 0.0
    %7709 = vmatpush1.msra.mxu0 0.0
    %7710 = vmatprep.subr.mxu0 0.0
    %7711 = vmatpush1.msra.mxu0 0.0
    %7712 = vmatprep.subr.mxu0 0.0
    %7713 = vmatpush1.msra.mxu0 0.0
    %7714 = vmatprep.subr.mxu0 0.0
    %7715 = vmatpush1.msra.mxu0 0.0
    %7716 = vmatprep.subr.mxu0 0.0
    %7717 = vmatpush1.msra.mxu0 0.0
    %7718 = vmatprep.subr.mxu0 0.0
    %7719 = vmatpush1.msra.mxu0 0.0
    %7720 = vmatprep.subr.mxu0 0.0
    %7721 = vmatpush1.msra.mxu0 0.0
    %7722 = vmatprep.subr.mxu0 0.0
    %7723 = vmatpush1.msra.mxu0 0.0
    %7724 = vmatprep.subr.mxu0 0.0
    %7725 = vmatpush1.msra.mxu0 0.0
    %7726 = vmatprep.subr.mxu0 0.0
    %7727 = vmatpush1.msra.mxu0 0.0
    %7728 = vmatprep.subr.mxu0 0.0
    %7729 = vmatpush1.msra.mxu0 0.0
    %7730 = vmatprep.subr.mxu0 0.0
    %7731 = vmatpush1.msra.mxu0 0.0
    %7732 = vmatprep.subr.mxu0 0.0
    %7733 = vmatpush1.msra.mxu0 0.0
    %7734 = vmatprep.subr.mxu0 0.0
    %7735 = vmatpush1.msra.mxu0 0.0
    %7736 = vmatprep.subr.mxu0 0.0
    %7737 = vmatpush1.msra.mxu0 0.0
    %7738 = vmatprep.subr.mxu0 0.0
    %7739 = vmatpush1.msra.mxu0 0.0
    %7740 = vmatprep.mubr.f32.mxu0 0.0
    %v7741 = vand.u32 %v7550, 4294901760
    %7742 = vmatmul.mubr.f32.gmra.mrb[0].mxu0 %v7741
    %v7743 = vpop.f32.mrb[0].mxu0
    %v7744 = vadd.f32 %v7632, %v7743
    %v7745 = vpop.f32.mrb[0].mxu0
    %v7746 = vadd.f32 %v7634, %v7745
    %7747 = vdwg.mxu0
    %v7748 = vand.u32 %v7533, 4294901760
    %v7749 = vsub.f32 %v7533, %v7748
    %7750 = vmatprep.subr.mxu0 %v7749
    %v7751 = vand.u32 %v7532, 4294901760
    %v7752 = vsub.f32 %v7532, %v7751
    %7753 = vmatpush1.msra.mxu0 %v7752
    %v7754 = vand.u32 %v7537, 4294901760
    %v7755 = vsub.f32 %v7537, %v7754
    %7756 = vmatprep.subr.mxu0 %v7755
    %v7757 = vand.u32 %v7536, 4294901760
    %v7758 = vsub.f32 %v7536, %v7757
    %7759 = vmatpush1.msra.mxu0 %v7758
    %v7760 = vand.u32 %v7541, 4294901760
    %v7761 = vsub.f32 %v7541, %v7760
    %7762 = vmatprep.subr.mxu0 %v7761
    %v7763 = vand.u32 %v7540, 4294901760
    %v7764 = vsub.f32 %v7540, %v7763
    %7765 = vmatpush1.msra.mxu0 %v7764
    %v7766 = vand.u32 %v7545, 4294901760
    %v7767 = vsub.f32 %v7545, %v7766
    %7768 = vmatprep.subr.mxu0 %v7767
    %v7769 = vand.u32 %v7544, 4294901760
    %v7770 = vsub.f32 %v7544, %v7769
    %7771 = vmatpush1.msra.mxu0 %v7770
    %7772 = vmatprep.subr.mxu0 0.0
    %7773 = vmatpush1.msra.mxu0 0.0
    %7774 = vmatprep.subr.mxu0 0.0
    %7775 = vmatpush1.msra.mxu0 0.0
    %7776 = vmatprep.subr.mxu0 0.0
    %7777 = vmatpush1.msra.mxu0 0.0
    %7778 = vmatprep.subr.mxu0 0.0
    %7779 = vmatpush1.msra.mxu0 0.0
    %7780 = vmatprep.subr.mxu0 0.0
    %7781 = vmatpush1.msra.mxu0 0.0
    %7782 = vmatprep.subr.mxu0 0.0
    %7783 = vmatpush1.msra.mxu0 0.0
    %7784 = vmatprep.subr.mxu0 0.0
    %7785 = vmatpush1.msra.mxu0 0.0
    %7786 = vmatprep.subr.mxu0 0.0
    %7787 = vmatpush1.msra.mxu0 0.0
    %7788 = vmatprep.subr.mxu0 0.0
    %7789 = vmatpush1.msra.mxu0 0.0
    %7790 = vmatprep.subr.mxu0 0.0
    %7791 = vmatpush1.msra.mxu0 0.0
    %7792 = vmatprep.subr.mxu0 0.0
    %7793 = vmatpush1.msra.mxu0 0.0
    %7794 = vmatprep.subr.mxu0 0.0
    %7795 = vmatpush1.msra.mxu0 0.0
    %7796 = vmatprep.subr.mxu0 0.0
    %7797 = vmatpush1.msra.mxu0 0.0
    %7798 = vmatprep.subr.mxu0 0.0
    %7799 = vmatpush1.msra.mxu0 0.0
    %7800 = vmatprep.subr.mxu0 0.0
    %7801 = vmatpush1.msra.mxu0 0.0
    %7802 = vmatprep.subr.mxu0 0.0
    %7803 = vmatpush1.msra.mxu0 0.0
    %7804 = vmatprep.subr.mxu0 0.0
    %7805 = vmatpush1.msra.mxu0 0.0
    %7806 = vmatprep.subr.mxu0 0.0
    %7807 = vmatpush1.msra.mxu0 0.0
    %7808 = vmatprep.subr.mxu0 0.0
    %7809 = vmatpush1.msra.mxu0 0.0
    %7810 = vmatprep.subr.mxu0 0.0
    %7811 = vmatpush1.msra.mxu0 0.0
    %7812 = vmatprep.subr.mxu0 0.0
    %7813 = vmatpush1.msra.mxu0 0.0
    %7814 = vmatprep.subr.mxu0 0.0
    %7815 = vmatpush1.msra.mxu0 0.0
    %7816 = vmatprep.subr.mxu0 0.0
    %7817 = vmatpush1.msra.mxu0 0.0
    %7818 = vmatprep.subr.mxu0 0.0
    %7819 = vmatpush1.msra.mxu0 0.0
    %7820 = vmatprep.subr.mxu0 0.0
    %7821 = vmatpush1.msra.mxu0 0.0
    %7822 = vmatprep.subr.mxu0 0.0
    %7823 = vmatpush1.msra.mxu0 0.0
    %7824 = vmatprep.subr.mxu0 0.0
    %7825 = vmatpush1.msra.mxu0 0.0
    %7826 = vmatprep.subr.mxu0 0.0
    %7827 = vmatpush1.msra.mxu0 0.0
    %7828 = vmatprep.mubr.f32.mxu0 0.0
    %v7829 = vand.u32 %v7550, 4294901760
    %v7830 = vsub.f32 %v7550, %v7829
    %7831 = vmatmul.mubr.f32.gmra.mrb[0].mxu0 %v7830
    %v7832 = vpop.f32.mrb[0].mxu0
    %v7833 = vadd.f32 %v7744, %v7832
    %v7834 = vpop.f32.mrb[0].mxu0
    %v7835 = vadd.f32 %v7746, %v7834
    %7836 = vdwg.mxu0
    %v7837 = vand.u32 %v7533, 4294901760
    %7838 = vmatprep.subr.mxu0 %v7837
    %v7839 = vand.u32 %v7532, 4294901760
    %7840 = vmatpush1.msra.mxu0 %v7839
    %v7841 = vand.u32 %v7537, 4294901760
    %7842 = vmatprep.subr.mxu0 %v7841
    %v7843 = vand.u32 %v7536, 4294901760
    %7844 = vmatpush1.msra.mxu0 %v7843
    %v7845 = vand.u32 %v7541, 4294901760
    %7846 = vmatprep.subr.mxu0 %v7845
    %v7847 = vand.u32 %v7540, 4294901760
    %7848 = vmatpush1.msra.mxu0 %v7847
    %v7849 = vand.u32 %v7545, 4294901760
    %7850 = vmatprep.subr.mxu0 %v7849
    %v7851 = vand.u32 %v7544, 4294901760
    %7852 = vmatpush1.msra.mxu0 %v7851
    %7853 = vmatprep.subr.mxu0 0.0
    %7854 = vmatpush1.msra.mxu0 0.0
    %7855 = vmatprep.subr.mxu0 0.0
    %7856 = vmatpush1.msra.mxu0 0.0
    %7857 = vmatprep.subr.mxu0 0.0
    %7858 = vmatpush1.msra.mxu0 0.0
    %7859 = vmatprep.subr.mxu0 0.0
    %7860 = vmatpush1.msra.mxu0 0.0
    %7861 = vmatprep.subr.mxu0 0.0
    %7862 = vmatpush1.msra.mxu0 0.0
    %7863 = vmatprep.subr.mxu0 0.0
    %7864 = vmatpush1.msra.mxu0 0.0
    %7865 = vmatprep.subr.mxu0 0.0
    %7866 = vmatpush1.msra.mxu0 0.0
    %7867 = vmatprep.subr.mxu0 0.0
    %7868 = vmatpush1.msra.mxu0 0.0
    %7869 = vmatprep.subr.mxu0 0.0
    %7870 = vmatpush1.msra.mxu0 0.0
    %7871 = vmatprep.subr.mxu0 0.0
    %7872 = vmatpush1.msra.mxu0 0.0
    %7873 = vmatprep.subr.mxu0 0.0
    %7874 = vmatpush1.msra.mxu0 0.0
    %7875 = vmatprep.subr.mxu0 0.0
    %7876 = vmatpush1.msra.mxu0 0.0
    %7877 = vmatprep.subr.mxu0 0.0
    %7878 = vmatpush1.msra.mxu0 0.0
    %7879 = vmatprep.subr.mxu0 0.0
    %7880 = vmatpush1.msra.mxu0 0.0
    %7881 = vmatprep.subr.mxu0 0.0
    %7882 = vmatpush1.msra.mxu0 0.0
    %7883 = vmatprep.subr.mxu0 0.0
    %7884 = vmatpush1.msra.mxu0 0.0
    %7885 = vmatprep.subr.mxu0 0.0
    %7886 = vmatpush1.msra.mxu0 0.0
    %7887 = vmatprep.subr.mxu0 0.0
    %7888 = vmatpush1.msra.mxu0 0.0
    %7889 = vmatprep.subr.mxu0 0.0
    %7890 = vmatpush1.msra.mxu0 0.0
    %7891 = vmatprep.subr.mxu0 0.0
    %7892 = vmatpush1.msra.mxu0 0.0
    %7893 = vmatprep.subr.mxu0 0.0
    %7894 = vmatpush1.msra.mxu0 0.0
    %7895 = vmatprep.subr.mxu0 0.0
    %7896 = vmatpush1.msra.mxu0 0.0
    %7897 = vmatprep.subr.mxu0 0.0
    %7898 = vmatpush1.msra.mxu0 0.0
    %7899 = vmatprep.subr.mxu0 0.0
    %7900 = vmatpush1.msra.mxu0 0.0
    %7901 = vmatprep.subr.mxu0 0.0
    %7902 = vmatpush1.msra.mxu0 0.0
    %7903 = vmatprep.subr.mxu0 0.0
    %7904 = vmatpush1.msra.mxu0 0.0
    %7905 = vmatprep.subr.mxu0 0.0
    %7906 = vmatpush1.msra.mxu0 0.0
    %7907 = vmatprep.subr.mxu0 0.0
    %7908 = vmatpush1.msra.mxu0 0.0
    %7909 = vmatprep.mubr.f32.mxu0 0.0
    %v7910 = vand.u32 %v7550, 4294901760
    %v7911 = vsub.f32 %v7550, %v7910
    %v7912 = vand.u32 %v7911, 4294901760
    %7913 = vmatmul.mubr.f32.gmra.mrb[0].mxu0 %v7912
    %v7914 = vpop.f32.mrb[0].mxu0
    %v7915 = vadd.f32 %v7833, %v7914
    %v7916 = vpop.f32.mrb[0].mxu0
    %v7917 = vadd.f32 %v7835, %v7916
    %7918 = vdwg.mxu0
    %v7919 = vand.u32 %v7533, 4294901760
    %v7920 = vsub.f32 %v7533, %v7919
    %v7921 = vand.u32 %v7920, 4294901760
    %7922 = vmatprep.subr.mxu0 %v7921
    %v7923 = vand.u32 %v7532, 4294901760
    %v7924 = vsub.f32 %v7532, %v7923
    %v7925 = vand.u32 %v7924, 4294901760
    %7926 = vmatpush1.msra.mxu0 %v7925
    %v7927 = vand.u32 %v7537, 4294901760
    %v7928 = vsub.f32 %v7537, %v7927
    %v7929 = vand.u32 %v7928, 4294901760
    %7930 = vmatprep.subr.mxu0 %v7929
    %v7931 = vand.u32 %v7536, 4294901760
    %v7932 = vsub.f32 %v7536, %v7931
    %v7933 = vand.u32 %v7932, 4294901760
    %7934 = vmatpush1.msra.mxu0 %v7933
    %v7935 = vand.u32 %v7541, 4294901760
    %v7936 = vsub.f32 %v7541, %v7935
    %v7937 = vand.u32 %v7936, 4294901760
    %7938 = vmatprep.subr.mxu0 %v7937
    %v7939 = vand.u32 %v7540, 4294901760
    %v7940 = vsub.f32 %v7540, %v7939
    %v7941 = vand.u32 %v7940, 4294901760
    %7942 = vmatpush1.msra.mxu0 %v7941
    %v7943 = vand.u32 %v7545, 4294901760
    %v7944 = vsub.f32 %v7545, %v7943
    %v7945 = vand.u32 %v7944, 4294901760
    %7946 = vmatprep.subr.mxu0 %v7945
    %v7947 = vand.u32 %v7544, 4294901760
    %v7948 = vsub.f32 %v7544, %v7947
    %v7949 = vand.u32 %v7948, 4294901760
    %7950 = vmatpush1.msra.mxu0 %v7949
    %7951 = vmatprep.subr.mxu0 0.0
    %7952 = vmatpush1.msra.mxu0 0.0
    %7953 = vmatprep.subr.mxu0 0.0
    %7954 = vmatpush1.msra.mxu0 0.0
    %7955 = vmatprep.subr.mxu0 0.0
    %7956 = vmatpush1.msra.mxu0 0.0
    %7957 = vmatprep.subr.mxu0 0.0
    %7958 = vmatpush1.msra.mxu0 0.0
    %7959 = vmatprep.subr.mxu0 0.0
    %7960 = vmatpush1.msra.mxu0 0.0
    %7961 = vmatprep.subr.mxu0 0.0
    %7962 = vmatpush1.msra.mxu0 0.0
    %7963 = vmatprep.subr.mxu0 0.0
    %7964 = vmatpush1.msra.mxu0 0.0
    %7965 = vmatprep.subr.mxu0 0.0
    %7966 = vmatpush1.msra.mxu0 0.0
    %7967 = vmatprep.subr.mxu0 0.0
    %7968 = vmatpush1.msra.mxu0 0.0
    %7969 = vmatprep.subr.mxu0 0.0
    %7970 = vmatpush1.msra.mxu0 0.0
    %7971 = vmatprep.subr.mxu0 0.0
    %7972 = vmatpush1.msra.mxu0 0.0
    %7973 = vmatprep.subr.mxu0 0.0
    %7974 = vmatpush1.msra.mxu0 0.0
    %7975 = vmatprep.subr.mxu0 0.0
    %7976 = vmatpush1.msra.mxu0 0.0
    %7977 = vmatprep.subr.mxu0 0.0
    %7978 = vmatpush1.msra.mxu0 0.0
    %7979 = vmatprep.subr.mxu0 0.0
    %7980 = vmatpush1.msra.mxu0 0.0
    %7981 = vmatprep.subr.mxu0 0.0
    %7982 = vmatpush1.msra.mxu0 0.0
    %7983 = vmatprep.subr.mxu0 0.0
    %7984 = vmatpush1.msra.mxu0 0.0
    %7985 = vmatprep.subr.mxu0 0.0
    %7986 = vmatpush1.msra.mxu0 0.0
    %7987 = vmatprep.subr.mxu0 0.0
    %7988 = vmatpush1.msra.mxu0 0.0
    %7989 = vmatprep.subr.mxu0 0.0
    %7990 = vmatpush1.msra.mxu0 0.0
    %7991 = vmatprep.subr.mxu0 0.0
    %7992 = vmatpush1.msra.mxu0 0.0
    %7993 = vmatprep.subr.mxu0 0.0
    %7994 = vmatpush1.msra.mxu0 0.0
    %7995 = vmatprep.subr.mxu0 0.0
    %7996 = vmatpush1.msra.mxu0 0.0
    %7997 = vmatprep.subr.mxu0 0.0
    %7998 = vmatpush1.msra.mxu0 0.0
    %7999 = vmatprep.subr.mxu0 0.0
    %8000 = vmatpush1.msra.mxu0 0.0
    %8001 = vmatprep.subr.mxu0 0.0
    %8002 = vmatpush1.msra.mxu0 0.0
    %8003 = vmatprep.subr.mxu0 0.0
    %8004 = vmatpush1.msra.mxu0 0.0
    %8005 = vmatprep.subr.mxu0 0.0
    %8006 = vmatpush1.msra.mxu0 0.0
    %8007 = vmatprep.mubr.f32.mxu0 0.0
    %v8008 = vand.u32 %v7550, 4294901760
    %8009 = vmatmul.mubr.f32.gmra.mrb[0].mxu0 %v8008
    %v8010 = vpop.f32.mrb[0].mxu0
    %v8011 = vadd.f32 %v7915, %v8010
    %v8012 = vpop.f32.mrb[0].mxu0
    %v8013 = vadd.f32 %v7917, %v8012
    %8014 = vdwg.mxu0
    %v8015 = vand.u32 %v7533, 4294901760
    %8016 = vmatprep.subr.mxu0 %v8015
    %v8017 = vand.u32 %v7532, 4294901760
    %8018 = vmatpush1.msra.mxu0 %v8017
    %v8019 = vand.u32 %v7537, 4294901760
    %8020 = vmatprep.subr.mxu0 %v8019
    %v8021 = vand.u32 %v7536, 4294901760
    %8022 = vmatpush1.msra.mxu0 %v8021
    %v8023 = vand.u32 %v7541, 4294901760
    %8024 = vmatprep.subr.mxu0 %v8023
    %v8025 = vand.u32 %v7540, 4294901760
    %8026 = vmatpush1.msra.mxu0 %v8025
    %v8027 = vand.u32 %v7545, 4294901760
    %8028 = vmatprep.subr.mxu0 %v8027
    %v8029 = vand.u32 %v7544, 4294901760
    %8030 = vmatpush1.msra.mxu0 %v8029
    %8031 = vmatprep.subr.mxu0 0.0
    %8032 = vmatpush1.msra.mxu0 0.0
    %8033 = vmatprep.subr.mxu0 0.0
    %8034 = vmatpush1.msra.mxu0 0.0
    %8035 = vmatprep.subr.mxu0 0.0
    %8036 = vmatpush1.msra.mxu0 0.0
    %8037 = vmatprep.subr.mxu0 0.0
    %8038 = vmatpush1.msra.mxu0 0.0
    %8039 = vmatprep.subr.mxu0 0.0
    %8040 = vmatpush1.msra.mxu0 0.0
    %8041 = vmatprep.subr.mxu0 0.0
    %8042 = vmatpush1.msra.mxu0 0.0
    %8043 = vmatprep.subr.mxu0 0.0
    %8044 = vmatpush1.msra.mxu0 0.0
    %8045 = vmatprep.subr.mxu0 0.0
    %8046 = vmatpush1.msra.mxu0 0.0
    %8047 = vmatprep.subr.mxu0 0.0
    %8048 = vmatpush1.msra.mxu0 0.0
    %8049 = vmatprep.subr.mxu0 0.0
    %8050 = vmatpush1.msra.mxu0 0.0
    %8051 = vmatprep.subr.mxu0 0.0
    %8052 = vmatpush1.msra.mxu0 0.0
    %8053 = vmatprep.subr.mxu0 0.0
    %8054 = vmatpush1.msra.mxu0 0.0
    %8055 = vmatprep.subr.mxu0 0.0
    %8056 = vmatpush1.msra.mxu0 0.0
    %8057 = vmatprep.subr.mxu0 0.0
    %8058 = vmatpush1.msra.mxu0 0.0
    %8059 = vmatprep.subr.mxu0 0.0
    %8060 = vmatpush1.msra.mxu0 0.0
    %8061 = vmatprep.subr.mxu0 0.0
    %8062 = vmatpush1.msra.mxu0 0.0
    %8063 = vmatprep.subr.mxu0 0.0
    %8064 = vmatpush1.msra.mxu0 0.0
    %8065 = vmatprep.subr.mxu0 0.0
    %8066 = vmatpush1.msra.mxu0 0.0
    %8067 = vmatprep.subr.mxu0 0.0
    %8068 = vmatpush1.msra.mxu0 0.0
    %8069 = vmatprep.subr.mxu0 0.0
    %8070 = vmatpush1.msra.mxu0 0.0
    %8071 = vmatprep.subr.mxu0 0.0
    %8072 = vmatpush1.msra.mxu0 0.0
    %8073 = vmatprep.subr.mxu0 0.0
    %8074 = vmatpush1.msra.mxu0 0.0
    %8075 = vmatprep.subr.mxu0 0.0
    %8076 = vmatpush1.msra.mxu0 0.0
    %8077 = vmatprep.subr.mxu0 0.0
    %8078 = vmatpush1.msra.mxu0 0.0
    %8079 = vmatprep.subr.mxu0 0.0
    %8080 = vmatpush1.msra.mxu0 0.0
    %8081 = vmatprep.subr.mxu0 0.0
    %8082 = vmatpush1.msra.mxu0 0.0
    %8083 = vmatprep.subr.mxu0 0.0
    %8084 = vmatpush1.msra.mxu0 0.0
    %8085 = vmatprep.subr.mxu0 0.0
    %8086 = vmatpush1.msra.mxu0 0.0
    %8087 = vmatprep.mubr.f32.mxu0 0.0
    %v8088 = vand.u32 %v7550, 4294901760
    %8089 = vmatmul.mubr.f32.gmra.mrb[0].mxu0 %v8088
    %v8090 = vpop.f32.mrb[0].mxu0
    %v8091 = vadd.f32 %v8011, %v8090
    %v8092 = vpop.f32.mrb[0].mxu0
    %v8093 = vadd.f32 %v8013, %v8092
    %8094 = vdwg.mxu0
    %v8095 = vand.u32 %v7535, 4294901760
    %8096 = vmatprep.subr.mxu0 %v8095
    %v8097 = vand.u32 %v7534, 4294901760
    %8098 = vmatpush1.msra.mxu0 %v8097
    %v8099 = vand.u32 %v7539, 4294901760
    %8100 = vmatprep.subr.mxu0 %v8099
    %v8101 = vand.u32 %v7538, 4294901760
    %8102 = vmatpush1.msra.mxu0 %v8101
    %v8103 = vand.u32 %v7543, 4294901760
    %8104 = vmatprep.subr.mxu0 %v8103
    %v8105 = vand.u32 %v7542, 4294901760
    %8106 = vmatpush1.msra.mxu0 %v8105
    %v8107 = vand.u32 %v7547, 4294901760
    %8108 = vmatprep.subr.mxu0 %v8107
    %v8109 = vand.u32 %v7546, 4294901760
    %8110 = vmatpush1.msra.mxu0 %v8109
    %8111 = vmatprep.subr.mxu0 0.0
    %8112 = vmatpush1.msra.mxu0 0.0
    %8113 = vmatprep.subr.mxu0 0.0
    %8114 = vmatpush1.msra.mxu0 0.0
    %8115 = vmatprep.subr.mxu0 0.0
    %8116 = vmatpush1.msra.mxu0 0.0
    %8117 = vmatprep.subr.mxu0 0.0
    %8118 = vmatpush1.msra.mxu0 0.0
    %8119 = vmatprep.subr.mxu0 0.0
    %8120 = vmatpush1.msra.mxu0 0.0
    %8121 = vmatprep.subr.mxu0 0.0
    %8122 = vmatpush1.msra.mxu0 0.0
    %8123 = vmatprep.subr.mxu0 0.0
    %8124 = vmatpush1.msra.mxu0 0.0
    %8125 = vmatprep.subr.mxu0 0.0
    %8126 = vmatpush1.msra.mxu0 0.0
    %8127 = vmatprep.subr.mxu0 0.0
    %8128 = vmatpush1.msra.mxu0 0.0
    %8129 = vmatprep.subr.mxu0 0.0
    %8130 = vmatpush1.msra.mxu0 0.0
    %8131 = vmatprep.subr.mxu0 0.0
    %8132 = vmatpush1.msra.mxu0 0.0
    %8133 = vmatprep.subr.mxu0 0.0
    %8134 = vmatpush1.msra.mxu0 0.0
    %8135 = vmatprep.subr.mxu0 0.0
    %8136 = vmatpush1.msra.mxu0 0.0
    %8137 = vmatprep.subr.mxu0 0.0
    %8138 = vmatpush1.msra.mxu0 0.0
    %8139 = vmatprep.subr.mxu0 0.0
    %8140 = vmatpush1.msra.mxu0 0.0
    %8141 = vmatprep.subr.mxu0 0.0
    %8142 = vmatpush1.msra.mxu0 0.0
    %8143 = vmatprep.subr.mxu0 0.0
    %8144 = vmatpush1.msra.mxu0 0.0
    %8145 = vmatprep.subr.mxu0 0.0
    %8146 = vmatpush1.msra.mxu0 0.0
    %8147 = vmatprep.subr.mxu0 0.0
    %8148 = vmatpush1.msra.mxu0 0.0
    %8149 = vmatprep.subr.mxu0 0.0
    %8150 = vmatpush1.msra.mxu0 0.0
    %8151 = vmatprep.subr.mxu0 0.0
    %8152 = vmatpush1.msra.mxu0 0.0
    %8153 = vmatprep.subr.mxu0 0.0
    %8154 = vmatpush1.msra.mxu0 0.0
    %8155 = vmatprep.subr.mxu0 0.0
    %8156 = vmatpush1.msra.mxu0 0.0
    %8157 = vmatprep.subr.mxu0 0.0
    %8158 = vmatpush1.msra.mxu0 0.0
    %8159 = vmatprep.subr.mxu0 0.0
    %8160 = vmatpush1.msra.mxu0 0.0
    %8161 = vmatprep.subr.mxu0 0.0
    %8162 = vmatpush1.msra.mxu0 0.0
    %8163 = vmatprep.subr.mxu0 0.0
    %8164 = vmatpush1.msra.mxu0 0.0
    %8165 = vmatprep.subr.mxu0 0.0
    %8166 = vmatpush1.msra.mxu0 0.0
    %8167 = vmatprep.mubr.f32.mxu0 0.0
    %v8168 = vand.u32 %v7550, 4294901760
    %v8169 = vsub.f32 %v7550, %v8168
    %v8170 = vand.u32 %v8169, 4294901760
    %v8171 = vsub.f32 %v8169, %v8170
    %v8172 = vand.u32 %v8171, 4294901760
    %8173 = vmatmul.mubr.f32.gmra.mrb[0].mxu0 %v8172
    %v8174 = vpop.f32.mrb[0].mxu0
    %v8175 = vadd.f32 0.0, %v8174
    %v8176 = vpop.f32.mrb[0].mxu0
    %v8177 = vadd.f32 0.0, %v8176
    %8178 = vdwg.mxu0
    %v8179 = vand.u32 %v7535, 4294901760
    %v8180 = vsub.f32 %v7535, %v8179
    %v8181 = vand.u32 %v8180, 4294901760
    %v8182 = vsub.f32 %v8180, %v8181
    %v8183 = vand.u32 %v8182, 4294901760
    %8184 = vmatprep.subr.mxu0 %v8183
    %v8185 = vand.u32 %v7534, 4294901760
    %v8186 = vsub.f32 %v7534, %v8185
    %v8187 = vand.u32 %v8186, 4294901760
    %v8188 = vsub.f32 %v8186, %v8187
    %v8189 = vand.u32 %v8188, 4294901760
    %8190 = vmatpush1.msra.mxu0 %v8189
    %v8191 = vand.u32 %v7539, 4294901760
    %v8192 = vsub.f32 %v7539, %v8191
    %v8193 = vand.u32 %v8192, 4294901760
    %v8194 = vsub.f32 %v8192, %v8193
    %v8195 = vand.u32 %v8194, 4294901760
    %8196 = vmatprep.subr.mxu0 %v8195
    %v8197 = vand.u32 %v7538, 4294901760
    %v8198 = vsub.f32 %v7538, %v8197
    %v8199 = vand.u32 %v8198, 4294901760
    %v8200 = vsub.f32 %v8198, %v8199
    %v8201 = vand.u32 %v8200, 4294901760
    %8202 = vmatpush1.msra.mxu0 %v8201
    %v8203 = vand.u32 %v7543, 4294901760
    %v8204 = vsub.f32 %v7543, %v8203
    %v8205 = vand.u32 %v8204, 4294901760
    %v8206 = vsub.f32 %v8204, %v8205
    %v8207 = vand.u32 %v8206, 4294901760
    %8208 = vmatprep.subr.mxu0 %v8207
    %v8209 = vand.u32 %v7542, 4294901760
    %v8210 = vsub.f32 %v7542, %v8209
    %v8211 = vand.u32 %v8210, 4294901760
    %v8212 = vsub.f32 %v8210, %v8211
    %v8213 = vand.u32 %v8212, 4294901760
    %8214 = vmatpush1.msra.mxu0 %v8213
    %v8215 = vand.u32 %v7547, 4294901760
    %v8216 = vsub.f32 %v7547, %v8215
    %v8217 = vand.u32 %v8216, 4294901760
    %v8218 = vsub.f32 %v8216, %v8217
    %v8219 = vand.u32 %v8218, 4294901760
    %8220 = vmatprep.subr.mxu0 %v8219
    %v8221 = vand.u32 %v7546, 4294901760
    %v8222 = vsub.f32 %v7546, %v8221
    %v8223 = vand.u32 %v8222, 4294901760
    %v8224 = vsub.f32 %v8222, %v8223
    %v8225 = vand.u32 %v8224, 4294901760
    %8226 = vmatpush1.msra.mxu0 %v8225
    %8227 = vmatprep.subr.mxu0 0.0
    %8228 = vmatpush1.msra.mxu0 0.0
    %8229 = vmatprep.subr.mxu0 0.0
    %8230 = vmatpush1.msra.mxu0 0.0
    %8231 = vmatprep.subr.mxu0 0.0
    %8232 = vmatpush1.msra.mxu0 0.0
    %8233 = vmatprep.subr.mxu0 0.0
    %8234 = vmatpush1.msra.mxu0 0.0
    %8235 = vmatprep.subr.mxu0 0.0
    %8236 = vmatpush1.msra.mxu0 0.0
    %8237 = vmatprep.subr.mxu0 0.0
    %8238 = vmatpush1.msra.mxu0 0.0
    %8239 = vmatprep.subr.mxu0 0.0
    %8240 = vmatpush1.msra.mxu0 0.0
    %8241 = vmatprep.subr.mxu0 0.0
    %8242 = vmatpush1.msra.mxu0 0.0
    %8243 = vmatprep.subr.mxu0 0.0
    %8244 = vmatpush1.msra.mxu0 0.0
    %8245 = vmatprep.subr.mxu0 0.0
    %8246 = vmatpush1.msra.mxu0 0.0
    %8247 = vmatprep.subr.mxu0 0.0
    %8248 = vmatpush1.msra.mxu0 0.0
    %8249 = vmatprep.subr.mxu0 0.0
    %8250 = vmatpush1.msra.mxu0 0.0
    %8251 = vmatprep.subr.mxu0 0.0
    %8252 = vmatpush1.msra.mxu0 0.0
    %8253 = vmatprep.subr.mxu0 0.0
    %8254 = vmatpush1.msra.mxu0 0.0
    %8255 = vmatprep.subr.mxu0 0.0
    %8256 = vmatpush1.msra.mxu0 0.0
    %8257 = vmatprep.subr.mxu0 0.0
    %8258 = vmatpush1.msra.mxu0 0.0
    %8259 = vmatprep.subr.mxu0 0.0
    %8260 = vmatpush1.msra.mxu0 0.0
    %8261 = vmatprep.subr.mxu0 0.0
    %8262 = vmatpush1.msra.mxu0 0.0
    %8263 = vmatprep.subr.mxu0 0.0
    %8264 = vmatpush1.msra.mxu0 0.0
    %8265 = vmatprep.subr.mxu0 0.0
    %8266 = vmatpush1.msra.mxu0 0.0
    %8267 = vmatprep.subr.mxu0 0.0
    %8268 = vmatpush1.msra.mxu0 0.0
    %8269 = vmatprep.subr.mxu0 0.0
    %8270 = vmatpush1.msra.mxu0 0.0
    %8271 = vmatprep.subr.mxu0 0.0
    %8272 = vmatpush1.msra.mxu0 0.0
    %8273 = vmatprep.subr.mxu0 0.0
    %8274 = vmatpush1.msra.mxu0 0.0
    %8275 = vmatprep.subr.mxu0 0.0
    %8276 = vmatpush1.msra.mxu0 0.0
    %8277 = vmatprep.subr.mxu0 0.0
    %8278 = vmatpush1.msra.mxu0 0.0
    %8279 = vmatprep.subr.mxu0 0.0
    %8280 = vmatpush1.msra.mxu0 0.0
    %8281 = vmatprep.subr.mxu0 0.0
    %8282 = vmatpush1.msra.mxu0 0.0
    %8283 = vmatprep.mubr.f32.mxu0 0.0
    %v8284 = vand.u32 %v7550, 4294901760
    %8285 = vmatmul.mubr.f32.gmra.mrb[0].mxu0 %v8284
    %v8286 = vpop.f32.mrb[0].mxu0
    %v8287 = vadd.f32 %v8175, %v8286
    %v8288 = vpop.f32.mrb[0].mxu0
    %v8289 = vadd.f32 %v8177, %v8288
    %8290 = vdwg.mxu0
    %v8291 = vand.u32 %v7535, 4294901760
    %v8292 = vsub.f32 %v7535, %v8291
    %8293 = vmatprep.subr.mxu0 %v8292
    %v8294 = vand.u32 %v7534, 4294901760
    %v8295 = vsub.f32 %v7534, %v8294
    %8296 = vmatpush1.msra.mxu0 %v8295
    %v8297 = vand.u32 %v7539, 4294901760
    %v8298 = vsub.f32 %v7539, %v8297
    %8299 = vmatprep.subr.mxu0 %v8298
    %v8300 = vand.u32 %v7538, 4294901760
    %v8301 = vsub.f32 %v7538, %v8300
    %8302 = vmatpush1.msra.mxu0 %v8301
    %v8303 = vand.u32 %v7543, 4294901760
    %v8304 = vsub.f32 %v7543, %v8303
    %8305 = vmatprep.subr.mxu0 %v8304
    %v8306 = vand.u32 %v7542, 4294901760
    %v8307 = vsub.f32 %v7542, %v8306
    %8308 = vmatpush1.msra.mxu0 %v8307
    %v8309 = vand.u32 %v7547, 4294901760
    %v8310 = vsub.f32 %v7547, %v8309
    %8311 = vmatprep.subr.mxu0 %v8310
    %v8312 = vand.u32 %v7546, 4294901760
    %v8313 = vsub.f32 %v7546, %v8312
    %8314 = vmatpush1.msra.mxu0 %v8313
    %8315 = vmatprep.subr.mxu0 0.0
    %8316 = vmatpush1.msra.mxu0 0.0
    %8317 = vmatprep.subr.mxu0 0.0
    %8318 = vmatpush1.msra.mxu0 0.0
    %8319 = vmatprep.subr.mxu0 0.0
    %8320 = vmatpush1.msra.mxu0 0.0
    %8321 = vmatprep.subr.mxu0 0.0
    %8322 = vmatpush1.msra.mxu0 0.0
    %8323 = vmatprep.subr.mxu0 0.0
    %8324 = vmatpush1.msra.mxu0 0.0
    %8325 = vmatprep.subr.mxu0 0.0
    %8326 = vmatpush1.msra.mxu0 0.0
    %8327 = vmatprep.subr.mxu0 0.0
    %8328 = vmatpush1.msra.mxu0 0.0
    %8329 = vmatprep.subr.mxu0 0.0
    %8330 = vmatpush1.msra.mxu0 0.0
    %8331 = vmatprep.subr.mxu0 0.0
    %8332 = vmatpush1.msra.mxu0 0.0
    %8333 = vmatprep.subr.mxu0 0.0
    %8334 = vmatpush1.msra.mxu0 0.0
    %8335 = vmatprep.subr.mxu0 0.0
    %8336 = vmatpush1.msra.mxu0 0.0
    %8337 = vmatprep.subr.mxu0 0.0
    %8338 = vmatpush1.msra.mxu0 0.0
    %8339 = vmatprep.subr.mxu0 0.0
    %8340 = vmatpush1.msra.mxu0 0.0
    %8341 = vmatprep.subr.mxu0 0.0
    %8342 = vmatpush1.msra.mxu0 0.0
    %8343 = vmatprep.subr.mxu0 0.0
    %8344 = vmatpush1.msra.mxu0 0.0
    %8345 = vmatprep.subr.mxu0 0.0
    %8346 = vmatpush1.msra.mxu0 0.0
    %8347 = vmatprep.subr.mxu0 0.0
    %8348 = vmatpush1.msra.mxu0 0.0
    %8349 = vmatprep.subr.mxu0 0.0
    %8350 = vmatpush1.msra.mxu0 0.0
    %8351 = vmatprep.subr.mxu0 0.0
    %8352 = vmatpush1.msra.mxu0 0.0
    %8353 = vmatprep.subr.mxu0 0.0
    %8354 = vmatpush1.msra.mxu0 0.0
    %8355 = vmatprep.subr.mxu0 0.0
    %8356 = vmatpush1.msra.mxu0 0.0
    %8357 = vmatprep.subr.mxu0 0.0
    %8358 = vmatpush1.msra.mxu0 0.0
    %8359 = vmatprep.subr.mxu0 0.0
    %8360 = vmatpush1.msra.mxu0 0.0
    %8361 = vmatprep.subr.mxu0 0.0
    %8362 = vmatpush1.msra.mxu0 0.0
    %8363 = vmatprep.subr.mxu0 0.0
    %8364 = vmatpush1.msra.mxu0 0.0
    %8365 = vmatprep.subr.mxu0 0.0
    %8366 = vmatpush1.msra.mxu0 0.0
    %8367 = vmatprep.subr.mxu0 0.0
    %8368 = vmatpush1.msra.mxu0 0.0
    %8369 = vmatprep.subr.mxu0 0.0
    %8370 = vmatpush1.msra.mxu0 0.0
    %8371 = vmatprep.mubr.f32.mxu0 0.0
    %v8372 = vand.u32 %v7550, 4294901760
    %v8373 = vsub.f32 %v7550, %v8372
    %8374 = vmatmul.mubr.f32.gmra.mrb[0].mxu0 %v8373
    %v8375 = vpop.f32.mrb[0].mxu0
    %v8376 = vadd.f32 %v8287, %v8375
    %v8377 = vpop.f32.mrb[0].mxu0
    %v8378 = vadd.f32 %v8289, %v8377
    %8379 = vdwg.mxu0
    %v8380 = vand.u32 %v7535, 4294901760
    %8381 = vmatprep.subr.mxu0 %v8380
    %v8382 = vand.u32 %v7534, 4294901760
    %8383 = vmatpush1.msra.mxu0 %v8382
    %v8384 = vand.u32 %v7539, 4294901760
    %8385 = vmatprep.subr.mxu0 %v8384
    %v8386 = vand.u32 %v7538, 4294901760
    %8387 = vmatpush1.msra.mxu0 %v8386
    %v8388 = vand.u32 %v7543, 4294901760
    %8389 = vmatprep.subr.mxu0 %v8388
    %v8390 = vand.u32 %v7542, 4294901760
    %8391 = vmatpush1.msra.mxu0 %v8390
    %v8392 = vand.u32 %v7547, 4294901760
    %8393 = vmatprep.subr.mxu0 %v8392
    %v8394 = vand.u32 %v7546, 4294901760
    %8395 = vmatpush1.msra.mxu0 %v8394
    %8396 = vmatprep.subr.mxu0 0.0
    %8397 = vmatpush1.msra.mxu0 0.0
    %8398 = vmatprep.subr.mxu0 0.0
    %8399 = vmatpush1.msra.mxu0 0.0
    %8400 = vmatprep.subr.mxu0 0.0
    %8401 = vmatpush1.msra.mxu0 0.0
    %8402 = vmatprep.subr.mxu0 0.0
    %8403 = vmatpush1.msra.mxu0 0.0
    %8404 = vmatprep.subr.mxu0 0.0
    %8405 = vmatpush1.msra.mxu0 0.0
    %8406 = vmatprep.subr.mxu0 0.0
    %8407 = vmatpush1.msra.mxu0 0.0
    %8408 = vmatprep.subr.mxu0 0.0
    %8409 = vmatpush1.msra.mxu0 0.0
    %8410 = vmatprep.subr.mxu0 0.0
    %8411 = vmatpush1.msra.mxu0 0.0
    %8412 = vmatprep.subr.mxu0 0.0
    %8413 = vmatpush1.msra.mxu0 0.0
    %8414 = vmatprep.subr.mxu0 0.0
    %8415 = vmatpush1.msra.mxu0 0.0
    %8416 = vmatprep.subr.mxu0 0.0
    %8417 = vmatpush1.msra.mxu0 0.0
    %8418 = vmatprep.subr.mxu0 0.0
    %8419 = vmatpush1.msra.mxu0 0.0
    %8420 = vmatprep.subr.mxu0 0.0
    %8421 = vmatpush1.msra.mxu0 0.0
    %8422 = vmatprep.subr.mxu0 0.0
    %8423 = vmatpush1.msra.mxu0 0.0
    %8424 = vmatprep.subr.mxu0 0.0
    %8425 = vmatpush1.msra.mxu0 0.0
    %8426 = vmatprep.subr.mxu0 0.0
    %8427 = vmatpush1.msra.mxu0 0.0
    %8428 = vmatprep.subr.mxu0 0.0
    %8429 = vmatpush1.msra.mxu0 0.0
    %8430 = vmatprep.subr.mxu0 0.0
    %8431 = vmatpush1.msra.mxu0 0.0
    %8432 = vmatprep.subr.mxu0 0.0
    %8433 = vmatpush1.msra.mxu0 0.0
    %8434 = vmatprep.subr.mxu0 0.0
    %8435 = vmatpush1.msra.mxu0 0.0
    %8436 = vmatprep.subr.mxu0 0.0
    %8437 = vmatpush1.msra.mxu0 0.0
    %8438 = vmatprep.subr.mxu0 0.0
    %8439 = vmatpush1.msra.mxu0 0.0
    %8440 = vmatprep.subr.mxu0 0.0
    %8441 = vmatpush1.msra.mxu0 0.0
    %8442 = vmatprep.subr.mxu0 0.0
    %8443 = vmatpush1.msra.mxu0 0.0
    %8444 = vmatprep.subr.mxu0 0.0
    %8445 = vmatpush1.msra.mxu0 0.0
    %8446 = vmatprep.subr.mxu0 0.0
    %8447 = vmatpush1.msra.mxu0 0.0
    %8448 = vmatprep.subr.mxu0 0.0
    %8449 = vmatpush1.msra.mxu0 0.0
    %8450 = vmatprep.subr.mxu0 0.0
    %8451 = vmatpush1.msra.mxu0 0.0
    %8452 = vmatprep.mubr.f32.mxu0 0.0
    %v8453 = vand.u32 %v7550, 4294901760
    %v8454 = vsub.f32 %v7550, %v8453
    %v8455 = vand.u32 %v8454, 4294901760
    %8456 = vmatmul.mubr.f32.gmra.mrb[0].mxu0 %v8455
    %v8457 = vpop.f32.mrb[0].mxu0
    %v8458 = vadd.f32 %v8376, %v8457
    %v8459 = vpop.f32.mrb[0].mxu0
    %v8460 = vadd.f32 %v8378, %v8459
    %8461 = vdwg.mxu0
    %v8462 = vand.u32 %v7535, 4294901760
    %v8463 = vsub.f32 %v7535, %v8462
    %v8464 = vand.u32 %v8463, 4294901760
    %8465 = vmatprep.subr.mxu0 %v8464
    %v8466 = vand.u32 %v7534, 4294901760
    %v8467 = vsub.f32 %v7534, %v8466
    %v8468 = vand.u32 %v8467, 4294901760
    %8469 = vmatpush1.msra.mxu0 %v8468
    %v8470 = vand.u32 %v7539, 4294901760
    %v8471 = vsub.f32 %v7539, %v8470
    %v8472 = vand.u32 %v8471, 4294901760
    %8473 = vmatprep.subr.mxu0 %v8472
    %v8474 = vand.u32 %v7538, 4294901760
    %v8475 = vsub.f32 %v7538, %v8474
    %v8476 = vand.u32 %v8475, 4294901760
    %8477 = vmatpush1.msra.mxu0 %v8476
    %v8478 = vand.u32 %v7543, 4294901760
    %v8479 = vsub.f32 %v7543, %v8478
    %v8480 = vand.u32 %v8479, 4294901760
    %8481 = vmatprep.subr.mxu0 %v8480
    %v8482 = vand.u32 %v7542, 4294901760
    %v8483 = vsub.f32 %v7542, %v8482
    %v8484 = vand.u32 %v8483, 4294901760
    %8485 = vmatpush1.msra.mxu0 %v8484
    %v8486 = vand.u32 %v7547, 4294901760
    %v8487 = vsub.f32 %v7547, %v8486
    %v8488 = vand.u32 %v8487, 4294901760
    %8489 = vmatprep.subr.mxu0 %v8488
    %v8490 = vand.u32 %v7546, 4294901760
    %v8491 = vsub.f32 %v7546, %v8490
    %v8492 = vand.u32 %v8491, 4294901760
    %8493 = vmatpush1.msra.mxu0 %v8492
    %8494 = vmatprep.subr.mxu0 0.0
    %8495 = vmatpush1.msra.mxu0 0.0
    %8496 = vmatprep.subr.mxu0 0.0
    %8497 = vmatpush1.msra.mxu0 0.0
    %8498 = vmatprep.subr.mxu0 0.0
    %8499 = vmatpush1.msra.mxu0 0.0
    %8500 = vmatprep.subr.mxu0 0.0
    %8501 = vmatpush1.msra.mxu0 0.0
    %8502 = vmatprep.subr.mxu0 0.0
    %8503 = vmatpush1.msra.mxu0 0.0
    %8504 = vmatprep.subr.mxu0 0.0
    %8505 = vmatpush1.msra.mxu0 0.0
    %8506 = vmatprep.subr.mxu0 0.0
    %8507 = vmatpush1.msra.mxu0 0.0
    %8508 = vmatprep.subr.mxu0 0.0
    %8509 = vmatpush1.msra.mxu0 0.0
    %8510 = vmatprep.subr.mxu0 0.0
    %8511 = vmatpush1.msra.mxu0 0.0
    %8512 = vmatprep.subr.mxu0 0.0
    %8513 = vmatpush1.msra.mxu0 0.0
    %8514 = vmatprep.subr.mxu0 0.0
    %8515 = vmatpush1.msra.mxu0 0.0
    %8516 = vmatprep.subr.mxu0 0.0
    %8517 = vmatpush1.msra.mxu0 0.0
    %8518 = vmatprep.subr.mxu0 0.0
    %8519 = vmatpush1.msra.mxu0 0.0
    %8520 = vmatprep.subr.mxu0 0.0
    %8521 = vmatpush1.msra.mxu0 0.0
    %8522 = vmatprep.subr.mxu0 0.0
    %8523 = vmatpush1.msra.mxu0 0.0
    %8524 = vmatprep.subr.mxu0 0.0
    %8525 = vmatpush1.msra.mxu0 0.0
    %8526 = vmatprep.subr.mxu0 0.0
    %8527 = vmatpush1.msra.mxu0 0.0
    %8528 = vmatprep.subr.mxu0 0.0
    %8529 = vmatpush1.msra.mxu0 0.0
    %8530 = vmatprep.subr.mxu0 0.0
    %8531 = vmatpush1.msra.mxu0 0.0
    %8532 = vmatprep.subr.mxu0 0.0
    %8533 = vmatpush1.msra.mxu0 0.0
    %8534 = vmatprep.subr.mxu0 0.0
    %8535 = vmatpush1.msra.mxu0 0.0
    %8536 = vmatprep.subr.mxu0 0.0
    %8537 = vmatpush1.msra.mxu0 0.0
    %8538 = vmatprep.subr.mxu0 0.0
    %8539 = vmatpush1.msra.mxu0 0.0
    %8540 = vmatprep.subr.mxu0 0.0
    %8541 = vmatpush1.msra.mxu0 0.0
    %8542 = vmatprep.subr.mxu0 0.0
    %8543 = vmatpush1.msra.mxu0 0.0
    %8544 = vmatprep.subr.mxu0 0.0
    %8545 = vmatpush1.msra.mxu0 0.0
    %8546 = vmatprep.subr.mxu0 0.0
    %8547 = vmatpush1.msra.mxu0 0.0
    %8548 = vmatprep.subr.mxu0 0.0
    %8549 = vmatpush1.msra.mxu0 0.0
    %8550 = vmatprep.mubr.f32.mxu0 0.0
    %v8551 = vand.u32 %v7550, 4294901760
    %8552 = vmatmul.mubr.f32.gmra.mrb[0].mxu0 %v8551
    %v8553 = vpop.f32.mrb[0].mxu0
    %v8554 = vadd.f32 %v8458, %v8553
    %v8555 = vpop.f32.mrb[0].mxu0
    %v8556 = vadd.f32 %v8460, %v8555
    %8557 = vdwg.mxu0
    %v8558 = vand.u32 %v7535, 4294901760
    %8559 = vmatprep.subr.mxu0 %v8558
    %v8560 = vand.u32 %v7534, 4294901760
    %8561 = vmatpush1.msra.mxu0 %v8560
    %v8562 = vand.u32 %v7539, 4294901760
    %8563 = vmatprep.subr.mxu0 %v8562
    %v8564 = vand.u32 %v7538, 4294901760
    %8565 = vmatpush1.msra.mxu0 %v8564
    %v8566 = vand.u32 %v7543, 4294901760
    %8567 = vmatprep.subr.mxu0 %v8566
    %v8568 = vand.u32 %v7542, 4294901760
    %8569 = vmatpush1.msra.mxu0 %v8568
    %v8570 = vand.u32 %v7547, 4294901760
    %8571 = vmatprep.subr.mxu0 %v8570
    %v8572 = vand.u32 %v7546, 4294901760
    %8573 = vmatpush1.msra.mxu0 %v8572
    %8574 = vmatprep.subr.mxu0 0.0
    %8575 = vmatpush1.msra.mxu0 0.0
    %8576 = vmatprep.subr.mxu0 0.0
    %8577 = vmatpush1.msra.mxu0 0.0
    %8578 = vmatprep.subr.mxu0 0.0
    %8579 = vmatpush1.msra.mxu0 0.0
    %8580 = vmatprep.subr.mxu0 0.0
    %8581 = vmatpush1.msra.mxu0 0.0
    %8582 = vmatprep.subr.mxu0 0.0
    %8583 = vmatpush1.msra.mxu0 0.0
    %8584 = vmatprep.subr.mxu0 0.0
    %8585 = vmatpush1.msra.mxu0 0.0
    %8586 = vmatprep.subr.mxu0 0.0
    %8587 = vmatpush1.msra.mxu0 0.0
    %8588 = vmatprep.subr.mxu0 0.0
    %8589 = vmatpush1.msra.mxu0 0.0
    %8590 = vmatprep.subr.mxu0 0.0
    %8591 = vmatpush1.msra.mxu0 0.0
    %8592 = vmatprep.subr.mxu0 0.0
    %8593 = vmatpush1.msra.mxu0 0.0
    %8594 = vmatprep.subr.mxu0 0.0
    %8595 = vmatpush1.msra.mxu0 0.0
    %8596 = vmatprep.subr.mxu0 0.0
    %8597 = vmatpush1.msra.mxu0 0.0
    %8598 = vmatprep.subr.mxu0 0.0
    %8599 = vmatpush1.msra.mxu0 0.0
    %8600 = vmatprep.subr.mxu0 0.0
    %8601 = vmatpush1.msra.mxu0 0.0
    %8602 = vmatprep.subr.mxu0 0.0
    %8603 = vmatpush1.msra.mxu0 0.0
    %8604 = vmatprep.subr.mxu0 0.0
    %8605 = vmatpush1.msra.mxu0 0.0
    %8606 = vmatprep.subr.mxu0 0.0
    %8607 = vmatpush1.msra.mxu0 0.0
    %8608 = vmatprep.subr.mxu0 0.0
    %8609 = vmatpush1.msra.mxu0 0.0
    %8610 = vmatprep.subr.mxu0 0.0
    %8611 = vmatpush1.msra.mxu0 0.0
    %8612 = vmatprep.subr.mxu0 0.0
    %8613 = vmatpush1.msra.mxu0 0.0
    %8614 = vmatprep.subr.mxu0 0.0
    %8615 = vmatpush1.msra.mxu0 0.0
    %8616 = vmatprep.subr.mxu0 0.0
    %8617 = vmatpush1.msra.mxu0 0.0
    %8618 = vmatprep.subr.mxu0 0.0
    %8619 = vmatpush1.msra.mxu0 0.0
    %8620 = vmatprep.subr.mxu0 0.0
    %8621 = vmatpush1.msra.mxu0 0.0
    %8622 = vmatprep.subr.mxu0 0.0
    %8623 = vmatpush1.msra.mxu0 0.0
    %8624 = vmatprep.subr.mxu0 0.0
    %8625 = vmatpush1.msra.mxu0 0.0
    %8626 = vmatprep.subr.mxu0 0.0
    %8627 = vmatpush1.msra.mxu0 0.0
    %8628 = vmatprep.subr.mxu0 0.0
    %8629 = vmatpush1.msra.mxu0 0.0
    %8630 = vmatprep.mubr.f32.mxu0 0.0
    %v8631 = vand.u32 %v7550, 4294901760
    %8632 = vmatmul.mubr.f32.gmra.mrb[0].mxu0 %v8631
    %v8633 = vpop.f32.mrb[0].mxu0
    %v8634 = vadd.f32 %v8554, %v8633
    %v8635 = vpop.f32.mrb[0].mxu0
    %v8636 = vadd.f32 %v8556, %v8635
    %8637 = vdwg.mxu0
    %v8638 = vlaneseq
    %v8639 = vshrl.u32 %v8638, 7
    %v8640 = vsub.s32 0, %v8639
    %v8641 = vrot.slane %v8091, %v8640
    %v8642 = vlaneseq
    %v8643 = vshrl.u32 %v8642, 7
    %v8644 = vsub.s32 0, %v8643
    %v8645 = vrot.slane %v8093, %v8644
    %v8646 = vlaneseq
    %v8647 = vshrl.u32 %v8646, 7
    %v8648 = vsub.s32 0, %v8647
    %v8649 = vrot.slane %v8634, %v8648
    %v8650 = vlaneseq
    %v8651 = vshrl.u32 %v8650, 7
    %v8652 = vsub.s32 0, %v8651
    %v8653 = vrot.slane %v8636, %v8652
    %v8654 = vmul.f32 %v5437, %v8641
    %v8655 = vmul.f32 %v5439, %v8645
    %v8656 = vmul.f32 %v5596, %v8649
    %v8657 = vmul.f32 %v5598, %v8653
    %v8658 = vmul.f32 %v5441, %v8641
    %v8659 = vmul.f32 %v5443, %v8645
    %v8660 = vmul.f32 %v5600, %v8649
    %v8661 = vmul.f32 %v5602, %v8653
    %v8662 = vmul.f32 %v5447, %v8641
    %v8663 = vmul.f32 %v5449, %v8645
    %v8664 = vmul.f32 %v5606, %v8649
    %v8665 = vmul.f32 %v5608, %v8653
    %v8666 = vmul.f32 %v5451, %v8641
    %v8667 = vmul.f32 %v5453, %v8645
    %v8668 = vmul.f32 %v5610, %v8649
    %v8669 = vmul.f32 %v5612, %v8653
    %v8670 = vlaneseq
    %v8671 = vshrl.u32 %v8670, 7
    %v8672 = vsub.s32 1, %v8671
    %v8673 = vrot.slane %v8091, %v8672
    %v8674 = vlaneseq
    %v8675 = vshrl.u32 %v8674, 7
    %v8676 = vsub.s32 1, %v8675
    %v8677 = vrot.slane %v8093, %v8676
    %v8678 = vlaneseq
    %v8679 = vshrl.u32 %v8678, 7
    %v8680 = vsub.s32 1, %v8679
    %v8681 = vrot.slane %v8634, %v8680
    %v8682 = vlaneseq
    %v8683 = vshrl.u32 %v8682, 7
    %v8684 = vsub.s32 1, %v8683
    %v8685 = vrot.slane %v8636, %v8684
    %v8686 = vadd.f32 %v8654, %v8673
    %v8687 = vadd.f32 %v8655, %v8677
    %v8688 = vadd.f32 %v8656, %v8681
    %v8689 = vadd.f32 %v8657, %v8685
    %v8690 = vadd.f32 %v8658, %v8673
    %v8691 = vadd.f32 %v8659, %v8677
    %v8692 = vadd.f32 %v8660, %v8681
    %v8693 = vadd.f32 %v8661, %v8685
    %v8694 = vadd.f32 %v8662, %v8673
    %v8695 = vadd.f32 %v8663, %v8677
    %v8696 = vadd.f32 %v8664, %v8681
    %v8697 = vadd.f32 %v8665, %v8685
    %v8698 = vadd.f32 %v8666, %v8673
    %v8699 = vadd.f32 %v8667, %v8677
    %v8700 = vadd.f32 %v8668, %v8681
    %v8701 = vadd.f32 %v8669, %v8685
    %v8702 = vmax.f32 %v8686, 0.0
    %v8703 = vmax.f32 %v8687, 0.0
    %v8704 = vmax.f32 %v8688, 0.0
    %v8705 = vmax.f32 %v8689, 0.0
    %v8706 = vmax.f32 %v8690, 0.0
    %v8707 = vmax.f32 %v8691, 0.0
    %v8708 = vmax.f32 %v8692, 0.0
    %v8709 = vmax.f32 %v8693, 0.0
    %v8710 = vmax.f32 %v8694, 0.0
    %v8711 = vmax.f32 %v8695, 0.0
    %v8712 = vmax.f32 %v8696, 0.0
    %v8713 = vmax.f32 %v8697, 0.0
    %v8714 = vmax.f32 %v8698, 0.0
    %v8715 = vmax.f32 %v8699, 0.0
    %v8716 = vmax.f32 %v8700, 0.0
    %v8717 = vmax.f32 %v8701, 0.0
    %8718 = vst [vmem:[#allocation8] sm:$0xff] %v8702
    %8719 = vst [vmem:[#allocation8 + $0x8] sm:$0xff] %v8703
    %8720 = vst [vmem:[#allocation8 + $0x10] sm:$0xff] %v8704
    %8721 = vst [vmem:[#allocation8 + $0x18] sm:$0xff] %v8705
    %8722 = vst [vmem:[#allocation8 + $0x20] sm:$0xff] %v8706
    %8723 = vst [vmem:[#allocation8 + $0x28] sm:$0xff] %v8707
    %8724 = vst [vmem:[#allocation8 + $0x30] sm:$0xff] %v8708
    %8725 = vst [vmem:[#allocation8 + $0x38] sm:$0xff] %v8709
    %8726 = vst [vmem:[#allocation8 + $0x40] sm:$0xff] %v8710
    %8727 = vst [vmem:[#allocation8 + $0x48] sm:$0xff] %v8711
    %8728 = vst [vmem:[#allocation8 + $0x50] sm:$0xff] %v8712
    %8729 = vst [vmem:[#allocation8 + $0x58] sm:$0xff] %v8713
    %8730 = vst [vmem:[#allocation8 + $0x60] sm:$0xff] %v8714
    %8731 = vst [vmem:[#allocation8 + $0x68] sm:$0xff] %v8715
    %8732 = vst [vmem:[#allocation8 + $0x70] sm:$0xff] %v8716
    %8733 = vst [vmem:[#allocation8 + $0x78] sm:$0xff] %v8717
    // Predicated region
    $region54: #{tpu_custom_call.1} parent=1 // pred_check
      _
    $region55: #{tpu_custom_call.1} parent=1 // pred_check_branch
      %8735 = sbr.rel (0) target = $region57
    $region56: #{tpu_custom_call.1} parent=1 // pred_region
      %s8737 = ssub.s32 2048, 2048
      %8738 = vsyncadd [#allocation5], %s8737
      %s8739 = sshll.u32 [#allocation8], 4
      %s8740 = int_to_ptr.vmem [resolvable:$true] %s8739
      %8745 = dma.vmem_to_hbm [thread:$0]  %s8740, 2048, %s11, [#allocation5], 512, 512, 32
    $region57: #{tpu_custom_call.1} parent=1 // pred_fallthru
      _
    // Predicated region
    $region58: #{tpu_custom_call.1} parent=1 // pred_check
      _
    $region59: #{tpu_custom_call.1} parent=1 // pred_check_branch
      %8747 = sbr.rel (0) target = $region61
    $region60: #{tpu_custom_call.1} parent=1 // pred_region
      %8748 = dma.done [#allocation5], 2048
    $region61: #{tpu_custom_call.1} parent=1 // pred_fallthru
      _
    %8749 = vsyncpa [#allocation4], 1
    %8750 = vsyncpa [#allocation7], 1
    %8751 = vsyncpa [#allocation5], 1

</llo_original>
